<compile_context>
chip_gen: v5e
topology: v5e:2x2
jax: 0.10.0
libtpu: 0.0.40
codegen_flags: <defaults>
</compile_context>

<pallas_src>
import functools
import math

import jax
import jax.numpy as jnp
from jax.experimental import pallas as pl
from jax.experimental.pallas import tpu as pltpu


# ----------------------------------------------------------------------------
# Kernel 1: fused 3x3 conv (pad=1) + bias + ReLU + 2x2/2 max-pool.
#
# Input block = one image flattened to (1, Rp, Cin), Rp = (H + 4) * (W + 2):
# padded by 1 on top/left/right and 3 on the bottom (1 conv pad + 2 slack rows
# so every tap's contiguous row window stays in bounds).  For tap t = kh*3+kw
# the contiguous rows [kh*(W+2)+kw, kh*(W+2)+kw + H*(W+2)) form an
# (H*(W+2), Cin) matrix whose row p = h*(W+2)+w is exactly padded pixel
# (h+kh, w+kw); columns w in {W, W+1} of each image row are garbage and are
# never read by the pooling epilogue.
# ----------------------------------------------------------------------------
def _conv_relu_pool_kernel(x_ref, w_ref, b_ref, o_ref, acc_ref, *,
                           H, W, Cin, Cout):
    Wp = W + 2
    L = H * Wp                      # rows of the "wide" conv result
    Ho, Wo = H // 2, W // 2

    # ---- conv accumulation in f32 -------------------------------------------------
    acc = jnp.zeros((L, Cout), jnp.float32)
    for t in range(9):
        kh, kw = divmod(t, 3)
        start = kh * Wp + kw
        lhs = x_ref[0, pl.ds(start, L), :]            # (L, Cin)  bf16
        w_t = w_ref[pl.ds(t * Cin, Cin), :]           # (Cin, Cout) bf16
        if Cin == 1:
            # conv1: contraction dim is 1 -> broadcast MAC on the VPU (f32),
            # keeping the MXU free and avoiding a degenerate K=1 matmul.
            acc = acc + lhs.astype(jnp.float32) * w_t.astype(jnp.float32)
        else:
            acc = acc + jnp.dot(lhs, w_t, preferred_element_type=jnp.float32)

    # ---- bias + ReLU (f32), stash in VMEM scratch for the pooling reads ----------
    acc = jnp.maximum(acc + b_ref[...].astype(jnp.float32), 0.0)
    acc_ref[...] = acc

    # ---- 2x2/2 max pool: 4 sublane-strided reads per pooled output row -----------
    for ho in range(Ho):
        r0 = acc_ref[pl.ds((2 * ho) * Wp, Wo, stride=2), :]
        r1 = acc_ref[pl.ds((2 * ho) * Wp + 1, Wo, stride=2), :]
        r2 = acc_ref[pl.ds((2 * ho + 1) * Wp, Wo, stride=2), :]
        r3 = acc_ref[pl.ds((2 * ho + 1) * Wp + 1, Wo, stride=2), :]
        pooled = jnp.maximum(jnp.maximum(r0, r1), jnp.maximum(r2, r3))
        o_ref[0, pl.ds(ho * Wo, Wo), :] = pooled.astype(o_ref.dtype)


def conv_relu_pool(x_nhwc, w_k, b_row):
    """(N,H,W,Cin) -> (N,H/2,W/2,Cout): conv3x3(pad1) + bias + ReLU + maxpool2x2."""
    N, H, W, Cin = x_nhwc.shape
    KC, Cout = w_k.shape
    assert KC == 9 * Cin and H % 2 == 0 and W % 2 == 0
    Wp, Ho, Wo = W + 2, H // 2, W // 2
    Rp = (H + 4) * Wp

    xp = jnp.pad(x_nhwc.astype(jnp.bfloat16), ((0, 0), (1, 3), (1, 1), (0, 0)))
    xp3 = xp.reshape(N, Rp, Cin)                 # free reshape (row-major kept)

    kernel = functools.partial(_conv_relu_pool_kernel,
                               H=H, W=W, Cin=Cin, Cout=Cout)
    out = pl.pallas_call(
        kernel,
        out_shape=jax.ShapeDtypeStruct((N, Ho * Wo, Cout), jnp.bfloat16),
        grid_spec=pltpu.PrefetchScalarGridSpec(
            num_scalar_prefetch=0,
            grid=(N,),
            in_specs=[
                pl.BlockSpec((1, Rp, Cin), lambda b: (b, 0, 0)),
                pl.BlockSpec((9 * Cin, Cout), lambda b: (0, 0)),
                pl.BlockSpec((1, Cout), lambda b: (0, 0)),
            ],
            out_specs=pl.BlockSpec((1, Ho * Wo, Cout), lambda b: (b, 0, 0)),
            scratch_shapes=[pltpu.VMEM((H * Wp, Cout), jnp.float32)],
        ),
        compiler_params=pltpu.CompilerParams(
            dimension_semantics=("parallel",)),
        cost_estimate=pl.CostEstimate(
            flops=2 * N * H * W * 9 * Cin * Cout,
            transcendentals=0,
            bytes_accessed=int(xp3.size * 2 + w_k.size * 2 + b_row.size * 4
                               + N * Ho * Wo * Cout * 2),
        ),
    )(xp3, w_k, b_row)
    return out.reshape(N, Ho, Wo, Cout)


# ----------------------------------------------------------------------------
# Kernel 2: fused fc1 + fc2 (fc2 runs on the VMEM-resident fc1 output).
# ----------------------------------------------------------------------------
def _fc_fused_kernel(x_ref, w1_ref, b1_ref, w2_ref, b2_ref, o_ref):
    h = jnp.dot(x_ref[...], w1_ref[...], preferred_element_type=jnp.float32)
    h = h + b1_ref[...]                                       # (tm, 128) f32
    out = jnp.dot(h, w2_ref[...], preferred_element_type=jnp.float32)
    o_ref[...] = (out + b2_ref[...]).astype(o_ref.dtype)      # (tm, 10) f32


def _pick_row_block(n, cap=512):
    if n <= cap:
        return n
    tm = cap
    while tm >= 8:
        if n % tm == 0:
            return tm
        tm -= 8
    return n


def fc_fused(x, w1, b1, w2, b2):
    N, K = x.shape
    K2, Hdim = w1.shape
    assert K == K2
    Nout = w2.shape[1]
    tm = _pick_row_block(N)
    return pl.pallas_call(
        _fc_fused_kernel,
        out_shape=jax.ShapeDtypeStruct((N, Nout), jnp.float32),
        grid=(N // tm,),
        in_specs=[
            pl.BlockSpec((tm, K), lambda i: (i, 0)),
            pl.BlockSpec((K, Hdim), lambda i: (0, 0)),
            pl.BlockSpec((1, Hdim), lambda i: (0, 0)),
            pl.BlockSpec((Hdim, Nout), lambda i: (0, 0)),
            pl.BlockSpec((1, Nout), lambda i: (0, 0)),
        ],
        out_specs=pl.BlockSpec((tm, Nout), lambda i: (i, 0)),
        compiler_params=pltpu.CompilerParams(
            dimension_semantics=("parallel",)),
        cost_estimate=pl.CostEstimate(
            flops=2 * N * K * Hdim + 2 * N * Hdim * Nout,
            transcendentals=0,
            bytes_accessed=int(x.size * 2 + w1.size * 2 + w2.size * 4
                               + (b1.size + b2.size) * 4 + N * Nout * 4),
        ),
    )(x, w1, b1, w2, b2)


# ----------------------------------------------------------------------------
# Parameters: PyTorch-layout init + one-time layout/dtype preparation.
# ----------------------------------------------------------------------------
def init_params(key):
    def uniform(k, shape, fan_in):
        bound = 1.0 / math.sqrt(fan_in)
        return jax.random.uniform(k, shape, jnp.float32, -bound, bound)

    ks = jax.random.split(key, 8)
    return {
        "w1": uniform(ks[0], (32, 1, 3, 3), 9),       # PyTorch (Cout,Cin,KH,KW)
        "b1": uniform(ks[1], (32,), 9),
        "w2": uniform(ks[2], (64, 32, 3, 3), 32 * 9),
        "b2": uniform(ks[3], (64,), 32 * 9),
        "fc1_w": uniform(ks[4], (128, 3136), 3136),   # PyTorch (out, in)
        "fc1_b": uniform(ks[5], (128,), 3136),
        "fc2_w": uniform(ks[6], (10, 128), 128),
        "fc2_b": uniform(ks[7], (10,), 128),
    }


def prepare_params(p):
    """One-time weight layout/dtype prep (runs OUTSIDE the jitted forward)."""
    def conv_w(w_oihw):                       # (Cout,Cin,3,3) -> (9*Cin, Cout) bf16
        cout, cin = w_oihw.shape[:2]
        return (jnp.transpose(w_oihw, (2, 3, 1, 0))
                .reshape(9 * cin, cout).astype(jnp.bfloat16))

    # fc1 consumes NHWC-flattened (h, w, c) features, so permute its input axis
    # from PyTorch's (c, h, w) flatten order once here -> identical numerics.
    fc1 = (p["fc1_w"].reshape(128, 64, 7, 7)          # (out, c, h, w)
           .transpose(2, 3, 1, 0)                     # (h, w, c, out)
           .reshape(3136, 128).astype(jnp.bfloat16))

    return {
        "conv1_w": conv_w(p["w1"]),
        "conv1_b": p["b1"].reshape(1, 32).astype(jnp.float32),
        "conv2_w": conv_w(p["w2"]),
        "conv2_b": p["b2"].reshape(1, 64).astype(jnp.float32),
        "fc1_w": fc1,
        "fc1_b": p["fc1_b"].reshape(1, 128).astype(jnp.float32),
        "fc2_w": p["fc2_w"].T.astype(jnp.float32),    # (128, 10)
        "fc2_b": p["fc2_b"].reshape(1, 10).astype(jnp.float32),
    }


# ----------------------------------------------------------------------------
# Full forward pass (matches ConvNet.forward semantics).
# ----------------------------------------------------------------------------
@jax.jit
def convnet_forward(x_nchw, params):
    # NCHW (PyTorch input convention) -> NHWC once at the boundary.
    x = jnp.transpose(x_nchw, (0, 2, 3, 1)).astype(jnp.float32)

    x = conv_relu_pool(x, params["conv1_w"], params["conv1_b"])   # (N,14,14,32)
    x = conv_relu_pool(x, params["conv2_w"], params["conv2_b"])   # (N, 7, 7,64)

    # Free NHWC flatten (fc1_w rows were permuted to (h,w,c) order at prep).
    N = x.shape[0]
    x = x.reshape(N, 7 * 7 * 64)                                  # (N, 3136)

    return fc_fused(x, params["fc1_w"], params["fc1_b"],
                    params["fc2_w"], params["fc2_b"])             # (N, 10) f32


if __name__ == "__main__":
    key = jax.random.PRNGKey(0)
    k_params, k_x = jax.random.split(key)

    params = prepare_params(init_params(k_params))
    # fc1 requires 64*7*7 = 3136 features => spatial input must be 28x28.
    x = jax.random.normal(k_x, (2, 1, 28, 28), dtype=jnp.float32)

    out = convnet_forward(x, params)
    out = jax.block_until_ready(out)

    assert out.shape == (2, 10), out.shape
    assert out.dtype == jnp.float32
    print("KERNEL_OK")
</pallas_src>

<mosaic_0001>
module attributes {stable_mosaic.version = 11 : i64} {
  func.func @_conv_relu_pool_kernel(%arg0: i32, %arg1: memref<1x960x1xbf16, #tpu.memory_space<vmem>>, %arg2: memref<9x32xbf16, #tpu.memory_space<vmem>>, %arg3: memref<1x32xf32, #tpu.memory_space<vmem>>, %arg4: memref<1x196x32xbf16, #tpu.memory_space<vmem>>, %arg5: memref<840x32xf32, #tpu.memory_space<vmem>>) attributes {dimension_semantics = [#tpu.dimension_semantics<parallel>], iteration_bounds = array<i64: 2>, scalar_prefetch = 0 : i64, scratch_operands = 1 : i64, tpu.core_type = #tpu.core_type<tc>, window_params = [{transform_indices = @transform_0, window_bounds = array<i64: 1, 960, 1>}, {pipeline_mode = #tpu.pipeline_mode<synchronous>, transform_indices = @transform_1, window_bounds = array<i64: 9, 32>}, {pipeline_mode = #tpu.pipeline_mode<synchronous>, transform_indices = @transform_2, window_bounds = array<i64: 1, 32>}, {transform_indices = @transform_3, window_bounds = array<i64: 1, 196, 32>}]} {
    %cst = arith.constant 0.000000e+00 : f32
    %0 = vector.broadcast %cst : f32 to vector<840x32xf32>
    %c0 = arith.constant 0 : index
    %c0_0 = arith.constant 0 : index
    %c0_1 = arith.constant 0 : index
    %1 = vector.load %arg1[%c0, %c0_0, %c0_1] : memref<1x960x1xbf16, #tpu.memory_space<vmem>>, vector<1x840x1xbf16>
    %2 = vector.shape_cast %1 : vector<1x840x1xbf16> to vector<840x1xbf16>
    %c0_2 = arith.constant 0 : index
    %c0_3 = arith.constant 0 : index
    %3 = vector.load %arg2[%c0_2, %c0_3] : memref<9x32xbf16, #tpu.memory_space<vmem>>, vector<1x32xbf16>
    %4 = arith.extf %2 : vector<840x1xbf16> to vector<840x1xf32>
    %5 = arith.extf %3 : vector<1x32xbf16> to vector<1x32xf32>
    %6 = vector.broadcast %4 : vector<840x1xf32> to vector<840x32xf32>
    %7 = vector.broadcast %5 : vector<1x32xf32> to vector<840x32xf32>
    %8 = arith.mulf %6, %7 : vector<840x32xf32>
    %9 = arith.addf %0, %8 : vector<840x32xf32>
    %c0_4 = arith.constant 0 : index
    %c1 = arith.constant 1 : index
    %c0_5 = arith.constant 0 : index
    %10 = vector.load %arg1[%c0_4, %c1, %c0_5] : memref<1x960x1xbf16, #tpu.memory_space<vmem>>, vector<1x840x1xbf16>
    %11 = vector.shape_cast %10 : vector<1x840x1xbf16> to vector<840x1xbf16>
    %c1_6 = arith.constant 1 : index
    %c0_7 = arith.constant 0 : index
    %12 = vector.load %arg2[%c1_6, %c0_7] : memref<9x32xbf16, #tpu.memory_space<vmem>>, vector<1x32xbf16>
    %13 = arith.extf %11 : vector<840x1xbf16> to vector<840x1xf32>
    %14 = arith.extf %12 : vector<1x32xbf16> to vector<1x32xf32>
    %15 = vector.broadcast %13 : vector<840x1xf32> to vector<840x32xf32>
    %16 = vector.broadcast %14 : vector<1x32xf32> to vector<840x32xf32>
    %17 = arith.mulf %15, %16 : vector<840x32xf32>
    %18 = arith.addf %9, %17 : vector<840x32xf32>
    %c0_8 = arith.constant 0 : index
    %c2 = arith.constant 2 : index
    %c0_9 = arith.constant 0 : index
    %19 = vector.load %arg1[%c0_8, %c2, %c0_9] : memref<1x960x1xbf16, #tpu.memory_space<vmem>>, vector<1x840x1xbf16>
    %20 = vector.shape_cast %19 : vector<1x840x1xbf16> to vector<840x1xbf16>
    %c2_10 = arith.constant 2 : index
    %c0_11 = arith.constant 0 : index
    %21 = vector.load %arg2[%c2_10, %c0_11] : memref<9x32xbf16, #tpu.memory_space<vmem>>, vector<1x32xbf16>
    %22 = arith.extf %20 : vector<840x1xbf16> to vector<840x1xf32>
    %23 = arith.extf %21 : vector<1x32xbf16> to vector<1x32xf32>
    %24 = vector.broadcast %22 : vector<840x1xf32> to vector<840x32xf32>
    %25 = vector.broadcast %23 : vector<1x32xf32> to vector<840x32xf32>
    %26 = arith.mulf %24, %25 : vector<840x32xf32>
    %27 = arith.addf %18, %26 : vector<840x32xf32>
    %c0_12 = arith.constant 0 : index
    %c30 = arith.constant 30 : index
    %c0_13 = arith.constant 0 : index
    %28 = vector.load %arg1[%c0_12, %c30, %c0_13] : memref<1x960x1xbf16, #tpu.memory_space<vmem>>, vector<1x840x1xbf16>
    %29 = vector.shape_cast %28 : vector<1x840x1xbf16> to vector<840x1xbf16>
    %c3 = arith.constant 3 : index
    %c0_14 = arith.constant 0 : index
    %30 = vector.load %arg2[%c3, %c0_14] : memref<9x32xbf16, #tpu.memory_space<vmem>>, vector<1x32xbf16>
    %31 = arith.extf %29 : vector<840x1xbf16> to vector<840x1xf32>
    %32 = arith.extf %30 : vector<1x32xbf16> to vector<1x32xf32>
    %33 = vector.broadcast %31 : vector<840x1xf32> to vector<840x32xf32>
    %34 = vector.broadcast %32 : vector<1x32xf32> to vector<840x32xf32>
    %35 = arith.mulf %33, %34 : vector<840x32xf32>
    %36 = arith.addf %27, %35 : vector<840x32xf32>
    %c0_15 = arith.constant 0 : index
    %c31 = arith.constant 31 : index
    %c0_16 = arith.constant 0 : index
    %37 = vector.load %arg1[%c0_15, %c31, %c0_16] : memref<1x960x1xbf16, #tpu.memory_space<vmem>>, vector<1x840x1xbf16>
    %38 = vector.shape_cast %37 : vector<1x840x1xbf16> to vector<840x1xbf16>
    %c4 = arith.constant 4 : index
    %c0_17 = arith.constant 0 : index
    %39 = vector.load %arg2[%c4, %c0_17] : memref<9x32xbf16, #tpu.memory_space<vmem>>, vector<1x32xbf16>
    %40 = arith.extf %38 : vector<840x1xbf16> to vector<840x1xf32>
    %41 = arith.extf %39 : vector<1x32xbf16> to vector<1x32xf32>
    %42 = vector.broadcast %40 : vector<840x1xf32> to vector<840x32xf32>
    %43 = vector.broadcast %41 : vector<1x32xf32> to vector<840x32xf32>
    %44 = arith.mulf %42, %43 : vector<840x32xf32>
    %45 = arith.addf %36, %44 : vector<840x32xf32>
    %c0_18 = arith.constant 0 : index
    %c32 = arith.constant 32 : index
    %c0_19 = arith.constant 0 : index
    %46 = vector.load %arg1[%c0_18, %c32, %c0_19] : memref<1x960x1xbf16, #tpu.memory_space<vmem>>, vector<1x840x1xbf16>
    %47 = vector.shape_cast %46 : vector<1x840x1xbf16> to vector<840x1xbf16>
    %c5 = arith.constant 5 : index
    %c0_20 = arith.constant 0 : index
    %48 = vector.load %arg2[%c5, %c0_20] : memref<9x32xbf16, #tpu.memory_space<vmem>>, vector<1x32xbf16>
    %49 = arith.extf %47 : vector<840x1xbf16> to vector<840x1xf32>
    %50 = arith.extf %48 : vector<1x32xbf16> to vector<1x32xf32>
    %51 = vector.broadcast %49 : vector<840x1xf32> to vector<840x32xf32>
    %52 = vector.broadcast %50 : vector<1x32xf32> to vector<840x32xf32>
    %53 = arith.mulf %51, %52 : vector<840x32xf32>
    %54 = arith.addf %45, %53 : vector<840x32xf32>
    %c0_21 = arith.constant 0 : index
    %c60 = arith.constant 60 : index
    %c0_22 = arith.constant 0 : index
    %55 = vector.load %arg1[%c0_21, %c60, %c0_22] : memref<1x960x1xbf16, #tpu.memory_space<vmem>>, vector<1x840x1xbf16>
    %56 = vector.shape_cast %55 : vector<1x840x1xbf16> to vector<840x1xbf16>
    %c6 = arith.constant 6 : index
    %c0_23 = arith.constant 0 : index
    %57 = vector.load %arg2[%c6, %c0_23] : memref<9x32xbf16, #tpu.memory_space<vmem>>, vector<1x32xbf16>
    %58 = arith.extf %56 : vector<840x1xbf16> to vector<840x1xf32>
    %59 = arith.extf %57 : vector<1x32xbf16> to vector<1x32xf32>
    %60 = vector.broadcast %58 : vector<840x1xf32> to vector<840x32xf32>
    %61 = vector.broadcast %59 : vector<1x32xf32> to vector<840x32xf32>
    %62 = arith.mulf %60, %61 : vector<840x32xf32>
    %63 = arith.addf %54, %62 : vector<840x32xf32>
    %c0_24 = arith.constant 0 : index
    %c61 = arith.constant 61 : index
    %c0_25 = arith.constant 0 : index
    %64 = vector.load %arg1[%c0_24, %c61, %c0_25] : memref<1x960x1xbf16, #tpu.memory_space<vmem>>, vector<1x840x1xbf16>
    %65 = vector.shape_cast %64 : vector<1x840x1xbf16> to vector<840x1xbf16>
    %c7 = arith.constant 7 : index
    %c0_26 = arith.constant 0 : index
    %66 = vector.load %arg2[%c7, %c0_26] : memref<9x32xbf16, #tpu.memory_space<vmem>>, vector<1x32xbf16>
    %67 = arith.extf %65 : vector<840x1xbf16> to vector<840x1xf32>
    %68 = arith.extf %66 : vector<1x32xbf16> to vector<1x32xf32>
    %69 = vector.broadcast %67 : vector<840x1xf32> to vector<840x32xf32>
    %70 = vector.broadcast %68 : vector<1x32xf32> to vector<840x32xf32>
    %71 = arith.mulf %69, %70 : vector<840x32xf32>
    %72 = arith.addf %63, %71 : vector<840x32xf32>
    %c0_27 = arith.constant 0 : index
    %c62 = arith.constant 62 : index
    %c0_28 = arith.constant 0 : index
    %73 = vector.load %arg1[%c0_27, %c62, %c0_28] : memref<1x960x1xbf16, #tpu.memory_space<vmem>>, vector<1x840x1xbf16>
    %74 = vector.shape_cast %73 : vector<1x840x1xbf16> to vector<840x1xbf16>
    %c8 = arith.constant 8 : index
    %c0_29 = arith.constant 0 : index
    %75 = vector.load %arg2[%c8, %c0_29] : memref<9x32xbf16, #tpu.memory_space<vmem>>, vector<1x32xbf16>
    %76 = arith.extf %74 : vector<840x1xbf16> to vector<840x1xf32>
    %77 = arith.extf %75 : vector<1x32xbf16> to vector<1x32xf32>
    %78 = vector.broadcast %76 : vector<840x1xf32> to vector<840x32xf32>
    %79 = vector.broadcast %77 : vector<1x32xf32> to vector<840x32xf32>
    %80 = arith.mulf %78, %79 : vector<840x32xf32>
    %81 = arith.addf %72, %80 : vector<840x32xf32>
    %c0_30 = arith.constant 0 : index
    %c0_31 = arith.constant 0 : index
    %82 = vector.load %arg3[%c0_30, %c0_31] : memref<1x32xf32, #tpu.memory_space<vmem>>, vector<1x32xf32>
    %83 = vector.broadcast %82 : vector<1x32xf32> to vector<840x32xf32>
    %84 = arith.addf %81, %83 : vector<840x32xf32>
    %cst_32 = arith.constant 0.000000e+00 : f32
    %85 = vector.broadcast %cst_32 : f32 to vector<840x32xf32>
    %86 = arith.maximumf %84, %85 : vector<840x32xf32>
    %c0_33 = arith.constant 0 : index
    %c0_34 = arith.constant 0 : index
    %87 = vector.load %arg5[%c0_33, %c0_34] : memref<840x32xf32, #tpu.memory_space<vmem>>, vector<840x32xf32>
    tpu.vector_store %arg5[%c0_33, %c0_34], %86 {strides = array<i32>} : memref<840x32xf32, #tpu.memory_space<vmem>>, vector<840x32xf32>,
    %c0_35 = arith.constant 0 : index
    %c0_36 = arith.constant 0 : index
    %88 = tpu.strided_load %arg5[%c0_35, %c0_36] {strides = array<i32: 2, 1>} : memref<840x32xf32, #tpu.memory_space<vmem>>, vector<14x32xf32>
    %c1_37 = arith.constant 1 : index
    %c0_38 = arith.constant 0 : index
    %89 = tpu.strided_load %arg5[%c1_37, %c0_38] {strides = array<i32: 2, 1>} : memref<840x32xf32, #tpu.memory_space<vmem>>, vector<14x32xf32>
    %c30_39 = arith.constant 30 : index
    %c0_40 = arith.constant 0 : index
    %90 = tpu.strided_load %arg5[%c30_39, %c0_40] {strides = array<i32: 2, 1>} : memref<840x32xf32, #tpu.memory_space<vmem>>, vector<14x32xf32>
    %c31_41 = arith.constant 31 : index
    %c0_42 = arith.constant 0 : index
    %91 = tpu.strided_load %arg5[%c31_41, %c0_42] {strides = array<i32: 2, 1>} : memref<840x32xf32, #tpu.memory_space<vmem>>, vector<14x32xf32>
    %92 = arith.maximumf %88, %89 : vector<14x32xf32>
    %93 = arith.maximumf %90, %91 : vector<14x32xf32>
    %94 = arith.maximumf %92, %93 : vector<14x32xf32>
    %95 = arith.truncf %94 : vector<14x32xf32> to vector<14x32xbf16>
    %c0_43 = arith.constant 0 : index
    %c0_44 = arith.constant 0 : index
    %c0_45 = arith.constant 0 : index
    %96 = vector.load %arg4[%c0_43, %c0_44, %c0_45] : memref<1x196x32xbf16, #tpu.memory_space<vmem>>, vector<1x14x32xbf16>
    %97 = vector.shape_cast %96 : vector<1x14x32xbf16> to vector<14x32xbf16>
    %98 = vector.shape_cast %95 : vector<14x32xbf16> to vector<1x14x32xbf16>
    tpu.vector_store %arg4[%c0_43, %c0_44, %c0_45], %98 {strides = array<i32>} : memref<1x196x32xbf16, #tpu.memory_space<vmem>>, vector<1x14x32xbf16>,
    %c60_46 = arith.constant 60 : index
    %c0_47 = arith.constant 0 : index
    %99 = tpu.strided_load %arg5[%c60_46, %c0_47] {strides = array<i32: 2, 1>} : memref<840x32xf32, #tpu.memory_space<vmem>>, vector<14x32xf32>
    %c61_48 = arith.constant 61 : index
    %c0_49 = arith.constant 0 : index
    %100 = tpu.strided_load %arg5[%c61_48, %c0_49] {strides = array<i32: 2, 1>} : memref<840x32xf32, #tpu.memory_space<vmem>>, vector<14x32xf32>
    %c90 = arith.constant 90 : index
    %c0_50 = arith.constant 0 : index
    %101 = tpu.strided_load %arg5[%c90, %c0_50] {strides = array<i32: 2, 1>} : memref<840x32xf32, #tpu.memory_space<vmem>>, vector<14x32xf32>
    %c91 = arith.constant 91 : index
    %c0_51 = arith.constant 0 : index
    %102 = tpu.strided_load %arg5[%c91, %c0_51] {strides = array<i32: 2, 1>} : memref<840x32xf32, #tpu.memory_space<vmem>>, vector<14x32xf32>
    %103 = arith.maximumf %99, %100 : vector<14x32xf32>
    %104 = arith.maximumf %101, %102 : vector<14x32xf32>
    %105 = arith.maximumf %103, %104 : vector<14x32xf32>
    %106 = arith.truncf %105 : vector<14x32xf32> to vector<14x32xbf16>
    %c0_52 = arith.constant 0 : index
    %c14 = arith.constant 14 : index
    %c0_53 = arith.constant 0 : index
    %107 = vector.load %arg4[%c0_52, %c14, %c0_53] : memref<1x196x32xbf16, #tpu.memory_space<vmem>>, vector<1x14x32xbf16>
    %108 = vector.shape_cast %107 : vector<1x14x32xbf16> to vector<14x32xbf16>
    %109 = vector.shape_cast %106 : vector<14x32xbf16> to vector<1x14x32xbf16>
    tpu.vector_store %arg4[%c0_52, %c14, %c0_53], %109 {strides = array<i32>} : memref<1x196x32xbf16, #tpu.memory_space<vmem>>, vector<1x14x32xbf16>,
    %c120 = arith.constant 120 : index
    %c0_54 = arith.constant 0 : index
    %110 = tpu.strided_load %arg5[%c120, %c0_54] {strides = array<i32: 2, 1>} : memref<840x32xf32, #tpu.memory_space<vmem>>, vector<14x32xf32>
    %c121 = arith.constant 121 : index
    %c0_55 = arith.constant 0 : index
    %111 = tpu.strided_load %arg5[%c121, %c0_55] {strides = array<i32: 2, 1>} : memref<840x32xf32, #tpu.memory_space<vmem>>, vector<14x32xf32>
    %c150 = arith.constant 150 : index
    %c0_56 = arith.constant 0 : index
    %112 = tpu.strided_load %arg5[%c150, %c0_56] {strides = array<i32: 2, 1>} : memref<840x32xf32, #tpu.memory_space<vmem>>, vector<14x32xf32>
    %c151 = arith.constant 151 : index
    %c0_57 = arith.constant 0 : index
    %113 = tpu.strided_load %arg5[%c151, %c0_57] {strides = array<i32: 2, 1>} : memref<840x32xf32, #tpu.memory_space<vmem>>, vector<14x32xf32>
    %114 = arith.maximumf %110, %111 : vector<14x32xf32>
    %115 = arith.maximumf %112, %113 : vector<14x32xf32>
    %116 = arith.maximumf %114, %115 : vector<14x32xf32>
    %117 = arith.truncf %116 : vector<14x32xf32> to vector<14x32xbf16>
    %c0_58 = arith.constant 0 : index
    %c28 = arith.constant 28 : index
    %c0_59 = arith.constant 0 : index
    %118 = vector.load %arg4[%c0_58, %c28, %c0_59] : memref<1x196x32xbf16, #tpu.memory_space<vmem>>, vector<1x14x32xbf16>
    %119 = vector.shape_cast %118 : vector<1x14x32xbf16> to vector<14x32xbf16>
    %120 = vector.shape_cast %117 : vector<14x32xbf16> to vector<1x14x32xbf16>
    tpu.vector_store %arg4[%c0_58, %c28, %c0_59], %120 {strides = array<i32>} : memref<1x196x32xbf16, #tpu.memory_space<vmem>>, vector<1x14x32xbf16>,
    %c180 = arith.constant 180 : index
    %c0_60 = arith.constant 0 : index
    %121 = tpu.strided_load %arg5[%c180, %c0_60] {strides = array<i32: 2, 1>} : memref<840x32xf32, #tpu.memory_space<vmem>>, vector<14x32xf32>
    %c181 = arith.constant 181 : index
    %c0_61 = arith.constant 0 : index
    %122 = tpu.strided_load %arg5[%c181, %c0_61] {strides = array<i32: 2, 1>} : memref<840x32xf32, #tpu.memory_space<vmem>>, vector<14x32xf32>
    %c210 = arith.constant 210 : index
    %c0_62 = arith.constant 0 : index
    %123 = tpu.strided_load %arg5[%c210, %c0_62] {strides = array<i32: 2, 1>} : memref<840x32xf32, #tpu.memory_space<vmem>>, vector<14x32xf32>
    %c211 = arith.constant 211 : index
    %c0_63 = arith.constant 0 : index
    %124 = tpu.strided_load %arg5[%c211, %c0_63] {strides = array<i32: 2, 1>} : memref<840x32xf32, #tpu.memory_space<vmem>>, vector<14x32xf32>
    %125 = arith.maximumf %121, %122 : vector<14x32xf32>
    %126 = arith.maximumf %123, %124 : vector<14x32xf32>
    %127 = arith.maximumf %125, %126 : vector<14x32xf32>
    %128 = arith.truncf %127 : vector<14x32xf32> to vector<14x32xbf16>
    %c0_64 = arith.constant 0 : index
    %c42 = arith.constant 42 : index
    %c0_65 = arith.constant 0 : index
    %129 = vector.load %arg4[%c0_64, %c42, %c0_65] : memref<1x196x32xbf16, #tpu.memory_space<vmem>>, vector<1x14x32xbf16>
    %130 = vector.shape_cast %129 : vector<1x14x32xbf16> to vector<14x32xbf16>
    %131 = vector.shape_cast %128 : vector<14x32xbf16> to vector<1x14x32xbf16>
    tpu.vector_store %arg4[%c0_64, %c42, %c0_65], %131 {strides = array<i32>} : memref<1x196x32xbf16, #tpu.memory_space<vmem>>, vector<1x14x32xbf16>,
    %c240 = arith.constant 240 : index
    %c0_66 = arith.constant 0 : index
    %132 = tpu.strided_load %arg5[%c240, %c0_66] {strides = array<i32: 2, 1>} : memref<840x32xf32, #tpu.memory_space<vmem>>, vector<14x32xf32>
    %c241 = arith.constant 241 : index
    %c0_67 = arith.constant 0 : index
    %133 = tpu.strided_load %arg5[%c241, %c0_67] {strides = array<i32: 2, 1>} : memref<840x32xf32, #tpu.memory_space<vmem>>, vector<14x32xf32>
    %c270 = arith.constant 270 : index
    %c0_68 = arith.constant 0 : index
    %134 = tpu.strided_load %arg5[%c270, %c0_68] {strides = array<i32: 2, 1>} : memref<840x32xf32, #tpu.memory_space<vmem>>, vector<14x32xf32>
    %c271 = arith.constant 271 : index
    %c0_69 = arith.constant 0 : index
    %135 = tpu.strided_load %arg5[%c271, %c0_69] {strides = array<i32: 2, 1>} : memref<840x32xf32, #tpu.memory_space<vmem>>, vector<14x32xf32>
    %136 = arith.maximumf %132, %133 : vector<14x32xf32>
    %137 = arith.maximumf %134, %135 : vector<14x32xf32>
    %138 = arith.maximumf %136, %137 : vector<14x32xf32>
    %139 = arith.truncf %138 : vector<14x32xf32> to vector<14x32xbf16>
    %c0_70 = arith.constant 0 : index
    %c56 = arith.constant 56 : index
    %c0_71 = arith.constant 0 : index
    %140 = vector.load %arg4[%c0_70, %c56, %c0_71] : memref<1x196x32xbf16, #tpu.memory_space<vmem>>, vector<1x14x32xbf16>
    %141 = vector.shape_cast %140 : vector<1x14x32xbf16> to vector<14x32xbf16>
    %142 = vector.shape_cast %139 : vector<14x32xbf16> to vector<1x14x32xbf16>
    tpu.vector_store %arg4[%c0_70, %c56, %c0_71], %142 {strides = array<i32>} : memref<1x196x32xbf16, #tpu.memory_space<vmem>>, vector<1x14x32xbf16>,
    %c300 = arith.constant 300 : index
    %c0_72 = arith.constant 0 : index
    %143 = tpu.strided_load %arg5[%c300, %c0_72] {strides = array<i32: 2, 1>} : memref<840x32xf32, #tpu.memory_space<vmem>>, vector<14x32xf32>
    %c301 = arith.constant 301 : index
    %c0_73 = arith.constant 0 : index
    %144 = tpu.strided_load %arg5[%c301, %c0_73] {strides = array<i32: 2, 1>} : memref<840x32xf32, #tpu.memory_space<vmem>>, vector<14x32xf32>
    %c330 = arith.constant 330 : index
    %c0_74 = arith.constant 0 : index
    %145 = tpu.strided_load %arg5[%c330, %c0_74] {strides = array<i32: 2, 1>} : memref<840x32xf32, #tpu.memory_space<vmem>>, vector<14x32xf32>
    %c331 = arith.constant 331 : index
    %c0_75 = arith.constant 0 : index
    %146 = tpu.strided_load %arg5[%c331, %c0_75] {strides = array<i32: 2, 1>} : memref<840x32xf32, #tpu.memory_space<vmem>>, vector<14x32xf32>
    %147 = arith.maximumf %143, %144 : vector<14x32xf32>
    %148 = arith.maximumf %145, %146 : vector<14x32xf32>
    %149 = arith.maximumf %147, %148 : vector<14x32xf32>
    %150 = arith.truncf %149 : vector<14x32xf32> to vector<14x32xbf16>
    %c0_76 = arith.constant 0 : index
    %c70 = arith.constant 70 : index
    %c0_77 = arith.constant 0 : index
    %151 = vector.load %arg4[%c0_76, %c70, %c0_77] : memref<1x196x32xbf16, #tpu.memory_space<vmem>>, vector<1x14x32xbf16>
    %152 = vector.shape_cast %151 : vector<1x14x32xbf16> to vector<14x32xbf16>
    %153 = vector.shape_cast %150 : vector<14x32xbf16> to vector<1x14x32xbf16>
    tpu.vector_store %arg4[%c0_76, %c70, %c0_77], %153 {strides = array<i32>} : memref<1x196x32xbf16, #tpu.memory_space<vmem>>, vector<1x14x32xbf16>,
    %c360 = arith.constant 360 : index
    %c0_78 = arith.constant 0 : index
    %154 = tpu.strided_load %arg5[%c360, %c0_78] {strides = array<i32: 2, 1>} : memref<840x32xf32, #tpu.memory_space<vmem>>, vector<14x32xf32>
    %c361 = arith.constant 361 : index
    %c0_79 = arith.constant 0 : index
    %155 = tpu.strided_load %arg5[%c361, %c0_79] {strides = array<i32: 2, 1>} : memref<840x32xf32, #tpu.memory_space<vmem>>, vector<14x32xf32>
    %c390 = arith.constant 390 : index
    %c0_80 = arith.constant 0 : index
    %156 = tpu.strided_load %arg5[%c390, %c0_80] {strides = array<i32: 2, 1>} : memref<840x32xf32, #tpu.memory_space<vmem>>, vector<14x32xf32>
    %c391 = arith.constant 391 : index
    %c0_81 = arith.constant 0 : index
    %157 = tpu.strided_load %arg5[%c391, %c0_81] {strides = array<i32: 2, 1>} : memref<840x32xf32, #tpu.memory_space<vmem>>, vector<14x32xf32>
    %158 = arith.maximumf %154, %155 : vector<14x32xf32>
    %159 = arith.maximumf %156, %157 : vector<14x32xf32>
    %160 = arith.maximumf %158, %159 : vector<14x32xf32>
    %161 = arith.truncf %160 : vector<14x32xf32> to vector<14x32xbf16>
    %c0_82 = arith.constant 0 : index
    %c84 = arith.constant 84 : index
    %c0_83 = arith.constant 0 : index
    %162 = vector.load %arg4[%c0_82, %c84, %c0_83] : memref<1x196x32xbf16, #tpu.memory_space<vmem>>, vector<1x14x32xbf16>
    %163 = vector.shape_cast %162 : vector<1x14x32xbf16> to vector<14x32xbf16>
    %164 = vector.shape_cast %161 : vector<14x32xbf16> to vector<1x14x32xbf16>
    tpu.vector_store %arg4[%c0_82, %c84, %c0_83], %164 {strides = array<i32>} : memref<1x196x32xbf16, #tpu.memory_space<vmem>>, vector<1x14x32xbf16>,
    %c420 = arith.constant 420 : index
    %c0_84 = arith.constant 0 : index
    %165 = tpu.strided_load %arg5[%c420, %c0_84] {strides = array<i32: 2, 1>} : memref<840x32xf32, #tpu.memory_space<vmem>>, vector<14x32xf32>
    %c421 = arith.constant 421 : index
    %c0_85 = arith.constant 0 : index
    %166 = tpu.strided_load %arg5[%c421, %c0_85] {strides = array<i32: 2, 1>} : memref<840x32xf32, #tpu.memory_space<vmem>>, vector<14x32xf32>
    %c450 = arith.constant 450 : index
    %c0_86 = arith.constant 0 : index
    %167 = tpu.strided_load %arg5[%c450, %c0_86] {strides = array<i32: 2, 1>} : memref<840x32xf32, #tpu.memory_space<vmem>>, vector<14x32xf32>
    %c451 = arith.constant 451 : index
    %c0_87 = arith.constant 0 : index
    %168 = tpu.strided_load %arg5[%c451, %c0_87] {strides = array<i32: 2, 1>} : memref<840x32xf32, #tpu.memory_space<vmem>>, vector<14x32xf32>
    %169 = arith.maximumf %165, %166 : vector<14x32xf32>
    %170 = arith.maximumf %167, %168 : vector<14x32xf32>
    %171 = arith.maximumf %169, %170 : vector<14x32xf32>
    %172 = arith.truncf %171 : vector<14x32xf32> to vector<14x32xbf16>
    %c0_88 = arith.constant 0 : index
    %c98 = arith.constant 98 : index
    %c0_89 = arith.constant 0 : index
    %173 = vector.load %arg4[%c0_88, %c98, %c0_89] : memref<1x196x32xbf16, #tpu.memory_space<vmem>>, vector<1x14x32xbf16>
    %174 = vector.shape_cast %173 : vector<1x14x32xbf16> to vector<14x32xbf16>
    %175 = vector.shape_cast %172 : vector<14x32xbf16> to vector<1x14x32xbf16>
    tpu.vector_store %arg4[%c0_88, %c98, %c0_89], %175 {strides = array<i32>} : memref<1x196x32xbf16, #tpu.memory_space<vmem>>, vector<1x14x32xbf16>,
    %c480 = arith.constant 480 : index
    %c0_90 = arith.constant 0 : index
    %176 = tpu.strided_load %arg5[%c480, %c0_90] {strides = array<i32: 2, 1>} : memref<840x32xf32, #tpu.memory_space<vmem>>, vector<14x32xf32>
    %c481 = arith.constant 481 : index
    %c0_91 = arith.constant 0 : index
    %177 = tpu.strided_load %arg5[%c481, %c0_91] {strides = array<i32: 2, 1>} : memref<840x32xf32, #tpu.memory_space<vmem>>, vector<14x32xf32>
    %c510 = arith.constant 510 : index
    %c0_92 = arith.constant 0 : index
    %178 = tpu.strided_load %arg5[%c510, %c0_92] {strides = array<i32: 2, 1>} : memref<840x32xf32, #tpu.memory_space<vmem>>, vector<14x32xf32>
    %c511 = arith.constant 511 : index
    %c0_93 = arith.constant 0 : index
    %179 = tpu.strided_load %arg5[%c511, %c0_93] {strides = array<i32: 2, 1>} : memref<840x32xf32, #tpu.memory_space<vmem>>, vector<14x32xf32>
    %180 = arith.maximumf %176, %177 : vector<14x32xf32>
    %181 = arith.maximumf %178, %179 : vector<14x32xf32>
    %182 = arith.maximumf %180, %181 : vector<14x32xf32>
    %183 = arith.truncf %182 : vector<14x32xf32> to vector<14x32xbf16>
    %c0_94 = arith.constant 0 : index
    %c112 = arith.constant 112 : index
    %c0_95 = arith.constant 0 : index
    %184 = vector.load %arg4[%c0_94, %c112, %c0_95] : memref<1x196x32xbf16, #tpu.memory_space<vmem>>, vector<1x14x32xbf16>
    %185 = vector.shape_cast %184 : vector<1x14x32xbf16> to vector<14x32xbf16>
    %186 = vector.shape_cast %183 : vector<14x32xbf16> to vector<1x14x32xbf16>
    tpu.vector_store %arg4[%c0_94, %c112, %c0_95], %186 {strides = array<i32>} : memref<1x196x32xbf16, #tpu.memory_space<vmem>>, vector<1x14x32xbf16>,
    %c540 = arith.constant 540 : index
    %c0_96 = arith.constant 0 : index
    %187 = tpu.strided_load %arg5[%c540, %c0_96] {strides = array<i32: 2, 1>} : memref<840x32xf32, #tpu.memory_space<vmem>>, vector<14x32xf32>
    %c541 = arith.constant 541 : index
    %c0_97 = arith.constant 0 : index
    %188 = tpu.strided_load %arg5[%c541, %c0_97] {strides = array<i32: 2, 1>} : memref<840x32xf32, #tpu.memory_space<vmem>>, vector<14x32xf32>
    %c570 = arith.constant 570 : index
    %c0_98 = arith.constant 0 : index
    %189 = tpu.strided_load %arg5[%c570, %c0_98] {strides = array<i32: 2, 1>} : memref<840x32xf32, #tpu.memory_space<vmem>>, vector<14x32xf32>
    %c571 = arith.constant 571 : index
    %c0_99 = arith.constant 0 : index
    %190 = tpu.strided_load %arg5[%c571, %c0_99] {strides = array<i32: 2, 1>} : memref<840x32xf32, #tpu.memory_space<vmem>>, vector<14x32xf32>
    %191 = arith.maximumf %187, %188 : vector<14x32xf32>
    %192 = arith.maximumf %189, %190 : vector<14x32xf32>
    %193 = arith.maximumf %191, %192 : vector<14x32xf32>
    %194 = arith.truncf %193 : vector<14x32xf32> to vector<14x32xbf16>
    %c0_100 = arith.constant 0 : index
    %c126 = arith.constant 126 : index
    %c0_101 = arith.constant 0 : index
    %195 = vector.load %arg4[%c0_100, %c126, %c0_101] : memref<1x196x32xbf16, #tpu.memory_space<vmem>>, vector<1x14x32xbf16>
    %196 = vector.shape_cast %195 : vector<1x14x32xbf16> to vector<14x32xbf16>
    %197 = vector.shape_cast %194 : vector<14x32xbf16> to vector<1x14x32xbf16>
    tpu.vector_store %arg4[%c0_100, %c126, %c0_101], %197 {strides = array<i32>} : memref<1x196x32xbf16, #tpu.memory_space<vmem>>, vector<1x14x32xbf16>,
    %c600 = arith.constant 600 : index
    %c0_102 = arith.constant 0 : index
    %198 = tpu.strided_load %arg5[%c600, %c0_102] {strides = array<i32: 2, 1>} : memref<840x32xf32, #tpu.memory_space<vmem>>, vector<14x32xf32>
    %c601 = arith.constant 601 : index
    %c0_103 = arith.constant 0 : index
    %199 = tpu.strided_load %arg5[%c601, %c0_103] {strides = array<i32: 2, 1>} : memref<840x32xf32, #tpu.memory_space<vmem>>, vector<14x32xf32>
    %c630 = arith.constant 630 : index
    %c0_104 = arith.constant 0 : index
    %200 = tpu.strided_load %arg5[%c630, %c0_104] {strides = array<i32: 2, 1>} : memref<840x32xf32, #tpu.memory_space<vmem>>, vector<14x32xf32>
    %c631 = arith.constant 631 : index
    %c0_105 = arith.constant 0 : index
    %201 = tpu.strided_load %arg5[%c631, %c0_105] {strides = array<i32: 2, 1>} : memref<840x32xf32, #tpu.memory_space<vmem>>, vector<14x32xf32>
    %202 = arith.maximumf %198, %199 : vector<14x32xf32>
    %203 = arith.maximumf %200, %201 : vector<14x32xf32>
    %204 = arith.maximumf %202, %203 : vector<14x32xf32>
    %205 = arith.truncf %204 : vector<14x32xf32> to vector<14x32xbf16>
    %c0_106 = arith.constant 0 : index
    %c140 = arith.constant 140 : index
    %c0_107 = arith.constant 0 : index
    %206 = vector.load %arg4[%c0_106, %c140, %c0_107] : memref<1x196x32xbf16, #tpu.memory_space<vmem>>, vector<1x14x32xbf16>
    %207 = vector.shape_cast %206 : vector<1x14x32xbf16> to vector<14x32xbf16>
    %208 = vector.shape_cast %205 : vector<14x32xbf16> to vector<1x14x32xbf16>
    tpu.vector_store %arg4[%c0_106, %c140, %c0_107], %208 {strides = array<i32>} : memref<1x196x32xbf16, #tpu.memory_space<vmem>>, vector<1x14x32xbf16>,
    %c660 = arith.constant 660 : index
    %c0_108 = arith.constant 0 : index
    %209 = tpu.strided_load %arg5[%c660, %c0_108] {strides = array<i32: 2, 1>} : memref<840x32xf32, #tpu.memory_space<vmem>>, vector<14x32xf32>
    %c661 = arith.constant 661 : index
    %c0_109 = arith.constant 0 : index
    %210 = tpu.strided_load %arg5[%c661, %c0_109] {strides = array<i32: 2, 1>} : memref<840x32xf32, #tpu.memory_space<vmem>>, vector<14x32xf32>
    %c690 = arith.constant 690 : index
    %c0_110 = arith.constant 0 : index
    %211 = tpu.strided_load %arg5[%c690, %c0_110] {strides = array<i32: 2, 1>} : memref<840x32xf32, #tpu.memory_space<vmem>>, vector<14x32xf32>
    %c691 = arith.constant 691 : index
    %c0_111 = arith.constant 0 : index
    %212 = tpu.strided_load %arg5[%c691, %c0_111] {strides = array<i32: 2, 1>} : memref<840x32xf32, #tpu.memory_space<vmem>>, vector<14x32xf32>
    %213 = arith.maximumf %209, %210 : vector<14x32xf32>
    %214 = arith.maximumf %211, %212 : vector<14x32xf32>
    %215 = arith.maximumf %213, %214 : vector<14x32xf32>
    %216 = arith.truncf %215 : vector<14x32xf32> to vector<14x32xbf16>
    %c0_112 = arith.constant 0 : index
    %c154 = arith.constant 154 : index
    %c0_113 = arith.constant 0 : index
    %217 = vector.load %arg4[%c0_112, %c154, %c0_113] : memref<1x196x32xbf16, #tpu.memory_space<vmem>>, vector<1x14x32xbf16>
    %218 = vector.shape_cast %217 : vector<1x14x32xbf16> to vector<14x32xbf16>
    %219 = vector.shape_cast %216 : vector<14x32xbf16> to vector<1x14x32xbf16>
    tpu.vector_store %arg4[%c0_112, %c154, %c0_113], %219 {strides = array<i32>} : memref<1x196x32xbf16, #tpu.memory_space<vmem>>, vector<1x14x32xbf16>,
    %c720 = arith.constant 720 : index
    %c0_114 = arith.constant 0 : index
    %220 = tpu.strided_load %arg5[%c720, %c0_114] {strides = array<i32: 2, 1>} : memref<840x32xf32, #tpu.memory_space<vmem>>, vector<14x32xf32>
    %c721 = arith.constant 721 : index
    %c0_115 = arith.constant 0 : index
    %221 = tpu.strided_load %arg5[%c721, %c0_115] {strides = array<i32: 2, 1>} : memref<840x32xf32, #tpu.memory_space<vmem>>, vector<14x32xf32>
    %c750 = arith.constant 750 : index
    %c0_116 = arith.constant 0 : index
    %222 = tpu.strided_load %arg5[%c750, %c0_116] {strides = array<i32: 2, 1>} : memref<840x32xf32, #tpu.memory_space<vmem>>, vector<14x32xf32>
    %c751 = arith.constant 751 : index
    %c0_117 = arith.constant 0 : index
    %223 = tpu.strided_load %arg5[%c751, %c0_117] {strides = array<i32: 2, 1>} : memref<840x32xf32, #tpu.memory_space<vmem>>, vector<14x32xf32>
    %224 = arith.maximumf %220, %221 : vector<14x32xf32>
    %225 = arith.maximumf %222, %223 : vector<14x32xf32>
    %226 = arith.maximumf %224, %225 : vector<14x32xf32>
    %227 = arith.truncf %226 : vector<14x32xf32> to vector<14x32xbf16>
    %c0_118 = arith.constant 0 : index
    %c168 = arith.constant 168 : index
    %c0_119 = arith.constant 0 : index
    %228 = vector.load %arg4[%c0_118, %c168, %c0_119] : memref<1x196x32xbf16, #tpu.memory_space<vmem>>, vector<1x14x32xbf16>
    %229 = vector.shape_cast %228 : vector<1x14x32xbf16> to vector<14x32xbf16>
    %230 = vector.shape_cast %227 : vector<14x32xbf16> to vector<1x14x32xbf16>
    tpu.vector_store %arg4[%c0_118, %c168, %c0_119], %230 {strides = array<i32>} : memref<1x196x32xbf16, #tpu.memory_space<vmem>>, vector<1x14x32xbf16>,
    %c780 = arith.constant 780 : index
    %c0_120 = arith.constant 0 : index
    %231 = tpu.strided_load %arg5[%c780, %c0_120] {strides = array<i32: 2, 1>} : memref<840x32xf32, #tpu.memory_space<vmem>>, vector<14x32xf32>
    %c781 = arith.constant 781 : index
    %c0_121 = arith.constant 0 : index
    %232 = tpu.strided_load %arg5[%c781, %c0_121] {strides = array<i32: 2, 1>} : memref<840x32xf32, #tpu.memory_space<vmem>>, vector<14x32xf32>
    %c810 = arith.constant 810 : index
    %c0_122 = arith.constant 0 : index
    %233 = tpu.strided_load %arg5[%c810, %c0_122] {strides = array<i32: 2, 1>} : memref<840x32xf32, #tpu.memory_space<vmem>>, vector<14x32xf32>
    %c811 = arith.constant 811 : index
    %c0_123 = arith.constant 0 : index
    %234 = tpu.strided_load %arg5[%c811, %c0_123] {strides = array<i32: 2, 1>} : memref<840x32xf32, #tpu.memory_space<vmem>>, vector<14x32xf32>
    %235 = arith.maximumf %231, %232 : vector<14x32xf32>
    %236 = arith.maximumf %233, %234 : vector<14x32xf32>
    %237 = arith.maximumf %235, %236 : vector<14x32xf32>
    %238 = arith.truncf %237 : vector<14x32xf32> to vector<14x32xbf16>
    %c0_124 = arith.constant 0 : index
    %c182 = arith.constant 182 : index
    %c0_125 = arith.constant 0 : index
    %239 = vector.load %arg4[%c0_124, %c182, %c0_125] : memref<1x196x32xbf16, #tpu.memory_space<vmem>>, vector<1x14x32xbf16>
    %240 = vector.shape_cast %239 : vector<1x14x32xbf16> to vector<14x32xbf16>
    %241 = vector.shape_cast %238 : vector<14x32xbf16> to vector<1x14x32xbf16>
    tpu.vector_store %arg4[%c0_124, %c182, %c0_125], %241 {strides = array<i32>} : memref<1x196x32xbf16, #tpu.memory_space<vmem>>, vector<1x14x32xbf16>,
    return
  }
  func.func @transform_0(%arg0: i32) -> (i32, i32, i32) {
    %c0_i32 = arith.constant 0 : i32
    %c0_i32_0 = arith.constant 0 : i32
    %c0_i32_1 = arith.constant 0 : i32
    return %arg0, %c0_i32, %c0_i32_0 : i32, i32, i32
  }
  func.func @transform_1(%arg0: i32) -> (i32, i32) {
    %c0_i32 = arith.constant 0 : i32
    %c0_i32_0 = arith.constant 0 : i32
    %c0_i32_1 = arith.constant 0 : i32
    return %c0_i32, %c0_i32_0 : i32, i32
  }
  func.func @transform_2(%arg0: i32) -> (i32, i32) {
    %c0_i32 = arith.constant 0 : i32
    %c0_i32_0 = arith.constant 0 : i32
    %c0_i32_1 = arith.constant 0 : i32
    return %c0_i32, %c0_i32_0 : i32, i32
  }
  func.func @transform_3(%arg0: i32) -> (i32, i32, i32) {
    %c0_i32 = arith.constant 0 : i32
    %c0_i32_0 = arith.constant 0 : i32
    %c0_i32_1 = arith.constant 0 : i32
    return %arg0, %c0_i32, %c0_i32_0 : i32, i32, i32
  }
}

module attributes {stable_mosaic.version = 11 : i64} {
  func.func @_conv_relu_pool_kernel(%arg0: i32, %arg1: memref<1x288x32xbf16, #tpu.memory_space<vmem>>, %arg2: memref<288x64xbf16, #tpu.memory_space<vmem>>, %arg3: memref<1x64xf32, #tpu.memory_space<vmem>>, %arg4: memref<1x49x64xbf16, #tpu.memory_space<vmem>>, %arg5: memref<224x64xf32, #tpu.memory_space<vmem>>) attributes {dimension_semantics = [#tpu.dimension_semantics<parallel>], iteration_bounds = array<i64: 2>, scalar_prefetch = 0 : i64, scratch_operands = 1 : i64, tpu.core_type = #tpu.core_type<tc>, window_params = [{transform_indices = @transform_0, window_bounds = array<i64: 1, 288, 32>}, {pipeline_mode = #tpu.pipeline_mode<synchronous>, transform_indices = @transform_1, window_bounds = array<i64: 288, 64>}, {pipeline_mode = #tpu.pipeline_mode<synchronous>, transform_indices = @transform_2, window_bounds = array<i64: 1, 64>}, {transform_indices = @transform_3, window_bounds = array<i64: 1, 49, 64>}]} {
    %cst = arith.constant 0.000000e+00 : f32
    %0 = vector.broadcast %cst : f32 to vector<224x64xf32>
    %c0 = arith.constant 0 : index
    %c0_0 = arith.constant 0 : index
    %c0_1 = arith.constant 0 : index
    %1 = vector.load %arg1[%c0, %c0_0, %c0_1] : memref<1x288x32xbf16, #tpu.memory_space<vmem>>, vector<1x224x32xbf16>
    %2 = vector.shape_cast %1 : vector<1x224x32xbf16> to vector<224x32xbf16>
    %c0_2 = arith.constant 0 : index
    %c0_3 = arith.constant 0 : index
    %3 = vector.load %arg2[%c0_2, %c0_3] : memref<288x64xbf16, #tpu.memory_space<vmem>>, vector<32x64xbf16>
    %cst_4 = arith.constant dense<0.000000e+00> : vector<224x64xf32>
    %4 = tpu.matmul %2, %3, %cst_4 {dimension_numbers = #tpu.dot_dimension_numbers<[1], [0], [0], [1], [0, 0, 1, 1], [], []>} : vector<224x32xbf16>, vector<32x64xbf16>, vector<224x64xf32> -> vector<224x64xf32>
    %5 = arith.addf %0, %4 : vector<224x64xf32>
    %c0_5 = arith.constant 0 : index
    %c1 = arith.constant 1 : index
    %c0_6 = arith.constant 0 : index
    %6 = vector.load %arg1[%c0_5, %c1, %c0_6] : memref<1x288x32xbf16, #tpu.memory_space<vmem>>, vector<1x224x32xbf16>
    %7 = vector.shape_cast %6 : vector<1x224x32xbf16> to vector<224x32xbf16>
    %c32 = arith.constant 32 : index
    %c0_7 = arith.constant 0 : index
    %8 = vector.load %arg2[%c32, %c0_7] : memref<288x64xbf16, #tpu.memory_space<vmem>>, vector<32x64xbf16>
    %cst_8 = arith.constant dense<0.000000e+00> : vector<224x64xf32>
    %9 = tpu.matmul %7, %8, %cst_8 {dimension_numbers = #tpu.dot_dimension_numbers<[1], [0], [0], [1], [0, 0, 1, 1], [], []>} : vector<224x32xbf16>, vector<32x64xbf16>, vector<224x64xf32> -> vector<224x64xf32>
    %10 = arith.addf %5, %9 : vector<224x64xf32>
    %c0_9 = arith.constant 0 : index
    %c2 = arith.constant 2 : index
    %c0_10 = arith.constant 0 : index
    %11 = vector.load %arg1[%c0_9, %c2, %c0_10] : memref<1x288x32xbf16, #tpu.memory_space<vmem>>, vector<1x224x32xbf16>
    %12 = vector.shape_cast %11 : vector<1x224x32xbf16> to vector<224x32xbf16>
    %c64 = arith.constant 64 : index
    %c0_11 = arith.constant 0 : index
    %13 = vector.load %arg2[%c64, %c0_11] : memref<288x64xbf16, #tpu.memory_space<vmem>>, vector<32x64xbf16>
    %cst_12 = arith.constant dense<0.000000e+00> : vector<224x64xf32>
    %14 = tpu.matmul %12, %13, %cst_12 {dimension_numbers = #tpu.dot_dimension_numbers<[1], [0], [0], [1], [0, 0, 1, 1], [], []>} : vector<224x32xbf16>, vector<32x64xbf16>, vector<224x64xf32> -> vector<224x64xf32>
    %15 = arith.addf %10, %14 : vector<224x64xf32>
    %c0_13 = arith.constant 0 : index
    %c16 = arith.constant 16 : index
    %c0_14 = arith.constant 0 : index
    %16 = vector.load %arg1[%c0_13, %c16, %c0_14] : memref<1x288x32xbf16, #tpu.memory_space<vmem>>, vector<1x224x32xbf16>
    %17 = vector.shape_cast %16 : vector<1x224x32xbf16> to vector<224x32xbf16>
    %c96 = arith.constant 96 : index
    %c0_15 = arith.constant 0 : index
    %18 = vector.load %arg2[%c96, %c0_15] : memref<288x64xbf16, #tpu.memory_space<vmem>>, vector<32x64xbf16>
    %cst_16 = arith.constant dense<0.000000e+00> : vector<224x64xf32>
    %19 = tpu.matmul %17, %18, %cst_16 {dimension_numbers = #tpu.dot_dimension_numbers<[1], [0], [0], [1], [0, 0, 1, 1], [], []>} : vector<224x32xbf16>, vector<32x64xbf16>, vector<224x64xf32> -> vector<224x64xf32>
    %20 = arith.addf %15, %19 : vector<224x64xf32>
    %c0_17 = arith.constant 0 : index
    %c17 = arith.constant 17 : index
    %c0_18 = arith.constant 0 : index
    %21 = vector.load %arg1[%c0_17, %c17, %c0_18] : memref<1x288x32xbf16, #tpu.memory_space<vmem>>, vector<1x224x32xbf16>
    %22 = vector.shape_cast %21 : vector<1x224x32xbf16> to vector<224x32xbf16>
    %c128 = arith.constant 128 : index
    %c0_19 = arith.constant 0 : index
    %23 = vector.load %arg2[%c128, %c0_19] : memref<288x64xbf16, #tpu.memory_space<vmem>>, vector<32x64xbf16>
    %cst_20 = arith.constant dense<0.000000e+00> : vector<224x64xf32>
    %24 = tpu.matmul %22, %23, %cst_20 {dimension_numbers = #tpu.dot_dimension_numbers<[1], [0], [0], [1], [0, 0, 1, 1], [], []>} : vector<224x32xbf16>, vector<32x64xbf16>, vector<224x64xf32> -> vector<224x64xf32>
    %25 = arith.addf %20, %24 : vector<224x64xf32>
    %c0_21 = arith.constant 0 : index
    %c18 = arith.constant 18 : index
    %c0_22 = arith.constant 0 : index
    %26 = vector.load %arg1[%c0_21, %c18, %c0_22] : memref<1x288x32xbf16, #tpu.memory_space<vmem>>, vector<1x224x32xbf16>
    %27 = vector.shape_cast %26 : vector<1x224x32xbf16> to vector<224x32xbf16>
    %c160 = arith.constant 160 : index
    %c0_23 = arith.constant 0 : index
    %28 = vector.load %arg2[%c160, %c0_23] : memref<288x64xbf16, #tpu.memory_space<vmem>>, vector<32x64xbf16>
    %cst_24 = arith.constant dense<0.000000e+00> : vector<224x64xf32>
    %29 = tpu.matmul %27, %28, %cst_24 {dimension_numbers = #tpu.dot_dimension_numbers<[1], [0], [0], [1], [0, 0, 1, 1], [], []>} : vector<224x32xbf16>, vector<32x64xbf16>, vector<224x64xf32> -> vector<224x64xf32>
    %30 = arith.addf %25, %29 : vector<224x64xf32>
    %c0_25 = arith.constant 0 : index
    %c32_26 = arith.constant 32 : index
    %c0_27 = arith.constant 0 : index
    %31 = vector.load %arg1[%c0_25, %c32_26, %c0_27] : memref<1x288x32xbf16, #tpu.memory_space<vmem>>, vector<1x224x32xbf16>
    %32 = vector.shape_cast %31 : vector<1x224x32xbf16> to vector<224x32xbf16>
    %c192 = arith.constant 192 : index
    %c0_28 = arith.constant 0 : index
    %33 = vector.load %arg2[%c192, %c0_28] : memref<288x64xbf16, #tpu.memory_space<vmem>>, vector<32x64xbf16>
    %cst_29 = arith.constant dense<0.000000e+00> : vector<224x64xf32>
    %34 = tpu.matmul %32, %33, %cst_29 {dimension_numbers = #tpu.dot_dimension_numbers<[1], [0], [0], [1], [0, 0, 1, 1], [], []>} : vector<224x32xbf16>, vector<32x64xbf16>, vector<224x64xf32> -> vector<224x64xf32>
    %35 = arith.addf %30, %34 : vector<224x64xf32>
    %c0_30 = arith.constant 0 : index
    %c33 = arith.constant 33 : index
    %c0_31 = arith.constant 0 : index
    %36 = vector.load %arg1[%c0_30, %c33, %c0_31] : memref<1x288x32xbf16, #tpu.memory_space<vmem>>, vector<1x224x32xbf16>
    %37 = vector.shape_cast %36 : vector<1x224x32xbf16> to vector<224x32xbf16>
    %c224 = arith.constant 224 : index
    %c0_32 = arith.constant 0 : index
    %38 = vector.load %arg2[%c224, %c0_32] : memref<288x64xbf16, #tpu.memory_space<vmem>>, vector<32x64xbf16>
    %cst_33 = arith.constant dense<0.000000e+00> : vector<224x64xf32>
    %39 = tpu.matmul %37, %38, %cst_33 {dimension_numbers = #tpu.dot_dimension_numbers<[1], [0], [0], [1], [0, 0, 1, 1], [], []>} : vector<224x32xbf16>, vector<32x64xbf16>, vector<224x64xf32> -> vector<224x64xf32>
    %40 = arith.addf %35, %39 : vector<224x64xf32>
    %c0_34 = arith.constant 0 : index
    %c34 = arith.constant 34 : index
    %c0_35 = arith.constant 0 : index
    %41 = vector.load %arg1[%c0_34, %c34, %c0_35] : memref<1x288x32xbf16, #tpu.memory_space<vmem>>, vector<1x224x32xbf16>
    %42 = vector.shape_cast %41 : vector<1x224x32xbf16> to vector<224x32xbf16>
    %c256 = arith.constant 256 : index
    %c0_36 = arith.constant 0 : index
    %43 = vector.load %arg2[%c256, %c0_36] : memref<288x64xbf16, #tpu.memory_space<vmem>>, vector<32x64xbf16>
    %cst_37 = arith.constant dense<0.000000e+00> : vector<224x64xf32>
    %44 = tpu.matmul %42, %43, %cst_37 {dimension_numbers = #tpu.dot_dimension_numbers<[1], [0], [0], [1], [0, 0, 1, 1], [], []>} : vector<224x32xbf16>, vector<32x64xbf16>, vector<224x64xf32> -> vector<224x64xf32>
    %45 = arith.addf %40, %44 : vector<224x64xf32>
    %c0_38 = arith.constant 0 : index
    %c0_39 = arith.constant 0 : index
    %46 = vector.load %arg3[%c0_38, %c0_39] : memref<1x64xf32, #tpu.memory_space<vmem>>, vector<1x64xf32>
    %47 = vector.broadcast %46 : vector<1x64xf32> to vector<224x64xf32>
    %48 = arith.addf %45, %47 : vector<224x64xf32>
    %cst_40 = arith.constant 0.000000e+00 : f32
    %49 = vector.broadcast %cst_40 : f32 to vector<224x64xf32>
    %50 = arith.maximumf %48, %49 : vector<224x64xf32>
    %c0_41 = arith.constant 0 : index
    %c0_42 = arith.constant 0 : index
    %51 = vector.load %arg5[%c0_41, %c0_42] : memref<224x64xf32, #tpu.memory_space<vmem>>, vector<224x64xf32>
    tpu.vector_store %arg5[%c0_41, %c0_42], %50 {strides = array<i32>} : memref<224x64xf32, #tpu.memory_space<vmem>>, vector<224x64xf32>,
    %c0_43 = arith.constant 0 : index
    %c0_44 = arith.constant 0 : index
    %52 = tpu.strided_load %arg5[%c0_43, %c0_44] {strides = array<i32: 2, 1>} : memref<224x64xf32, #tpu.memory_space<vmem>>, vector<7x64xf32>
    %c1_45 = arith.constant 1 : index
    %c0_46 = arith.constant 0 : index
    %53 = tpu.strided_load %arg5[%c1_45, %c0_46] {strides = array<i32: 2, 1>} : memref<224x64xf32, #tpu.memory_space<vmem>>, vector<7x64xf32>
    %c16_47 = arith.constant 16 : index
    %c0_48 = arith.constant 0 : index
    %54 = tpu.strided_load %arg5[%c16_47, %c0_48] {strides = array<i32: 2, 1>} : memref<224x64xf32, #tpu.memory_space<vmem>>, vector<7x64xf32>
    %c17_49 = arith.constant 17 : index
    %c0_50 = arith.constant 0 : index
    %55 = tpu.strided_load %arg5[%c17_49, %c0_50] {strides = array<i32: 2, 1>} : memref<224x64xf32, #tpu.memory_space<vmem>>, vector<7x64xf32>
    %56 = arith.maximumf %52, %53 : vector<7x64xf32>
    %57 = arith.maximumf %54, %55 : vector<7x64xf32>
    %58 = arith.maximumf %56, %57 : vector<7x64xf32>
    %59 = arith.truncf %58 : vector<7x64xf32> to vector<7x64xbf16>
    %c0_51 = arith.constant 0 : index
    %c0_52 = arith.constant 0 : index
    %c0_53 = arith.constant 0 : index
    %60 = vector.load %arg4[%c0_51, %c0_52, %c0_53] : memref<1x49x64xbf16, #tpu.memory_space<vmem>>, vector<1x7x64xbf16>
    %61 = vector.shape_cast %60 : vector<1x7x64xbf16> to vector<7x64xbf16>
    %62 = vector.shape_cast %59 : vector<7x64xbf16> to vector<1x7x64xbf16>
    tpu.vector_store %arg4[%c0_51, %c0_52, %c0_53], %62 {strides = array<i32>} : memref<1x49x64xbf16, #tpu.memory_space<vmem>>, vector<1x7x64xbf16>,
    %c32_54 = arith.constant 32 : index
    %c0_55 = arith.constant 0 : index
    %63 = tpu.strided_load %arg5[%c32_54, %c0_55] {strides = array<i32: 2, 1>} : memref<224x64xf32, #tpu.memory_space<vmem>>, vector<7x64xf32>
    %c33_56 = arith.constant 33 : index
    %c0_57 = arith.constant 0 : index
    %64 = tpu.strided_load %arg5[%c33_56, %c0_57] {strides = array<i32: 2, 1>} : memref<224x64xf32, #tpu.memory_space<vmem>>, vector<7x64xf32>
    %c48 = arith.constant 48 : index
    %c0_58 = arith.constant 0 : index
    %65 = tpu.strided_load %arg5[%c48, %c0_58] {strides = array<i32: 2, 1>} : memref<224x64xf32, #tpu.memory_space<vmem>>, vector<7x64xf32>
    %c49 = arith.constant 49 : index
    %c0_59 = arith.constant 0 : index
    %66 = tpu.strided_load %arg5[%c49, %c0_59] {strides = array<i32: 2, 1>} : memref<224x64xf32, #tpu.memory_space<vmem>>, vector<7x64xf32>
    %67 = arith.maximumf %63, %64 : vector<7x64xf32>
    %68 = arith.maximumf %65, %66 : vector<7x64xf32>
    %69 = arith.maximumf %67, %68 : vector<7x64xf32>
    %70 = arith.truncf %69 : vector<7x64xf32> to vector<7x64xbf16>
    %c0_60 = arith.constant 0 : index
    %c7 = arith.constant 7 : index
    %c0_61 = arith.constant 0 : index
    %71 = vector.load %arg4[%c0_60, %c7, %c0_61] : memref<1x49x64xbf16, #tpu.memory_space<vmem>>, vector<1x7x64xbf16>
    %72 = vector.shape_cast %71 : vector<1x7x64xbf16> to vector<7x64xbf16>
    %73 = vector.shape_cast %70 : vector<7x64xbf16> to vector<1x7x64xbf16>
    tpu.vector_store %arg4[%c0_60, %c7, %c0_61], %73 {strides = array<i32>} : memref<1x49x64xbf16, #tpu.memory_space<vmem>>, vector<1x7x64xbf16>,
    %c64_62 = arith.constant 64 : index
    %c0_63 = arith.constant 0 : index
    %74 = tpu.strided_load %arg5[%c64_62, %c0_63] {strides = array<i32: 2, 1>} : memref<224x64xf32, #tpu.memory_space<vmem>>, vector<7x64xf32>
    %c65 = arith.constant 65 : index
    %c0_64 = arith.constant 0 : index
    %75 = tpu.strided_load %arg5[%c65, %c0_64] {strides = array<i32: 2, 1>} : memref<224x64xf32, #tpu.memory_space<vmem>>, vector<7x64xf32>
    %c80 = arith.constant 80 : index
    %c0_65 = arith.constant 0 : index
    %76 = tpu.strided_load %arg5[%c80, %c0_65] {strides = array<i32: 2, 1>} : memref<224x64xf32, #tpu.memory_space<vmem>>, vector<7x64xf32>
    %c81 = arith.constant 81 : index
    %c0_66 = arith.constant 0 : index
    %77 = tpu.strided_load %arg5[%c81, %c0_66] {strides = array<i32: 2, 1>} : memref<224x64xf32, #tpu.memory_space<vmem>>, vector<7x64xf32>
    %78 = arith.maximumf %74, %75 : vector<7x64xf32>
    %79 = arith.maximumf %76, %77 : vector<7x64xf32>
    %80 = arith.maximumf %78, %79 : vector<7x64xf32>
    %81 = arith.truncf %80 : vector<7x64xf32> to vector<7x64xbf16>
    %c0_67 = arith.constant 0 : index
    %c14 = arith.constant 14 : index
    %c0_68 = arith.constant 0 : index
    %82 = vector.load %arg4[%c0_67, %c14, %c0_68] : memref<1x49x64xbf16, #tpu.memory_space<vmem>>, vector<1x7x64xbf16>
    %83 = vector.shape_cast %82 : vector<1x7x64xbf16> to vector<7x64xbf16>
    %84 = vector.shape_cast %81 : vector<7x64xbf16> to vector<1x7x64xbf16>
    tpu.vector_store %arg4[%c0_67, %c14, %c0_68], %84 {strides = array<i32>} : memref<1x49x64xbf16, #tpu.memory_space<vmem>>, vector<1x7x64xbf16>,
    %c96_69 = arith.constant 96 : index
    %c0_70 = arith.constant 0 : index
    %85 = tpu.strided_load %arg5[%c96_69, %c0_70] {strides = array<i32: 2, 1>} : memref<224x64xf32, #tpu.memory_space<vmem>>, vector<7x64xf32>
    %c97 = arith.constant 97 : index
    %c0_71 = arith.constant 0 : index
    %86 = tpu.strided_load %arg5[%c97, %c0_71] {strides = array<i32: 2, 1>} : memref<224x64xf32, #tpu.memory_space<vmem>>, vector<7x64xf32>
    %c112 = arith.constant 112 : index
    %c0_72 = arith.constant 0 : index
    %87 = tpu.strided_load %arg5[%c112, %c0_72] {strides = array<i32: 2, 1>} : memref<224x64xf32, #tpu.memory_space<vmem>>, vector<7x64xf32>
    %c113 = arith.constant 113 : index
    %c0_73 = arith.constant 0 : index
    %88 = tpu.strided_load %arg5[%c113, %c0_73] {strides = array<i32: 2, 1>} : memref<224x64xf32, #tpu.memory_space<vmem>>, vector<7x64xf32>
    %89 = arith.maximumf %85, %86 : vector<7x64xf32>
    %90 = arith.maximumf %87, %88 : vector<7x64xf32>
    %91 = arith.maximumf %89, %90 : vector<7x64xf32>
    %92 = arith.truncf %91 : vector<7x64xf32> to vector<7x64xbf16>
    %c0_74 = arith.constant 0 : index
    %c21 = arith.constant 21 : index
    %c0_75 = arith.constant 0 : index
    %93 = vector.load %arg4[%c0_74, %c21, %c0_75] : memref<1x49x64xbf16, #tpu.memory_space<vmem>>, vector<1x7x64xbf16>
    %94 = vector.shape_cast %93 : vector<1x7x64xbf16> to vector<7x64xbf16>
    %95 = vector.shape_cast %92 : vector<7x64xbf16> to vector<1x7x64xbf16>
    tpu.vector_store %arg4[%c0_74, %c21, %c0_75], %95 {strides = array<i32>} : memref<1x49x64xbf16, #tpu.memory_space<vmem>>, vector<1x7x64xbf16>,
    %c128_76 = arith.constant 128 : index
    %c0_77 = arith.constant 0 : index
    %96 = tpu.strided_load %arg5[%c128_76, %c0_77] {strides = array<i32: 2, 1>} : memref<224x64xf32, #tpu.memory_space<vmem>>, vector<7x64xf32>
    %c129 = arith.constant 129 : index
    %c0_78 = arith.constant 0 : index
    %97 = tpu.strided_load %arg5[%c129, %c0_78] {strides = array<i32: 2, 1>} : memref<224x64xf32, #tpu.memory_space<vmem>>, vector<7x64xf32>
    %c144 = arith.constant 144 : index
    %c0_79 = arith.constant 0 : index
    %98 = tpu.strided_load %arg5[%c144, %c0_79] {strides = array<i32: 2, 1>} : memref<224x64xf32, #tpu.memory_space<vmem>>, vector<7x64xf32>
    %c145 = arith.constant 145 : index
    %c0_80 = arith.constant 0 : index
    %99 = tpu.strided_load %arg5[%c145, %c0_80] {strides = array<i32: 2, 1>} : memref<224x64xf32, #tpu.memory_space<vmem>>, vector<7x64xf32>
    %100 = arith.maximumf %96, %97 : vector<7x64xf32>
    %101 = arith.maximumf %98, %99 : vector<7x64xf32>
    %102 = arith.maximumf %100, %101 : vector<7x64xf32>
    %103 = arith.truncf %102 : vector<7x64xf32> to vector<7x64xbf16>
    %c0_81 = arith.constant 0 : index
    %c28 = arith.constant 28 : index
    %c0_82 = arith.constant 0 : index
    %104 = vector.load %arg4[%c0_81, %c28, %c0_82] : memref<1x49x64xbf16, #tpu.memory_space<vmem>>, vector<1x7x64xbf16>
    %105 = vector.shape_cast %104 : vector<1x7x64xbf16> to vector<7x64xbf16>
    %106 = vector.shape_cast %103 : vector<7x64xbf16> to vector<1x7x64xbf16>
    tpu.vector_store %arg4[%c0_81, %c28, %c0_82], %106 {strides = array<i32>} : memref<1x49x64xbf16, #tpu.memory_space<vmem>>, vector<1x7x64xbf16>,
    %c160_83 = arith.constant 160 : index
    %c0_84 = arith.constant 0 : index
    %107 = tpu.strided_load %arg5[%c160_83, %c0_84] {strides = array<i32: 2, 1>} : memref<224x64xf32, #tpu.memory_space<vmem>>, vector<7x64xf32>
    %c161 = arith.constant 161 : index
    %c0_85 = arith.constant 0 : index
    %108 = tpu.strided_load %arg5[%c161, %c0_85] {strides = array<i32: 2, 1>} : memref<224x64xf32, #tpu.memory_space<vmem>>, vector<7x64xf32>
    %c176 = arith.constant 176 : index
    %c0_86 = arith.constant 0 : index
    %109 = tpu.strided_load %arg5[%c176, %c0_86] {strides = array<i32: 2, 1>} : memref<224x64xf32, #tpu.memory_space<vmem>>, vector<7x64xf32>
    %c177 = arith.constant 177 : index
    %c0_87 = arith.constant 0 : index
    %110 = tpu.strided_load %arg5[%c177, %c0_87] {strides = array<i32: 2, 1>} : memref<224x64xf32, #tpu.memory_space<vmem>>, vector<7x64xf32>
    %111 = arith.maximumf %107, %108 : vector<7x64xf32>
    %112 = arith.maximumf %109, %110 : vector<7x64xf32>
    %113 = arith.maximumf %111, %112 : vector<7x64xf32>
    %114 = arith.truncf %113 : vector<7x64xf32> to vector<7x64xbf16>
    %c0_88 = arith.constant 0 : index
    %c35 = arith.constant 35 : index
    %c0_89 = arith.constant 0 : index
    %115 = vector.load %arg4[%c0_88, %c35, %c0_89] : memref<1x49x64xbf16, #tpu.memory_space<vmem>>, vector<1x7x64xbf16>
    %116 = vector.shape_cast %115 : vector<1x7x64xbf16> to vector<7x64xbf16>
    %117 = vector.shape_cast %114 : vector<7x64xbf16> to vector<1x7x64xbf16>
    tpu.vector_store %arg4[%c0_88, %c35, %c0_89], %117 {strides = array<i32>} : memref<1x49x64xbf16, #tpu.memory_space<vmem>>, vector<1x7x64xbf16>,
    %c192_90 = arith.constant 192 : index
    %c0_91 = arith.constant 0 : index
    %118 = tpu.strided_load %arg5[%c192_90, %c0_91] {strides = array<i32: 2, 1>} : memref<224x64xf32, #tpu.memory_space<vmem>>, vector<7x64xf32>
    %c193 = arith.constant 193 : index
    %c0_92 = arith.constant 0 : index
    %119 = tpu.strided_load %arg5[%c193, %c0_92] {strides = array<i32: 2, 1>} : memref<224x64xf32, #tpu.memory_space<vmem>>, vector<7x64xf32>
    %c208 = arith.constant 208 : index
    %c0_93 = arith.constant 0 : index
    %120 = tpu.strided_load %arg5[%c208, %c0_93] {strides = array<i32: 2, 1>} : memref<224x64xf32, #tpu.memory_space<vmem>>, vector<7x64xf32>
    %c209 = arith.constant 209 : index
    %c0_94 = arith.constant 0 : index
    %121 = tpu.strided_load %arg5[%c209, %c0_94] {strides = array<i32: 2, 1>} : memref<224x64xf32, #tpu.memory_space<vmem>>, vector<7x64xf32>
    %122 = arith.maximumf %118, %119 : vector<7x64xf32>
    %123 = arith.maximumf %120, %121 : vector<7x64xf32>
    %124 = arith.maximumf %122, %123 : vector<7x64xf32>
    %125 = arith.truncf %124 : vector<7x64xf32> to vector<7x64xbf16>
    %c0_95 = arith.constant 0 : index
    %c42 = arith.constant 42 : index
    %c0_96 = arith.constant 0 : index
    %126 = vector.load %arg4[%c0_95, %c42, %c0_96] : memref<1x49x64xbf16, #tpu.memory_space<vmem>>, vector<1x7x64xbf16>
    %127 = vector.shape_cast %126 : vector<1x7x64xbf16> to vector<7x64xbf16>
    %128 = vector.shape_cast %125 : vector<7x64xbf16> to vector<1x7x64xbf16>
    tpu.vector_store %arg4[%c0_95, %c42, %c0_96], %128 {strides = array<i32>} : memref<1x49x64xbf16, #tpu.memory_space<vmem>>, vector<1x7x64xbf16>,
    return
  }
  func.func @transform_0(%arg0: i32) -> (i32, i32, i32) {
    %c0_i32 = arith.constant 0 : i32
    %c0_i32_0 = arith.constant 0 : i32
    %c0_i32_1 = arith.constant 0 : i32
    return %arg0, %c0_i32, %c0_i32_0 : i32, i32, i32
  }
  func.func @transform_1(%arg0: i32) -> (i32, i32) {
    %c0_i32 = arith.constant 0 : i32
    %c0_i32_0 = arith.constant 0 : i32
    %c0_i32_1 = arith.constant 0 : i32
    return %c0_i32, %c0_i32_0 : i32, i32
  }
  func.func @transform_2(%arg0: i32) -> (i32, i32) {
    %c0_i32 = arith.constant 0 : i32
    %c0_i32_0 = arith.constant 0 : i32
    %c0_i32_1 = arith.constant 0 : i32
    return %c0_i32, %c0_i32_0 : i32, i32
  }
  func.func @transform_3(%arg0: i32) -> (i32, i32, i32) {
    %c0_i32 = arith.constant 0 : i32
    %c0_i32_0 = arith.constant 0 : i32
    %c0_i32_1 = arith.constant 0 : i32
    return %arg0, %c0_i32, %c0_i32_0 : i32, i32, i32
  }
}

module attributes {stable_mosaic.version = 11 : i64} {
  func.func @_fc_fused_kernel(%arg0: i32, %arg1: memref<2x3136xbf16, #tpu.memory_space<vmem>>, %arg2: memref<3136x128xbf16, #tpu.memory_space<vmem>>, %arg3: memref<1x128xf32, #tpu.memory_space<vmem>>, %arg4: memref<128x10xf32, #tpu.memory_space<vmem>>, %arg5: memref<1x10xf32, #tpu.memory_space<vmem>>, %arg6: memref<2x10xf32, #tpu.memory_space<vmem>>) attributes {dimension_semantics = [#tpu.dimension_semantics<parallel>], iteration_bounds = array<i64: 1>, scalar_prefetch = 0 : i64, scratch_operands = 0 : i64, tpu.core_type = #tpu.core_type<tc>, window_params = [{transform_indices = @transform_0, window_bounds = array<i64: 2, 3136>}, {pipeline_mode = #tpu.pipeline_mode<synchronous>, transform_indices = @transform_1, window_bounds = array<i64: 3136, 128>}, {pipeline_mode = #tpu.pipeline_mode<synchronous>, transform_indices = @transform_2, window_bounds = array<i64: 1, 128>}, {pipeline_mode = #tpu.pipeline_mode<synchronous>, transform_indices = @transform_3, window_bounds = array<i64: 128, 10>}, {pipeline_mode = #tpu.pipeline_mode<synchronous>, transform_indices = @transform_4, window_bounds = array<i64: 1, 10>}, {transform_indices = @transform_5, window_bounds = array<i64: 2, 10>}]} {
    %c0 = arith.constant 0 : index
    %c0_0 = arith.constant 0 : index
    %0 = vector.load %arg1[%c0, %c0_0] : memref<2x3136xbf16, #tpu.memory_space<vmem>>, vector<2x3136xbf16>
    %c0_1 = arith.constant 0 : index
    %c0_2 = arith.constant 0 : index
    %1 = vector.load %arg2[%c0_1, %c0_2] : memref<3136x128xbf16, #tpu.memory_space<vmem>>, vector<3136x128xbf16>
    %cst = arith.constant dense<0.000000e+00> : vector<2x128xf32>
    %2 = tpu.matmul %0, %1, %cst {dimension_numbers = #tpu.dot_dimension_numbers<[1], [0], [0], [1], [0, 0, 1, 1], [], []>} : vector<2x3136xbf16>, vector<3136x128xbf16>, vector<2x128xf32> -> vector<2x128xf32>
    %c0_3 = arith.constant 0 : index
    %c0_4 = arith.constant 0 : index
    %3 = vector.load %arg3[%c0_3, %c0_4] : memref<1x128xf32, #tpu.memory_space<vmem>>, vector<1x128xf32>
    %4 = vector.broadcast %3 : vector<1x128xf32> to vector<2x128xf32>
    %5 = arith.addf %2, %4 : vector<2x128xf32>
    %c0_5 = arith.constant 0 : index
    %c0_6 = arith.constant 0 : index
    %6 = vector.load %arg4[%c0_5, %c0_6] : memref<128x10xf32, #tpu.memory_space<vmem>>, vector<128x10xf32>
    %cst_7 = arith.constant dense<0.000000e+00> : vector<2x10xf32>
    %7 = tpu.matmul %5, %6, %cst_7 {dimension_numbers = #tpu.dot_dimension_numbers<[1], [0], [0], [1], [0, 0, 1, 1], [], []>} : vector<2x128xf32>, vector<128x10xf32>, vector<2x10xf32> -> vector<2x10xf32>
    %c0_8 = arith.constant 0 : index
    %c0_9 = arith.constant 0 : index
    %8 = vector.load %arg5[%c0_8, %c0_9] : memref<1x10xf32, #tpu.memory_space<vmem>>, vector<1x10xf32>
    %9 = vector.broadcast %8 : vector<1x10xf32> to vector<2x10xf32>
    %10 = arith.addf %7, %9 : vector<2x10xf32>
    %c0_10 = arith.constant 0 : index
    %c0_11 = arith.constant 0 : index
    %11 = vector.load %arg6[%c0_10, %c0_11] : memref<2x10xf32, #tpu.memory_space<vmem>>, vector<2x10xf32>
    tpu.vector_store %arg6[%c0_10, %c0_11], %10 {strides = array<i32>} : memref<2x10xf32, #tpu.memory_space<vmem>>, vector<2x10xf32>,
    return
  }
  func.func @transform_0(%arg0: i32) -> (i32, i32) {
    %c0_i32 = arith.constant 0 : i32
    %c0_i32_0 = arith.constant 0 : i32
    return %arg0, %c0_i32 : i32, i32
  }
  func.func @transform_1(%arg0: i32) -> (i32, i32) {
    %c0_i32 = arith.constant 0 : i32
    %c0_i32_0 = arith.constant 0 : i32
    %c0_i32_1 = arith.constant 0 : i32
    return %c0_i32, %c0_i32_0 : i32, i32
  }
  func.func @transform_2(%arg0: i32) -> (i32, i32) {
    %c0_i32 = arith.constant 0 : i32
    %c0_i32_0 = arith.constant 0 : i32
    %c0_i32_1 = arith.constant 0 : i32
    return %c0_i32, %c0_i32_0 : i32, i32
  }
  func.func @transform_3(%arg0: i32) -> (i32, i32) {
    %c0_i32 = arith.constant 0 : i32
    %c0_i32_0 = arith.constant 0 : i32
    %c0_i32_1 = arith.constant 0 : i32
    return %c0_i32, %c0_i32_0 : i32, i32
  }
  func.func @transform_4(%arg0: i32) -> (i32, i32) {
    %c0_i32 = arith.constant 0 : i32
    %c0_i32_0 = arith.constant 0 : i32
    %c0_i32_1 = arith.constant 0 : i32
    return %c0_i32, %c0_i32_0 : i32, i32
  }
  func.func @transform_5(%arg0: i32) -> (i32, i32) {
    %c0_i32 = arith.constant 0 : i32
    %c0_i32_0 = arith.constant 0 : i32
    return %arg0, %c0_i32 : i32, i32
  }
}

</mosaic_0001>

<llo_original>
// kernel: convnet_forward.5
$region0: #{convnet_forward.5}
  #allocation0 [shape = 'u32[]', space=smem, size = 0x4, offset = 0x4, fixed_abs, tag = 'smem constant byte address 0x4 - core index']
  #allocation1 [shape = 'u32[72,128]{1,0:T(1,128)}', space=vmem, size = 0x9000, scoped, tag = 'internal scratch']
  %s0 = inlined_call_operand.vmem [shape: bf16[2,3136], index: 0, kind: input, shape index: {}]
  %s1 = inlined_call_operand.vmem [shape: bf16[3136,128], index: 1, kind: input, shape index: {}]
  %s2 = inlined_call_operand.vmem [shape: f32[1,128], index: 2, kind: input, shape index: {}]
  %s3 = inlined_call_operand.vmem [shape: f32[128,10], index: 3, kind: input, shape index: {}]
  %s4 = inlined_call_operand.vmem [shape: f32[1,10], index: 4, kind: input, shape index: {}]
  %s5 = inlined_call_operand.hbm [shape: f32[2,10], index: 5, kind: output, shape index: {}]
  %s6 = sld [smem:[#allocation0]]
  $region30: #{convnet_forward.5} parent=0
    _
  %s8 = ssub.s32 1, %s6
  %s9 = scalar_select 0, %s8, %s6
  $region1: #{convnet_forward.5} parent=0
    #allocation2 [shape = 'u8[1024]{0}', space=vmem, size = 0x400, scoped, tag = 'output window, operand 0, single buffered']
    #allocation3 [shape = 's32[1]{0}', space=sflag, size = 0x4, scoped, tag = 'scoped memory for convnet_forward.5']
    %10 = vsyncpa [#allocation3], 0
    // Predicated region
    $region2: #{convnet_forward.5} parent=1 // pred_check
      _
    $region3: #{convnet_forward.5} parent=1 // pred_check_branch
      %12 = sbr.rel (0) target = $region5
    $region4: #{convnet_forward.5} parent=1 // pred_region
      _
    $region5: #{convnet_forward.5} parent=1 // pred_fallthru
      _
    // Predicated region
    $region6: #{convnet_forward.5} parent=1 // pred_check
      _
    $region7: #{convnet_forward.5} parent=1 // pred_check_branch
      %14 = sbr.rel (0) target = $region9
    $region8: #{convnet_forward.5} parent=1 // pred_region
      _
    $region9: #{convnet_forward.5} parent=1 // pred_fallthru
      _
    // Predicated region
    $region10: #{convnet_forward.5} parent=1 // pred_check
      _
    $region11: #{convnet_forward.5} parent=1 // pred_check_branch
      %16 = sbr.rel (0) target = $region13
    $region12: #{convnet_forward.5} parent=1 // pred_region
      _
    $region13: #{convnet_forward.5} parent=1 // pred_fallthru
      _
    // Predicated region
    $region14: #{convnet_forward.5} parent=1 // pred_check
      _
    $region15: #{convnet_forward.5} parent=1 // pred_check_branch
      %18 = sbr.rel (0) target = $region17
    $region16: #{convnet_forward.5} parent=1 // pred_region
      _
    $region17: #{convnet_forward.5} parent=1 // pred_fallthru
      _
    // Predicated region
    $region18: #{convnet_forward.5} parent=1 // pred_check
      _
    $region19: #{convnet_forward.5} parent=1 // pred_check_branch
      %20 = sbr.rel (0) target = $region21
    $region20: #{convnet_forward.5} parent=1 // pred_region
      _
    $region21: #{convnet_forward.5} parent=1 // pred_fallthru
      _
    %v22 = vld [vmem:[%s0] sm:$0xff]
    %v23 = vld [vmem:[%s0 + $0x8] sm:$0xff]
    %v24 = vld [vmem:[%s0 + $0x10] sm:$0xff]
    %v25 = vld [vmem:[%s0 + $0x18] sm:$0x1]
    %v26 = vld [vmem:[%s1] sm:$0xf]
    %v27 = vld [vmem:[%s1 + $0x4] sm:$0xf]
    %v28 = vld [vmem:[%s1 + $0x8] sm:$0xf]
    %v29 = vld [vmem:[%s1 + $0xc] sm:$0xf]
    %v30 = vld [vmem:[%s1 + $0x10] sm:$0xf]
    %v31 = vld [vmem:[%s1 + $0x14] sm:$0xf]
    %v32 = vld [vmem:[%s1 + $0x18] sm:$0xf]
    %v33 = vld [vmem:[%s1 + $0x1c] sm:$0xf]
    %v34 = vld [vmem:[%s1 + $0x20] sm:$0xf]
    %v35 = vld [vmem:[%s1 + $0x24] sm:$0xf]
    %v36 = vld [vmem:[%s1 + $0x28] sm:$0xf]
    %v37 = vld [vmem:[%s1 + $0x2c] sm:$0xf]
    %v38 = vld [vmem:[%s1 + $0x30] sm:$0xf]
    %v39 = vld [vmem:[%s1 + $0x34] sm:$0xf]
    %v40 = vld [vmem:[%s1 + $0x38] sm:$0xf]
    %v41 = vld [vmem:[%s1 + $0x3c] sm:$0xf]
    %v42 = vld [vmem:[%s1 + $0x40] sm:$0xf]
    %v43 = vld [vmem:[%s1 + $0x44] sm:$0xf]
    %v44 = vld [vmem:[%s1 + $0x48] sm:$0xf]
    %v45 = vld [vmem:[%s1 + $0x4c] sm:$0xf]
    %v46 = vld [vmem:[%s1 + $0x50] sm:$0xf]
    %v47 = vld [vmem:[%s1 + $0x54] sm:$0xf]
    %v48 = vld [vmem:[%s1 + $0x58] sm:$0xf]
    %v49 = vld [vmem:[%s1 + $0x5c] sm:$0xf]
    %v50 = vld [vmem:[%s1 + $0x60] sm:$0xf]
    %v51 = vld [vmem:[%s1 + $0x64] sm:$0xf]
    %v52 = vld [vmem:[%s1 + $0x68] sm:$0xf]
    %v53 = vld [vmem:[%s1 + $0x6c] sm:$0xf]
    %v54 = vld [vmem:[%s1 + $0x70] sm:$0xf]
    %v55 = vld [vmem:[%s1 + $0x74] sm:$0xf]
    %v56 = vld [vmem:[%s1 + $0x78] sm:$0xf]
    %v57 = vld [vmem:[%s1 + $0x7c] sm:$0xf]
    %v58 = vld [vmem:[%s1 + $0x80] sm:$0xf]
    %v59 = vld [vmem:[%s1 + $0x84] sm:$0xf]
    %v60 = vld [vmem:[%s1 + $0x88] sm:$0xf]
    %v61 = vld [vmem:[%s1 + $0x8c] sm:$0xf]
    %v62 = vld [vmem:[%s1 + $0x90] sm:$0xf]
    %v63 = vld [vmem:[%s1 + $0x94] sm:$0xf]
    %v64 = vld [vmem:[%s1 + $0x98] sm:$0xf]
    %v65 = vld [vmem:[%s1 + $0x9c] sm:$0xf]
    %v66 = vld [vmem:[%s1 + $0xa0] sm:$0xf]
    %v67 = vld [vmem:[%s1 + $0xa4] sm:$0xf]
    %v68 = vld [vmem:[%s1 + $0xa8] sm:$0xf]
    %v69 = vld [vmem:[%s1 + $0xac] sm:$0xf]
    %v70 = vld [vmem:[%s1 + $0xb0] sm:$0xf]
    %v71 = vld [vmem:[%s1 + $0xb4] sm:$0xf]
    %v72 = vld [vmem:[%s1 + $0xb8] sm:$0xf]
    %v73 = vld [vmem:[%s1 + $0xbc] sm:$0xf]
    %v74 = vld [vmem:[%s1 + $0xc0] sm:$0xf]
    %v75 = vld [vmem:[%s1 + $0xc4] sm:$0xf]
    %v76 = vld [vmem:[%s1 + $0xc8] sm:$0xf]
    %v77 = vld [vmem:[%s1 + $0xcc] sm:$0xf]
    %v78 = vld [vmem:[%s1 + $0xd0] sm:$0xf]
    %v79 = vld [vmem:[%s1 + $0xd4] sm:$0xf]
    %v80 = vld [vmem:[%s1 + $0xd8] sm:$0xf]
    %v81 = vld [vmem:[%s1 + $0xdc] sm:$0xf]
    %v82 = vld [vmem:[%s1 + $0xe0] sm:$0xf]
    %v83 = vld [vmem:[%s1 + $0xe4] sm:$0xf]
    %v84 = vld [vmem:[%s1 + $0xe8] sm:$0xf]
    %v85 = vld [vmem:[%s1 + $0xec] sm:$0xf]
    %v86 = vld [vmem:[%s1 + $0xf0] sm:$0xf]
    %v87 = vld [vmem:[%s1 + $0xf4] sm:$0xf]
    %v88 = vld [vmem:[%s1 + $0xf8] sm:$0xf]
    %v89 = vld [vmem:[%s1 + $0xfc] sm:$0xf]
    %v90 = vld [vmem:[%s1 + $0x100] sm:$0xf]
    %v91 = vld [vmem:[%s1 + $0x104] sm:$0xf]
    %v92 = vld [vmem:[%s1 + $0x108] sm:$0xf]
    %v93 = vld [vmem:[%s1 + $0x10c] sm:$0xf]
    %v94 = vld [vmem:[%s1 + $0x110] sm:$0xf]
    %v95 = vld [vmem:[%s1 + $0x114] sm:$0xf]
    %v96 = vld [vmem:[%s1 + $0x118] sm:$0xf]
    %v97 = vld [vmem:[%s1 + $0x11c] sm:$0xf]
    %v98 = vld [vmem:[%s1 + $0x120] sm:$0xf]
    %v99 = vld [vmem:[%s1 + $0x124] sm:$0xf]
    %v100 = vld [vmem:[%s1 + $0x128] sm:$0xf]
    %v101 = vld [vmem:[%s1 + $0x12c] sm:$0xf]
    %v102 = vld [vmem:[%s1 + $0x130] sm:$0xf]
    %v103 = vld [vmem:[%s1 + $0x134] sm:$0xf]
    %v104 = vld [vmem:[%s1 + $0x138] sm:$0xf]
    %v105 = vld [vmem:[%s1 + $0x13c] sm:$0xf]
    %v106 = vld [vmem:[%s1 + $0x140] sm:$0xf]
    %v107 = vld [vmem:[%s1 + $0x144] sm:$0xf]
    %v108 = vld [vmem:[%s1 + $0x148] sm:$0xf]
    %v109 = vld [vmem:[%s1 + $0x14c] sm:$0xf]
    %v110 = vld [vmem:[%s1 + $0x150] sm:$0xf]
    %v111 = vld [vmem:[%s1 + $0x154] sm:$0xf]
    %v112 = vld [vmem:[%s1 + $0x158] sm:$0xf]
    %v113 = vld [vmem:[%s1 + $0x15c] sm:$0xf]
    %v114 = vld [vmem:[%s1 + $0x160] sm:$0xf]
    %v115 = vld [vmem:[%s1 + $0x164] sm:$0xf]
    %v116 = vld [vmem:[%s1 + $0x168] sm:$0xf]
    %v117 = vld [vmem:[%s1 + $0x16c] sm:$0xf]
    %v118 = vld [vmem:[%s1 + $0x170] sm:$0xf]
    %v119 = vld [vmem:[%s1 + $0x174] sm:$0xf]
    %v120 = vld [vmem:[%s1 + $0x178] sm:$0xf]
    %v121 = vld [vmem:[%s1 + $0x17c] sm:$0xf]
    %v122 = vld [vmem:[%s1 + $0x180] sm:$0xf]
    %v123 = vld [vmem:[%s1 + $0x184] sm:$0xf]
    %v124 = vld [vmem:[%s1 + $0x188] sm:$0xf]
    %v125 = vld [vmem:[%s1 + $0x18c] sm:$0xf]
    %v126 = vld [vmem:[%s1 + $0x190] sm:$0xf]
    %v127 = vld [vmem:[%s1 + $0x194] sm:$0xf]
    %v128 = vld [vmem:[%s1 + $0x198] sm:$0xf]
    %v129 = vld [vmem:[%s1 + $0x19c] sm:$0xf]
    %v130 = vld [vmem:[%s1 + $0x1a0] sm:$0xf]
    %v131 = vld [vmem:[%s1 + $0x1a4] sm:$0xf]
    %v132 = vld [vmem:[%s1 + $0x1a8] sm:$0xf]
    %v133 = vld [vmem:[%s1 + $0x1ac] sm:$0xf]
    %v134 = vld [vmem:[%s1 + $0x1b0] sm:$0xf]
    %v135 = vld [vmem:[%s1 + $0x1b4] sm:$0xf]
    %v136 = vld [vmem:[%s1 + $0x1b8] sm:$0xf]
    %v137 = vld [vmem:[%s1 + $0x1bc] sm:$0xf]
    %v138 = vld [vmem:[%s1 + $0x1c0] sm:$0xf]
    %v139 = vld [vmem:[%s1 + $0x1c4] sm:$0xf]
    %v140 = vld [vmem:[%s1 + $0x1c8] sm:$0xf]
    %v141 = vld [vmem:[%s1 + $0x1cc] sm:$0xf]
    %v142 = vld [vmem:[%s1 + $0x1d0] sm:$0xf]
    %v143 = vld [vmem:[%s1 + $0x1d4] sm:$0xf]
    %v144 = vld [vmem:[%s1 + $0x1d8] sm:$0xf]
    %v145 = vld [vmem:[%s1 + $0x1dc] sm:$0xf]
    %v146 = vld [vmem:[%s1 + $0x1e0] sm:$0xf]
    %v147 = vld [vmem:[%s1 + $0x1e4] sm:$0xf]
    %v148 = vld [vmem:[%s1 + $0x1e8] sm:$0xf]
    %v149 = vld [vmem:[%s1 + $0x1ec] sm:$0xf]
    %v150 = vld [vmem:[%s1 + $0x1f0] sm:$0xf]
    %v151 = vld [vmem:[%s1 + $0x1f4] sm:$0xf]
    %v152 = vld [vmem:[%s1 + $0x1f8] sm:$0xf]
    %v153 = vld [vmem:[%s1 + $0x1fc] sm:$0xf]
    %v154 = vld [vmem:[%s1 + $0x200] sm:$0xf]
    %v155 = vld [vmem:[%s1 + $0x204] sm:$0xf]
    %v156 = vld [vmem:[%s1 + $0x208] sm:$0xf]
    %v157 = vld [vmem:[%s1 + $0x20c] sm:$0xf]
    %v158 = vld [vmem:[%s1 + $0x210] sm:$0xf]
    %v159 = vld [vmem:[%s1 + $0x214] sm:$0xf]
    %v160 = vld [vmem:[%s1 + $0x218] sm:$0xf]
    %v161 = vld [vmem:[%s1 + $0x21c] sm:$0xf]
    %v162 = vld [vmem:[%s1 + $0x220] sm:$0xf]
    %v163 = vld [vmem:[%s1 + $0x224] sm:$0xf]
    %v164 = vld [vmem:[%s1 + $0x228] sm:$0xf]
    %v165 = vld [vmem:[%s1 + $0x22c] sm:$0xf]
    %v166 = vld [vmem:[%s1 + $0x230] sm:$0xf]
    %v167 = vld [vmem:[%s1 + $0x234] sm:$0xf]
    %v168 = vld [vmem:[%s1 + $0x238] sm:$0xf]
    %v169 = vld [vmem:[%s1 + $0x23c] sm:$0xf]
    %v170 = vld [vmem:[%s1 + $0x240] sm:$0xf]
    %v171 = vld [vmem:[%s1 + $0x244] sm:$0xf]
    %v172 = vld [vmem:[%s1 + $0x248] sm:$0xf]
    %v173 = vld [vmem:[%s1 + $0x24c] sm:$0xf]
    %v174 = vld [vmem:[%s1 + $0x250] sm:$0xf]
    %v175 = vld [vmem:[%s1 + $0x254] sm:$0xf]
    %v176 = vld [vmem:[%s1 + $0x258] sm:$0xf]
    %v177 = vld [vmem:[%s1 + $0x25c] sm:$0xf]
    %v178 = vld [vmem:[%s1 + $0x260] sm:$0xf]
    %v179 = vld [vmem:[%s1 + $0x264] sm:$0xf]
    %v180 = vld [vmem:[%s1 + $0x268] sm:$0xf]
    %v181 = vld [vmem:[%s1 + $0x26c] sm:$0xf]
    %v182 = vld [vmem:[%s1 + $0x270] sm:$0xf]
    %v183 = vld [vmem:[%s1 + $0x274] sm:$0xf]
    %v184 = vld [vmem:[%s1 + $0x278] sm:$0xf]
    %v185 = vld [vmem:[%s1 + $0x27c] sm:$0xf]
    %v186 = vld [vmem:[%s1 + $0x280] sm:$0xf]
    %v187 = vld [vmem:[%s1 + $0x284] sm:$0xf]
    %v188 = vld [vmem:[%s1 + $0x288] sm:$0xf]
    %v189 = vld [vmem:[%s1 + $0x28c] sm:$0xf]
    %v190 = vld [vmem:[%s1 + $0x290] sm:$0xf]
    %v191 = vld [vmem:[%s1 + $0x294] sm:$0xf]
    %v192 = vld [vmem:[%s1 + $0x298] sm:$0xf]
    %v193 = vld [vmem:[%s1 + $0x29c] sm:$0xf]
    %v194 = vld [vmem:[%s1 + $0x2a0] sm:$0xf]
    %v195 = vld [vmem:[%s1 + $0x2a4] sm:$0xf]
    %v196 = vld [vmem:[%s1 + $0x2a8] sm:$0xf]
    %v197 = vld [vmem:[%s1 + $0x2ac] sm:$0xf]
    %v198 = vld [vmem:[%s1 + $0x2b0] sm:$0xf]
    %v199 = vld [vmem:[%s1 + $0x2b4] sm:$0xf]
    %v200 = vld [vmem:[%s1 + $0x2b8] sm:$0xf]
    %v201 = vld [vmem:[%s1 + $0x2bc] sm:$0xf]
    %v202 = vld [vmem:[%s1 + $0x2c0] sm:$0xf]
    %v203 = vld [vmem:[%s1 + $0x2c4] sm:$0xf]
    %v204 = vld [vmem:[%s1 + $0x2c8] sm:$0xf]
    %v205 = vld [vmem:[%s1 + $0x2cc] sm:$0xf]
    %v206 = vld [vmem:[%s1 + $0x2d0] sm:$0xf]
    %v207 = vld [vmem:[%s1 + $0x2d4] sm:$0xf]
    %v208 = vld [vmem:[%s1 + $0x2d8] sm:$0xf]
    %v209 = vld [vmem:[%s1 + $0x2dc] sm:$0xf]
    %v210 = vld [vmem:[%s1 + $0x2e0] sm:$0xf]
    %v211 = vld [vmem:[%s1 + $0x2e4] sm:$0xf]
    %v212 = vld [vmem:[%s1 + $0x2e8] sm:$0xf]
    %v213 = vld [vmem:[%s1 + $0x2ec] sm:$0xf]
    %v214 = vld [vmem:[%s1 + $0x2f0] sm:$0xf]
    %v215 = vld [vmem:[%s1 + $0x2f4] sm:$0xf]
    %v216 = vld [vmem:[%s1 + $0x2f8] sm:$0xf]
    %v217 = vld [vmem:[%s1 + $0x2fc] sm:$0xf]
    %v218 = vld [vmem:[%s1 + $0x300] sm:$0xf]
    %v219 = vld [vmem:[%s1 + $0x304] sm:$0xf]
    %v220 = vld [vmem:[%s1 + $0x308] sm:$0xf]
    %v221 = vld [vmem:[%s1 + $0x30c] sm:$0xf]
    %v222 = vld [vmem:[%s1 + $0x310] sm:$0xf]
    %v223 = vld [vmem:[%s1 + $0x314] sm:$0xf]
    %v224 = vld [vmem:[%s1 + $0x318] sm:$0xf]
    %v225 = vld [vmem:[%s1 + $0x31c] sm:$0xf]
    %v226 = vld [vmem:[%s1 + $0x320] sm:$0xf]
    %v227 = vld [vmem:[%s1 + $0x324] sm:$0xf]
    %v228 = vld [vmem:[%s1 + $0x328] sm:$0xf]
    %v229 = vld [vmem:[%s1 + $0x32c] sm:$0xf]
    %v230 = vld [vmem:[%s1 + $0x330] sm:$0xf]
    %v231 = vld [vmem:[%s1 + $0x334] sm:$0xf]
    %v232 = vld [vmem:[%s1 + $0x338] sm:$0xf]
    %v233 = vld [vmem:[%s1 + $0x33c] sm:$0xf]
    %v234 = vld [vmem:[%s1 + $0x340] sm:$0xf]
    %v235 = vld [vmem:[%s1 + $0x344] sm:$0xf]
    %v236 = vld [vmem:[%s1 + $0x348] sm:$0xf]
    %v237 = vld [vmem:[%s1 + $0x34c] sm:$0xf]
    %v238 = vld [vmem:[%s1 + $0x350] sm:$0xf]
    %v239 = vld [vmem:[%s1 + $0x354] sm:$0xf]
    %v240 = vld [vmem:[%s1 + $0x358] sm:$0xf]
    %v241 = vld [vmem:[%s1 + $0x35c] sm:$0xf]
    %v242 = vld [vmem:[%s1 + $0x360] sm:$0xf]
    %v243 = vld [vmem:[%s1 + $0x364] sm:$0xf]
    %v244 = vld [vmem:[%s1 + $0x368] sm:$0xf]
    %v245 = vld [vmem:[%s1 + $0x36c] sm:$0xf]
    %v246 = vld [vmem:[%s1 + $0x370] sm:$0xf]
    %v247 = vld [vmem:[%s1 + $0x374] sm:$0xf]
    %v248 = vld [vmem:[%s1 + $0x378] sm:$0xf]
    %v249 = vld [vmem:[%s1 + $0x37c] sm:$0xf]
    %v250 = vld [vmem:[%s1 + $0x380] sm:$0xf]
    %v251 = vld [vmem:[%s1 + $0x384] sm:$0xf]
    %v252 = vld [vmem:[%s1 + $0x388] sm:$0xf]
    %v253 = vld [vmem:[%s1 + $0x38c] sm:$0xf]
    %v254 = vld [vmem:[%s1 + $0x390] sm:$0xf]
    %v255 = vld [vmem:[%s1 + $0x394] sm:$0xf]
    %v256 = vld [vmem:[%s1 + $0x398] sm:$0xf]
    %v257 = vld [vmem:[%s1 + $0x39c] sm:$0xf]
    %v258 = vld [vmem:[%s1 + $0x3a0] sm:$0xf]
    %v259 = vld [vmem:[%s1 + $0x3a4] sm:$0xf]
    %v260 = vld [vmem:[%s1 + $0x3a8] sm:$0xf]
    %v261 = vld [vmem:[%s1 + $0x3ac] sm:$0xf]
    %v262 = vld [vmem:[%s1 + $0x3b0] sm:$0xf]
    %v263 = vld [vmem:[%s1 + $0x3b4] sm:$0xf]
    %v264 = vld [vmem:[%s1 + $0x3b8] sm:$0xf]
    %v265 = vld [vmem:[%s1 + $0x3bc] sm:$0xf]
    %v266 = vld [vmem:[%s1 + $0x3c0] sm:$0xf]
    %v267 = vld [vmem:[%s1 + $0x3c4] sm:$0xf]
    %v268 = vld [vmem:[%s1 + $0x3c8] sm:$0xf]
    %v269 = vld [vmem:[%s1 + $0x3cc] sm:$0xf]
    %v270 = vld [vmem:[%s1 + $0x3d0] sm:$0xf]
    %v271 = vld [vmem:[%s1 + $0x3d4] sm:$0xf]
    %v272 = vld [vmem:[%s1 + $0x3d8] sm:$0xf]
    %v273 = vld [vmem:[%s1 + $0x3dc] sm:$0xf]
    %v274 = vld [vmem:[%s1 + $0x3e0] sm:$0xf]
    %v275 = vld [vmem:[%s1 + $0x3e4] sm:$0xf]
    %v276 = vld [vmem:[%s1 + $0x3e8] sm:$0xf]
    %v277 = vld [vmem:[%s1 + $0x3ec] sm:$0xf]
    %v278 = vld [vmem:[%s1 + $0x3f0] sm:$0xf]
    %v279 = vld [vmem:[%s1 + $0x3f4] sm:$0xf]
    %v280 = vld [vmem:[%s1 + $0x3f8] sm:$0xf]
    %v281 = vld [vmem:[%s1 + $0x3fc] sm:$0xf]
    %v282 = vld [vmem:[%s1 + $0x400] sm:$0xf]
    %v283 = vld [vmem:[%s1 + $0x404] sm:$0xf]
    %v284 = vld [vmem:[%s1 + $0x408] sm:$0xf]
    %v285 = vld [vmem:[%s1 + $0x40c] sm:$0xf]
    %v286 = vld [vmem:[%s1 + $0x410] sm:$0xf]
    %v287 = vld [vmem:[%s1 + $0x414] sm:$0xf]
    %v288 = vld [vmem:[%s1 + $0x418] sm:$0xf]
    %v289 = vld [vmem:[%s1 + $0x41c] sm:$0xf]
    %v290 = vld [vmem:[%s1 + $0x420] sm:$0xf]
    %v291 = vld [vmem:[%s1 + $0x424] sm:$0xf]
    %v292 = vld [vmem:[%s1 + $0x428] sm:$0xf]
    %v293 = vld [vmem:[%s1 + $0x42c] sm:$0xf]
    %v294 = vld [vmem:[%s1 + $0x430] sm:$0xf]
    %v295 = vld [vmem:[%s1 + $0x434] sm:$0xf]
    %v296 = vld [vmem:[%s1 + $0x438] sm:$0xf]
    %v297 = vld [vmem:[%s1 + $0x43c] sm:$0xf]
    %v298 = vld [vmem:[%s1 + $0x440] sm:$0xf]
    %v299 = vld [vmem:[%s1 + $0x444] sm:$0xf]
    %v300 = vld [vmem:[%s1 + $0x448] sm:$0xf]
    %v301 = vld [vmem:[%s1 + $0x44c] sm:$0xf]
    %v302 = vld [vmem:[%s1 + $0x450] sm:$0xf]
    %v303 = vld [vmem:[%s1 + $0x454] sm:$0xf]
    %v304 = vld [vmem:[%s1 + $0x458] sm:$0xf]
    %v305 = vld [vmem:[%s1 + $0x45c] sm:$0xf]
    %v306 = vld [vmem:[%s1 + $0x460] sm:$0xf]
    %v307 = vld [vmem:[%s1 + $0x464] sm:$0xf]
    %v308 = vld [vmem:[%s1 + $0x468] sm:$0xf]
    %v309 = vld [vmem:[%s1 + $0x46c] sm:$0xf]
    %v310 = vld [vmem:[%s1 + $0x470] sm:$0xf]
    %v311 = vld [vmem:[%s1 + $0x474] sm:$0xf]
    %v312 = vld [vmem:[%s1 + $0x478] sm:$0xf]
    %v313 = vld [vmem:[%s1 + $0x47c] sm:$0xf]
    %v314 = vld [vmem:[%s1 + $0x480] sm:$0xf]
    %v315 = vld [vmem:[%s1 + $0x484] sm:$0xf]
    %v316 = vld [vmem:[%s1 + $0x488] sm:$0xf]
    %v317 = vld [vmem:[%s1 + $0x48c] sm:$0xf]
    %v318 = vld [vmem:[%s1 + $0x490] sm:$0xf]
    %v319 = vld [vmem:[%s1 + $0x494] sm:$0xf]
    %v320 = vld [vmem:[%s1 + $0x498] sm:$0xf]
    %v321 = vld [vmem:[%s1 + $0x49c] sm:$0xf]
    %v322 = vld [vmem:[%s1 + $0x4a0] sm:$0xf]
    %v323 = vld [vmem:[%s1 + $0x4a4] sm:$0xf]
    %v324 = vld [vmem:[%s1 + $0x4a8] sm:$0xf]
    %v325 = vld [vmem:[%s1 + $0x4ac] sm:$0xf]
    %v326 = vld [vmem:[%s1 + $0x4b0] sm:$0xf]
    %v327 = vld [vmem:[%s1 + $0x4b4] sm:$0xf]
    %v328 = vld [vmem:[%s1 + $0x4b8] sm:$0xf]
    %v329 = vld [vmem:[%s1 + $0x4bc] sm:$0xf]
    %v330 = vld [vmem:[%s1 + $0x4c0] sm:$0xf]
    %v331 = vld [vmem:[%s1 + $0x4c4] sm:$0xf]
    %v332 = vld [vmem:[%s1 + $0x4c8] sm:$0xf]
    %v333 = vld [vmem:[%s1 + $0x4cc] sm:$0xf]
    %v334 = vld [vmem:[%s1 + $0x4d0] sm:$0xf]
    %v335 = vld [vmem:[%s1 + $0x4d4] sm:$0xf]
    %v336 = vld [vmem:[%s1 + $0x4d8] sm:$0xf]
    %v337 = vld [vmem:[%s1 + $0x4dc] sm:$0xf]
    %v338 = vld [vmem:[%s1 + $0x4e0] sm:$0xf]
    %v339 = vld [vmem:[%s1 + $0x4e4] sm:$0xf]
    %v340 = vld [vmem:[%s1 + $0x4e8] sm:$0xf]
    %v341 = vld [vmem:[%s1 + $0x4ec] sm:$0xf]
    %v342 = vld [vmem:[%s1 + $0x4f0] sm:$0xf]
    %v343 = vld [vmem:[%s1 + $0x4f4] sm:$0xf]
    %v344 = vld [vmem:[%s1 + $0x4f8] sm:$0xf]
    %v345 = vld [vmem:[%s1 + $0x4fc] sm:$0xf]
    %v346 = vld [vmem:[%s1 + $0x500] sm:$0xf]
    %v347 = vld [vmem:[%s1 + $0x504] sm:$0xf]
    %v348 = vld [vmem:[%s1 + $0x508] sm:$0xf]
    %v349 = vld [vmem:[%s1 + $0x50c] sm:$0xf]
    %v350 = vld [vmem:[%s1 + $0x510] sm:$0xf]
    %v351 = vld [vmem:[%s1 + $0x514] sm:$0xf]
    %v352 = vld [vmem:[%s1 + $0x518] sm:$0xf]
    %v353 = vld [vmem:[%s1 + $0x51c] sm:$0xf]
    %v354 = vld [vmem:[%s1 + $0x520] sm:$0xf]
    %v355 = vld [vmem:[%s1 + $0x524] sm:$0xf]
    %v356 = vld [vmem:[%s1 + $0x528] sm:$0xf]
    %v357 = vld [vmem:[%s1 + $0x52c] sm:$0xf]
    %v358 = vld [vmem:[%s1 + $0x530] sm:$0xf]
    %v359 = vld [vmem:[%s1 + $0x534] sm:$0xf]
    %v360 = vld [vmem:[%s1 + $0x538] sm:$0xf]
    %v361 = vld [vmem:[%s1 + $0x53c] sm:$0xf]
    %v362 = vld [vmem:[%s1 + $0x540] sm:$0xf]
    %v363 = vld [vmem:[%s1 + $0x544] sm:$0xf]
    %v364 = vld [vmem:[%s1 + $0x548] sm:$0xf]
    %v365 = vld [vmem:[%s1 + $0x54c] sm:$0xf]
    %v366 = vld [vmem:[%s1 + $0x550] sm:$0xf]
    %v367 = vld [vmem:[%s1 + $0x554] sm:$0xf]
    %v368 = vld [vmem:[%s1 + $0x558] sm:$0xf]
    %v369 = vld [vmem:[%s1 + $0x55c] sm:$0xf]
    %v370 = vld [vmem:[%s1 + $0x560] sm:$0xf]
    %v371 = vld [vmem:[%s1 + $0x564] sm:$0xf]
    %v372 = vld [vmem:[%s1 + $0x568] sm:$0xf]
    %v373 = vld [vmem:[%s1 + $0x56c] sm:$0xf]
    %v374 = vld [vmem:[%s1 + $0x570] sm:$0xf]
    %v375 = vld [vmem:[%s1 + $0x574] sm:$0xf]
    %v376 = vld [vmem:[%s1 + $0x578] sm:$0xf]
    %v377 = vld [vmem:[%s1 + $0x57c] sm:$0xf]
    %v378 = vld [vmem:[%s1 + $0x580] sm:$0xf]
    %v379 = vld [vmem:[%s1 + $0x584] sm:$0xf]
    %v380 = vld [vmem:[%s1 + $0x588] sm:$0xf]
    %v381 = vld [vmem:[%s1 + $0x58c] sm:$0xf]
    %v382 = vld [vmem:[%s1 + $0x590] sm:$0xf]
    %v383 = vld [vmem:[%s1 + $0x594] sm:$0xf]
    %v384 = vld [vmem:[%s1 + $0x598] sm:$0xf]
    %v385 = vld [vmem:[%s1 + $0x59c] sm:$0xf]
    %v386 = vld [vmem:[%s1 + $0x5a0] sm:$0xf]
    %v387 = vld [vmem:[%s1 + $0x5a4] sm:$0xf]
    %v388 = vld [vmem:[%s1 + $0x5a8] sm:$0xf]
    %v389 = vld [vmem:[%s1 + $0x5ac] sm:$0xf]
    %v390 = vld [vmem:[%s1 + $0x5b0] sm:$0xf]
    %v391 = vld [vmem:[%s1 + $0x5b4] sm:$0xf]
    %v392 = vld [vmem:[%s1 + $0x5b8] sm:$0xf]
    %v393 = vld [vmem:[%s1 + $0x5bc] sm:$0xf]
    %v394 = vld [vmem:[%s1 + $0x5c0] sm:$0xf]
    %v395 = vld [vmem:[%s1 + $0x5c4] sm:$0xf]
    %v396 = vld [vmem:[%s1 + $0x5c8] sm:$0xf]
    %v397 = vld [vmem:[%s1 + $0x5cc] sm:$0xf]
    %v398 = vld [vmem:[%s1 + $0x5d0] sm:$0xf]
    %v399 = vld [vmem:[%s1 + $0x5d4] sm:$0xf]
    %v400 = vld [vmem:[%s1 + $0x5d8] sm:$0xf]
    %v401 = vld [vmem:[%s1 + $0x5dc] sm:$0xf]
    %v402 = vld [vmem:[%s1 + $0x5e0] sm:$0xf]
    %v403 = vld [vmem:[%s1 + $0x5e4] sm:$0xf]
    %v404 = vld [vmem:[%s1 + $0x5e8] sm:$0xf]
    %v405 = vld [vmem:[%s1 + $0x5ec] sm:$0xf]
    %v406 = vld [vmem:[%s1 + $0x5f0] sm:$0xf]
    %v407 = vld [vmem:[%s1 + $0x5f4] sm:$0xf]
    %v408 = vld [vmem:[%s1 + $0x5f8] sm:$0xf]
    %v409 = vld [vmem:[%s1 + $0x5fc] sm:$0xf]
    %v410 = vld [vmem:[%s1 + $0x600] sm:$0xf]
    %v411 = vld [vmem:[%s1 + $0x604] sm:$0xf]
    %v412 = vld [vmem:[%s1 + $0x608] sm:$0xf]
    %v413 = vld [vmem:[%s1 + $0x60c] sm:$0xf]
    %v414 = vld [vmem:[%s1 + $0x610] sm:$0xf]
    %v415 = vld [vmem:[%s1 + $0x614] sm:$0xf]
    %v416 = vld [vmem:[%s1 + $0x618] sm:$0xf]
    %v417 = vld [vmem:[%s1 + $0x61c] sm:$0xf]
    %v418 = vld [vmem:[%s2] sm:$0x1]
    %v420 = vperm.slane %v418, 0
    %423 = vst [vmem:[#allocation1] ss:$9 sm:$0xff] %v22
    %v424 = vld [vmem:[#allocation1] sm:$0xff]
    %v425 = vld [vmem:[#allocation1 + $0x9] sm:$0xff]
    %v426 = vld [vmem:[#allocation1 + $0x12] sm:$0xff]
    %v427 = vld [vmem:[#allocation1 + $0x1b] sm:$0xff]
    %v428 = vld [vmem:[#allocation1 + $0x24] sm:$0xff]
    %v429 = vld [vmem:[#allocation1 + $0x2d] sm:$0xff]
    %v430 = vld [vmem:[#allocation1 + $0x36] sm:$0xff]
    %v431 = vld [vmem:[#allocation1 + $0x3f] sm:$0xff]
    %433 = vst [vmem:[#allocation1] ss:$9 sm:$0xff] %v23
    %v434 = vld [vmem:[#allocation1] sm:$0xff]
    %v435 = vld [vmem:[#allocation1 + $0x9] sm:$0xff]
    %v436 = vld [vmem:[#allocation1 + $0x12] sm:$0xff]
    %v437 = vld [vmem:[#allocation1 + $0x1b] sm:$0xff]
    %v438 = vld [vmem:[#allocation1 + $0x24] sm:$0xff]
    %v439 = vld [vmem:[#allocation1 + $0x2d] sm:$0xff]
    %v440 = vld [vmem:[#allocation1 + $0x36] sm:$0xff]
    %v441 = vld [vmem:[#allocation1 + $0x3f] sm:$0xff]
    %443 = vst [vmem:[#allocation1] ss:$9 sm:$0xff] %v24
    %v444 = vld [vmem:[#allocation1] sm:$0xff]
    %v445 = vld [vmem:[#allocation1 + $0x9] sm:$0xff]
    %v446 = vld [vmem:[#allocation1 + $0x12] sm:$0xff]
    %v447 = vld [vmem:[#allocation1 + $0x1b] sm:$0xff]
    %v448 = vld [vmem:[#allocation1 + $0x24] sm:$0xff]
    %v449 = vld [vmem:[#allocation1 + $0x2d] sm:$0xff]
    %v450 = vld [vmem:[#allocation1 + $0x36] sm:$0xff]
    %v451 = vld [vmem:[#allocation1 + $0x3f] sm:$0xff]
    %453 = vst [vmem:[#allocation1] ss:$9 sm:$0xff] %v25
    %v454 = vld [vmem:[#allocation1] sm:$0xff]
    %v871 = vunpack.c.l.b16 %v26
    %v872 = vunpack.c.l.b16 %v27
    %v873 = vunpack.c.l.b16 %v28
    %v874 = vunpack.c.l.b16 %v29
    %v875 = vunpack.c.l.b16 %v30
    %v876 = vunpack.c.l.b16 %v31
    %v877 = vunpack.c.l.b16 %v32
    %v878 = vunpack.c.l.b16 %v33
    %v879 = vunpack.c.l.b16 %v34
    %v880 = vunpack.c.l.b16 %v35
    %v881 = vunpack.c.l.b16 %v36
    %v882 = vunpack.c.l.b16 %v37
    %v883 = vunpack.c.l.b16 %v38
    %v884 = vunpack.c.l.b16 %v39
    %v885 = vunpack.c.l.b16 %v40
    %v886 = vunpack.c.l.b16 %v41
    %v887 = vunpack.c.l.b16 %v42
    %v888 = vunpack.c.l.b16 %v43
    %v889 = vunpack.c.l.b16 %v44
    %v890 = vunpack.c.l.b16 %v45
    %v891 = vunpack.c.l.b16 %v46
    %v892 = vunpack.c.l.b16 %v47
    %v893 = vunpack.c.l.b16 %v48
    %v894 = vunpack.c.l.b16 %v49
    %v895 = vunpack.c.l.b16 %v50
    %v896 = vunpack.c.l.b16 %v51
    %v897 = vunpack.c.l.b16 %v52
    %v898 = vunpack.c.l.b16 %v53
    %v899 = vunpack.c.l.b16 %v54
    %v900 = vunpack.c.l.b16 %v55
    %v901 = vunpack.c.l.b16 %v56
    %v902 = vunpack.c.l.b16 %v57
    %v903 = vunpack.c.l.b16 %v58
    %v904 = vunpack.c.l.b16 %v59
    %v905 = vunpack.c.l.b16 %v60
    %v906 = vunpack.c.l.b16 %v61
    %v907 = vunpack.c.l.b16 %v62
    %v908 = vunpack.c.l.b16 %v63
    %v909 = vunpack.c.l.b16 %v64
    %v910 = vunpack.c.l.b16 %v65
    %v911 = vunpack.c.l.b16 %v66
    %v912 = vunpack.c.l.b16 %v67
    %v913 = vunpack.c.l.b16 %v68
    %v914 = vunpack.c.l.b16 %v69
    %v915 = vunpack.c.l.b16 %v70
    %v916 = vunpack.c.l.b16 %v71
    %v917 = vunpack.c.l.b16 %v72
    %v918 = vunpack.c.l.b16 %v73
    %v919 = vunpack.c.l.b16 %v74
    %v920 = vunpack.c.l.b16 %v75
    %v921 = vunpack.c.l.b16 %v76
    %v922 = vunpack.c.l.b16 %v77
    %v923 = vunpack.c.l.b16 %v78
    %v924 = vunpack.c.l.b16 %v79
    %v925 = vunpack.c.l.b16 %v80
    %v926 = vunpack.c.l.b16 %v81
    %v927 = vunpack.c.l.b16 %v82
    %v928 = vunpack.c.l.b16 %v83
    %v929 = vunpack.c.l.b16 %v84
    %v930 = vunpack.c.l.b16 %v85
    %v931 = vunpack.c.l.b16 %v86
    %v932 = vunpack.c.l.b16 %v87
    %v933 = vunpack.c.l.b16 %v88
    %v934 = vunpack.c.l.b16 %v89
    %v935 = vunpack.c.l.b16 %v90
    %v936 = vunpack.c.l.b16 %v91
    %v937 = vunpack.c.l.b16 %v92
    %v938 = vunpack.c.l.b16 %v93
    %v939 = vunpack.c.l.b16 %v94
    %v940 = vunpack.c.l.b16 %v95
    %v941 = vunpack.c.l.b16 %v96
    %v942 = vunpack.c.l.b16 %v97
    %v943 = vunpack.c.l.b16 %v98
    %v944 = vunpack.c.l.b16 %v99
    %v945 = vunpack.c.l.b16 %v100
    %v946 = vunpack.c.l.b16 %v101
    %v947 = vunpack.c.l.b16 %v102
    %v948 = vunpack.c.l.b16 %v103
    %v949 = vunpack.c.l.b16 %v104
    %v950 = vunpack.c.l.b16 %v105
    %v951 = vunpack.c.l.b16 %v106
    %v952 = vunpack.c.l.b16 %v107
    %v953 = vunpack.c.l.b16 %v108
    %v954 = vunpack.c.l.b16 %v109
    %v955 = vunpack.c.l.b16 %v110
    %v956 = vunpack.c.l.b16 %v111
    %v957 = vunpack.c.l.b16 %v112
    %v958 = vunpack.c.l.b16 %v113
    %v959 = vunpack.c.l.b16 %v114
    %v960 = vunpack.c.l.b16 %v115
    %v961 = vunpack.c.l.b16 %v116
    %v962 = vunpack.c.l.b16 %v117
    %v963 = vunpack.c.l.b16 %v118
    %v964 = vunpack.c.l.b16 %v119
    %v965 = vunpack.c.l.b16 %v120
    %v966 = vunpack.c.l.b16 %v121
    %v967 = vunpack.c.l.b16 %v122
    %v968 = vunpack.c.l.b16 %v123
    %v969 = vunpack.c.l.b16 %v124
    %v970 = vunpack.c.l.b16 %v125
    %v971 = vunpack.c.l.b16 %v126
    %v972 = vunpack.c.l.b16 %v127
    %v973 = vunpack.c.l.b16 %v128
    %v974 = vunpack.c.l.b16 %v129
    %v975 = vunpack.c.l.b16 %v130
    %v976 = vunpack.c.l.b16 %v131
    %v977 = vunpack.c.l.b16 %v132
    %v978 = vunpack.c.l.b16 %v133
    %v979 = vunpack.c.l.b16 %v134
    %v980 = vunpack.c.l.b16 %v135
    %v981 = vunpack.c.l.b16 %v136
    %v982 = vunpack.c.l.b16 %v137
    %v983 = vunpack.c.l.b16 %v138
    %v984 = vunpack.c.l.b16 %v139
    %v985 = vunpack.c.l.b16 %v140
    %v986 = vunpack.c.l.b16 %v141
    %v987 = vunpack.c.l.b16 %v142
    %v988 = vunpack.c.l.b16 %v143
    %v989 = vunpack.c.l.b16 %v144
    %v990 = vunpack.c.l.b16 %v145
    %v991 = vunpack.c.l.b16 %v146
    %v992 = vunpack.c.l.b16 %v147
    %v993 = vunpack.c.l.b16 %v148
    %v994 = vunpack.c.l.b16 %v149
    %v995 = vunpack.c.l.b16 %v150
    %v996 = vunpack.c.l.b16 %v151
    %v997 = vunpack.c.l.b16 %v152
    %v998 = vunpack.c.l.b16 %v153
    %v999 = vunpack.c.l.b16 %v154
    %v1000 = vunpack.c.l.b16 %v155
    %v1001 = vunpack.c.l.b16 %v156
    %v1002 = vunpack.c.l.b16 %v157
    %v1003 = vunpack.c.l.b16 %v158
    %v1004 = vunpack.c.l.b16 %v159
    %v1005 = vunpack.c.l.b16 %v160
    %v1006 = vunpack.c.l.b16 %v161
    %v1007 = vunpack.c.l.b16 %v162
    %v1008 = vunpack.c.l.b16 %v163
    %v1009 = vunpack.c.l.b16 %v164
    %v1010 = vunpack.c.l.b16 %v165
    %v1011 = vunpack.c.l.b16 %v166
    %v1012 = vunpack.c.l.b16 %v167
    %v1013 = vunpack.c.l.b16 %v168
    %v1014 = vunpack.c.l.b16 %v169
    %v1015 = vunpack.c.l.b16 %v170
    %v1016 = vunpack.c.l.b16 %v171
    %v1017 = vunpack.c.l.b16 %v172
    %v1018 = vunpack.c.l.b16 %v173
    %v1019 = vunpack.c.l.b16 %v174
    %v1020 = vunpack.c.l.b16 %v175
    %v1021 = vunpack.c.l.b16 %v176
    %v1022 = vunpack.c.l.b16 %v177
    %v1023 = vunpack.c.l.b16 %v178
    %v1024 = vunpack.c.l.b16 %v179
    %v1025 = vunpack.c.l.b16 %v180
    %v1026 = vunpack.c.l.b16 %v181
    %v1027 = vunpack.c.l.b16 %v182
    %v1028 = vunpack.c.l.b16 %v183
    %v1029 = vunpack.c.l.b16 %v184
    %v1030 = vunpack.c.l.b16 %v185
    %v1031 = vunpack.c.l.b16 %v186
    %v1032 = vunpack.c.l.b16 %v187
    %v1033 = vunpack.c.l.b16 %v188
    %v1034 = vunpack.c.l.b16 %v189
    %v1035 = vunpack.c.l.b16 %v190
    %v1036 = vunpack.c.l.b16 %v191
    %v1037 = vunpack.c.l.b16 %v192
    %v1038 = vunpack.c.l.b16 %v193
    %v1039 = vunpack.c.l.b16 %v194
    %v1040 = vunpack.c.l.b16 %v195
    %v1041 = vunpack.c.l.b16 %v196
    %v1042 = vunpack.c.l.b16 %v197
    %v1043 = vunpack.c.l.b16 %v198
    %v1044 = vunpack.c.l.b16 %v199
    %v1045 = vunpack.c.l.b16 %v200
    %v1046 = vunpack.c.l.b16 %v201
    %v1047 = vunpack.c.l.b16 %v202
    %v1048 = vunpack.c.l.b16 %v203
    %v1049 = vunpack.c.l.b16 %v204
    %v1050 = vunpack.c.l.b16 %v205
    %v1051 = vunpack.c.l.b16 %v206
    %v1052 = vunpack.c.l.b16 %v207
    %v1053 = vunpack.c.l.b16 %v208
    %v1054 = vunpack.c.l.b16 %v209
    %v1055 = vunpack.c.l.b16 %v210
    %v1056 = vunpack.c.l.b16 %v211
    %v1057 = vunpack.c.l.b16 %v212
    %v1058 = vunpack.c.l.b16 %v213
    %v1059 = vunpack.c.l.b16 %v214
    %v1060 = vunpack.c.l.b16 %v215
    %v1061 = vunpack.c.l.b16 %v216
    %v1062 = vunpack.c.l.b16 %v217
    %v1063 = vunpack.c.l.b16 %v218
    %v1064 = vunpack.c.l.b16 %v219
    %v1065 = vunpack.c.l.b16 %v220
    %v1066 = vunpack.c.l.b16 %v221
    %v1067 = vunpack.c.l.b16 %v222
    %v1068 = vunpack.c.l.b16 %v223
    %v1069 = vunpack.c.l.b16 %v224
    %v1070 = vunpack.c.l.b16 %v225
    %v1071 = vunpack.c.l.b16 %v226
    %v1072 = vunpack.c.l.b16 %v227
    %v1073 = vunpack.c.l.b16 %v228
    %v1074 = vunpack.c.l.b16 %v229
    %v1075 = vunpack.c.l.b16 %v230
    %v1076 = vunpack.c.l.b16 %v231
    %v1077 = vunpack.c.l.b16 %v232
    %v1078 = vunpack.c.l.b16 %v233
    %v1079 = vunpack.c.l.b16 %v234
    %v1080 = vunpack.c.l.b16 %v235
    %v1081 = vunpack.c.l.b16 %v236
    %v1082 = vunpack.c.l.b16 %v237
    %v1083 = vunpack.c.l.b16 %v238
    %v1084 = vunpack.c.l.b16 %v239
    %v1085 = vunpack.c.l.b16 %v240
    %v1086 = vunpack.c.l.b16 %v241
    %v1087 = vunpack.c.l.b16 %v242
    %v1088 = vunpack.c.l.b16 %v243
    %v1089 = vunpack.c.l.b16 %v244
    %v1090 = vunpack.c.l.b16 %v245
    %v1091 = vunpack.c.l.b16 %v246
    %v1092 = vunpack.c.l.b16 %v247
    %v1093 = vunpack.c.l.b16 %v248
    %v1094 = vunpack.c.l.b16 %v249
    %v1095 = vunpack.c.l.b16 %v250
    %v1096 = vunpack.c.l.b16 %v251
    %v1097 = vunpack.c.l.b16 %v252
    %v1098 = vunpack.c.l.b16 %v253
    %v1099 = vunpack.c.l.b16 %v254
    %v1100 = vunpack.c.l.b16 %v255
    %v1101 = vunpack.c.l.b16 %v256
    %v1102 = vunpack.c.l.b16 %v257
    %v1103 = vunpack.c.l.b16 %v258
    %v1104 = vunpack.c.l.b16 %v259
    %v1105 = vunpack.c.l.b16 %v260
    %v1106 = vunpack.c.l.b16 %v261
    %v1107 = vunpack.c.l.b16 %v262
    %v1108 = vunpack.c.l.b16 %v263
    %v1109 = vunpack.c.l.b16 %v264
    %v1110 = vunpack.c.l.b16 %v265
    %v1111 = vunpack.c.l.b16 %v266
    %v1112 = vunpack.c.l.b16 %v267
    %v1113 = vunpack.c.l.b16 %v268
    %v1114 = vunpack.c.l.b16 %v269
    %v1115 = vunpack.c.l.b16 %v270
    %v1116 = vunpack.c.l.b16 %v271
    %v1117 = vunpack.c.l.b16 %v272
    %v1118 = vunpack.c.l.b16 %v273
    %v1119 = vunpack.c.l.b16 %v274
    %v1120 = vunpack.c.l.b16 %v275
    %v1121 = vunpack.c.l.b16 %v276
    %v1122 = vunpack.c.l.b16 %v277
    %v1123 = vunpack.c.l.b16 %v278
    %v1124 = vunpack.c.l.b16 %v279
    %v1125 = vunpack.c.l.b16 %v280
    %v1126 = vunpack.c.l.b16 %v281
    %v1127 = vunpack.c.l.b16 %v282
    %v1128 = vunpack.c.l.b16 %v283
    %v1129 = vunpack.c.l.b16 %v284
    %v1130 = vunpack.c.l.b16 %v285
    %v1131 = vunpack.c.l.b16 %v286
    %v1132 = vunpack.c.l.b16 %v287
    %v1133 = vunpack.c.l.b16 %v288
    %v1134 = vunpack.c.l.b16 %v289
    %v1135 = vunpack.c.l.b16 %v290
    %v1136 = vunpack.c.l.b16 %v291
    %v1137 = vunpack.c.l.b16 %v292
    %v1138 = vunpack.c.l.b16 %v293
    %v1139 = vunpack.c.l.b16 %v294
    %v1140 = vunpack.c.l.b16 %v295
    %v1141 = vunpack.c.l.b16 %v296
    %v1142 = vunpack.c.l.b16 %v297
    %v1143 = vunpack.c.l.b16 %v298
    %v1144 = vunpack.c.l.b16 %v299
    %v1145 = vunpack.c.l.b16 %v300
    %v1146 = vunpack.c.l.b16 %v301
    %v1147 = vunpack.c.l.b16 %v302
    %v1148 = vunpack.c.l.b16 %v303
    %v1149 = vunpack.c.l.b16 %v304
    %v1150 = vunpack.c.l.b16 %v305
    %v1151 = vunpack.c.l.b16 %v306
    %v1152 = vunpack.c.l.b16 %v307
    %v1153 = vunpack.c.l.b16 %v308
    %v1154 = vunpack.c.l.b16 %v309
    %v1155 = vunpack.c.l.b16 %v310
    %v1156 = vunpack.c.l.b16 %v311
    %v1157 = vunpack.c.l.b16 %v312
    %v1158 = vunpack.c.l.b16 %v313
    %v1159 = vunpack.c.l.b16 %v314
    %v1160 = vunpack.c.l.b16 %v315
    %v1161 = vunpack.c.l.b16 %v316
    %v1162 = vunpack.c.l.b16 %v317
    %v1163 = vunpack.c.l.b16 %v318
    %v1164 = vunpack.c.l.b16 %v319
    %v1165 = vunpack.c.l.b16 %v320
    %v1166 = vunpack.c.l.b16 %v321
    %v1167 = vunpack.c.l.b16 %v322
    %v1168 = vunpack.c.l.b16 %v323
    %v1169 = vunpack.c.l.b16 %v324
    %v1170 = vunpack.c.l.b16 %v325
    %v1171 = vunpack.c.l.b16 %v326
    %v1172 = vunpack.c.l.b16 %v327
    %v1173 = vunpack.c.l.b16 %v328
    %v1174 = vunpack.c.l.b16 %v329
    %v1175 = vunpack.c.l.b16 %v330
    %v1176 = vunpack.c.l.b16 %v331
    %v1177 = vunpack.c.l.b16 %v332
    %v1178 = vunpack.c.l.b16 %v333
    %v1179 = vunpack.c.l.b16 %v334
    %v1180 = vunpack.c.l.b16 %v335
    %v1181 = vunpack.c.l.b16 %v336
    %v1182 = vunpack.c.l.b16 %v337
    %v1183 = vunpack.c.l.b16 %v338
    %v1184 = vunpack.c.l.b16 %v339
    %v1185 = vunpack.c.l.b16 %v340
    %v1186 = vunpack.c.l.b16 %v341
    %v1187 = vunpack.c.l.b16 %v342
    %v1188 = vunpack.c.l.b16 %v343
    %v1189 = vunpack.c.l.b16 %v344
    %v1190 = vunpack.c.l.b16 %v345
    %v1191 = vunpack.c.l.b16 %v346
    %v1192 = vunpack.c.l.b16 %v347
    %v1193 = vunpack.c.l.b16 %v348
    %v1194 = vunpack.c.l.b16 %v349
    %v1195 = vunpack.c.l.b16 %v350
    %v1196 = vunpack.c.l.b16 %v351
    %v1197 = vunpack.c.l.b16 %v352
    %v1198 = vunpack.c.l.b16 %v353
    %v1199 = vunpack.c.l.b16 %v354
    %v1200 = vunpack.c.l.b16 %v355
    %v1201 = vunpack.c.l.b16 %v356
    %v1202 = vunpack.c.l.b16 %v357
    %v1203 = vunpack.c.l.b16 %v358
    %v1204 = vunpack.c.l.b16 %v359
    %v1205 = vunpack.c.l.b16 %v360
    %v1206 = vunpack.c.l.b16 %v361
    %v1207 = vunpack.c.l.b16 %v362
    %v1208 = vunpack.c.l.b16 %v363
    %v1209 = vunpack.c.l.b16 %v364
    %v1210 = vunpack.c.l.b16 %v365
    %v1211 = vunpack.c.l.b16 %v366
    %v1212 = vunpack.c.l.b16 %v367
    %v1213 = vunpack.c.l.b16 %v368
    %v1214 = vunpack.c.l.b16 %v369
    %v1215 = vunpack.c.l.b16 %v370
    %v1216 = vunpack.c.l.b16 %v371
    %v1217 = vunpack.c.l.b16 %v372
    %v1218 = vunpack.c.l.b16 %v373
    %v1219 = vunpack.c.l.b16 %v374
    %v1220 = vunpack.c.l.b16 %v375
    %v1221 = vunpack.c.l.b16 %v376
    %v1222 = vunpack.c.l.b16 %v377
    %v1223 = vunpack.c.l.b16 %v378
    %v1224 = vunpack.c.l.b16 %v379
    %v1225 = vunpack.c.l.b16 %v380
    %v1226 = vunpack.c.l.b16 %v381
    %v1227 = vunpack.c.l.b16 %v382
    %v1228 = vunpack.c.l.b16 %v383
    %v1229 = vunpack.c.l.b16 %v384
    %v1230 = vunpack.c.l.b16 %v385
    %v1231 = vunpack.c.l.b16 %v386
    %v1232 = vunpack.c.l.b16 %v387
    %v1233 = vunpack.c.l.b16 %v388
    %v1234 = vunpack.c.l.b16 %v389
    %v1235 = vunpack.c.l.b16 %v390
    %v1236 = vunpack.c.l.b16 %v391
    %v1237 = vunpack.c.l.b16 %v392
    %v1238 = vunpack.c.l.b16 %v393
    %v1239 = vunpack.c.l.b16 %v394
    %v1240 = vunpack.c.l.b16 %v395
    %v1241 = vunpack.c.l.b16 %v396
    %v1242 = vunpack.c.l.b16 %v397
    %v1243 = vunpack.c.l.b16 %v398
    %v1244 = vunpack.c.l.b16 %v399
    %v1245 = vunpack.c.l.b16 %v400
    %v1246 = vunpack.c.l.b16 %v401
    %v1247 = vunpack.c.l.b16 %v402
    %v1248 = vunpack.c.l.b16 %v403
    %v1249 = vunpack.c.l.b16 %v404
    %v1250 = vunpack.c.l.b16 %v405
    %v1251 = vunpack.c.l.b16 %v406
    %v1252 = vunpack.c.l.b16 %v407
    %v1253 = vunpack.c.l.b16 %v408
    %v1254 = vunpack.c.l.b16 %v409
    %v1255 = vunpack.c.l.b16 %v410
    %v1256 = vunpack.c.l.b16 %v411
    %v1257 = vunpack.c.l.b16 %v412
    %v1258 = vunpack.c.l.b16 %v413
    %v1259 = vunpack.c.l.b16 %v414
    %v1260 = vunpack.c.l.b16 %v415
    %v1261 = vunpack.c.l.b16 %v416
    %v1262 = vunpack.c.l.b16 %v417
    %v1263 = vpack.c.b16 %v872, %v871
    %v1264 = vpack.c.b16 %v874, %v873
    %v1265 = vpack.c.b16 %v876, %v875
    %v1266 = vpack.c.b16 %v878, %v877
    %v1267 = vpack.c.b16 %v880, %v879
    %v1268 = vpack.c.b16 %v882, %v881
    %v1269 = vpack.c.b16 %v884, %v883
    %v1270 = vpack.c.b16 %v886, %v885
    %v1271 = vpack.c.b16 %v888, %v887
    %v1272 = vpack.c.b16 %v890, %v889
    %v1273 = vpack.c.b16 %v892, %v891
    %v1274 = vpack.c.b16 %v894, %v893
    %v1275 = vpack.c.b16 %v896, %v895
    %v1276 = vpack.c.b16 %v898, %v897
    %v1277 = vpack.c.b16 %v900, %v899
    %v1278 = vpack.c.b16 %v902, %v901
    %v1279 = vpack.c.b16 %v904, %v903
    %v1280 = vpack.c.b16 %v906, %v905
    %v1281 = vpack.c.b16 %v908, %v907
    %v1282 = vpack.c.b16 %v910, %v909
    %v1283 = vpack.c.b16 %v912, %v911
    %v1284 = vpack.c.b16 %v914, %v913
    %v1285 = vpack.c.b16 %v916, %v915
    %v1286 = vpack.c.b16 %v918, %v917
    %v1287 = vpack.c.b16 %v920, %v919
    %v1288 = vpack.c.b16 %v922, %v921
    %v1289 = vpack.c.b16 %v924, %v923
    %v1290 = vpack.c.b16 %v926, %v925
    %v1291 = vpack.c.b16 %v928, %v927
    %v1292 = vpack.c.b16 %v930, %v929
    %v1293 = vpack.c.b16 %v932, %v931
    %v1294 = vpack.c.b16 %v934, %v933
    %v1295 = vpack.c.b16 %v936, %v935
    %v1296 = vpack.c.b16 %v938, %v937
    %v1297 = vpack.c.b16 %v940, %v939
    %v1298 = vpack.c.b16 %v942, %v941
    %v1299 = vpack.c.b16 %v944, %v943
    %v1300 = vpack.c.b16 %v946, %v945
    %v1301 = vpack.c.b16 %v948, %v947
    %v1302 = vpack.c.b16 %v950, %v949
    %v1303 = vpack.c.b16 %v952, %v951
    %v1304 = vpack.c.b16 %v954, %v953
    %v1305 = vpack.c.b16 %v956, %v955
    %v1306 = vpack.c.b16 %v958, %v957
    %v1307 = vpack.c.b16 %v960, %v959
    %v1308 = vpack.c.b16 %v962, %v961
    %v1309 = vpack.c.b16 %v964, %v963
    %v1310 = vpack.c.b16 %v966, %v965
    %v1311 = vpack.c.b16 %v968, %v967
    %v1312 = vpack.c.b16 %v970, %v969
    %v1313 = vpack.c.b16 %v972, %v971
    %v1314 = vpack.c.b16 %v974, %v973
    %v1315 = vpack.c.b16 %v976, %v975
    %v1316 = vpack.c.b16 %v978, %v977
    %v1317 = vpack.c.b16 %v980, %v979
    %v1318 = vpack.c.b16 %v982, %v981
    %v1319 = vpack.c.b16 %v984, %v983
    %v1320 = vpack.c.b16 %v986, %v985
    %v1321 = vpack.c.b16 %v988, %v987
    %v1322 = vpack.c.b16 %v990, %v989
    %v1323 = vpack.c.b16 %v992, %v991
    %v1324 = vpack.c.b16 %v994, %v993
    %v1325 = vpack.c.b16 %v996, %v995
    %v1326 = vpack.c.b16 %v998, %v997
    %v1327 = vpack.c.b16 %v1000, %v999
    %v1328 = vpack.c.b16 %v1002, %v1001
    %v1329 = vpack.c.b16 %v1004, %v1003
    %v1330 = vpack.c.b16 %v1006, %v1005
    %v1331 = vpack.c.b16 %v1008, %v1007
    %v1332 = vpack.c.b16 %v1010, %v1009
    %v1333 = vpack.c.b16 %v1012, %v1011
    %v1334 = vpack.c.b16 %v1014, %v1013
    %v1335 = vpack.c.b16 %v1016, %v1015
    %v1336 = vpack.c.b16 %v1018, %v1017
    %v1337 = vpack.c.b16 %v1020, %v1019
    %v1338 = vpack.c.b16 %v1022, %v1021
    %v1339 = vpack.c.b16 %v1024, %v1023
    %v1340 = vpack.c.b16 %v1026, %v1025
    %v1341 = vpack.c.b16 %v1028, %v1027
    %v1342 = vpack.c.b16 %v1030, %v1029
    %v1343 = vpack.c.b16 %v1032, %v1031
    %v1344 = vpack.c.b16 %v1034, %v1033
    %v1345 = vpack.c.b16 %v1036, %v1035
    %v1346 = vpack.c.b16 %v1038, %v1037
    %v1347 = vpack.c.b16 %v1040, %v1039
    %v1348 = vpack.c.b16 %v1042, %v1041
    %v1349 = vpack.c.b16 %v1044, %v1043
    %v1350 = vpack.c.b16 %v1046, %v1045
    %v1351 = vpack.c.b16 %v1048, %v1047
    %v1352 = vpack.c.b16 %v1050, %v1049
    %v1353 = vpack.c.b16 %v1052, %v1051
    %v1354 = vpack.c.b16 %v1054, %v1053
    %v1355 = vpack.c.b16 %v1056, %v1055
    %v1356 = vpack.c.b16 %v1058, %v1057
    %v1357 = vpack.c.b16 %v1060, %v1059
    %v1358 = vpack.c.b16 %v1062, %v1061
    %v1359 = vpack.c.b16 %v1064, %v1063
    %v1360 = vpack.c.b16 %v1066, %v1065
    %v1361 = vpack.c.b16 %v1068, %v1067
    %v1362 = vpack.c.b16 %v1070, %v1069
    %v1363 = vpack.c.b16 %v1072, %v1071
    %v1364 = vpack.c.b16 %v1074, %v1073
    %v1365 = vpack.c.b16 %v1076, %v1075
    %v1366 = vpack.c.b16 %v1078, %v1077
    %v1367 = vpack.c.b16 %v1080, %v1079
    %v1368 = vpack.c.b16 %v1082, %v1081
    %v1369 = vpack.c.b16 %v1084, %v1083
    %v1370 = vpack.c.b16 %v1086, %v1085
    %v1371 = vpack.c.b16 %v1088, %v1087
    %v1372 = vpack.c.b16 %v1090, %v1089
    %v1373 = vpack.c.b16 %v1092, %v1091
    %v1374 = vpack.c.b16 %v1094, %v1093
    %v1375 = vpack.c.b16 %v1096, %v1095
    %v1376 = vpack.c.b16 %v1098, %v1097
    %v1377 = vpack.c.b16 %v1100, %v1099
    %v1378 = vpack.c.b16 %v1102, %v1101
    %v1379 = vpack.c.b16 %v1104, %v1103
    %v1380 = vpack.c.b16 %v1106, %v1105
    %v1381 = vpack.c.b16 %v1108, %v1107
    %v1382 = vpack.c.b16 %v1110, %v1109
    %v1383 = vpack.c.b16 %v1112, %v1111
    %v1384 = vpack.c.b16 %v1114, %v1113
    %v1385 = vpack.c.b16 %v1116, %v1115
    %v1386 = vpack.c.b16 %v1118, %v1117
    %v1387 = vpack.c.b16 %v1120, %v1119
    %v1388 = vpack.c.b16 %v1122, %v1121
    %v1389 = vpack.c.b16 %v1124, %v1123
    %v1390 = vpack.c.b16 %v1126, %v1125
    %v1391 = vpack.c.b16 %v1128, %v1127
    %v1392 = vpack.c.b16 %v1130, %v1129
    %v1393 = vpack.c.b16 %v1132, %v1131
    %v1394 = vpack.c.b16 %v1134, %v1133
    %v1395 = vpack.c.b16 %v1136, %v1135
    %v1396 = vpack.c.b16 %v1138, %v1137
    %v1397 = vpack.c.b16 %v1140, %v1139
    %v1398 = vpack.c.b16 %v1142, %v1141
    %v1399 = vpack.c.b16 %v1144, %v1143
    %v1400 = vpack.c.b16 %v1146, %v1145
    %v1401 = vpack.c.b16 %v1148, %v1147
    %v1402 = vpack.c.b16 %v1150, %v1149
    %v1403 = vpack.c.b16 %v1152, %v1151
    %v1404 = vpack.c.b16 %v1154, %v1153
    %v1405 = vpack.c.b16 %v1156, %v1155
    %v1406 = vpack.c.b16 %v1158, %v1157
    %v1407 = vpack.c.b16 %v1160, %v1159
    %v1408 = vpack.c.b16 %v1162, %v1161
    %v1409 = vpack.c.b16 %v1164, %v1163
    %v1410 = vpack.c.b16 %v1166, %v1165
    %v1411 = vpack.c.b16 %v1168, %v1167
    %v1412 = vpack.c.b16 %v1170, %v1169
    %v1413 = vpack.c.b16 %v1172, %v1171
    %v1414 = vpack.c.b16 %v1174, %v1173
    %v1415 = vpack.c.b16 %v1176, %v1175
    %v1416 = vpack.c.b16 %v1178, %v1177
    %v1417 = vpack.c.b16 %v1180, %v1179
    %v1418 = vpack.c.b16 %v1182, %v1181
    %v1419 = vpack.c.b16 %v1184, %v1183
    %v1420 = vpack.c.b16 %v1186, %v1185
    %v1421 = vpack.c.b16 %v1188, %v1187
    %v1422 = vpack.c.b16 %v1190, %v1189
    %v1423 = vpack.c.b16 %v1192, %v1191
    %v1424 = vpack.c.b16 %v1194, %v1193
    %v1425 = vpack.c.b16 %v1196, %v1195
    %v1426 = vpack.c.b16 %v1198, %v1197
    %v1427 = vpack.c.b16 %v1200, %v1199
    %v1428 = vpack.c.b16 %v1202, %v1201
    %v1429 = vpack.c.b16 %v1204, %v1203
    %v1430 = vpack.c.b16 %v1206, %v1205
    %v1431 = vpack.c.b16 %v1208, %v1207
    %v1432 = vpack.c.b16 %v1210, %v1209
    %v1433 = vpack.c.b16 %v1212, %v1211
    %v1434 = vpack.c.b16 %v1214, %v1213
    %v1435 = vpack.c.b16 %v1216, %v1215
    %v1436 = vpack.c.b16 %v1218, %v1217
    %v1437 = vpack.c.b16 %v1220, %v1219
    %v1438 = vpack.c.b16 %v1222, %v1221
    %v1439 = vpack.c.b16 %v1224, %v1223
    %v1440 = vpack.c.b16 %v1226, %v1225
    %v1441 = vpack.c.b16 %v1228, %v1227
    %v1442 = vpack.c.b16 %v1230, %v1229
    %v1443 = vpack.c.b16 %v1232, %v1231
    %v1444 = vpack.c.b16 %v1234, %v1233
    %v1445 = vpack.c.b16 %v1236, %v1235
    %v1446 = vpack.c.b16 %v1238, %v1237
    %v1447 = vpack.c.b16 %v1240, %v1239
    %v1448 = vpack.c.b16 %v1242, %v1241
    %v1449 = vpack.c.b16 %v1244, %v1243
    %v1450 = vpack.c.b16 %v1246, %v1245
    %v1451 = vpack.c.b16 %v1248, %v1247
    %v1452 = vpack.c.b16 %v1250, %v1249
    %v1453 = vpack.c.b16 %v1252, %v1251
    %v1454 = vpack.c.b16 %v1254, %v1253
    %v1455 = vpack.c.b16 %v1256, %v1255
    %v1456 = vpack.c.b16 %v1258, %v1257
    %v1457 = vpack.c.b16 %v1260, %v1259
    %v1458 = vpack.c.b16 %v1262, %v1261
    %vm1655 = vcmask 523264
    %v1656 = vsel %vm1655, %v454, 0
    %1658 = vmatpush.bf16.msra.mxu0 %v1270
    %1659 = vmatpush.bf16.msra.mxu0 %v1269
    %1660 = vmatpush.bf16.msra.mxu0 %v1268
    %1661 = vmatpush.bf16.msra.mxu0 %v1267
    %1662 = vmatpush.bf16.msra.mxu0 %v1266
    %1663 = vmatpush.bf16.msra.mxu0 %v1265
    %1664 = vmatpush.bf16.msra.mxu0 %v1264
    %1665 = vmatpush.bf16.msra.mxu0 %v1263
    %1666 = vmatmul.bf16.gmra.mxu0 %v424
    %v1667 = vpop.f32.mrf.mxu0
    %v1668 = vadd.f32 %v420, %v1667
    %v1669 = vpop.f32.mrf.mxu0
    %1670 = vdwg.mxu0
    %1671 = vmatpush.bf16.msra.mxu0 %v1278
    %1672 = vmatpush.bf16.msra.mxu0 %v1277
    %1673 = vmatpush.bf16.msra.mxu0 %v1276
    %1674 = vmatpush.bf16.msra.mxu0 %v1275
    %1675 = vmatpush.bf16.msra.mxu0 %v1274
    %1676 = vmatpush.bf16.msra.mxu0 %v1273
    %1677 = vmatpush.bf16.msra.mxu0 %v1272
    %1678 = vmatpush.bf16.msra.mxu0 %v1271
    %1679 = vmatmul.bf16.gmra.mxu0 %v425
    %v1680 = vpop.f32.mrf.mxu0
    %v1681 = vadd.f32 %v1668, %v1680
    %v1682 = vpop.f32.mrf.mxu0
    %1683 = vdwg.mxu0
    %1684 = vmatpush.bf16.msra.mxu0 %v1286
    %1685 = vmatpush.bf16.msra.mxu0 %v1285
    %1686 = vmatpush.bf16.msra.mxu0 %v1284
    %1687 = vmatpush.bf16.msra.mxu0 %v1283
    %1688 = vmatpush.bf16.msra.mxu0 %v1282
    %1689 = vmatpush.bf16.msra.mxu0 %v1281
    %1690 = vmatpush.bf16.msra.mxu0 %v1280
    %1691 = vmatpush.bf16.msra.mxu0 %v1279
    %1692 = vmatmul.bf16.gmra.mxu0 %v426
    %v1693 = vpop.f32.mrf.mxu0
    %v1694 = vadd.f32 %v1681, %v1693
    %v1695 = vpop.f32.mrf.mxu0
    %1696 = vdwg.mxu0
    %1697 = vmatpush.bf16.msra.mxu0 %v1294
    %1698 = vmatpush.bf16.msra.mxu0 %v1293
    %1699 = vmatpush.bf16.msra.mxu0 %v1292
    %1700 = vmatpush.bf16.msra.mxu0 %v1291
    %1701 = vmatpush.bf16.msra.mxu0 %v1290
    %1702 = vmatpush.bf16.msra.mxu0 %v1289
    %1703 = vmatpush.bf16.msra.mxu0 %v1288
    %1704 = vmatpush.bf16.msra.mxu0 %v1287
    %1705 = vmatmul.bf16.gmra.mxu0 %v427
    %v1706 = vpop.f32.mrf.mxu0
    %v1707 = vadd.f32 %v1694, %v1706
    %v1708 = vpop.f32.mrf.mxu0
    %1709 = vdwg.mxu0
    %1710 = vmatpush.bf16.msra.mxu0 %v1302
    %1711 = vmatpush.bf16.msra.mxu0 %v1301
    %1712 = vmatpush.bf16.msra.mxu0 %v1300
    %1713 = vmatpush.bf16.msra.mxu0 %v1299
    %1714 = vmatpush.bf16.msra.mxu0 %v1298
    %1715 = vmatpush.bf16.msra.mxu0 %v1297
    %1716 = vmatpush.bf16.msra.mxu0 %v1296
    %1717 = vmatpush.bf16.msra.mxu0 %v1295
    %1718 = vmatmul.bf16.gmra.mxu0 %v428
    %v1719 = vpop.f32.mrf.mxu0
    %v1720 = vadd.f32 %v1707, %v1719
    %v1721 = vpop.f32.mrf.mxu0
    %1722 = vdwg.mxu0
    %1723 = vmatpush.bf16.msra.mxu0 %v1310
    %1724 = vmatpush.bf16.msra.mxu0 %v1309
    %1725 = vmatpush.bf16.msra.mxu0 %v1308
    %1726 = vmatpush.bf16.msra.mxu0 %v1307
    %1727 = vmatpush.bf16.msra.mxu0 %v1306
    %1728 = vmatpush.bf16.msra.mxu0 %v1305
    %1729 = vmatpush.bf16.msra.mxu0 %v1304
    %1730 = vmatpush.bf16.msra.mxu0 %v1303
    %1731 = vmatmul.bf16.gmra.mxu0 %v429
    %v1732 = vpop.f32.mrf.mxu0
    %v1733 = vadd.f32 %v1720, %v1732
    %v1734 = vpop.f32.mrf.mxu0
    %1735 = vdwg.mxu0
    %1736 = vmatpush.bf16.msra.mxu0 %v1318
    %1737 = vmatpush.bf16.msra.mxu0 %v1317
    %1738 = vmatpush.bf16.msra.mxu0 %v1316
    %1739 = vmatpush.bf16.msra.mxu0 %v1315
    %1740 = vmatpush.bf16.msra.mxu0 %v1314
    %1741 = vmatpush.bf16.msra.mxu0 %v1313
    %1742 = vmatpush.bf16.msra.mxu0 %v1312
    %1743 = vmatpush.bf16.msra.mxu0 %v1311
    %1744 = vmatmul.bf16.gmra.mxu0 %v430
    %v1745 = vpop.f32.mrf.mxu0
    %v1746 = vadd.f32 %v1733, %v1745
    %v1747 = vpop.f32.mrf.mxu0
    %1748 = vdwg.mxu0
    %1749 = vmatpush.bf16.msra.mxu0 %v1326
    %1750 = vmatpush.bf16.msra.mxu0 %v1325
    %1751 = vmatpush.bf16.msra.mxu0 %v1324
    %1752 = vmatpush.bf16.msra.mxu0 %v1323
    %1753 = vmatpush.bf16.msra.mxu0 %v1322
    %1754 = vmatpush.bf16.msra.mxu0 %v1321
    %1755 = vmatpush.bf16.msra.mxu0 %v1320
    %1756 = vmatpush.bf16.msra.mxu0 %v1319
    %1757 = vmatmul.bf16.gmra.mxu0 %v431
    %v1758 = vpop.f32.mrf.mxu0
    %v1759 = vadd.f32 %v1746, %v1758
    %v1760 = vpop.f32.mrf.mxu0
    %1761 = vdwg.mxu0
    %1762 = vmatpush.bf16.msra.mxu0 %v1334
    %1763 = vmatpush.bf16.msra.mxu0 %v1333
    %1764 = vmatpush.bf16.msra.mxu0 %v1332
    %1765 = vmatpush.bf16.msra.mxu0 %v1331
    %1766 = vmatpush.bf16.msra.mxu0 %v1330
    %1767 = vmatpush.bf16.msra.mxu0 %v1329
    %1768 = vmatpush.bf16.msra.mxu0 %v1328
    %1769 = vmatpush.bf16.msra.mxu0 %v1327
    %1770 = vmatmul.bf16.gmra.mxu0 %v434
    %v1771 = vpop.f32.mrf.mxu0
    %v1772 = vadd.f32 %v1759, %v1771
    %v1773 = vpop.f32.mrf.mxu0
    %1774 = vdwg.mxu0
    %1775 = vmatpush.bf16.msra.mxu0 %v1342
    %1776 = vmatpush.bf16.msra.mxu0 %v1341
    %1777 = vmatpush.bf16.msra.mxu0 %v1340
    %1778 = vmatpush.bf16.msra.mxu0 %v1339
    %1779 = vmatpush.bf16.msra.mxu0 %v1338
    %1780 = vmatpush.bf16.msra.mxu0 %v1337
    %1781 = vmatpush.bf16.msra.mxu0 %v1336
    %1782 = vmatpush.bf16.msra.mxu0 %v1335
    %1783 = vmatmul.bf16.gmra.mxu0 %v435
    %v1784 = vpop.f32.mrf.mxu0
    %v1785 = vadd.f32 %v1772, %v1784
    %v1786 = vpop.f32.mrf.mxu0
    %1787 = vdwg.mxu0
    %1788 = vmatpush.bf16.msra.mxu0 %v1350
    %1789 = vmatpush.bf16.msra.mxu0 %v1349
    %1790 = vmatpush.bf16.msra.mxu0 %v1348
    %1791 = vmatpush.bf16.msra.mxu0 %v1347
    %1792 = vmatpush.bf16.msra.mxu0 %v1346
    %1793 = vmatpush.bf16.msra.mxu0 %v1345
    %1794 = vmatpush.bf16.msra.mxu0 %v1344
    %1795 = vmatpush.bf16.msra.mxu0 %v1343
    %1796 = vmatmul.bf16.gmra.mxu0 %v436
    %v1797 = vpop.f32.mrf.mxu0
    %v1798 = vadd.f32 %v1785, %v1797
    %v1799 = vpop.f32.mrf.mxu0
    %1800 = vdwg.mxu0
    %1801 = vmatpush.bf16.msra.mxu0 %v1358
    %1802 = vmatpush.bf16.msra.mxu0 %v1357
    %1803 = vmatpush.bf16.msra.mxu0 %v1356
    %1804 = vmatpush.bf16.msra.mxu0 %v1355
    %1805 = vmatpush.bf16.msra.mxu0 %v1354
    %1806 = vmatpush.bf16.msra.mxu0 %v1353
    %1807 = vmatpush.bf16.msra.mxu0 %v1352
    %1808 = vmatpush.bf16.msra.mxu0 %v1351
    %1809 = vmatmul.bf16.gmra.mxu0 %v437
    %v1810 = vpop.f32.mrf.mxu0
    %v1811 = vadd.f32 %v1798, %v1810
    %v1812 = vpop.f32.mrf.mxu0
    %1813 = vdwg.mxu0
    %1814 = vmatpush.bf16.msra.mxu0 %v1366
    %1815 = vmatpush.bf16.msra.mxu0 %v1365
    %1816 = vmatpush.bf16.msra.mxu0 %v1364
    %1817 = vmatpush.bf16.msra.mxu0 %v1363
    %1818 = vmatpush.bf16.msra.mxu0 %v1362
    %1819 = vmatpush.bf16.msra.mxu0 %v1361
    %1820 = vmatpush.bf16.msra.mxu0 %v1360
    %1821 = vmatpush.bf16.msra.mxu0 %v1359
    %1822 = vmatmul.bf16.gmra.mxu0 %v438
    %v1823 = vpop.f32.mrf.mxu0
    %v1824 = vadd.f32 %v1811, %v1823
    %v1825 = vpop.f32.mrf.mxu0
    %1826 = vdwg.mxu0
    %1827 = vmatpush.bf16.msra.mxu0 %v1374
    %1828 = vmatpush.bf16.msra.mxu0 %v1373
    %1829 = vmatpush.bf16.msra.mxu0 %v1372
    %1830 = vmatpush.bf16.msra.mxu0 %v1371
    %1831 = vmatpush.bf16.msra.mxu0 %v1370
    %1832 = vmatpush.bf16.msra.mxu0 %v1369
    %1833 = vmatpush.bf16.msra.mxu0 %v1368
    %1834 = vmatpush.bf16.msra.mxu0 %v1367
    %1835 = vmatmul.bf16.gmra.mxu0 %v439
    %v1836 = vpop.f32.mrf.mxu0
    %v1837 = vadd.f32 %v1824, %v1836
    %v1838 = vpop.f32.mrf.mxu0
    %1839 = vdwg.mxu0
    %1840 = vmatpush.bf16.msra.mxu0 %v1382
    %1841 = vmatpush.bf16.msra.mxu0 %v1381
    %1842 = vmatpush.bf16.msra.mxu0 %v1380
    %1843 = vmatpush.bf16.msra.mxu0 %v1379
    %1844 = vmatpush.bf16.msra.mxu0 %v1378
    %1845 = vmatpush.bf16.msra.mxu0 %v1377
    %1846 = vmatpush.bf16.msra.mxu0 %v1376
    %1847 = vmatpush.bf16.msra.mxu0 %v1375
    %1848 = vmatmul.bf16.gmra.mxu0 %v440
    %v1849 = vpop.f32.mrf.mxu0
    %v1850 = vadd.f32 %v1837, %v1849
    %v1851 = vpop.f32.mrf.mxu0
    %1852 = vdwg.mxu0
    %1853 = vmatpush.bf16.msra.mxu0 %v1390
    %1854 = vmatpush.bf16.msra.mxu0 %v1389
    %1855 = vmatpush.bf16.msra.mxu0 %v1388
    %1856 = vmatpush.bf16.msra.mxu0 %v1387
    %1857 = vmatpush.bf16.msra.mxu0 %v1386
    %1858 = vmatpush.bf16.msra.mxu0 %v1385
    %1859 = vmatpush.bf16.msra.mxu0 %v1384
    %1860 = vmatpush.bf16.msra.mxu0 %v1383
    %1861 = vmatmul.bf16.gmra.mxu0 %v441
    %v1862 = vpop.f32.mrf.mxu0
    %v1863 = vadd.f32 %v1850, %v1862
    %v1864 = vpop.f32.mrf.mxu0
    %1865 = vdwg.mxu0
    %1866 = vmatpush.bf16.msra.mxu0 %v1398
    %1867 = vmatpush.bf16.msra.mxu0 %v1397
    %1868 = vmatpush.bf16.msra.mxu0 %v1396
    %1869 = vmatpush.bf16.msra.mxu0 %v1395
    %1870 = vmatpush.bf16.msra.mxu0 %v1394
    %1871 = vmatpush.bf16.msra.mxu0 %v1393
    %1872 = vmatpush.bf16.msra.mxu0 %v1392
    %1873 = vmatpush.bf16.msra.mxu0 %v1391
    %1874 = vmatmul.bf16.gmra.mxu0 %v444
    %v1875 = vpop.f32.mrf.mxu0
    %v1876 = vadd.f32 %v1863, %v1875
    %v1877 = vpop.f32.mrf.mxu0
    %1878 = vdwg.mxu0
    %1879 = vmatpush.bf16.msra.mxu0 %v1406
    %1880 = vmatpush.bf16.msra.mxu0 %v1405
    %1881 = vmatpush.bf16.msra.mxu0 %v1404
    %1882 = vmatpush.bf16.msra.mxu0 %v1403
    %1883 = vmatpush.bf16.msra.mxu0 %v1402
    %1884 = vmatpush.bf16.msra.mxu0 %v1401
    %1885 = vmatpush.bf16.msra.mxu0 %v1400
    %1886 = vmatpush.bf16.msra.mxu0 %v1399
    %1887 = vmatmul.bf16.gmra.mxu0 %v445
    %v1888 = vpop.f32.mrf.mxu0
    %v1889 = vadd.f32 %v1876, %v1888
    %v1890 = vpop.f32.mrf.mxu0
    %1891 = vdwg.mxu0
    %1892 = vmatpush.bf16.msra.mxu0 %v1414
    %1893 = vmatpush.bf16.msra.mxu0 %v1413
    %1894 = vmatpush.bf16.msra.mxu0 %v1412
    %1895 = vmatpush.bf16.msra.mxu0 %v1411
    %1896 = vmatpush.bf16.msra.mxu0 %v1410
    %1897 = vmatpush.bf16.msra.mxu0 %v1409
    %1898 = vmatpush.bf16.msra.mxu0 %v1408
    %1899 = vmatpush.bf16.msra.mxu0 %v1407
    %1900 = vmatmul.bf16.gmra.mxu0 %v446
    %v1901 = vpop.f32.mrf.mxu0
    %v1902 = vadd.f32 %v1889, %v1901
    %v1903 = vpop.f32.mrf.mxu0
    %1904 = vdwg.mxu0
    %1905 = vmatpush.bf16.msra.mxu0 %v1422
    %1906 = vmatpush.bf16.msra.mxu0 %v1421
    %1907 = vmatpush.bf16.msra.mxu0 %v1420
    %1908 = vmatpush.bf16.msra.mxu0 %v1419
    %1909 = vmatpush.bf16.msra.mxu0 %v1418
    %1910 = vmatpush.bf16.msra.mxu0 %v1417
    %1911 = vmatpush.bf16.msra.mxu0 %v1416
    %1912 = vmatpush.bf16.msra.mxu0 %v1415
    %1913 = vmatmul.bf16.gmra.mxu0 %v447
    %v1914 = vpop.f32.mrf.mxu0
    %v1915 = vadd.f32 %v1902, %v1914
    %v1916 = vpop.f32.mrf.mxu0
    %1917 = vdwg.mxu0
    %1918 = vmatpush.bf16.msra.mxu0 %v1430
    %1919 = vmatpush.bf16.msra.mxu0 %v1429
    %1920 = vmatpush.bf16.msra.mxu0 %v1428
    %1921 = vmatpush.bf16.msra.mxu0 %v1427
    %1922 = vmatpush.bf16.msra.mxu0 %v1426
    %1923 = vmatpush.bf16.msra.mxu0 %v1425
    %1924 = vmatpush.bf16.msra.mxu0 %v1424
    %1925 = vmatpush.bf16.msra.mxu0 %v1423
    %1926 = vmatmul.bf16.gmra.mxu0 %v448
    %v1927 = vpop.f32.mrf.mxu0
    %v1928 = vadd.f32 %v1915, %v1927
    %v1929 = vpop.f32.mrf.mxu0
    %1930 = vdwg.mxu0
    %1931 = vmatpush.bf16.msra.mxu0 %v1438
    %1932 = vmatpush.bf16.msra.mxu0 %v1437
    %1933 = vmatpush.bf16.msra.mxu0 %v1436
    %1934 = vmatpush.bf16.msra.mxu0 %v1435
    %1935 = vmatpush.bf16.msra.mxu0 %v1434
    %1936 = vmatpush.bf16.msra.mxu0 %v1433
    %1937 = vmatpush.bf16.msra.mxu0 %v1432
    %1938 = vmatpush.bf16.msra.mxu0 %v1431
    %1939 = vmatmul.bf16.gmra.mxu0 %v449
    %v1940 = vpop.f32.mrf.mxu0
    %v1941 = vadd.f32 %v1928, %v1940
    %v1942 = vpop.f32.mrf.mxu0
    %1943 = vdwg.mxu0
    %1944 = vmatpush.bf16.msra.mxu0 %v1446
    %1945 = vmatpush.bf16.msra.mxu0 %v1445
    %1946 = vmatpush.bf16.msra.mxu0 %v1444
    %1947 = vmatpush.bf16.msra.mxu0 %v1443
    %1948 = vmatpush.bf16.msra.mxu0 %v1442
    %1949 = vmatpush.bf16.msra.mxu0 %v1441
    %1950 = vmatpush.bf16.msra.mxu0 %v1440
    %1951 = vmatpush.bf16.msra.mxu0 %v1439
    %1952 = vmatmul.bf16.gmra.mxu0 %v450
    %v1953 = vpop.f32.mrf.mxu0
    %v1954 = vadd.f32 %v1941, %v1953
    %v1955 = vpop.f32.mrf.mxu0
    %1956 = vdwg.mxu0
    %1957 = vmatpush.bf16.msra.mxu0 %v1454
    %1958 = vmatpush.bf16.msra.mxu0 %v1453
    %1959 = vmatpush.bf16.msra.mxu0 %v1452
    %1960 = vmatpush.bf16.msra.mxu0 %v1451
    %1961 = vmatpush.bf16.msra.mxu0 %v1450
    %1962 = vmatpush.bf16.msra.mxu0 %v1449
    %1963 = vmatpush.bf16.msra.mxu0 %v1448
    %1964 = vmatpush.bf16.msra.mxu0 %v1447
    %1965 = vmatmul.bf16.gmra.mxu0 %v451
    %v1966 = vpop.f32.mrf.mxu0
    %v1967 = vadd.f32 %v1954, %v1966
    %v1968 = vpop.f32.mrf.mxu0
    %1969 = vdwg.mxu0
    %1970 = vmatpush.bf16.msra.mxu0 0
    %1971 = vmatpush.bf16.msra.mxu0 0
    %1972 = vmatpush.bf16.msra.mxu0 0
    %1973 = vmatpush.bf16.msra.mxu0 0
    %1974 = vmatpush.bf16.msra.mxu0 %v1458
    %1975 = vmatpush.bf16.msra.mxu0 %v1457
    %1976 = vmatpush.bf16.msra.mxu0 %v1456
    %1977 = vmatpush.bf16.msra.mxu0 %v1455
    %1978 = vmatmul.bf16.gmra.mxu0 %v1656
    %v1979 = vpop.f32.mrf.mxu0
    %v1980 = vadd.f32 %v1967, %v1979
    %v1981 = vpop.f32.mrf.mxu0
    %1982 = vdwg.mxu0
    %v1983 = vld [vmem:[%s3] sm:$0xff]
    %v1984 = vld [vmem:[%s3 + $0x8] sm:$0xff]
    %v1985 = vld [vmem:[%s3 + $0x10] sm:$0xff]
    %v1986 = vld [vmem:[%s3 + $0x18] sm:$0xff]
    %v1987 = vld [vmem:[%s3 + $0x20] sm:$0xff]
    %v1988 = vld [vmem:[%s3 + $0x28] sm:$0xff]
    %v1989 = vld [vmem:[%s3 + $0x30] sm:$0xff]
    %v1990 = vld [vmem:[%s3 + $0x38] sm:$0xff]
    %v1991 = vld [vmem:[%s3 + $0x40] sm:$0xff]
    %v1992 = vld [vmem:[%s3 + $0x48] sm:$0xff]
    %v1993 = vld [vmem:[%s3 + $0x50] sm:$0xff]
    %v1994 = vld [vmem:[%s3 + $0x58] sm:$0xff]
    %v1995 = vld [vmem:[%s3 + $0x60] sm:$0xff]
    %v1996 = vld [vmem:[%s3 + $0x68] sm:$0xff]
    %v1997 = vld [vmem:[%s3 + $0x70] sm:$0xff]
    %v1998 = vld [vmem:[%s3 + $0x78] sm:$0xff]
    %v1999 = vld [vmem:[%s4] sm:$0x1]
    %v2001 = vperm.slane %v1999, 0
    %2003 = vmatpush.msra.mxu0 %v1998
    %2004 = vmatpush.msra.mxu0 %v1997
    %2005 = vmatpush.msra.mxu0 %v1996
    %2006 = vmatpush.msra.mxu0 %v1995
    %2007 = vmatpush.msra.mxu0 %v1994
    %2008 = vmatpush.msra.mxu0 %v1993
    %2009 = vmatpush.msra.mxu0 %v1992
    %2010 = vmatpush.msra.mxu0 %v1991
    %2011 = vmatpush.msra.mxu0 %v1990
    %2012 = vmatpush.msra.mxu0 %v1989
    %2013 = vmatpush.msra.mxu0 %v1988
    %2014 = vmatpush.msra.mxu0 %v1987
    %2015 = vmatpush.msra.mxu0 %v1986
    %2016 = vmatpush.msra.mxu0 %v1985
    %2017 = vmatpush.msra.mxu0 %v1984
    %2018 = vmatpush.msra.mxu0 %v1983
    %2019 = vmatmul.f32.gmra.mxu0 %v1980
    %v2020 = vpop.f32.mrf.mxu0
    %v2021 = vadd.f32 %v2001, %v2020
    %2022 = vdwg.mxu0
    %vm2023 = vcmask 74752
    %2024 = vst.msk [vmem:[#allocation2] sm:$0x3] %vm2023, %v2021
    // Predicated region
    $region22: #{convnet_forward.5} parent=1 // pred_check
      _
    $region23: #{convnet_forward.5} parent=1 // pred_check_branch
      %2026 = sbr.rel (0) target = $region25
    $region24: #{convnet_forward.5} parent=1 // pred_region
      %2028 = vsyncadd [#allocation3], 0
      %s2030 = sshll.u32 [#allocation2], 4
      %s2031 = int_to_ptr.vmem [resolvable:$true] %s2030
      %s2032 = sshll.u32 %s5, 4
      %s2033 = int_to_ptr.hbm [resolvable:$true] %s2032
      %2035 = dma.vmem_to_hbm [thread:$0]  %s2031, 32, %s2033, [#allocation3]
    $region25: #{convnet_forward.5} parent=1 // pred_fallthru
      _
    // Predicated region
    $region26: #{convnet_forward.5} parent=1 // pred_check
      _
    $region27: #{convnet_forward.5} parent=1 // pred_check_branch
      %2037 = sbr.rel (0) target = $region29
    $region28: #{convnet_forward.5} parent=1 // pred_region
      %2039 = dma.done [#allocation3], 32
    $region29: #{convnet_forward.5} parent=1 // pred_fallthru
      _
    %2040 = vsyncpa [#allocation3], 1

// kernel: convnet_forward.4
$region0: #{convnet_forward.4}
  #allocation0 [shape = 'u32[]', space=smem, size = 0x4, offset = 0x4, fixed_abs, tag = 'smem constant byte address 0x4 - core index']
  #allocation1 [shape = 'u32[72,128]{1,0:T(1,128)}', space=vmem, size = 0x9000, scoped, tag = 'internal scratch']
  #allocation2 [shape = 'f32[224,64]{1,0:T(8,128)}', space=vmem, size = 0x1c000, scoped, tag = 'scratch operand']
  %s0 = inlined_call_operand.vmem [shape: bf16[2,288,32], index: 0, kind: input, shape index: {}]
  %s1 = inlined_call_operand.vmem [shape: bf16[288,64], index: 1, kind: input, shape index: {}]
  %s2 = inlined_call_operand.vmem [shape: f32[1,64], index: 2, kind: input, shape index: {}]
  %s3 = inlined_call_operand.vmem [shape: bf16[2,49,64], index: 3, kind: output, shape index: {}]
  %s4 = sld [smem:[#allocation0]]
  $region45: #{convnet_forward.4} parent=0
    _
  %s6 = ssub.s32 1, %s4
  %s7 = scalar_select 0, %s6, %s4
  loop: start=0, step=1, limit=4
  $region2: #{convnet_forward.4} parent=0 // loop_pre_header
    _
  $region3: #{convnet_forward.4} parent=0 // loop_header
    %s9 = sphi 0, %s13
    %p10 = scmp.ge.s32.totalorder %s9, 4
    %s19 = sphi 0, %s21
    %s22 = sphi 0, %s19
    %s23 = sphi 0, %s22
    %s39 = sphi 0, %s23
    %s43 = sphi 0, %s43
    %s45 = sphi 0, %s43
    %s46 = sphi 0, %s45
    %s60 = sphi 0, %s46
    %s64 = sphi 0, %s64
    %s66 = sphi 0, %s64
    %s67 = sphi 0, %s66
    %s81 = sphi 0, %s67
    %s87 = sphi 0, %s89
    %s90 = sphi 0, %s87
    %s91 = sphi 0, %s90
    %s107 = sphi 0, %s91
  $region4: #{convnet_forward.4} parent=0 // loop_header_branch
    %12 = sbr.rel (%p10) target = $region8
  $region5: #{convnet_forward.4} parent=0 // loop_body
    %s14 = ssub.s32 %s9, 1
    %s15 = ssub.s32 %s9, 2
    %s16 = sadd.s32 %s9, 1
    %s17 = ssub.s32 %s9, %s16
    %p18 = scmp.eq.s32.totalorder %s17, 0
    %s20 = sadd.s32 %s19, 1
    %s21 = scalar_select %p18, %s19, %s20
    %p24 = pneg %p18
    %p25 = scmp.eq.s32.totalorder %s9, 1
    %p26 = por %p24, %p25
    %p27 = scmp.ne.s32.totalorder %s19, %s22
    %p28 = scmp.eq.s32.totalorder %s9, 0
    %p29 = por %p27, %p28
    %p30 = scmp.ne.s32.totalorder %s19, %s22
    %p31 = scmp.eq.s32.totalorder %s14, 1
    %p32 = por %p30, %p31
    %p33 = scmp.ne.s32.totalorder %s22, %s23
    %p34 = scmp.eq.s32.totalorder %s14, 0
    %p35 = por %p33, %p34
    %p36 = scmp.ne.s32.totalorder %s22, %s23
    %p37 = scmp.eq.s32.totalorder %s15, 1
    %p38 = por %p36, %p37
    %p40 = scmp.ne.s32.totalorder %s23, %s39
    %p41 = scmp.eq.s32.totalorder %s15, 0
    %p42 = por %p40, %p41
    %s44 = sadd.s32 %s43, 1
    %p47 = scmp.eq.s32.totalorder %s9, 1
    %p48 = scmp.ne.s32.totalorder %s43, %s45
    %p49 = scmp.eq.s32.totalorder %s9, 0
    %p50 = por %p48, %p49
    %p51 = scmp.ne.s32.totalorder %s43, %s45
    %p52 = scmp.eq.s32.totalorder %s14, 1
    %p53 = por %p51, %p52
    %p54 = scmp.ne.s32.totalorder %s45, %s46
    %p55 = scmp.eq.s32.totalorder %s14, 0
    %p56 = por %p54, %p55
    %p57 = scmp.ne.s32.totalorder %s45, %s46
    %p58 = scmp.eq.s32.totalorder %s15, 1
    %p59 = por %p57, %p58
    %p61 = scmp.ne.s32.totalorder %s46, %s60
    %p62 = scmp.eq.s32.totalorder %s15, 0
    %p63 = por %p61, %p62
    %s65 = sadd.s32 %s64, 1
    %p68 = scmp.eq.s32.totalorder %s9, 1
    %p69 = scmp.ne.s32.totalorder %s64, %s66
    %p70 = scmp.eq.s32.totalorder %s9, 0
    %p71 = por %p69, %p70
    %p72 = scmp.ne.s32.totalorder %s64, %s66
    %p73 = scmp.eq.s32.totalorder %s14, 1
    %p74 = por %p72, %p73
    %p75 = scmp.ne.s32.totalorder %s66, %s67
    %p76 = scmp.eq.s32.totalorder %s14, 0
    %p77 = por %p75, %p76
    %p78 = scmp.ne.s32.totalorder %s66, %s67
    %p79 = scmp.eq.s32.totalorder %s15, 1
    %p80 = por %p78, %p79
    %p82 = scmp.ne.s32.totalorder %s67, %s81
    %p83 = scmp.eq.s32.totalorder %s15, 0
    %p84 = por %p82, %p83
    %s85 = ssub.s32 %s9, %s16
    %p86 = scmp.eq.s32.totalorder %s85, 0
    %s88 = sadd.s32 %s87, 1
    %s89 = scalar_select %p86, %s87, %s88
    %p92 = pneg %p86
    %p93 = scmp.eq.s32.totalorder %s9, 1
    %p94 = por %p92, %p93
    %p95 = scmp.ne.s32.totalorder %s87, %s90
    %p96 = scmp.eq.s32.totalorder %s9, 0
    %p97 = por %p95, %p96
    %p98 = scmp.ne.s32.totalorder %s87, %s90
    %p99 = scmp.eq.s32.totalorder %s14, 1
    %p100 = por %p98, %p99
    %p101 = scmp.ne.s32.totalorder %s90, %s91
    %p102 = scmp.eq.s32.totalorder %s14, 0
    %p103 = por %p101, %p102
    %p104 = scmp.ne.s32.totalorder %s90, %s91
    %p105 = scmp.eq.s32.totalorder %s15, 1
    %p106 = por %p104, %p105
    %p108 = scmp.ne.s32.totalorder %s91, %s107
    %p109 = scmp.eq.s32.totalorder %s15, 0
    %p110 = por %p108, %p109
    %p111 = scmp.le.s32.totalorder 1, %s9
    %p112 = scmp.lt.s32.totalorder %s9, 3
    %p113 = pnand %p111, %p112
    %p114 = pneg %p113
    // Predicated region
    $region9: #{convnet_forward.4} parent=5 // pred_check
      _
    $region10: #{convnet_forward.4} parent=5 // pred_check_branch
      %116 = sbr.rel (%p113) target = $region12
    $region11: #{convnet_forward.4} parent=5 // pred_region
      %s117 = ssub.s32 %s9, 1
      // Predicated region
      $region13: #{convnet_forward.4} parent=11 // pred_check
        %p118 = pneg %p56
      $region14: #{convnet_forward.4} parent=11 // pred_check_branch
        %120 = sbr.rel (%p118) target = $region16
      $region15: #{convnet_forward.4} parent=11 // pred_region
        _
      $region16: #{convnet_forward.4} parent=11 // pred_fallthru
        _
      // Predicated region
      $region17: #{convnet_forward.4} parent=11 // pred_check
        %p121 = pneg %p77
      $region18: #{convnet_forward.4} parent=11 // pred_check_branch
        %123 = sbr.rel (%p121) target = $region20
      $region19: #{convnet_forward.4} parent=11 // pred_region
        _
      $region20: #{convnet_forward.4} parent=11 // pred_fallthru
        _
    $region12: #{convnet_forward.4} parent=5 // pred_fallthru
      _
    %p124 = scmp.lt.s32.totalorder %s9, 2
    // Predicated region
    $region21: #{convnet_forward.4} parent=5 // pred_check
      %p125 = pneg %p124
    $region22: #{convnet_forward.4} parent=5 // pred_check_branch
      %127 = sbr.rel (%p125) target = $region24
    $region23: #{convnet_forward.4} parent=5 // pred_region
      // Predicated region
      $region25: #{convnet_forward.4} parent=23 // pred_check
        %p128 = pneg %p29
      $region26: #{convnet_forward.4} parent=23 // pred_check_branch
        %130 = sbr.rel (%p128) target = $region28
      $region27: #{convnet_forward.4} parent=23 // pred_region
        %p131 = scmp.lt.s32.totalorder %s9, 1
        %s132 = scalar_select %p131, %s9, 1
        %s133 = smul.addr %s132, 36
        %s134 = smul.addr %s133, 4
        %s135 = scalar_lea.vmem %s0, %s134
      $region28: #{convnet_forward.4} parent=23 // pred_fallthru
        _
    $region24: #{convnet_forward.4} parent=5 // pred_fallthru
      _
    %p136 = scmp.le.s32.totalorder 1, %s9
    %p137 = scmp.lt.s32.totalorder %s9, 3
    %p138 = pnand %p136, %p137
    %p139 = pneg %p138
    // Predicated region
    $region29: #{convnet_forward.4} parent=5 // pred_check
      _
    $region30: #{convnet_forward.4} parent=5 // pred_check_branch
      %141 = sbr.rel (%p138) target = $region32
    $region31: #{convnet_forward.4} parent=5 // pred_region
      %s142 = ssub.s32 %s9, 1
      %p143 = scmp.lt.s32.totalorder %s14, 1
      %s144 = scalar_select %p143, %s14, 1
      %s145 = smul.addr %s144, 36
      %s146 = smul.addr %s145, 4
      %s147 = scalar_lea.vmem %s0, %s146
      %p148 = pneg %p35
      %p149 = pneg %p32
      %p150 = pneg %p56
      %p151 = pneg %p53
      %p152 = pneg %p77
      %p153 = pneg %p74
      %p154 = pneg %p103
      %p155 = pneg %p100
      %p156 = scmp.lt.s32.totalorder %s14, 1
      %s157 = scalar_select %p156, %s14, 1
      %s158 = smul.addr %s157, 7
      %s159 = smul.addr %s158, 4
      %s160 = scalar_lea.vmem %s3, %s159
      %p161 = scmp.lt.s32.totalorder %s14, 1
      %s162 = scalar_select %p161, %s14, 1
      %s163 = smul.addr %s162, 36
      %s164 = smul.addr %s163, 4
      %s165 = scalar_lea.vmem %s0, %s164
      %p166 = scmp.lt.s32.totalorder %s14, 1
      %s167 = scalar_select %p166, %s14, 1
      %s168 = smul.addr %s167, 7
      %s169 = smul.addr %s168, 4
      %s170 = scalar_lea.vmem %s3, %s169
      %v172 = vld [vmem:[%s165] sm:$0xf]
      %v173 = vld [vmem:[%s165 + $0x4] sm:$0xf]
      %v174 = vld [vmem:[%s165 + $0x8] sm:$0xf]
      %v175 = vld [vmem:[%s165 + $0xc] sm:$0xf]
      %v176 = vld [vmem:[%s165 + $0x10] sm:$0xf]
      %v177 = vld [vmem:[%s165 + $0x14] sm:$0xf]
      %v178 = vld [vmem:[%s165 + $0x18] sm:$0xf]
      %v179 = vld [vmem:[%s165 + $0x1c] sm:$0xf]
      %v180 = vld [vmem:[%s165 + $0x20] sm:$0xf]
      %v181 = vld [vmem:[%s165 + $0x24] sm:$0xf]
      %v182 = vld [vmem:[%s165 + $0x28] sm:$0xf]
      %v183 = vld [vmem:[%s165 + $0x2c] sm:$0xf]
      %v184 = vld [vmem:[%s165 + $0x30] sm:$0xf]
      %v185 = vld [vmem:[%s165 + $0x34] sm:$0xf]
      %v186 = vld [vmem:[%s165 + $0x38] sm:$0xf]
      %v187 = vld [vmem:[%s165 + $0x3c] sm:$0xf]
      %v188 = vld [vmem:[%s165 + $0x40] sm:$0xf]
      %v189 = vld [vmem:[%s165 + $0x44] sm:$0xf]
      %v190 = vld [vmem:[%s165 + $0x48] sm:$0xf]
      %v191 = vld [vmem:[%s165 + $0x4c] sm:$0xf]
      %v192 = vld [vmem:[%s165 + $0x50] sm:$0xf]
      %v193 = vld [vmem:[%s165 + $0x54] sm:$0xf]
      %v194 = vld [vmem:[%s165 + $0x58] sm:$0xf]
      %v195 = vld [vmem:[%s165 + $0x5c] sm:$0xf]
      %v196 = vld [vmem:[%s165 + $0x60] sm:$0xf]
      %v197 = vld [vmem:[%s165 + $0x64] sm:$0xf]
      %v198 = vld [vmem:[%s165 + $0x68] sm:$0xf]
      %v199 = vld [vmem:[%s165 + $0x6c] sm:$0xf]
      %v200 = vld [vmem:[%s1] sm:$0xf]
      %v201 = vld [vmem:[%s1 + $0x4] sm:$0xf]
      %v202 = vld [vmem:[%s1 + $0x8] sm:$0xf]
      %v203 = vld [vmem:[%s1 + $0xc] sm:$0xf]
      %v204 = vld [vmem:[%s165 + $0x70] sm:$0x1]
      %v205 = vld [vmem:[%s1 + $0x10] sm:$0xf]
      %v206 = vld [vmem:[%s1 + $0x14] sm:$0xf]
      %v207 = vld [vmem:[%s1 + $0x18] sm:$0xf]
      %v208 = vld [vmem:[%s1 + $0x1c] sm:$0xf]
      %v238 = vunpack.c.l.b16 %v172
      %v239 = vunpack.c.l.b16 %v173
      %v240 = vunpack.c.l.b16 %v174
      %v241 = vunpack.c.l.b16 %v175
      %v242 = vunpack.c.l.b16 %v176
      %v243 = vunpack.c.l.b16 %v177
      %v244 = vunpack.c.l.b16 %v178
      %v245 = vunpack.c.l.b16 %v179
      %v246 = vunpack.c.l.b16 %v180
      %v247 = vunpack.c.l.b16 %v181
      %v248 = vunpack.c.l.b16 %v182
      %v249 = vunpack.c.l.b16 %v183
      %v250 = vunpack.c.l.b16 %v184
      %v251 = vunpack.c.l.b16 %v185
      %v252 = vunpack.c.l.b16 %v186
      %v253 = vunpack.c.l.b16 %v187
      %v254 = vunpack.c.l.b16 %v188
      %v255 = vunpack.c.l.b16 %v189
      %v256 = vunpack.c.l.b16 %v190
      %v257 = vunpack.c.l.b16 %v191
      %v258 = vunpack.c.l.b16 %v192
      %v259 = vunpack.c.l.b16 %v193
      %v260 = vunpack.c.l.b16 %v194
      %v261 = vunpack.c.l.b16 %v195
      %v262 = vunpack.c.l.b16 %v196
      %v263 = vunpack.c.l.b16 %v197
      %v264 = vunpack.c.l.b16 %v198
      %v265 = vunpack.c.l.b16 %v199
      %v266 = vunpack.c.l.b16 %v204
      %v267 = vpack.c.b16 %v239, %v238
      %v268 = vpack.c.b16 %v241, %v240
      %v269 = vpack.c.b16 %v243, %v242
      %v270 = vpack.c.b16 %v245, %v244
      %v271 = vpack.c.b16 %v247, %v246
      %v272 = vpack.c.b16 %v249, %v248
      %v273 = vpack.c.b16 %v251, %v250
      %v274 = vpack.c.b16 %v253, %v252
      %v275 = vpack.c.b16 %v255, %v254
      %v276 = vpack.c.b16 %v257, %v256
      %v277 = vpack.c.b16 %v259, %v258
      %v278 = vpack.c.b16 %v261, %v260
      %v279 = vpack.c.b16 %v263, %v262
      %v280 = vpack.c.b16 %v265, %v264
      %v281 = vpack.c.b16 %v266, %v266
      %vm282 = vsmask.f32 7424
      %v284 = vshrl.u32 %v267, 16
      %v286 = vshll.u32 %v267, 16
      %v288 = vrot.slane %v286, 1
      %v289 = vor.u32 %v284, %v288
      %v291 = vshll.u32 %v268, 16
      %v293 = vrot.slane %v291, 1
      %v294 = vsel %vm282, %v289, %v293
      %v295 = vshrl.u32 %v268, 16
      %v297 = vor.u32 %v295, %v293
      %v299 = vshll.u32 %v269, 16
      %v301 = vrot.slane %v299, 1
      %v302 = vsel %vm282, %v297, %v301
      %v303 = vshrl.u32 %v269, 16
      %v305 = vor.u32 %v303, %v301
      %v307 = vshll.u32 %v270, 16
      %v309 = vrot.slane %v307, 1
      %v310 = vsel %vm282, %v305, %v309
      %v311 = vshrl.u32 %v270, 16
      %v313 = vor.u32 %v311, %v309
      %v315 = vshll.u32 %v271, 16
      %v317 = vrot.slane %v315, 1
      %v318 = vsel %vm282, %v313, %v317
      %v319 = vshrl.u32 %v271, 16
      %v321 = vor.u32 %v319, %v317
      %v323 = vshll.u32 %v272, 16
      %v325 = vrot.slane %v323, 1
      %v326 = vsel %vm282, %v321, %v325
      %v327 = vshrl.u32 %v272, 16
      %v329 = vor.u32 %v327, %v325
      %v331 = vshll.u32 %v273, 16
      %v333 = vrot.slane %v331, 1
      %v334 = vsel %vm282, %v329, %v333
      %v335 = vshrl.u32 %v273, 16
      %v337 = vor.u32 %v335, %v333
      %v339 = vshll.u32 %v274, 16
      %v341 = vrot.slane %v339, 1
      %v342 = vsel %vm282, %v337, %v341
      %v343 = vshrl.u32 %v274, 16
      %v345 = vor.u32 %v343, %v341
      %v347 = vshll.u32 %v275, 16
      %v349 = vrot.slane %v347, 1
      %v350 = vsel %vm282, %v345, %v349
      %v351 = vshrl.u32 %v275, 16
      %v353 = vor.u32 %v351, %v349
      %v355 = vshll.u32 %v276, 16
      %v357 = vrot.slane %v355, 1
      %v358 = vsel %vm282, %v353, %v357
      %v359 = vshrl.u32 %v276, 16
      %v361 = vor.u32 %v359, %v357
      %v363 = vshll.u32 %v277, 16
      %v365 = vrot.slane %v363, 1
      %v366 = vsel %vm282, %v361, %v365
      %v367 = vshrl.u32 %v277, 16
      %v369 = vor.u32 %v367, %v365
      %v371 = vshll.u32 %v278, 16
      %v373 = vrot.slane %v371, 1
      %v374 = vsel %vm282, %v369, %v373
      %v375 = vshrl.u32 %v278, 16
      %v377 = vor.u32 %v375, %v373
      %v379 = vshll.u32 %v279, 16
      %v381 = vrot.slane %v379, 1
      %v382 = vsel %vm282, %v377, %v381
      %v383 = vshrl.u32 %v279, 16
      %v385 = vor.u32 %v383, %v381
      %v387 = vshll.u32 %v280, 16
      %v389 = vrot.slane %v387, 1
      %v390 = vsel %vm282, %v385, %v389
      %v391 = vshrl.u32 %v280, 16
      %v393 = vor.u32 %v391, %v389
      %v395 = vshll.u32 %v281, 16
      %v397 = vrot.slane %v395, 1
      %v398 = vsel %vm282, %v393, %v397
      %v403 = vunpack.c.l.b16 %v205
      %v404 = vunpack.c.l.b16 %v206
      %v405 = vunpack.c.l.b16 %v207
      %v406 = vunpack.c.l.b16 %v208
      %v407 = vpack.c.b16 %v404, %v403
      %v408 = vpack.c.b16 %v406, %v405
      %vm411 = vcmask 261120
      %v413 = vsel %vm411, %v294, 0
      %v416 = vsel %vm411, %v302, 0
      %v419 = vsel %vm411, %v310, 0
      %v422 = vsel %vm411, %v318, 0
      %v425 = vsel %vm411, %v326, 0
      %v428 = vsel %vm411, %v334, 0
      %v431 = vsel %vm411, %v342, 0
      %v434 = vsel %vm411, %v350, 0
      %v437 = vsel %vm411, %v358, 0
      %v440 = vsel %vm411, %v366, 0
      %v443 = vsel %vm411, %v374, 0
      %v446 = vsel %vm411, %v382, 0
      %v449 = vsel %vm411, %v390, 0
      %v452 = vsel %vm411, %v398, 0
      %454 = vmatpush.bf16.msra.mxu0 0
      %455 = vmatpush.bf16.msra.mxu0 0
      %456 = vmatpush.bf16.msra.mxu0 0
      %457 = vmatpush.bf16.msra.mxu0 0
      %458 = vmatpush.bf16.msra.mxu0 0
      %459 = vmatpush.bf16.msra.mxu0 0
      %460 = vmatpush.bf16.msra.mxu0 %v408
      %461 = vmatpush.bf16.msra.mxu0 %v407
      %462 = vmatmul.bf16.gmra.mxu0 %v413
      %v463 = vpop.f32.mrf.mxu0
      %v464 = vadd.f32 0.0, %v463
      %v465 = vpop.f32.mrf.mxu0
      %v466 = vadd.f32 0.0, %v465
      %467 = vmatmul.bf16.gmra.mxu0 %v416
      %v468 = vpop.f32.mrf.mxu0
      %v469 = vadd.f32 0.0, %v468
      %v470 = vpop.f32.mrf.mxu0
      %v471 = vadd.f32 0.0, %v470
      %472 = vmatmul.bf16.gmra.mxu0 %v419
      %v473 = vpop.f32.mrf.mxu0
      %v474 = vadd.f32 0.0, %v473
      %v475 = vpop.f32.mrf.mxu0
      %v476 = vadd.f32 0.0, %v475
      %477 = vmatmul.bf16.gmra.mxu0 %v422
      %v478 = vpop.f32.mrf.mxu0
      %v479 = vadd.f32 0.0, %v478
      %v480 = vpop.f32.mrf.mxu0
      %v481 = vadd.f32 0.0, %v480
      %482 = vmatmul.bf16.gmra.mxu0 %v425
      %v483 = vpop.f32.mrf.mxu0
      %v484 = vadd.f32 0.0, %v483
      %v485 = vpop.f32.mrf.mxu0
      %v486 = vadd.f32 0.0, %v485
      %487 = vmatmul.bf16.gmra.mxu0 %v428
      %v488 = vpop.f32.mrf.mxu0
      %v489 = vadd.f32 0.0, %v488
      %v490 = vpop.f32.mrf.mxu0
      %v491 = vadd.f32 0.0, %v490
      %492 = vmatmul.bf16.gmra.mxu0 %v431
      %v493 = vpop.f32.mrf.mxu0
      %v494 = vadd.f32 0.0, %v493
      %v495 = vpop.f32.mrf.mxu0
      %v496 = vadd.f32 0.0, %v495
      %497 = vmatmul.bf16.gmra.mxu0 %v434
      %v498 = vpop.f32.mrf.mxu0
      %v499 = vadd.f32 0.0, %v498
      %v500 = vpop.f32.mrf.mxu0
      %v501 = vadd.f32 0.0, %v500
      %502 = vmatmul.bf16.gmra.mxu0 %v437
      %v503 = vpop.f32.mrf.mxu0
      %v504 = vadd.f32 0.0, %v503
      %v505 = vpop.f32.mrf.mxu0
      %v506 = vadd.f32 0.0, %v505
      %507 = vmatmul.bf16.gmra.mxu0 %v440
      %v508 = vpop.f32.mrf.mxu0
      %v509 = vadd.f32 0.0, %v508
      %v510 = vpop.f32.mrf.mxu0
      %v511 = vadd.f32 0.0, %v510
      %512 = vmatmul.bf16.gmra.mxu0 %v443
      %v513 = vpop.f32.mrf.mxu0
      %v514 = vadd.f32 0.0, %v513
      %v515 = vpop.f32.mrf.mxu0
      %v516 = vadd.f32 0.0, %v515
      %517 = vmatmul.bf16.gmra.mxu0 %v446
      %v518 = vpop.f32.mrf.mxu0
      %v519 = vadd.f32 0.0, %v518
      %v520 = vpop.f32.mrf.mxu0
      %v521 = vadd.f32 0.0, %v520
      %522 = vmatmul.bf16.gmra.mxu0 %v449
      %v523 = vpop.f32.mrf.mxu0
      %v524 = vadd.f32 0.0, %v523
      %v525 = vpop.f32.mrf.mxu0
      %v526 = vadd.f32 0.0, %v525
      %527 = vmatmul.bf16.gmra.mxu0 %v452
      %v528 = vpop.f32.mrf.mxu0
      %v529 = vadd.f32 0.0, %v528
      %v530 = vpop.f32.mrf.mxu0
      %v531 = vadd.f32 0.0, %v530
      %532 = vdwg.mxu0
      %v537 = vunpack.c.l.b16 %v200
      %v538 = vunpack.c.l.b16 %v201
      %v539 = vunpack.c.l.b16 %v202
      %v540 = vunpack.c.l.b16 %v203
      %v541 = vpack.c.b16 %v538, %v537
      %v542 = vpack.c.b16 %v540, %v539
      %v545 = vsel %vm411, %v267, 0
      %v547 = vsel %vm411, %v268, 0
      %v549 = vsel %vm411, %v269, 0
      %v551 = vsel %vm411, %v270, 0
      %v553 = vsel %vm411, %v271, 0
      %v555 = vsel %vm411, %v272, 0
      %v557 = vsel %vm411, %v273, 0
      %v559 = vsel %vm411, %v274, 0
      %v561 = vsel %vm411, %v275, 0
      %v563 = vsel %vm411, %v276, 0
      %v565 = vsel %vm411, %v277, 0
      %v567 = vsel %vm411, %v278, 0
      %v569 = vsel %vm411, %v279, 0
      %v571 = vsel %vm411, %v280, 0
      %573 = vmatpush.bf16.msra.mxu0 0
      %574 = vmatpush.bf16.msra.mxu0 0
      %575 = vmatpush.bf16.msra.mxu0 0
      %576 = vmatpush.bf16.msra.mxu0 0
      %577 = vmatpush.bf16.msra.mxu0 0
      %578 = vmatpush.bf16.msra.mxu0 0
      %579 = vmatpush.bf16.msra.mxu0 %v542
      %580 = vmatpush.bf16.msra.mxu0 %v541
      %581 = vmatmul.bf16.gmra.mxu0 %v545
      %v582 = vpop.f32.mrf.mxu0
      %v583 = vadd.f32 %v464, %v582
      %v584 = vpop.f32.mrf.mxu0
      %v585 = vadd.f32 %v466, %v584
      %586 = vmatmul.bf16.gmra.mxu0 %v547
      %v587 = vpop.f32.mrf.mxu0
      %v588 = vadd.f32 %v469, %v587
      %v589 = vpop.f32.mrf.mxu0
      %v590 = vadd.f32 %v471, %v589
      %591 = vmatmul.bf16.gmra.mxu0 %v549
      %v592 = vpop.f32.mrf.mxu0
      %v593 = vadd.f32 %v474, %v592
      %v594 = vpop.f32.mrf.mxu0
      %v595 = vadd.f32 %v476, %v594
      %596 = vmatmul.bf16.gmra.mxu0 %v551
      %v597 = vpop.f32.mrf.mxu0
      %v598 = vadd.f32 %v479, %v597
      %v599 = vpop.f32.mrf.mxu0
      %v600 = vadd.f32 %v481, %v599
      %601 = vmatmul.bf16.gmra.mxu0 %v553
      %v602 = vpop.f32.mrf.mxu0
      %v603 = vadd.f32 %v484, %v602
      %v604 = vpop.f32.mrf.mxu0
      %v605 = vadd.f32 %v486, %v604
      %606 = vmatmul.bf16.gmra.mxu0 %v555
      %v607 = vpop.f32.mrf.mxu0
      %v608 = vadd.f32 %v489, %v607
      %v609 = vpop.f32.mrf.mxu0
      %v610 = vadd.f32 %v491, %v609
      %611 = vmatmul.bf16.gmra.mxu0 %v557
      %v612 = vpop.f32.mrf.mxu0
      %v613 = vadd.f32 %v494, %v612
      %v614 = vpop.f32.mrf.mxu0
      %v615 = vadd.f32 %v496, %v614
      %616 = vmatmul.bf16.gmra.mxu0 %v559
      %v617 = vpop.f32.mrf.mxu0
      %v618 = vadd.f32 %v499, %v617
      %v619 = vpop.f32.mrf.mxu0
      %v620 = vadd.f32 %v501, %v619
      %621 = vmatmul.bf16.gmra.mxu0 %v561
      %v622 = vpop.f32.mrf.mxu0
      %v623 = vadd.f32 %v504, %v622
      %v624 = vpop.f32.mrf.mxu0
      %v625 = vadd.f32 %v506, %v624
      %626 = vmatmul.bf16.gmra.mxu0 %v563
      %v627 = vpop.f32.mrf.mxu0
      %v628 = vadd.f32 %v509, %v627
      %v629 = vpop.f32.mrf.mxu0
      %v630 = vadd.f32 %v511, %v629
      %631 = vmatmul.bf16.gmra.mxu0 %v565
      %v632 = vpop.f32.mrf.mxu0
      %v633 = vadd.f32 %v514, %v632
      %v634 = vpop.f32.mrf.mxu0
      %v635 = vadd.f32 %v516, %v634
      %636 = vmatmul.bf16.gmra.mxu0 %v567
      %v637 = vpop.f32.mrf.mxu0
      %v638 = vadd.f32 %v519, %v637
      %v639 = vpop.f32.mrf.mxu0
      %v640 = vadd.f32 %v521, %v639
      %641 = vmatmul.bf16.gmra.mxu0 %v569
      %v642 = vpop.f32.mrf.mxu0
      %v643 = vadd.f32 %v524, %v642
      %v644 = vpop.f32.mrf.mxu0
      %v645 = vadd.f32 %v526, %v644
      %646 = vmatmul.bf16.gmra.mxu0 %v571
      %v647 = vpop.f32.mrf.mxu0
      %v648 = vadd.f32 %v529, %v647
      %v649 = vpop.f32.mrf.mxu0
      %v650 = vadd.f32 %v531, %v649
      %651 = vdwg.mxu0
      %v652 = vld [vmem:[%s165] sm:$0xe]
      %v653 = vld [vmem:[%s1 + $0x20] sm:$0xf]
      %v654 = vld [vmem:[%s1 + $0x24] sm:$0xf]
      %v655 = vld [vmem:[%s1 + $0x28] sm:$0xf]
      %v656 = vld [vmem:[%s1 + $0x2c] sm:$0xf]
      %v658 = vunpack.c.l.b16 %v652
      %v659 = vpack.c.b16 %v239, %v658
      %vm660 = vcmask 1046528
      %v661 = vrot.slane %v659, 1
      %v662 = vrot.slane %v268, 1
      %v663 = vsel %vm660, %v661, %v662
      %v664 = vrot.slane %v269, 1
      %v665 = vsel %vm660, %v662, %v664
      %v666 = vrot.slane %v270, 1
      %v667 = vsel %vm660, %v664, %v666
      %v668 = vrot.slane %v271, 1
      %v669 = vsel %vm660, %v666, %v668
      %v670 = vrot.slane %v272, 1
      %v671 = vsel %vm660, %v668, %v670
      %v672 = vrot.slane %v273, 1
      %v673 = vsel %vm660, %v670, %v672
      %v674 = vrot.slane %v274, 1
      %v675 = vsel %vm660, %v672, %v674
      %v676 = vrot.slane %v275, 1
      %v677 = vsel %vm660, %v674, %v676
      %v678 = vrot.slane %v276, 1
      %v679 = vsel %vm660, %v676, %v678
      %v680 = vrot.slane %v277, 1
      %v681 = vsel %vm660, %v678, %v680
      %v682 = vrot.slane %v278, 1
      %v683 = vsel %vm660, %v680, %v682
      %v684 = vrot.slane %v279, 1
      %v685 = vsel %vm660, %v682, %v684
      %v686 = vrot.slane %v280, 1
      %v687 = vsel %vm660, %v684, %v686
      %v688 = vrot.slane %v281, 1
      %v689 = vsel %vm660, %v686, %v688
      %v694 = vunpack.c.l.b16 %v653
      %v695 = vunpack.c.l.b16 %v654
      %v696 = vunpack.c.l.b16 %v655
      %v697 = vunpack.c.l.b16 %v656
      %v698 = vpack.c.b16 %v695, %v694
      %v699 = vpack.c.b16 %v697, %v696
      %v703 = vsel %vm411, %v663, 0
      %v706 = vsel %vm411, %v665, 0
      %v709 = vsel %vm411, %v667, 0
      %v712 = vsel %vm411, %v669, 0
      %v715 = vsel %vm411, %v671, 0
      %v718 = vsel %vm411, %v673, 0
      %v721 = vsel %vm411, %v675, 0
      %v724 = vsel %vm411, %v677, 0
      %v727 = vsel %vm411, %v679, 0
      %v730 = vsel %vm411, %v681, 0
      %v733 = vsel %vm411, %v683, 0
      %v736 = vsel %vm411, %v685, 0
      %v739 = vsel %vm411, %v687, 0
      %v742 = vsel %vm411, %v689, 0
      %744 = vmatpush.bf16.msra.mxu0 0
      %745 = vmatpush.bf16.msra.mxu0 0
      %746 = vmatpush.bf16.msra.mxu0 0
      %747 = vmatpush.bf16.msra.mxu0 0
      %748 = vmatpush.bf16.msra.mxu0 0
      %749 = vmatpush.bf16.msra.mxu0 0
      %750 = vmatpush.bf16.msra.mxu0 %v699
      %751 = vmatpush.bf16.msra.mxu0 %v698
      %752 = vmatmul.bf16.gmra.mxu0 %v703
      %v753 = vpop.f32.mrf.mxu0
      %v754 = vadd.f32 0.0, %v753
      %v755 = vpop.f32.mrf.mxu0
      %v756 = vadd.f32 0.0, %v755
      %757 = vmatmul.bf16.gmra.mxu0 %v706
      %v758 = vpop.f32.mrf.mxu0
      %v759 = vadd.f32 0.0, %v758
      %v760 = vpop.f32.mrf.mxu0
      %v761 = vadd.f32 0.0, %v760
      %762 = vmatmul.bf16.gmra.mxu0 %v709
      %v763 = vpop.f32.mrf.mxu0
      %v764 = vadd.f32 0.0, %v763
      %v765 = vpop.f32.mrf.mxu0
      %v766 = vadd.f32 0.0, %v765
      %767 = vmatmul.bf16.gmra.mxu0 %v712
      %v768 = vpop.f32.mrf.mxu0
      %v769 = vadd.f32 0.0, %v768
      %v770 = vpop.f32.mrf.mxu0
      %v771 = vadd.f32 0.0, %v770
      %772 = vmatmul.bf16.gmra.mxu0 %v715
      %v773 = vpop.f32.mrf.mxu0
      %v774 = vadd.f32 0.0, %v773
      %v775 = vpop.f32.mrf.mxu0
      %v776 = vadd.f32 0.0, %v775
      %777 = vmatmul.bf16.gmra.mxu0 %v718
      %v778 = vpop.f32.mrf.mxu0
      %v779 = vadd.f32 0.0, %v778
      %v780 = vpop.f32.mrf.mxu0
      %v781 = vadd.f32 0.0, %v780
      %782 = vmatmul.bf16.gmra.mxu0 %v721
      %v783 = vpop.f32.mrf.mxu0
      %v784 = vadd.f32 0.0, %v783
      %v785 = vpop.f32.mrf.mxu0
      %v786 = vadd.f32 0.0, %v785
      %787 = vmatmul.bf16.gmra.mxu0 %v724
      %v788 = vpop.f32.mrf.mxu0
      %v789 = vadd.f32 0.0, %v788
      %v790 = vpop.f32.mrf.mxu0
      %v791 = vadd.f32 0.0, %v790
      %792 = vmatmul.bf16.gmra.mxu0 %v727
      %v793 = vpop.f32.mrf.mxu0
      %v794 = vadd.f32 0.0, %v793
      %v795 = vpop.f32.mrf.mxu0
      %v796 = vadd.f32 0.0, %v795
      %797 = vmatmul.bf16.gmra.mxu0 %v730
      %v798 = vpop.f32.mrf.mxu0
      %v799 = vadd.f32 0.0, %v798
      %v800 = vpop.f32.mrf.mxu0
      %v801 = vadd.f32 0.0, %v800
      %802 = vmatmul.bf16.gmra.mxu0 %v733
      %v803 = vpop.f32.mrf.mxu0
      %v804 = vadd.f32 0.0, %v803
      %v805 = vpop.f32.mrf.mxu0
      %v806 = vadd.f32 0.0, %v805
      %807 = vmatmul.bf16.gmra.mxu0 %v736
      %v808 = vpop.f32.mrf.mxu0
      %v809 = vadd.f32 0.0, %v808
      %v810 = vpop.f32.mrf.mxu0
      %v811 = vadd.f32 0.0, %v810
      %812 = vmatmul.bf16.gmra.mxu0 %v739
      %v813 = vpop.f32.mrf.mxu0
      %v814 = vadd.f32 0.0, %v813
      %v815 = vpop.f32.mrf.mxu0
      %v816 = vadd.f32 0.0, %v815
      %817 = vmatmul.bf16.gmra.mxu0 %v742
      %v818 = vpop.f32.mrf.mxu0
      %v819 = vadd.f32 0.0, %v818
      %v820 = vpop.f32.mrf.mxu0
      %v821 = vadd.f32 0.0, %v820
      %822 = vdwg.mxu0
      %v823 = vadd.f32 %v583, %v754
      %v824 = vadd.f32 %v585, %v756
      %v825 = vadd.f32 %v588, %v759
      %v826 = vadd.f32 %v590, %v761
      %v827 = vadd.f32 %v593, %v764
      %v828 = vadd.f32 %v595, %v766
      %v829 = vadd.f32 %v598, %v769
      %v830 = vadd.f32 %v600, %v771
      %v831 = vadd.f32 %v603, %v774
      %v832 = vadd.f32 %v605, %v776
      %v833 = vadd.f32 %v608, %v779
      %v834 = vadd.f32 %v610, %v781
      %v835 = vadd.f32 %v613, %v784
      %v836 = vadd.f32 %v615, %v786
      %v837 = vadd.f32 %v618, %v789
      %v838 = vadd.f32 %v620, %v791
      %v839 = vadd.f32 %v623, %v794
      %v840 = vadd.f32 %v625, %v796
      %v841 = vadd.f32 %v628, %v799
      %v842 = vadd.f32 %v630, %v801
      %v843 = vadd.f32 %v633, %v804
      %v844 = vadd.f32 %v635, %v806
      %v845 = vadd.f32 %v638, %v809
      %v846 = vadd.f32 %v640, %v811
      %v847 = vadd.f32 %v643, %v814
      %v848 = vadd.f32 %v645, %v816
      %v849 = vadd.f32 %v648, %v819
      %v850 = vadd.f32 %v650, %v821
      %v851 = vld [vmem:[%s165 + $0x8] sm:$0xf]
      %v852 = vld [vmem:[%s165 + $0xc] sm:$0xf]
      %v853 = vld [vmem:[%s165 + $0x10] sm:$0xf]
      %v854 = vld [vmem:[%s165 + $0x14] sm:$0xf]
      %v855 = vld [vmem:[%s165 + $0x18] sm:$0xf]
      %v856 = vld [vmem:[%s165 + $0x1c] sm:$0xf]
      %v857 = vld [vmem:[%s165 + $0x20] sm:$0xf]
      %v858 = vld [vmem:[%s165 + $0x24] sm:$0xf]
      %v859 = vld [vmem:[%s165 + $0x28] sm:$0xf]
      %v860 = vld [vmem:[%s165 + $0x2c] sm:$0xf]
      %v861 = vld [vmem:[%s165 + $0x30] sm:$0xf]
      %v862 = vld [vmem:[%s165 + $0x34] sm:$0xf]
      %v863 = vld [vmem:[%s165 + $0x38] sm:$0xf]
      %v864 = vld [vmem:[%s165 + $0x3c] sm:$0xf]
      %v865 = vld [vmem:[%s165 + $0x40] sm:$0xf]
      %v866 = vld [vmem:[%s165 + $0x44] sm:$0xf]
      %v867 = vld [vmem:[%s165 + $0x48] sm:$0xf]
      %v868 = vld [vmem:[%s165 + $0x4c] sm:$0xf]
      %v869 = vld [vmem:[%s165 + $0x50] sm:$0xf]
      %v870 = vld [vmem:[%s165 + $0x54] sm:$0xf]
      %v871 = vld [vmem:[%s165 + $0x58] sm:$0xf]
      %v872 = vld [vmem:[%s165 + $0x5c] sm:$0xf]
      %v873 = vld [vmem:[%s165 + $0x60] sm:$0xf]
      %v874 = vld [vmem:[%s165 + $0x64] sm:$0xf]
      %v875 = vld [vmem:[%s165 + $0x68] sm:$0xf]
      %v876 = vld [vmem:[%s165 + $0x6c] sm:$0xf]
      %v877 = vld [vmem:[%s165 + $0x70] sm:$0xf]
      %v878 = vld [vmem:[%s165 + $0x74] sm:$0xf]
      %v879 = vld [vmem:[%s1 + $0x30] sm:$0xf]
      %v880 = vld [vmem:[%s1 + $0x34] sm:$0xf]
      %v881 = vld [vmem:[%s1 + $0x38] sm:$0xf]
      %v882 = vld [vmem:[%s1 + $0x3c] sm:$0xf]
      %v911 = vunpack.c.l.b16 %v851
      %v912 = vunpack.c.l.b16 %v852
      %v913 = vunpack.c.l.b16 %v853
      %v914 = vunpack.c.l.b16 %v854
      %v915 = vunpack.c.l.b16 %v855
      %v916 = vunpack.c.l.b16 %v856
      %v917 = vunpack.c.l.b16 %v857
      %v918 = vunpack.c.l.b16 %v858
      %v919 = vunpack.c.l.b16 %v859
      %v920 = vunpack.c.l.b16 %v860
      %v921 = vunpack.c.l.b16 %v861
      %v922 = vunpack.c.l.b16 %v862
      %v923 = vunpack.c.l.b16 %v863
      %v924 = vunpack.c.l.b16 %v864
      %v925 = vunpack.c.l.b16 %v865
      %v926 = vunpack.c.l.b16 %v866
      %v927 = vunpack.c.l.b16 %v867
      %v928 = vunpack.c.l.b16 %v868
      %v929 = vunpack.c.l.b16 %v869
      %v930 = vunpack.c.l.b16 %v870
      %v931 = vunpack.c.l.b16 %v871
      %v932 = vunpack.c.l.b16 %v872
      %v933 = vunpack.c.l.b16 %v873
      %v934 = vunpack.c.l.b16 %v874
      %v935 = vunpack.c.l.b16 %v875
      %v936 = vunpack.c.l.b16 %v876
      %v937 = vunpack.c.l.b16 %v877
      %v938 = vunpack.c.l.b16 %v878
      %v939 = vpack.c.b16 %v912, %v911
      %v940 = vpack.c.b16 %v914, %v913
      %v941 = vpack.c.b16 %v916, %v915
      %v942 = vpack.c.b16 %v918, %v917
      %v943 = vpack.c.b16 %v920, %v919
      %v944 = vpack.c.b16 %v922, %v921
      %v945 = vpack.c.b16 %v924, %v923
      %v946 = vpack.c.b16 %v926, %v925
      %v947 = vpack.c.b16 %v928, %v927
      %v948 = vpack.c.b16 %v930, %v929
      %v949 = vpack.c.b16 %v932, %v931
      %v950 = vpack.c.b16 %v934, %v933
      %v951 = vpack.c.b16 %v936, %v935
      %v952 = vpack.c.b16 %v938, %v937
      %v957 = vunpack.c.l.b16 %v879
      %v958 = vunpack.c.l.b16 %v880
      %v959 = vunpack.c.l.b16 %v881
      %v960 = vunpack.c.l.b16 %v882
      %v961 = vpack.c.b16 %v958, %v957
      %v962 = vpack.c.b16 %v960, %v959
      %v966 = vsel %vm411, %v939, 0
      %v969 = vsel %vm411, %v940, 0
      %v972 = vsel %vm411, %v941, 0
      %v975 = vsel %vm411, %v942, 0
      %v978 = vsel %vm411, %v943, 0
      %v981 = vsel %vm411, %v944, 0
      %v984 = vsel %vm411, %v945, 0
      %v987 = vsel %vm411, %v946, 0
      %v990 = vsel %vm411, %v947, 0
      %v993 = vsel %vm411, %v948, 0
      %v996 = vsel %vm411, %v949, 0
      %v999 = vsel %vm411, %v950, 0
      %v1002 = vsel %vm411, %v951, 0
      %v1005 = vsel %vm411, %v952, 0
      %1007 = vmatpush.bf16.msra.mxu0 0
      %1008 = vmatpush.bf16.msra.mxu0 0
      %1009 = vmatpush.bf16.msra.mxu0 0
      %1010 = vmatpush.bf16.msra.mxu0 0
      %1011 = vmatpush.bf16.msra.mxu0 0
      %1012 = vmatpush.bf16.msra.mxu0 0
      %1013 = vmatpush.bf16.msra.mxu0 %v962
      %1014 = vmatpush.bf16.msra.mxu0 %v961
      %1015 = vmatmul.bf16.gmra.mxu0 %v966
      %v1016 = vpop.f32.mrf.mxu0
      %v1017 = vadd.f32 0.0, %v1016
      %v1018 = vpop.f32.mrf.mxu0
      %v1019 = vadd.f32 0.0, %v1018
      %1020 = vmatmul.bf16.gmra.mxu0 %v969
      %v1021 = vpop.f32.mrf.mxu0
      %v1022 = vadd.f32 0.0, %v1021
      %v1023 = vpop.f32.mrf.mxu0
      %v1024 = vadd.f32 0.0, %v1023
      %1025 = vmatmul.bf16.gmra.mxu0 %v972
      %v1026 = vpop.f32.mrf.mxu0
      %v1027 = vadd.f32 0.0, %v1026
      %v1028 = vpop.f32.mrf.mxu0
      %v1029 = vadd.f32 0.0, %v1028
      %1030 = vmatmul.bf16.gmra.mxu0 %v975
      %v1031 = vpop.f32.mrf.mxu0
      %v1032 = vadd.f32 0.0, %v1031
      %v1033 = vpop.f32.mrf.mxu0
      %v1034 = vadd.f32 0.0, %v1033
      %1035 = vmatmul.bf16.gmra.mxu0 %v978
      %v1036 = vpop.f32.mrf.mxu0
      %v1037 = vadd.f32 0.0, %v1036
      %v1038 = vpop.f32.mrf.mxu0
      %v1039 = vadd.f32 0.0, %v1038
      %1040 = vmatmul.bf16.gmra.mxu0 %v981
      %v1041 = vpop.f32.mrf.mxu0
      %v1042 = vadd.f32 0.0, %v1041
      %v1043 = vpop.f32.mrf.mxu0
      %v1044 = vadd.f32 0.0, %v1043
      %1045 = vmatmul.bf16.gmra.mxu0 %v984
      %v1046 = vpop.f32.mrf.mxu0
      %v1047 = vadd.f32 0.0, %v1046
      %v1048 = vpop.f32.mrf.mxu0
      %v1049 = vadd.f32 0.0, %v1048
      %1050 = vmatmul.bf16.gmra.mxu0 %v987
      %v1051 = vpop.f32.mrf.mxu0
      %v1052 = vadd.f32 0.0, %v1051
      %v1053 = vpop.f32.mrf.mxu0
      %v1054 = vadd.f32 0.0, %v1053
      %1055 = vmatmul.bf16.gmra.mxu0 %v990
      %v1056 = vpop.f32.mrf.mxu0
      %v1057 = vadd.f32 0.0, %v1056
      %v1058 = vpop.f32.mrf.mxu0
      %v1059 = vadd.f32 0.0, %v1058
      %1060 = vmatmul.bf16.gmra.mxu0 %v993
      %v1061 = vpop.f32.mrf.mxu0
      %v1062 = vadd.f32 0.0, %v1061
      %v1063 = vpop.f32.mrf.mxu0
      %v1064 = vadd.f32 0.0, %v1063
      %1065 = vmatmul.bf16.gmra.mxu0 %v996
      %v1066 = vpop.f32.mrf.mxu0
      %v1067 = vadd.f32 0.0, %v1066
      %v1068 = vpop.f32.mrf.mxu0
      %v1069 = vadd.f32 0.0, %v1068
      %1070 = vmatmul.bf16.gmra.mxu0 %v999
      %v1071 = vpop.f32.mrf.mxu0
      %v1072 = vadd.f32 0.0, %v1071
      %v1073 = vpop.f32.mrf.mxu0
      %v1074 = vadd.f32 0.0, %v1073
      %1075 = vmatmul.bf16.gmra.mxu0 %v1002
      %v1076 = vpop.f32.mrf.mxu0
      %v1077 = vadd.f32 0.0, %v1076
      %v1078 = vpop.f32.mrf.mxu0
      %v1079 = vadd.f32 0.0, %v1078
      %1080 = vmatmul.bf16.gmra.mxu0 %v1005
      %v1081 = vpop.f32.mrf.mxu0
      %v1082 = vadd.f32 0.0, %v1081
      %v1083 = vpop.f32.mrf.mxu0
      %v1084 = vadd.f32 0.0, %v1083
      %1085 = vdwg.mxu0
      %v1086 = vadd.f32 %v823, %v1017
      %v1087 = vadd.f32 %v824, %v1019
      %v1088 = vadd.f32 %v825, %v1022
      %v1089 = vadd.f32 %v826, %v1024
      %v1090 = vadd.f32 %v827, %v1027
      %v1091 = vadd.f32 %v828, %v1029
      %v1092 = vadd.f32 %v829, %v1032
      %v1093 = vadd.f32 %v830, %v1034
      %v1094 = vadd.f32 %v831, %v1037
      %v1095 = vadd.f32 %v832, %v1039
      %v1096 = vadd.f32 %v833, %v1042
      %v1097 = vadd.f32 %v834, %v1044
      %v1098 = vadd.f32 %v835, %v1047
      %v1099 = vadd.f32 %v836, %v1049
      %v1100 = vadd.f32 %v837, %v1052
      %v1101 = vadd.f32 %v838, %v1054
      %v1102 = vadd.f32 %v839, %v1057
      %v1103 = vadd.f32 %v840, %v1059
      %v1104 = vadd.f32 %v841, %v1062
      %v1105 = vadd.f32 %v842, %v1064
      %v1106 = vadd.f32 %v843, %v1067
      %v1107 = vadd.f32 %v844, %v1069
      %v1108 = vadd.f32 %v845, %v1072
      %v1109 = vadd.f32 %v846, %v1074
      %v1110 = vadd.f32 %v847, %v1077
      %v1111 = vadd.f32 %v848, %v1079
      %v1112 = vadd.f32 %v849, %v1082
      %v1113 = vadd.f32 %v850, %v1084
      %v1114 = vld [vmem:[%s165 + $0x8] sm:$0xf]
      %v1115 = vld [vmem:[%s165 + $0xc] sm:$0xf]
      %v1116 = vld [vmem:[%s165 + $0x10] sm:$0xf]
      %v1117 = vld [vmem:[%s165 + $0x14] sm:$0xf]
      %v1118 = vld [vmem:[%s165 + $0x18] sm:$0xf]
      %v1119 = vld [vmem:[%s165 + $0x1c] sm:$0xf]
      %v1120 = vld [vmem:[%s165 + $0x20] sm:$0xf]
      %v1121 = vld [vmem:[%s165 + $0x24] sm:$0xf]
      %v1122 = vld [vmem:[%s165 + $0x28] sm:$0xf]
      %v1123 = vld [vmem:[%s165 + $0x2c] sm:$0xf]
      %v1124 = vld [vmem:[%s165 + $0x30] sm:$0xf]
      %v1125 = vld [vmem:[%s165 + $0x34] sm:$0xf]
      %v1126 = vld [vmem:[%s165 + $0x38] sm:$0xf]
      %v1127 = vld [vmem:[%s165 + $0x3c] sm:$0xf]
      %v1128 = vld [vmem:[%s165 + $0x40] sm:$0xf]
      %v1129 = vld [vmem:[%s165 + $0x44] sm:$0xf]
      %v1130 = vld [vmem:[%s165 + $0x48] sm:$0xf]
      %v1131 = vld [vmem:[%s165 + $0x4c] sm:$0xf]
      %v1132 = vld [vmem:[%s165 + $0x50] sm:$0xf]
      %v1133 = vld [vmem:[%s165 + $0x54] sm:$0xf]
      %v1134 = vld [vmem:[%s165 + $0x58] sm:$0xf]
      %v1135 = vld [vmem:[%s165 + $0x5c] sm:$0xf]
      %v1136 = vld [vmem:[%s165 + $0x60] sm:$0xf]
      %v1137 = vld [vmem:[%s165 + $0x64] sm:$0xf]
      %v1138 = vld [vmem:[%s165 + $0x68] sm:$0xf]
      %v1139 = vld [vmem:[%s165 + $0x6c] sm:$0xf]
      %v1140 = vld [vmem:[%s165 + $0x70] sm:$0xf]
      %v1141 = vld [vmem:[%s165 + $0x74] sm:$0xf]
      %v1142 = vld [vmem:[%s165 + $0x78] sm:$0x1]
      %v1143 = vld [vmem:[%s1 + $0x40] sm:$0xf]
      %v1144 = vld [vmem:[%s1 + $0x44] sm:$0xf]
      %v1145 = vld [vmem:[%s1 + $0x48] sm:$0xf]
      %v1146 = vld [vmem:[%s1 + $0x4c] sm:$0xf]
      %v1176 = vunpack.c.l.b16 %v1114
      %v1177 = vunpack.c.l.b16 %v1115
      %v1178 = vunpack.c.l.b16 %v1116
      %v1179 = vunpack.c.l.b16 %v1117
      %v1180 = vunpack.c.l.b16 %v1118
      %v1181 = vunpack.c.l.b16 %v1119
      %v1182 = vunpack.c.l.b16 %v1120
      %v1183 = vunpack.c.l.b16 %v1121
      %v1184 = vunpack.c.l.b16 %v1122
      %v1185 = vunpack.c.l.b16 %v1123
      %v1186 = vunpack.c.l.b16 %v1124
      %v1187 = vunpack.c.l.b16 %v1125
      %v1188 = vunpack.c.l.b16 %v1126
      %v1189 = vunpack.c.l.b16 %v1127
      %v1190 = vunpack.c.l.b16 %v1128
      %v1191 = vunpack.c.l.b16 %v1129
      %v1192 = vunpack.c.l.b16 %v1130
      %v1193 = vunpack.c.l.b16 %v1131
      %v1194 = vunpack.c.l.b16 %v1132
      %v1195 = vunpack.c.l.b16 %v1133
      %v1196 = vunpack.c.l.b16 %v1134
      %v1197 = vunpack.c.l.b16 %v1135
      %v1198 = vunpack.c.l.b16 %v1136
      %v1199 = vunpack.c.l.b16 %v1137
      %v1200 = vunpack.c.l.b16 %v1138
      %v1201 = vunpack.c.l.b16 %v1139
      %v1202 = vunpack.c.l.b16 %v1140
      %v1203 = vunpack.c.l.b16 %v1141
      %v1204 = vunpack.c.l.b16 %v1142
      %v1205 = vpack.c.b16 %v1177, %v1176
      %v1206 = vpack.c.b16 %v1179, %v1178
      %v1207 = vpack.c.b16 %v1181, %v1180
      %v1208 = vpack.c.b16 %v1183, %v1182
      %v1209 = vpack.c.b16 %v1185, %v1184
      %v1210 = vpack.c.b16 %v1187, %v1186
      %v1211 = vpack.c.b16 %v1189, %v1188
      %v1212 = vpack.c.b16 %v1191, %v1190
      %v1213 = vpack.c.b16 %v1193, %v1192
      %v1214 = vpack.c.b16 %v1195, %v1194
      %v1215 = vpack.c.b16 %v1197, %v1196
      %v1216 = vpack.c.b16 %v1199, %v1198
      %v1217 = vpack.c.b16 %v1201, %v1200
      %v1218 = vpack.c.b16 %v1203, %v1202
      %v1219 = vpack.c.b16 %v1204, %v1204
      %v1221 = vshrl.u32 %v1205, 16
      %v1223 = vshll.u32 %v1205, 16
      %v1225 = vrot.slane %v1223, 1
      %v1226 = vor.u32 %v1221, %v1225
      %v1228 = vshll.u32 %v1206, 16
      %v1230 = vrot.slane %v1228, 1
      %v1231 = vsel %vm282, %v1226, %v1230
      %v1232 = vshrl.u32 %v1206, 16
      %v1234 = vor.u32 %v1232, %v1230
      %v1236 = vshll.u32 %v1207, 16
      %v1238 = vrot.slane %v1236, 1
      %v1239 = vsel %vm282, %v1234, %v1238
      %v1240 = vshrl.u32 %v1207, 16
      %v1242 = vor.u32 %v1240, %v1238
      %v1244 = vshll.u32 %v1208, 16
      %v1246 = vrot.slane %v1244, 1
      %v1247 = vsel %vm282, %v1242, %v1246
      %v1248 = vshrl.u32 %v1208, 16
      %v1250 = vor.u32 %v1248, %v1246
      %v1252 = vshll.u32 %v1209, 16
      %v1254 = vrot.slane %v1252, 1
      %v1255 = vsel %vm282, %v1250, %v1254
      %v1256 = vshrl.u32 %v1209, 16
      %v1258 = vor.u32 %v1256, %v1254
      %v1260 = vshll.u32 %v1210, 16
      %v1262 = vrot.slane %v1260, 1
      %v1263 = vsel %vm282, %v1258, %v1262
      %v1264 = vshrl.u32 %v1210, 16
      %v1266 = vor.u32 %v1264, %v1262
      %v1268 = vshll.u32 %v1211, 16
      %v1270 = vrot.slane %v1268, 1
      %v1271 = vsel %vm282, %v1266, %v1270
      %v1272 = vshrl.u32 %v1211, 16
      %v1274 = vor.u32 %v1272, %v1270
      %v1276 = vshll.u32 %v1212, 16
      %v1278 = vrot.slane %v1276, 1
      %v1279 = vsel %vm282, %v1274, %v1278
      %v1280 = vshrl.u32 %v1212, 16
      %v1282 = vor.u32 %v1280, %v1278
      %v1284 = vshll.u32 %v1213, 16
      %v1286 = vrot.slane %v1284, 1
      %v1287 = vsel %vm282, %v1282, %v1286
      %v1288 = vshrl.u32 %v1213, 16
      %v1290 = vor.u32 %v1288, %v1286
      %v1292 = vshll.u32 %v1214, 16
      %v1294 = vrot.slane %v1292, 1
      %v1295 = vsel %vm282, %v1290, %v1294
      %v1296 = vshrl.u32 %v1214, 16
      %v1298 = vor.u32 %v1296, %v1294
      %v1300 = vshll.u32 %v1215, 16
      %v1302 = vrot.slane %v1300, 1
      %v1303 = vsel %vm282, %v1298, %v1302
      %v1304 = vshrl.u32 %v1215, 16
      %v1306 = vor.u32 %v1304, %v1302
      %v1308 = vshll.u32 %v1216, 16
      %v1310 = vrot.slane %v1308, 1
      %v1311 = vsel %vm282, %v1306, %v1310
      %v1312 = vshrl.u32 %v1216, 16
      %v1314 = vor.u32 %v1312, %v1310
      %v1316 = vshll.u32 %v1217, 16
      %v1318 = vrot.slane %v1316, 1
      %v1319 = vsel %vm282, %v1314, %v1318
      %v1320 = vshrl.u32 %v1217, 16
      %v1322 = vor.u32 %v1320, %v1318
      %v1324 = vshll.u32 %v1218, 16
      %v1326 = vrot.slane %v1324, 1
      %v1327 = vsel %vm282, %v1322, %v1326
      %v1328 = vshrl.u32 %v1218, 16
      %v1330 = vor.u32 %v1328, %v1326
      %v1332 = vshll.u32 %v1219, 16
      %v1334 = vrot.slane %v1332, 1
      %v1335 = vsel %vm282, %v1330, %v1334
      %v1340 = vunpack.c.l.b16 %v1143
      %v1341 = vunpack.c.l.b16 %v1144
      %v1342 = vunpack.c.l.b16 %v1145
      %v1343 = vunpack.c.l.b16 %v1146
      %v1344 = vpack.c.b16 %v1341, %v1340
      %v1345 = vpack.c.b16 %v1343, %v1342
      %v1349 = vsel %vm411, %v1231, 0
      %v1352 = vsel %vm411, %v1239, 0
      %v1355 = vsel %vm411, %v1247, 0
      %v1358 = vsel %vm411, %v1255, 0
      %v1361 = vsel %vm411, %v1263, 0
      %v1364 = vsel %vm411, %v1271, 0
      %v1367 = vsel %vm411, %v1279, 0
      %v1370 = vsel %vm411, %v1287, 0
      %v1373 = vsel %vm411, %v1295, 0
      %v1376 = vsel %vm411, %v1303, 0
      %v1379 = vsel %vm411, %v1311, 0
      %v1382 = vsel %vm411, %v1319, 0
      %v1385 = vsel %vm411, %v1327, 0
      %v1388 = vsel %vm411, %v1335, 0
      %1390 = vmatpush.bf16.msra.mxu0 0
      %1391 = vmatpush.bf16.msra.mxu0 0
      %1392 = vmatpush.bf16.msra.mxu0 0
      %1393 = vmatpush.bf16.msra.mxu0 0
      %1394 = vmatpush.bf16.msra.mxu0 0
      %1395 = vmatpush.bf16.msra.mxu0 0
      %1396 = vmatpush.bf16.msra.mxu0 %v1345
      %1397 = vmatpush.bf16.msra.mxu0 %v1344
      %1398 = vmatmul.bf16.gmra.mxu0 %v1349
      %v1399 = vpop.f32.mrf.mxu0
      %v1400 = vadd.f32 0.0, %v1399
      %v1401 = vpop.f32.mrf.mxu0
      %v1402 = vadd.f32 0.0, %v1401
      %1403 = vmatmul.bf16.gmra.mxu0 %v1352
      %v1404 = vpop.f32.mrf.mxu0
      %v1405 = vadd.f32 0.0, %v1404
      %v1406 = vpop.f32.mrf.mxu0
      %v1407 = vadd.f32 0.0, %v1406
      %1408 = vmatmul.bf16.gmra.mxu0 %v1355
      %v1409 = vpop.f32.mrf.mxu0
      %v1410 = vadd.f32 0.0, %v1409
      %v1411 = vpop.f32.mrf.mxu0
      %v1412 = vadd.f32 0.0, %v1411
      %1413 = vmatmul.bf16.gmra.mxu0 %v1358
      %v1414 = vpop.f32.mrf.mxu0
      %v1415 = vadd.f32 0.0, %v1414
      %v1416 = vpop.f32.mrf.mxu0
      %v1417 = vadd.f32 0.0, %v1416
      %1418 = vmatmul.bf16.gmra.mxu0 %v1361
      %v1419 = vpop.f32.mrf.mxu0
      %v1420 = vadd.f32 0.0, %v1419
      %v1421 = vpop.f32.mrf.mxu0
      %v1422 = vadd.f32 0.0, %v1421
      %1423 = vmatmul.bf16.gmra.mxu0 %v1364
      %v1424 = vpop.f32.mrf.mxu0
      %v1425 = vadd.f32 0.0, %v1424
      %v1426 = vpop.f32.mrf.mxu0
      %v1427 = vadd.f32 0.0, %v1426
      %1428 = vmatmul.bf16.gmra.mxu0 %v1367
      %v1429 = vpop.f32.mrf.mxu0
      %v1430 = vadd.f32 0.0, %v1429
      %v1431 = vpop.f32.mrf.mxu0
      %v1432 = vadd.f32 0.0, %v1431
      %1433 = vmatmul.bf16.gmra.mxu0 %v1370
      %v1434 = vpop.f32.mrf.mxu0
      %v1435 = vadd.f32 0.0, %v1434
      %v1436 = vpop.f32.mrf.mxu0
      %v1437 = vadd.f32 0.0, %v1436
      %1438 = vmatmul.bf16.gmra.mxu0 %v1373
      %v1439 = vpop.f32.mrf.mxu0
      %v1440 = vadd.f32 0.0, %v1439
      %v1441 = vpop.f32.mrf.mxu0
      %v1442 = vadd.f32 0.0, %v1441
      %1443 = vmatmul.bf16.gmra.mxu0 %v1376
      %v1444 = vpop.f32.mrf.mxu0
      %v1445 = vadd.f32 0.0, %v1444
      %v1446 = vpop.f32.mrf.mxu0
      %v1447 = vadd.f32 0.0, %v1446
      %1448 = vmatmul.bf16.gmra.mxu0 %v1379
      %v1449 = vpop.f32.mrf.mxu0
      %v1450 = vadd.f32 0.0, %v1449
      %v1451 = vpop.f32.mrf.mxu0
      %v1452 = vadd.f32 0.0, %v1451
      %1453 = vmatmul.bf16.gmra.mxu0 %v1382
      %v1454 = vpop.f32.mrf.mxu0
      %v1455 = vadd.f32 0.0, %v1454
      %v1456 = vpop.f32.mrf.mxu0
      %v1457 = vadd.f32 0.0, %v1456
      %1458 = vmatmul.bf16.gmra.mxu0 %v1385
      %v1459 = vpop.f32.mrf.mxu0
      %v1460 = vadd.f32 0.0, %v1459
      %v1461 = vpop.f32.mrf.mxu0
      %v1462 = vadd.f32 0.0, %v1461
      %1463 = vmatmul.bf16.gmra.mxu0 %v1388
      %v1464 = vpop.f32.mrf.mxu0
      %v1465 = vadd.f32 0.0, %v1464
      %v1466 = vpop.f32.mrf.mxu0
      %v1467 = vadd.f32 0.0, %v1466
      %1468 = vdwg.mxu0
      %v1469 = vadd.f32 %v1086, %v1400
      %v1470 = vadd.f32 %v1087, %v1402
      %v1471 = vadd.f32 %v1088, %v1405
      %v1472 = vadd.f32 %v1089, %v1407
      %v1473 = vadd.f32 %v1090, %v1410
      %v1474 = vadd.f32 %v1091, %v1412
      %v1475 = vadd.f32 %v1092, %v1415
      %v1476 = vadd.f32 %v1093, %v1417
      %v1477 = vadd.f32 %v1094, %v1420
      %v1478 = vadd.f32 %v1095, %v1422
      %v1479 = vadd.f32 %v1096, %v1425
      %v1480 = vadd.f32 %v1097, %v1427
      %v1481 = vadd.f32 %v1098, %v1430
      %v1482 = vadd.f32 %v1099, %v1432
      %v1483 = vadd.f32 %v1100, %v1435
      %v1484 = vadd.f32 %v1101, %v1437
      %v1485 = vadd.f32 %v1102, %v1440
      %v1486 = vadd.f32 %v1103, %v1442
      %v1487 = vadd.f32 %v1104, %v1445
      %v1488 = vadd.f32 %v1105, %v1447
      %v1489 = vadd.f32 %v1106, %v1450
      %v1490 = vadd.f32 %v1107, %v1452
      %v1491 = vadd.f32 %v1108, %v1455
      %v1492 = vadd.f32 %v1109, %v1457
      %v1493 = vadd.f32 %v1110, %v1460
      %v1494 = vadd.f32 %v1111, %v1462
      %v1495 = vadd.f32 %v1112, %v1465
      %v1496 = vadd.f32 %v1113, %v1467
      %v1497 = vld [vmem:[%s165 + $0x8] sm:$0xe]
      %v1498 = vld [vmem:[%s1 + $0x50] sm:$0xf]
      %v1499 = vld [vmem:[%s1 + $0x54] sm:$0xf]
      %v1500 = vld [vmem:[%s1 + $0x58] sm:$0xf]
      %v1501 = vld [vmem:[%s1 + $0x5c] sm:$0xf]
      %v1503 = vunpack.c.l.b16 %v1497
      %v1504 = vpack.c.b16 %v1177, %v1503
      %v1505 = vrot.slane %v1504, 1
      %v1506 = vrot.slane %v1206, 1
      %v1507 = vsel %vm660, %v1505, %v1506
      %v1508 = vrot.slane %v1207, 1
      %v1509 = vsel %vm660, %v1506, %v1508
      %v1510 = vrot.slane %v1208, 1
      %v1511 = vsel %vm660, %v1508, %v1510
      %v1512 = vrot.slane %v1209, 1
      %v1513 = vsel %vm660, %v1510, %v1512
      %v1514 = vrot.slane %v1210, 1
      %v1515 = vsel %vm660, %v1512, %v1514
      %v1516 = vrot.slane %v1211, 1
      %v1517 = vsel %vm660, %v1514, %v1516
      %v1518 = vrot.slane %v1212, 1
      %v1519 = vsel %vm660, %v1516, %v1518
      %v1520 = vrot.slane %v1213, 1
      %v1521 = vsel %vm660, %v1518, %v1520
      %v1522 = vrot.slane %v1214, 1
      %v1523 = vsel %vm660, %v1520, %v1522
      %v1524 = vrot.slane %v1215, 1
      %v1525 = vsel %vm660, %v1522, %v1524
      %v1526 = vrot.slane %v1216, 1
      %v1527 = vsel %vm660, %v1524, %v1526
      %v1528 = vrot.slane %v1217, 1
      %v1529 = vsel %vm660, %v1526, %v1528
      %v1530 = vrot.slane %v1218, 1
      %v1531 = vsel %vm660, %v1528, %v1530
      %v1532 = vrot.slane %v1219, 1
      %v1533 = vsel %vm660, %v1530, %v1532
      %v1538 = vunpack.c.l.b16 %v1498
      %v1539 = vunpack.c.l.b16 %v1499
      %v1540 = vunpack.c.l.b16 %v1500
      %v1541 = vunpack.c.l.b16 %v1501
      %v1542 = vpack.c.b16 %v1539, %v1538
      %v1543 = vpack.c.b16 %v1541, %v1540
      %v1547 = vsel %vm411, %v1507, 0
      %v1550 = vsel %vm411, %v1509, 0
      %v1553 = vsel %vm411, %v1511, 0
      %v1556 = vsel %vm411, %v1513, 0
      %v1559 = vsel %vm411, %v1515, 0
      %v1562 = vsel %vm411, %v1517, 0
      %v1565 = vsel %vm411, %v1519, 0
      %v1568 = vsel %vm411, %v1521, 0
      %v1571 = vsel %vm411, %v1523, 0
      %v1574 = vsel %vm411, %v1525, 0
      %v1577 = vsel %vm411, %v1527, 0
      %v1580 = vsel %vm411, %v1529, 0
      %v1583 = vsel %vm411, %v1531, 0
      %v1586 = vsel %vm411, %v1533, 0
      %1588 = vmatpush.bf16.msra.mxu0 0
      %1589 = vmatpush.bf16.msra.mxu0 0
      %1590 = vmatpush.bf16.msra.mxu0 0
      %1591 = vmatpush.bf16.msra.mxu0 0
      %1592 = vmatpush.bf16.msra.mxu0 0
      %1593 = vmatpush.bf16.msra.mxu0 0
      %1594 = vmatpush.bf16.msra.mxu0 %v1543
      %1595 = vmatpush.bf16.msra.mxu0 %v1542
      %1596 = vmatmul.bf16.gmra.mxu0 %v1547
      %v1597 = vpop.f32.mrf.mxu0
      %v1598 = vadd.f32 0.0, %v1597
      %v1599 = vpop.f32.mrf.mxu0
      %v1600 = vadd.f32 0.0, %v1599
      %1601 = vmatmul.bf16.gmra.mxu0 %v1550
      %v1602 = vpop.f32.mrf.mxu0
      %v1603 = vadd.f32 0.0, %v1602
      %v1604 = vpop.f32.mrf.mxu0
      %v1605 = vadd.f32 0.0, %v1604
      %1606 = vmatmul.bf16.gmra.mxu0 %v1553
      %v1607 = vpop.f32.mrf.mxu0
      %v1608 = vadd.f32 0.0, %v1607
      %v1609 = vpop.f32.mrf.mxu0
      %v1610 = vadd.f32 0.0, %v1609
      %1611 = vmatmul.bf16.gmra.mxu0 %v1556
      %v1612 = vpop.f32.mrf.mxu0
      %v1613 = vadd.f32 0.0, %v1612
      %v1614 = vpop.f32.mrf.mxu0
      %v1615 = vadd.f32 0.0, %v1614
      %1616 = vmatmul.bf16.gmra.mxu0 %v1559
      %v1617 = vpop.f32.mrf.mxu0
      %v1618 = vadd.f32 0.0, %v1617
      %v1619 = vpop.f32.mrf.mxu0
      %v1620 = vadd.f32 0.0, %v1619
      %1621 = vmatmul.bf16.gmra.mxu0 %v1562
      %v1622 = vpop.f32.mrf.mxu0
      %v1623 = vadd.f32 0.0, %v1622
      %v1624 = vpop.f32.mrf.mxu0
      %v1625 = vadd.f32 0.0, %v1624
      %1626 = vmatmul.bf16.gmra.mxu0 %v1565
      %v1627 = vpop.f32.mrf.mxu0
      %v1628 = vadd.f32 0.0, %v1627
      %v1629 = vpop.f32.mrf.mxu0
      %v1630 = vadd.f32 0.0, %v1629
      %1631 = vmatmul.bf16.gmra.mxu0 %v1568
      %v1632 = vpop.f32.mrf.mxu0
      %v1633 = vadd.f32 0.0, %v1632
      %v1634 = vpop.f32.mrf.mxu0
      %v1635 = vadd.f32 0.0, %v1634
      %1636 = vmatmul.bf16.gmra.mxu0 %v1571
      %v1637 = vpop.f32.mrf.mxu0
      %v1638 = vadd.f32 0.0, %v1637
      %v1639 = vpop.f32.mrf.mxu0
      %v1640 = vadd.f32 0.0, %v1639
      %1641 = vmatmul.bf16.gmra.mxu0 %v1574
      %v1642 = vpop.f32.mrf.mxu0
      %v1643 = vadd.f32 0.0, %v1642
      %v1644 = vpop.f32.mrf.mxu0
      %v1645 = vadd.f32 0.0, %v1644
      %1646 = vmatmul.bf16.gmra.mxu0 %v1577
      %v1647 = vpop.f32.mrf.mxu0
      %v1648 = vadd.f32 0.0, %v1647
      %v1649 = vpop.f32.mrf.mxu0
      %v1650 = vadd.f32 0.0, %v1649
      %1651 = vmatmul.bf16.gmra.mxu0 %v1580
      %v1652 = vpop.f32.mrf.mxu0
      %v1653 = vadd.f32 0.0, %v1652
      %v1654 = vpop.f32.mrf.mxu0
      %v1655 = vadd.f32 0.0, %v1654
      %1656 = vmatmul.bf16.gmra.mxu0 %v1583
      %v1657 = vpop.f32.mrf.mxu0
      %v1658 = vadd.f32 0.0, %v1657
      %v1659 = vpop.f32.mrf.mxu0
      %v1660 = vadd.f32 0.0, %v1659
      %1661 = vmatmul.bf16.gmra.mxu0 %v1586
      %v1662 = vpop.f32.mrf.mxu0
      %v1663 = vadd.f32 0.0, %v1662
      %v1664 = vpop.f32.mrf.mxu0
      %v1665 = vadd.f32 0.0, %v1664
      %1666 = vdwg.mxu0
      %v1667 = vadd.f32 %v1469, %v1598
      %v1668 = vadd.f32 %v1470, %v1600
      %v1669 = vadd.f32 %v1471, %v1603
      %v1670 = vadd.f32 %v1472, %v1605
      %v1671 = vadd.f32 %v1473, %v1608
      %v1672 = vadd.f32 %v1474, %v1610
      %v1673 = vadd.f32 %v1475, %v1613
      %v1674 = vadd.f32 %v1476, %v1615
      %v1675 = vadd.f32 %v1477, %v1618
      %v1676 = vadd.f32 %v1478, %v1620
      %v1677 = vadd.f32 %v1479, %v1623
      %v1678 = vadd.f32 %v1480, %v1625
      %v1679 = vadd.f32 %v1481, %v1628
      %v1680 = vadd.f32 %v1482, %v1630
      %v1681 = vadd.f32 %v1483, %v1633
      %v1682 = vadd.f32 %v1484, %v1635
      %v1683 = vadd.f32 %v1485, %v1638
      %v1684 = vadd.f32 %v1486, %v1640
      %v1685 = vadd.f32 %v1487, %v1643
      %v1686 = vadd.f32 %v1488, %v1645
      %v1687 = vadd.f32 %v1489, %v1648
      %v1688 = vadd.f32 %v1490, %v1650
      %v1689 = vadd.f32 %v1491, %v1653
      %v1690 = vadd.f32 %v1492, %v1655
      %v1691 = vadd.f32 %v1493, %v1658
      %v1692 = vadd.f32 %v1494, %v1660
      %v1693 = vadd.f32 %v1495, %v1663
      %v1694 = vadd.f32 %v1496, %v1665
      %v1695 = vld [vmem:[%s165 + $0x10] sm:$0xf]
      %v1696 = vld [vmem:[%s165 + $0x14] sm:$0xf]
      %v1697 = vld [vmem:[%s165 + $0x18] sm:$0xf]
      %v1698 = vld [vmem:[%s165 + $0x1c] sm:$0xf]
      %v1699 = vld [vmem:[%s165 + $0x20] sm:$0xf]
      %v1700 = vld [vmem:[%s165 + $0x24] sm:$0xf]
      %v1701 = vld [vmem:[%s165 + $0x28] sm:$0xf]
      %v1702 = vld [vmem:[%s165 + $0x2c] sm:$0xf]
      %v1703 = vld [vmem:[%s165 + $0x30] sm:$0xf]
      %v1704 = vld [vmem:[%s165 + $0x34] sm:$0xf]
      %v1705 = vld [vmem:[%s165 + $0x38] sm:$0xf]
      %v1706 = vld [vmem:[%s165 + $0x3c] sm:$0xf]
      %v1707 = vld [vmem:[%s165 + $0x40] sm:$0xf]
      %v1708 = vld [vmem:[%s165 + $0x44] sm:$0xf]
      %v1709 = vld [vmem:[%s165 + $0x48] sm:$0xf]
      %v1710 = vld [vmem:[%s165 + $0x4c] sm:$0xf]
      %v1711 = vld [vmem:[%s165 + $0x50] sm:$0xf]
      %v1712 = vld [vmem:[%s165 + $0x54] sm:$0xf]
      %v1713 = vld [vmem:[%s165 + $0x58] sm:$0xf]
      %v1714 = vld [vmem:[%s165 + $0x5c] sm:$0xf]
      %v1715 = vld [vmem:[%s165 + $0x60] sm:$0xf]
      %v1716 = vld [vmem:[%s165 + $0x64] sm:$0xf]
      %v1717 = vld [vmem:[%s165 + $0x68] sm:$0xf]
      %v1718 = vld [vmem:[%s165 + $0x6c] sm:$0xf]
      %v1719 = vld [vmem:[%s165 + $0x70] sm:$0xf]
      %v1720 = vld [vmem:[%s165 + $0x74] sm:$0xf]
      %v1721 = vld [vmem:[%s165 + $0x78] sm:$0xf]
      %v1722 = vld [vmem:[%s165 + $0x7c] sm:$0xf]
      %v1723 = vld [vmem:[%s1 + $0x60] sm:$0xf]
      %v1724 = vld [vmem:[%s1 + $0x64] sm:$0xf]
      %v1725 = vld [vmem:[%s1 + $0x68] sm:$0xf]
      %v1726 = vld [vmem:[%s1 + $0x6c] sm:$0xf]
      %v1755 = vunpack.c.l.b16 %v1695
      %v1756 = vunpack.c.l.b16 %v1696
      %v1757 = vunpack.c.l.b16 %v1697
      %v1758 = vunpack.c.l.b16 %v1698
      %v1759 = vunpack.c.l.b16 %v1699
      %v1760 = vunpack.c.l.b16 %v1700
      %v1761 = vunpack.c.l.b16 %v1701
      %v1762 = vunpack.c.l.b16 %v1702
      %v1763 = vunpack.c.l.b16 %v1703
      %v1764 = vunpack.c.l.b16 %v1704
      %v1765 = vunpack.c.l.b16 %v1705
      %v1766 = vunpack.c.l.b16 %v1706
      %v1767 = vunpack.c.l.b16 %v1707
      %v1768 = vunpack.c.l.b16 %v1708
      %v1769 = vunpack.c.l.b16 %v1709
      %v1770 = vunpack.c.l.b16 %v1710
      %v1771 = vunpack.c.l.b16 %v1711
      %v1772 = vunpack.c.l.b16 %v1712
      %v1773 = vunpack.c.l.b16 %v1713
      %v1774 = vunpack.c.l.b16 %v1714
      %v1775 = vunpack.c.l.b16 %v1715
      %v1776 = vunpack.c.l.b16 %v1716
      %v1777 = vunpack.c.l.b16 %v1717
      %v1778 = vunpack.c.l.b16 %v1718
      %v1779 = vunpack.c.l.b16 %v1719
      %v1780 = vunpack.c.l.b16 %v1720
      %v1781 = vunpack.c.l.b16 %v1721
      %v1782 = vunpack.c.l.b16 %v1722
      %v1783 = vpack.c.b16 %v1756, %v1755
      %v1784 = vpack.c.b16 %v1758, %v1757
      %v1785 = vpack.c.b16 %v1760, %v1759
      %v1786 = vpack.c.b16 %v1762, %v1761
      %v1787 = vpack.c.b16 %v1764, %v1763
      %v1788 = vpack.c.b16 %v1766, %v1765
      %v1789 = vpack.c.b16 %v1768, %v1767
      %v1790 = vpack.c.b16 %v1770, %v1769
      %v1791 = vpack.c.b16 %v1772, %v1771
      %v1792 = vpack.c.b16 %v1774, %v1773
      %v1793 = vpack.c.b16 %v1776, %v1775
      %v1794 = vpack.c.b16 %v1778, %v1777
      %v1795 = vpack.c.b16 %v1780, %v1779
      %v1796 = vpack.c.b16 %v1782, %v1781
      %v1801 = vunpack.c.l.b16 %v1723
      %v1802 = vunpack.c.l.b16 %v1724
      %v1803 = vunpack.c.l.b16 %v1725
      %v1804 = vunpack.c.l.b16 %v1726
      %v1805 = vpack.c.b16 %v1802, %v1801
      %v1806 = vpack.c.b16 %v1804, %v1803
      %v1810 = vsel %vm411, %v1783, 0
      %v1813 = vsel %vm411, %v1784, 0
      %v1816 = vsel %vm411, %v1785, 0
      %v1819 = vsel %vm411, %v1786, 0
      %v1822 = vsel %vm411, %v1787, 0
      %v1825 = vsel %vm411, %v1788, 0
      %v1828 = vsel %vm411, %v1789, 0
      %v1831 = vsel %vm411, %v1790, 0
      %v1834 = vsel %vm411, %v1791, 0
      %v1837 = vsel %vm411, %v1792, 0
      %v1840 = vsel %vm411, %v1793, 0
      %v1843 = vsel %vm411, %v1794, 0
      %v1846 = vsel %vm411, %v1795, 0
      %v1849 = vsel %vm411, %v1796, 0
      %1851 = vmatpush.bf16.msra.mxu0 0
      %1852 = vmatpush.bf16.msra.mxu0 0
      %1853 = vmatpush.bf16.msra.mxu0 0
      %1854 = vmatpush.bf16.msra.mxu0 0
      %1855 = vmatpush.bf16.msra.mxu0 0
      %1856 = vmatpush.bf16.msra.mxu0 0
      %1857 = vmatpush.bf16.msra.mxu0 %v1806
      %1858 = vmatpush.bf16.msra.mxu0 %v1805
      %1859 = vmatmul.bf16.gmra.mxu0 %v1810
      %v1860 = vpop.f32.mrf.mxu0
      %v1861 = vadd.f32 0.0, %v1860
      %v1862 = vpop.f32.mrf.mxu0
      %v1863 = vadd.f32 0.0, %v1862
      %1864 = vmatmul.bf16.gmra.mxu0 %v1813
      %v1865 = vpop.f32.mrf.mxu0
      %v1866 = vadd.f32 0.0, %v1865
      %v1867 = vpop.f32.mrf.mxu0
      %v1868 = vadd.f32 0.0, %v1867
      %1869 = vmatmul.bf16.gmra.mxu0 %v1816
      %v1870 = vpop.f32.mrf.mxu0
      %v1871 = vadd.f32 0.0, %v1870
      %v1872 = vpop.f32.mrf.mxu0
      %v1873 = vadd.f32 0.0, %v1872
      %1874 = vmatmul.bf16.gmra.mxu0 %v1819
      %v1875 = vpop.f32.mrf.mxu0
      %v1876 = vadd.f32 0.0, %v1875
      %v1877 = vpop.f32.mrf.mxu0
      %v1878 = vadd.f32 0.0, %v1877
      %1879 = vmatmul.bf16.gmra.mxu0 %v1822
      %v1880 = vpop.f32.mrf.mxu0
      %v1881 = vadd.f32 0.0, %v1880
      %v1882 = vpop.f32.mrf.mxu0
      %v1883 = vadd.f32 0.0, %v1882
      %1884 = vmatmul.bf16.gmra.mxu0 %v1825
      %v1885 = vpop.f32.mrf.mxu0
      %v1886 = vadd.f32 0.0, %v1885
      %v1887 = vpop.f32.mrf.mxu0
      %v1888 = vadd.f32 0.0, %v1887
      %1889 = vmatmul.bf16.gmra.mxu0 %v1828
      %v1890 = vpop.f32.mrf.mxu0
      %v1891 = vadd.f32 0.0, %v1890
      %v1892 = vpop.f32.mrf.mxu0
      %v1893 = vadd.f32 0.0, %v1892
      %1894 = vmatmul.bf16.gmra.mxu0 %v1831
      %v1895 = vpop.f32.mrf.mxu0
      %v1896 = vadd.f32 0.0, %v1895
      %v1897 = vpop.f32.mrf.mxu0
      %v1898 = vadd.f32 0.0, %v1897
      %1899 = vmatmul.bf16.gmra.mxu0 %v1834
      %v1900 = vpop.f32.mrf.mxu0
      %v1901 = vadd.f32 0.0, %v1900
      %v1902 = vpop.f32.mrf.mxu0
      %v1903 = vadd.f32 0.0, %v1902
      %1904 = vmatmul.bf16.gmra.mxu0 %v1837
      %v1905 = vpop.f32.mrf.mxu0
      %v1906 = vadd.f32 0.0, %v1905
      %v1907 = vpop.f32.mrf.mxu0
      %v1908 = vadd.f32 0.0, %v1907
      %1909 = vmatmul.bf16.gmra.mxu0 %v1840
      %v1910 = vpop.f32.mrf.mxu0
      %v1911 = vadd.f32 0.0, %v1910
      %v1912 = vpop.f32.mrf.mxu0
      %v1913 = vadd.f32 0.0, %v1912
      %1914 = vmatmul.bf16.gmra.mxu0 %v1843
      %v1915 = vpop.f32.mrf.mxu0
      %v1916 = vadd.f32 0.0, %v1915
      %v1917 = vpop.f32.mrf.mxu0
      %v1918 = vadd.f32 0.0, %v1917
      %1919 = vmatmul.bf16.gmra.mxu0 %v1846
      %v1920 = vpop.f32.mrf.mxu0
      %v1921 = vadd.f32 0.0, %v1920
      %v1922 = vpop.f32.mrf.mxu0
      %v1923 = vadd.f32 0.0, %v1922
      %1924 = vmatmul.bf16.gmra.mxu0 %v1849
      %v1925 = vpop.f32.mrf.mxu0
      %v1926 = vadd.f32 0.0, %v1925
      %v1927 = vpop.f32.mrf.mxu0
      %v1928 = vadd.f32 0.0, %v1927
      %1929 = vdwg.mxu0
      %v1930 = vadd.f32 %v1667, %v1861
      %v1931 = vadd.f32 %v1668, %v1863
      %v1932 = vadd.f32 %v1669, %v1866
      %v1933 = vadd.f32 %v1670, %v1868
      %v1934 = vadd.f32 %v1671, %v1871
      %v1935 = vadd.f32 %v1672, %v1873
      %v1936 = vadd.f32 %v1673, %v1876
      %v1937 = vadd.f32 %v1674, %v1878
      %v1938 = vadd.f32 %v1675, %v1881
      %v1939 = vadd.f32 %v1676, %v1883
      %v1940 = vadd.f32 %v1677, %v1886
      %v1941 = vadd.f32 %v1678, %v1888
      %v1942 = vadd.f32 %v1679, %v1891
      %v1943 = vadd.f32 %v1680, %v1893
      %v1944 = vadd.f32 %v1681, %v1896
      %v1945 = vadd.f32 %v1682, %v1898
      %v1946 = vadd.f32 %v1683, %v1901
      %v1947 = vadd.f32 %v1684, %v1903
      %v1948 = vadd.f32 %v1685, %v1906
      %v1949 = vadd.f32 %v1686, %v1908
      %v1950 = vadd.f32 %v1687, %v1911
      %v1951 = vadd.f32 %v1688, %v1913
      %v1952 = vadd.f32 %v1689, %v1916
      %v1953 = vadd.f32 %v1690, %v1918
      %v1954 = vadd.f32 %v1691, %v1921
      %v1955 = vadd.f32 %v1692, %v1923
      %v1956 = vadd.f32 %v1693, %v1926
      %v1957 = vadd.f32 %v1694, %v1928
      %v1958 = vld [vmem:[%s165 + $0x10] sm:$0xf]
      %v1959 = vld [vmem:[%s165 + $0x14] sm:$0xf]
      %v1960 = vld [vmem:[%s165 + $0x18] sm:$0xf]
      %v1961 = vld [vmem:[%s165 + $0x1c] sm:$0xf]
      %v1962 = vld [vmem:[%s165 + $0x20] sm:$0xf]
      %v1963 = vld [vmem:[%s165 + $0x24] sm:$0xf]
      %v1964 = vld [vmem:[%s165 + $0x28] sm:$0xf]
      %v1965 = vld [vmem:[%s165 + $0x2c] sm:$0xf]
      %v1966 = vld [vmem:[%s165 + $0x30] sm:$0xf]
      %v1967 = vld [vmem:[%s165 + $0x34] sm:$0xf]
      %v1968 = vld [vmem:[%s165 + $0x38] sm:$0xf]
      %v1969 = vld [vmem:[%s165 + $0x3c] sm:$0xf]
      %v1970 = vld [vmem:[%s165 + $0x40] sm:$0xf]
      %v1971 = vld [vmem:[%s165 + $0x44] sm:$0xf]
      %v1972 = vld [vmem:[%s165 + $0x48] sm:$0xf]
      %v1973 = vld [vmem:[%s165 + $0x4c] sm:$0xf]
      %v1974 = vld [vmem:[%s165 + $0x50] sm:$0xf]
      %v1975 = vld [vmem:[%s165 + $0x54] sm:$0xf]
      %v1976 = vld [vmem:[%s165 + $0x58] sm:$0xf]
      %v1977 = vld [vmem:[%s165 + $0x5c] sm:$0xf]
      %v1978 = vld [vmem:[%s165 + $0x60] sm:$0xf]
      %v1979 = vld [vmem:[%s165 + $0x64] sm:$0xf]
      %v1980 = vld [vmem:[%s165 + $0x68] sm:$0xf]
      %v1981 = vld [vmem:[%s165 + $0x6c] sm:$0xf]
      %v1982 = vld [vmem:[%s165 + $0x70] sm:$0xf]
      %v1983 = vld [vmem:[%s165 + $0x74] sm:$0xf]
      %v1984 = vld [vmem:[%s165 + $0x78] sm:$0xf]
      %v1985 = vld [vmem:[%s165 + $0x7c] sm:$0xf]
      %v1986 = vld [vmem:[%s165 + $0x80] sm:$0x1]
      %v1987 = vld [vmem:[%s1 + $0x70] sm:$0xf]
      %v1988 = vld [vmem:[%s1 + $0x74] sm:$0xf]
      %v1989 = vld [vmem:[%s1 + $0x78] sm:$0xf]
      %v1990 = vld [vmem:[%s1 + $0x7c] sm:$0xf]
      %v2020 = vunpack.c.l.b16 %v1958
      %v2021 = vunpack.c.l.b16 %v1959
      %v2022 = vunpack.c.l.b16 %v1960
      %v2023 = vunpack.c.l.b16 %v1961
      %v2024 = vunpack.c.l.b16 %v1962
      %v2025 = vunpack.c.l.b16 %v1963
      %v2026 = vunpack.c.l.b16 %v1964
      %v2027 = vunpack.c.l.b16 %v1965
      %v2028 = vunpack.c.l.b16 %v1966
      %v2029 = vunpack.c.l.b16 %v1967
      %v2030 = vunpack.c.l.b16 %v1968
      %v2031 = vunpack.c.l.b16 %v1969
      %v2032 = vunpack.c.l.b16 %v1970
      %v2033 = vunpack.c.l.b16 %v1971
      %v2034 = vunpack.c.l.b16 %v1972
      %v2035 = vunpack.c.l.b16 %v1973
      %v2036 = vunpack.c.l.b16 %v1974
      %v2037 = vunpack.c.l.b16 %v1975
      %v2038 = vunpack.c.l.b16 %v1976
      %v2039 = vunpack.c.l.b16 %v1977
      %v2040 = vunpack.c.l.b16 %v1978
      %v2041 = vunpack.c.l.b16 %v1979
      %v2042 = vunpack.c.l.b16 %v1980
      %v2043 = vunpack.c.l.b16 %v1981
      %v2044 = vunpack.c.l.b16 %v1982
      %v2045 = vunpack.c.l.b16 %v1983
      %v2046 = vunpack.c.l.b16 %v1984
      %v2047 = vunpack.c.l.b16 %v1985
      %v2048 = vunpack.c.l.b16 %v1986
      %v2049 = vpack.c.b16 %v2021, %v2020
      %v2050 = vpack.c.b16 %v2023, %v2022
      %v2051 = vpack.c.b16 %v2025, %v2024
      %v2052 = vpack.c.b16 %v2027, %v2026
      %v2053 = vpack.c.b16 %v2029, %v2028
      %v2054 = vpack.c.b16 %v2031, %v2030
      %v2055 = vpack.c.b16 %v2033, %v2032
      %v2056 = vpack.c.b16 %v2035, %v2034
      %v2057 = vpack.c.b16 %v2037, %v2036
      %v2058 = vpack.c.b16 %v2039, %v2038
      %v2059 = vpack.c.b16 %v2041, %v2040
      %v2060 = vpack.c.b16 %v2043, %v2042
      %v2061 = vpack.c.b16 %v2045, %v2044
      %v2062 = vpack.c.b16 %v2047, %v2046
      %v2063 = vpack.c.b16 %v2048, %v2048
      %v2065 = vshrl.u32 %v2049, 16
      %v2067 = vshll.u32 %v2049, 16
      %v2069 = vrot.slane %v2067, 1
      %v2070 = vor.u32 %v2065, %v2069
      %v2072 = vshll.u32 %v2050, 16
      %v2074 = vrot.slane %v2072, 1
      %v2075 = vsel %vm282, %v2070, %v2074
      %v2076 = vshrl.u32 %v2050, 16
      %v2078 = vor.u32 %v2076, %v2074
      %v2080 = vshll.u32 %v2051, 16
      %v2082 = vrot.slane %v2080, 1
      %v2083 = vsel %vm282, %v2078, %v2082
      %v2084 = vshrl.u32 %v2051, 16
      %v2086 = vor.u32 %v2084, %v2082
      %v2088 = vshll.u32 %v2052, 16
      %v2090 = vrot.slane %v2088, 1
      %v2091 = vsel %vm282, %v2086, %v2090
      %v2092 = vshrl.u32 %v2052, 16
      %v2094 = vor.u32 %v2092, %v2090
      %v2096 = vshll.u32 %v2053, 16
      %v2098 = vrot.slane %v2096, 1
      %v2099 = vsel %vm282, %v2094, %v2098
      %v2100 = vshrl.u32 %v2053, 16
      %v2102 = vor.u32 %v2100, %v2098
      %v2104 = vshll.u32 %v2054, 16
      %v2106 = vrot.slane %v2104, 1
      %v2107 = vsel %vm282, %v2102, %v2106
      %v2108 = vshrl.u32 %v2054, 16
      %v2110 = vor.u32 %v2108, %v2106
      %v2112 = vshll.u32 %v2055, 16
      %v2114 = vrot.slane %v2112, 1
      %v2115 = vsel %vm282, %v2110, %v2114
      %v2116 = vshrl.u32 %v2055, 16
      %v2118 = vor.u32 %v2116, %v2114
      %v2120 = vshll.u32 %v2056, 16
      %v2122 = vrot.slane %v2120, 1
      %v2123 = vsel %vm282, %v2118, %v2122
      %v2124 = vshrl.u32 %v2056, 16
      %v2126 = vor.u32 %v2124, %v2122
      %v2128 = vshll.u32 %v2057, 16
      %v2130 = vrot.slane %v2128, 1
      %v2131 = vsel %vm282, %v2126, %v2130
      %v2132 = vshrl.u32 %v2057, 16
      %v2134 = vor.u32 %v2132, %v2130
      %v2136 = vshll.u32 %v2058, 16
      %v2138 = vrot.slane %v2136, 1
      %v2139 = vsel %vm282, %v2134, %v2138
      %v2140 = vshrl.u32 %v2058, 16
      %v2142 = vor.u32 %v2140, %v2138
      %v2144 = vshll.u32 %v2059, 16
      %v2146 = vrot.slane %v2144, 1
      %v2147 = vsel %vm282, %v2142, %v2146
      %v2148 = vshrl.u32 %v2059, 16
      %v2150 = vor.u32 %v2148, %v2146
      %v2152 = vshll.u32 %v2060, 16
      %v2154 = vrot.slane %v2152, 1
      %v2155 = vsel %vm282, %v2150, %v2154
      %v2156 = vshrl.u32 %v2060, 16
      %v2158 = vor.u32 %v2156, %v2154
      %v2160 = vshll.u32 %v2061, 16
      %v2162 = vrot.slane %v2160, 1
      %v2163 = vsel %vm282, %v2158, %v2162
      %v2164 = vshrl.u32 %v2061, 16
      %v2166 = vor.u32 %v2164, %v2162
      %v2168 = vshll.u32 %v2062, 16
      %v2170 = vrot.slane %v2168, 1
      %v2171 = vsel %vm282, %v2166, %v2170
      %v2172 = vshrl.u32 %v2062, 16
      %v2174 = vor.u32 %v2172, %v2170
      %v2176 = vshll.u32 %v2063, 16
      %v2178 = vrot.slane %v2176, 1
      %v2179 = vsel %vm282, %v2174, %v2178
      %v2184 = vunpack.c.l.b16 %v1987
      %v2185 = vunpack.c.l.b16 %v1988
      %v2186 = vunpack.c.l.b16 %v1989
      %v2187 = vunpack.c.l.b16 %v1990
      %v2188 = vpack.c.b16 %v2185, %v2184
      %v2189 = vpack.c.b16 %v2187, %v2186
      %v2193 = vsel %vm411, %v2075, 0
      %v2196 = vsel %vm411, %v2083, 0
      %v2199 = vsel %vm411, %v2091, 0
      %v2202 = vsel %vm411, %v2099, 0
      %v2205 = vsel %vm411, %v2107, 0
      %v2208 = vsel %vm411, %v2115, 0
      %v2211 = vsel %vm411, %v2123, 0
      %v2214 = vsel %vm411, %v2131, 0
      %v2217 = vsel %vm411, %v2139, 0
      %v2220 = vsel %vm411, %v2147, 0
      %v2223 = vsel %vm411, %v2155, 0
      %v2226 = vsel %vm411, %v2163, 0
      %v2229 = vsel %vm411, %v2171, 0
      %v2232 = vsel %vm411, %v2179, 0
      %2234 = vmatpush.bf16.msra.mxu0 0
      %2235 = vmatpush.bf16.msra.mxu0 0
      %2236 = vmatpush.bf16.msra.mxu0 0
      %2237 = vmatpush.bf16.msra.mxu0 0
      %2238 = vmatpush.bf16.msra.mxu0 0
      %2239 = vmatpush.bf16.msra.mxu0 0
      %2240 = vmatpush.bf16.msra.mxu0 %v2189
      %2241 = vmatpush.bf16.msra.mxu0 %v2188
      %2242 = vmatmul.bf16.gmra.mxu0 %v2193
      %v2243 = vpop.f32.mrf.mxu0
      %v2244 = vadd.f32 0.0, %v2243
      %v2245 = vpop.f32.mrf.mxu0
      %v2246 = vadd.f32 0.0, %v2245
      %2247 = vmatmul.bf16.gmra.mxu0 %v2196
      %v2248 = vpop.f32.mrf.mxu0
      %v2249 = vadd.f32 0.0, %v2248
      %v2250 = vpop.f32.mrf.mxu0
      %v2251 = vadd.f32 0.0, %v2250
      %2252 = vmatmul.bf16.gmra.mxu0 %v2199
      %v2253 = vpop.f32.mrf.mxu0
      %v2254 = vadd.f32 0.0, %v2253
      %v2255 = vpop.f32.mrf.mxu0
      %v2256 = vadd.f32 0.0, %v2255
      %2257 = vmatmul.bf16.gmra.mxu0 %v2202
      %v2258 = vpop.f32.mrf.mxu0
      %v2259 = vadd.f32 0.0, %v2258
      %v2260 = vpop.f32.mrf.mxu0
      %v2261 = vadd.f32 0.0, %v2260
      %2262 = vmatmul.bf16.gmra.mxu0 %v2205
      %v2263 = vpop.f32.mrf.mxu0
      %v2264 = vadd.f32 0.0, %v2263
      %v2265 = vpop.f32.mrf.mxu0
      %v2266 = vadd.f32 0.0, %v2265
      %2267 = vmatmul.bf16.gmra.mxu0 %v2208
      %v2268 = vpop.f32.mrf.mxu0
      %v2269 = vadd.f32 0.0, %v2268
      %v2270 = vpop.f32.mrf.mxu0
      %v2271 = vadd.f32 0.0, %v2270
      %2272 = vmatmul.bf16.gmra.mxu0 %v2211
      %v2273 = vpop.f32.mrf.mxu0
      %v2274 = vadd.f32 0.0, %v2273
      %v2275 = vpop.f32.mrf.mxu0
      %v2276 = vadd.f32 0.0, %v2275
      %2277 = vmatmul.bf16.gmra.mxu0 %v2214
      %v2278 = vpop.f32.mrf.mxu0
      %v2279 = vadd.f32 0.0, %v2278
      %v2280 = vpop.f32.mrf.mxu0
      %v2281 = vadd.f32 0.0, %v2280
      %2282 = vmatmul.bf16.gmra.mxu0 %v2217
      %v2283 = vpop.f32.mrf.mxu0
      %v2284 = vadd.f32 0.0, %v2283
      %v2285 = vpop.f32.mrf.mxu0
      %v2286 = vadd.f32 0.0, %v2285
      %2287 = vmatmul.bf16.gmra.mxu0 %v2220
      %v2288 = vpop.f32.mrf.mxu0
      %v2289 = vadd.f32 0.0, %v2288
      %v2290 = vpop.f32.mrf.mxu0
      %v2291 = vadd.f32 0.0, %v2290
      %2292 = vmatmul.bf16.gmra.mxu0 %v2223
      %v2293 = vpop.f32.mrf.mxu0
      %v2294 = vadd.f32 0.0, %v2293
      %v2295 = vpop.f32.mrf.mxu0
      %v2296 = vadd.f32 0.0, %v2295
      %2297 = vmatmul.bf16.gmra.mxu0 %v2226
      %v2298 = vpop.f32.mrf.mxu0
      %v2299 = vadd.f32 0.0, %v2298
      %v2300 = vpop.f32.mrf.mxu0
      %v2301 = vadd.f32 0.0, %v2300
      %2302 = vmatmul.bf16.gmra.mxu0 %v2229
      %v2303 = vpop.f32.mrf.mxu0
      %v2304 = vadd.f32 0.0, %v2303
      %v2305 = vpop.f32.mrf.mxu0
      %v2306 = vadd.f32 0.0, %v2305
      %2307 = vmatmul.bf16.gmra.mxu0 %v2232
      %v2308 = vpop.f32.mrf.mxu0
      %v2309 = vadd.f32 0.0, %v2308
      %v2310 = vpop.f32.mrf.mxu0
      %v2311 = vadd.f32 0.0, %v2310
      %2312 = vdwg.mxu0
      %v2313 = vadd.f32 %v1930, %v2244
      %v2314 = vadd.f32 %v1931, %v2246
      %v2315 = vadd.f32 %v1932, %v2249
      %v2316 = vadd.f32 %v1933, %v2251
      %v2317 = vadd.f32 %v1934, %v2254
      %v2318 = vadd.f32 %v1935, %v2256
      %v2319 = vadd.f32 %v1936, %v2259
      %v2320 = vadd.f32 %v1937, %v2261
      %v2321 = vadd.f32 %v1938, %v2264
      %v2322 = vadd.f32 %v1939, %v2266
      %v2323 = vadd.f32 %v1940, %v2269
      %v2324 = vadd.f32 %v1941, %v2271
      %v2325 = vadd.f32 %v1942, %v2274
      %v2326 = vadd.f32 %v1943, %v2276
      %v2327 = vadd.f32 %v1944, %v2279
      %v2328 = vadd.f32 %v1945, %v2281
      %v2329 = vadd.f32 %v1946, %v2284
      %v2330 = vadd.f32 %v1947, %v2286
      %v2331 = vadd.f32 %v1948, %v2289
      %v2332 = vadd.f32 %v1949, %v2291
      %v2333 = vadd.f32 %v1950, %v2294
      %v2334 = vadd.f32 %v1951, %v2296
      %v2335 = vadd.f32 %v1952, %v2299
      %v2336 = vadd.f32 %v1953, %v2301
      %v2337 = vadd.f32 %v1954, %v2304
      %v2338 = vadd.f32 %v1955, %v2306
      %v2339 = vadd.f32 %v1956, %v2309
      %v2340 = vadd.f32 %v1957, %v2311
      %v2341 = vld [vmem:[%s165 + $0x10] sm:$0xe]
      %v2342 = vld [vmem:[%s1 + $0x80] sm:$0xf]
      %v2343 = vld [vmem:[%s1 + $0x84] sm:$0xf]
      %v2344 = vld [vmem:[%s1 + $0x88] sm:$0xf]
      %v2345 = vld [vmem:[%s1 + $0x8c] sm:$0xf]
      %v2347 = vunpack.c.l.b16 %v2341
      %v2348 = vpack.c.b16 %v2021, %v2347
      %v2349 = vrot.slane %v2348, 1
      %v2350 = vrot.slane %v2050, 1
      %v2351 = vsel %vm660, %v2349, %v2350
      %v2352 = vrot.slane %v2051, 1
      %v2353 = vsel %vm660, %v2350, %v2352
      %v2354 = vrot.slane %v2052, 1
      %v2355 = vsel %vm660, %v2352, %v2354
      %v2356 = vrot.slane %v2053, 1
      %v2357 = vsel %vm660, %v2354, %v2356
      %v2358 = vrot.slane %v2054, 1
      %v2359 = vsel %vm660, %v2356, %v2358
      %v2360 = vrot.slane %v2055, 1
      %v2361 = vsel %vm660, %v2358, %v2360
      %v2362 = vrot.slane %v2056, 1
      %v2363 = vsel %vm660, %v2360, %v2362
      %v2364 = vrot.slane %v2057, 1
      %v2365 = vsel %vm660, %v2362, %v2364
      %v2366 = vrot.slane %v2058, 1
      %v2367 = vsel %vm660, %v2364, %v2366
      %v2368 = vrot.slane %v2059, 1
      %v2369 = vsel %vm660, %v2366, %v2368
      %v2370 = vrot.slane %v2060, 1
      %v2371 = vsel %vm660, %v2368, %v2370
      %v2372 = vrot.slane %v2061, 1
      %v2373 = vsel %vm660, %v2370, %v2372
      %v2374 = vrot.slane %v2062, 1
      %v2375 = vsel %vm660, %v2372, %v2374
      %v2376 = vrot.slane %v2063, 1
      %v2377 = vsel %vm660, %v2374, %v2376
      %v2382 = vunpack.c.l.b16 %v2342
      %v2383 = vunpack.c.l.b16 %v2343
      %v2384 = vunpack.c.l.b16 %v2344
      %v2385 = vunpack.c.l.b16 %v2345
      %v2386 = vpack.c.b16 %v2383, %v2382
      %v2387 = vpack.c.b16 %v2385, %v2384
      %v2391 = vsel %vm411, %v2351, 0
      %v2394 = vsel %vm411, %v2353, 0
      %v2397 = vsel %vm411, %v2355, 0
      %v2400 = vsel %vm411, %v2357, 0
      %v2403 = vsel %vm411, %v2359, 0
      %v2406 = vsel %vm411, %v2361, 0
      %v2409 = vsel %vm411, %v2363, 0
      %v2412 = vsel %vm411, %v2365, 0
      %v2415 = vsel %vm411, %v2367, 0
      %v2418 = vsel %vm411, %v2369, 0
      %v2421 = vsel %vm411, %v2371, 0
      %v2424 = vsel %vm411, %v2373, 0
      %v2427 = vsel %vm411, %v2375, 0
      %v2430 = vsel %vm411, %v2377, 0
      %2432 = vmatpush.bf16.msra.mxu0 0
      %2433 = vmatpush.bf16.msra.mxu0 0
      %2434 = vmatpush.bf16.msra.mxu0 0
      %2435 = vmatpush.bf16.msra.mxu0 0
      %2436 = vmatpush.bf16.msra.mxu0 0
      %2437 = vmatpush.bf16.msra.mxu0 0
      %2438 = vmatpush.bf16.msra.mxu0 %v2387
      %2439 = vmatpush.bf16.msra.mxu0 %v2386
      %2440 = vmatmul.bf16.gmra.mxu0 %v2391
      %v2441 = vpop.f32.mrf.mxu0
      %v2442 = vadd.f32 0.0, %v2441
      %v2443 = vpop.f32.mrf.mxu0
      %v2444 = vadd.f32 0.0, %v2443
      %2445 = vmatmul.bf16.gmra.mxu0 %v2394
      %v2446 = vpop.f32.mrf.mxu0
      %v2447 = vadd.f32 0.0, %v2446
      %v2448 = vpop.f32.mrf.mxu0
      %v2449 = vadd.f32 0.0, %v2448
      %2450 = vmatmul.bf16.gmra.mxu0 %v2397
      %v2451 = vpop.f32.mrf.mxu0
      %v2452 = vadd.f32 0.0, %v2451
      %v2453 = vpop.f32.mrf.mxu0
      %v2454 = vadd.f32 0.0, %v2453
      %2455 = vmatmul.bf16.gmra.mxu0 %v2400
      %v2456 = vpop.f32.mrf.mxu0
      %v2457 = vadd.f32 0.0, %v2456
      %v2458 = vpop.f32.mrf.mxu0
      %v2459 = vadd.f32 0.0, %v2458
      %2460 = vmatmul.bf16.gmra.mxu0 %v2403
      %v2461 = vpop.f32.mrf.mxu0
      %v2462 = vadd.f32 0.0, %v2461
      %v2463 = vpop.f32.mrf.mxu0
      %v2464 = vadd.f32 0.0, %v2463
      %2465 = vmatmul.bf16.gmra.mxu0 %v2406
      %v2466 = vpop.f32.mrf.mxu0
      %v2467 = vadd.f32 0.0, %v2466
      %v2468 = vpop.f32.mrf.mxu0
      %v2469 = vadd.f32 0.0, %v2468
      %2470 = vmatmul.bf16.gmra.mxu0 %v2409
      %v2471 = vpop.f32.mrf.mxu0
      %v2472 = vadd.f32 0.0, %v2471
      %v2473 = vpop.f32.mrf.mxu0
      %v2474 = vadd.f32 0.0, %v2473
      %2475 = vmatmul.bf16.gmra.mxu0 %v2412
      %v2476 = vpop.f32.mrf.mxu0
      %v2477 = vadd.f32 0.0, %v2476
      %v2478 = vpop.f32.mrf.mxu0
      %v2479 = vadd.f32 0.0, %v2478
      %2480 = vmatmul.bf16.gmra.mxu0 %v2415
      %v2481 = vpop.f32.mrf.mxu0
      %v2482 = vadd.f32 0.0, %v2481
      %v2483 = vpop.f32.mrf.mxu0
      %v2484 = vadd.f32 0.0, %v2483
      %2485 = vmatmul.bf16.gmra.mxu0 %v2418
      %v2486 = vpop.f32.mrf.mxu0
      %v2487 = vadd.f32 0.0, %v2486
      %v2488 = vpop.f32.mrf.mxu0
      %v2489 = vadd.f32 0.0, %v2488
      %2490 = vmatmul.bf16.gmra.mxu0 %v2421
      %v2491 = vpop.f32.mrf.mxu0
      %v2492 = vadd.f32 0.0, %v2491
      %v2493 = vpop.f32.mrf.mxu0
      %v2494 = vadd.f32 0.0, %v2493
      %2495 = vmatmul.bf16.gmra.mxu0 %v2424
      %v2496 = vpop.f32.mrf.mxu0
      %v2497 = vadd.f32 0.0, %v2496
      %v2498 = vpop.f32.mrf.mxu0
      %v2499 = vadd.f32 0.0, %v2498
      %2500 = vmatmul.bf16.gmra.mxu0 %v2427
      %v2501 = vpop.f32.mrf.mxu0
      %v2502 = vadd.f32 0.0, %v2501
      %v2503 = vpop.f32.mrf.mxu0
      %v2504 = vadd.f32 0.0, %v2503
      %2505 = vmatmul.bf16.gmra.mxu0 %v2430
      %v2506 = vpop.f32.mrf.mxu0
      %v2507 = vadd.f32 0.0, %v2506
      %v2508 = vpop.f32.mrf.mxu0
      %v2509 = vadd.f32 0.0, %v2508
      %2510 = vdwg.mxu0
      %v2511 = vadd.f32 %v2313, %v2442
      %v2512 = vadd.f32 %v2314, %v2444
      %v2513 = vadd.f32 %v2315, %v2447
      %v2514 = vadd.f32 %v2316, %v2449
      %v2515 = vadd.f32 %v2317, %v2452
      %v2516 = vadd.f32 %v2318, %v2454
      %v2517 = vadd.f32 %v2319, %v2457
      %v2518 = vadd.f32 %v2320, %v2459
      %v2519 = vadd.f32 %v2321, %v2462
      %v2520 = vadd.f32 %v2322, %v2464
      %v2521 = vadd.f32 %v2323, %v2467
      %v2522 = vadd.f32 %v2324, %v2469
      %v2523 = vadd.f32 %v2325, %v2472
      %v2524 = vadd.f32 %v2326, %v2474
      %v2525 = vadd.f32 %v2327, %v2477
      %v2526 = vadd.f32 %v2328, %v2479
      %v2527 = vadd.f32 %v2329, %v2482
      %v2528 = vadd.f32 %v2330, %v2484
      %v2529 = vadd.f32 %v2331, %v2487
      %v2530 = vadd.f32 %v2332, %v2489
      %v2531 = vadd.f32 %v2333, %v2492
      %v2532 = vadd.f32 %v2334, %v2494
      %v2533 = vadd.f32 %v2335, %v2497
      %v2534 = vadd.f32 %v2336, %v2499
      %v2535 = vadd.f32 %v2337, %v2502
      %v2536 = vadd.f32 %v2338, %v2504
      %v2537 = vadd.f32 %v2339, %v2507
      %v2538 = vadd.f32 %v2340, %v2509
      %v2539 = vld [vmem:[%s2] sm:$0x1]
      %v2541 = vperm.slane %v2539, 0
      %v2543 = vadd.f32 %v2511, %v2541
      %v2544 = vadd.f32 %v2512, %v2541
      %v2545 = vadd.f32 %v2513, %v2541
      %v2546 = vadd.f32 %v2514, %v2541
      %v2547 = vadd.f32 %v2515, %v2541
      %v2548 = vadd.f32 %v2516, %v2541
      %v2549 = vadd.f32 %v2517, %v2541
      %v2550 = vadd.f32 %v2518, %v2541
      %v2551 = vadd.f32 %v2519, %v2541
      %v2552 = vadd.f32 %v2520, %v2541
      %v2553 = vadd.f32 %v2521, %v2541
      %v2554 = vadd.f32 %v2522, %v2541
      %v2555 = vadd.f32 %v2523, %v2541
      %v2556 = vadd.f32 %v2524, %v2541
      %v2557 = vadd.f32 %v2525, %v2541
      %v2558 = vadd.f32 %v2526, %v2541
      %v2559 = vadd.f32 %v2527, %v2541
      %v2560 = vadd.f32 %v2528, %v2541
      %v2561 = vadd.f32 %v2529, %v2541
      %v2562 = vadd.f32 %v2530, %v2541
      %v2563 = vadd.f32 %v2531, %v2541
      %v2564 = vadd.f32 %v2532, %v2541
      %v2565 = vadd.f32 %v2533, %v2541
      %v2566 = vadd.f32 %v2534, %v2541
      %v2567 = vadd.f32 %v2535, %v2541
      %v2568 = vadd.f32 %v2536, %v2541
      %v2569 = vadd.f32 %v2537, %v2541
      %v2570 = vadd.f32 %v2538, %v2541
      %v2571 = vmax.f32 %v2543, 0.0
      %v2572 = vmax.f32 %v2544, 0.0
      %v2573 = vmax.f32 %v2545, 0.0
      %v2574 = vmax.f32 %v2546, 0.0
      %v2575 = vmax.f32 %v2547, 0.0
      %v2576 = vmax.f32 %v2548, 0.0
      %v2577 = vmax.f32 %v2549, 0.0
      %v2578 = vmax.f32 %v2550, 0.0
      %v2579 = vmax.f32 %v2551, 0.0
      %v2580 = vmax.f32 %v2552, 0.0
      %v2581 = vmax.f32 %v2553, 0.0
      %v2582 = vmax.f32 %v2554, 0.0
      %v2583 = vmax.f32 %v2555, 0.0
      %v2584 = vmax.f32 %v2556, 0.0
      %v2585 = vmax.f32 %v2557, 0.0
      %v2586 = vmax.f32 %v2558, 0.0
      %v2587 = vmax.f32 %v2559, 0.0
      %v2588 = vmax.f32 %v2560, 0.0
      %v2589 = vmax.f32 %v2561, 0.0
      %v2590 = vmax.f32 %v2562, 0.0
      %v2591 = vmax.f32 %v2563, 0.0
      %v2592 = vmax.f32 %v2564, 0.0
      %v2593 = vmax.f32 %v2565, 0.0
      %v2594 = vmax.f32 %v2566, 0.0
      %v2595 = vmax.f32 %v2567, 0.0
      %v2596 = vmax.f32 %v2568, 0.0
      %v2597 = vmax.f32 %v2569, 0.0
      %v2598 = vmax.f32 %v2570, 0.0
      %vm2599 = vcmask 523264
      %2600 = vst.msk [vmem:[#allocation2] sm:$0xff] %vm2599, %v2571
      %2601 = vst.msk [vmem:[#allocation2 + $0x8] sm:$0xff] %vm2599, %v2572
      %2602 = vst.msk [vmem:[#allocation2 + $0x10] sm:$0xff] %vm2599, %v2573
      %2603 = vst.msk [vmem:[#allocation2 + $0x18] sm:$0xff] %vm2599, %v2574
      %2604 = vst.msk [vmem:[#allocation2 + $0x20] sm:$0xff] %vm2599, %v2575
      %2605 = vst.msk [vmem:[#allocation2 + $0x28] sm:$0xff] %vm2599, %v2576
      %2606 = vst.msk [vmem:[#allocation2 + $0x30] sm:$0xff] %vm2599, %v2577
      %2607 = vst.msk [vmem:[#allocation2 + $0x38] sm:$0xff] %vm2599, %v2578
      %2608 = vst.msk [vmem:[#allocation2 + $0x40] sm:$0xff] %vm2599, %v2579
      %2609 = vst.msk [vmem:[#allocation2 + $0x48] sm:$0xff] %vm2599, %v2580
      %2610 = vst.msk [vmem:[#allocation2 + $0x50] sm:$0xff] %vm2599, %v2581
      %2611 = vst.msk [vmem:[#allocation2 + $0x58] sm:$0xff] %vm2599, %v2582
      %2612 = vst.msk [vmem:[#allocation2 + $0x60] sm:$0xff] %vm2599, %v2583
      %2613 = vst.msk [vmem:[#allocation2 + $0x68] sm:$0xff] %vm2599, %v2584
      %2614 = vst.msk [vmem:[#allocation2 + $0x70] sm:$0xff] %vm2599, %v2585
      %2615 = vst.msk [vmem:[#allocation2 + $0x78] sm:$0xff] %vm2599, %v2586
      %2616 = vst.msk [vmem:[#allocation2 + $0x80] sm:$0xff] %vm2599, %v2587
      %2617 = vst.msk [vmem:[#allocation2 + $0x88] sm:$0xff] %vm2599, %v2588
      %2618 = vst.msk [vmem:[#allocation2 + $0x90] sm:$0xff] %vm2599, %v2589
      %2619 = vst.msk [vmem:[#allocation2 + $0x98] sm:$0xff] %vm2599, %v2590
      %2620 = vst.msk [vmem:[#allocation2 + $0xa0] sm:$0xff] %vm2599, %v2591
      %2621 = vst.msk [vmem:[#allocation2 + $0xa8] sm:$0xff] %vm2599, %v2592
      %2622 = vst.msk [vmem:[#allocation2 + $0xb0] sm:$0xff] %vm2599, %v2593
      %2623 = vst.msk [vmem:[#allocation2 + $0xb8] sm:$0xff] %vm2599, %v2594
      %2624 = vst.msk [vmem:[#allocation2 + $0xc0] sm:$0xff] %vm2599, %v2595
      %2625 = vst.msk [vmem:[#allocation2 + $0xc8] sm:$0xff] %vm2599, %v2596
      %2626 = vst.msk [vmem:[#allocation2 + $0xd0] sm:$0xff] %vm2599, %v2597
      %2627 = vst.msk [vmem:[#allocation2 + $0xd8] sm:$0xff] %vm2599, %v2598
      %v2628 = vld [vmem:[#allocation2] ss:$2 sm:$0x7f]
      %s2629 = scalar_lea.vmem [#allocation2], 1
      %v2630 = vld [vmem:[%s2629] ss:$2 sm:$0x7f]
      %s2631 = scalar_lea.vmem [#allocation2], 16
      %v2632 = vld [vmem:[%s2631] ss:$2 sm:$0x7f]
      %s2633 = scalar_lea.vmem [#allocation2], 17
      %v2634 = vld [vmem:[%s2633] ss:$2 sm:$0x7f]
      %v2635 = vmax.f32 %v2628, %v2630
      %v2636 = vmax.f32 %v2632, %v2634
      %v2637 = vmax.f32 %v2635, %v2636
      %v2638 = vpack.c.bf16 %v2637, %v2637
      %vm2639 = vcmask 519168
      %vm2640 = vsmask.f32 3328
      %vm2641 = vmand %vm2639, %vm2640
      %v2642 = vld [vmem:[%s170] sm:$0xf]
      %v2643 = vsel %vm2641, %v2638, %v2642
      %2644 = vst [vmem:[%s170] sm:$0xf] %v2643
      %s2645 = scalar_lea.vmem [#allocation2], 32
      %v2646 = vld [vmem:[%s2645] ss:$2 sm:$0x7f]
      %s2647 = scalar_lea.vmem [#allocation2], 33
      %v2648 = vld [vmem:[%s2647] ss:$2 sm:$0x7f]
      %s2649 = scalar_lea.vmem [#allocation2], 48
      %v2650 = vld [vmem:[%s2649] ss:$2 sm:$0x7f]
      %s2651 = scalar_lea.vmem [#allocation2], 49
      %v2652 = vld [vmem:[%s2651] ss:$2 sm:$0x7f]
      %v2653 = vmax.f32 %v2646, %v2648
      %v2654 = vmax.f32 %v2650, %v2652
      %v2655 = vmax.f32 %v2653, %v2654
      %v2656 = vpack.c.bf16 %v2655, %v2655
      %v2658 = vshll.u32 %v2656, 16
      %v2660 = vrot.slane %v2658, 5
      %v2661 = vshrl.u32 %v2656, 16
      %v2663 = vrot.slane %v2661, 4
      %v2664 = vor.u32 %v2663, %v2660
      %v2665 = vrot.slane %v2664, 4
      %vm2668 = vcmask 519171
      %vm2669 = vsmask.f32 7950
      %vm2670 = vmand %vm2668, %vm2669
      %v2671 = vld [vmem:[%s170] sm:$0x8]
      %v2672 = vsel %vm2670, %v2660, %v2671
      %2673 = vst [vmem:[%s170] sm:$0x8] %v2672
      %vm2674 = vcmask 518144
      %2675 = vst.msk [vmem:[%s170 + $0x4] sm:$0x7] %vm2674, %v2665
      %s2676 = scalar_lea.vmem [#allocation2], 64
      %v2677 = vld [vmem:[%s2676] ss:$2 sm:$0x7f]
      %s2678 = scalar_lea.vmem [#allocation2], 65
      %v2679 = vld [vmem:[%s2678] ss:$2 sm:$0x7f]
      %s2680 = scalar_lea.vmem [#allocation2], 80
      %v2681 = vld [vmem:[%s2680] ss:$2 sm:$0x7f]
      %s2682 = scalar_lea.vmem [#allocation2], 81
      %v2683 = vld [vmem:[%s2682] ss:$2 sm:$0x7f]
      %v2684 = vmax.f32 %v2677, %v2679
      %v2685 = vmax.f32 %v2681, %v2683
      %v2686 = vmax.f32 %v2684, %v2685
      %v2687 = vpack.c.bf16 %v2686, %v2686
      %v2689 = vrot.slane %v2687, 5
      %v2690 = vrot.slane %v2689, 4
      %vm2693 = vcmask 519171
      %2694 = vst.msk [vmem:[%s170 + $0x4] sm:$0x8] %vm2693, %v2689
      %vm2695 = vcmask 518144
      %vm2696 = vsmask.f32 2304
      %vm2697 = vmand %vm2695, %vm2696
      %v2698 = vld [vmem:[%s170 + $0x8] sm:$0x7]
      %v2699 = vsel %vm2697, %v2690, %v2698
      %2700 = vst [vmem:[%s170 + $0x8] sm:$0x7] %v2699
      %s2701 = scalar_lea.vmem [#allocation2], 96
      %v2702 = vld [vmem:[%s2701] ss:$2 sm:$0x7f]
      %s2703 = scalar_lea.vmem [#allocation2], 97
      %v2704 = vld [vmem:[%s2703] ss:$2 sm:$0x7f]
      %s2705 = scalar_lea.vmem [#allocation2], 112
      %v2706 = vld [vmem:[%s2705] ss:$2 sm:$0x7f]
      %s2707 = scalar_lea.vmem [#allocation2], 113
      %v2708 = vld [vmem:[%s2707] ss:$2 sm:$0x7f]
      %v2709 = vmax.f32 %v2702, %v2704
      %v2710 = vmax.f32 %v2706, %v2708
      %v2711 = vmax.f32 %v2709, %v2710
      %v2712 = vpack.c.bf16 %v2711, %v2711
      %v2714 = vshrl.u32 %v2712, 16
      %v2716 = vrot.slane %v2714, 5
      %v2717 = vshll.u32 %v2712, 16
      %v2719 = vrot.slane %v2717, 6
      %v2720 = vor.u32 %v2716, %v2719
      %v2721 = vrot.slane %v2720, 4
      %vm2724 = vcmask 519170
      %vm2725 = vsmask.f32 7946
      %vm2726 = vmand %vm2724, %vm2725
      %v2727 = vld [vmem:[%s170 + $0x8] sm:$0xc]
      %v2728 = vsel %vm2726, %v2720, %v2727
      %2729 = vst [vmem:[%s170 + $0x8] sm:$0xc] %v2728
      %vm2730 = vcmask 517120
      %2731 = vst.msk [vmem:[%s170 + $0xc] sm:$0x3] %vm2730, %v2721
      %s2732 = scalar_lea.vmem [#allocation2], 128
      %v2733 = vld [vmem:[%s2732] ss:$2 sm:$0x7f]
      %s2734 = scalar_lea.vmem [#allocation2], 129
      %v2735 = vld [vmem:[%s2734] ss:$2 sm:$0x7f]
      %s2736 = scalar_lea.vmem [#allocation2], 144
      %v2737 = vld [vmem:[%s2736] ss:$2 sm:$0x7f]
      %s2738 = scalar_lea.vmem [#allocation2], 145
      %v2739 = vld [vmem:[%s2738] ss:$2 sm:$0x7f]
      %v2740 = vmax.f32 %v2733, %v2735
      %v2741 = vmax.f32 %v2737, %v2739
      %v2742 = vmax.f32 %v2740, %v2741
      %v2743 = vpack.c.bf16 %v2742, %v2742
      %v2745 = vrot.slane %v2743, 6
      %v2746 = vrot.slane %v2745, 4
      %vm2749 = vcmask 519170
      %2750 = vst.msk [vmem:[%s170 + $0xc] sm:$0xc] %vm2749, %v2745
      %vm2751 = vcmask 517120
      %vm2752 = vsmask.f32 1280
      %vm2753 = vmand %vm2751, %vm2752
      %v2754 = vld [vmem:[%s170 + $0x10] sm:$0x3]
      %v2755 = vsel %vm2753, %v2746, %v2754
      %2756 = vst [vmem:[%s170 + $0x10] sm:$0x3] %v2755
      %s2757 = scalar_lea.vmem [#allocation2], 160
      %v2758 = vld [vmem:[%s2757] ss:$2 sm:$0x7f]
      %s2759 = scalar_lea.vmem [#allocation2], 161
      %v2760 = vld [vmem:[%s2759] ss:$2 sm:$0x7f]
      %s2761 = scalar_lea.vmem [#allocation2], 176
      %v2762 = vld [vmem:[%s2761] ss:$2 sm:$0x7f]
      %s2763 = scalar_lea.vmem [#allocation2], 177
      %v2764 = vld [vmem:[%s2763] ss:$2 sm:$0x7f]
      %v2765 = vmax.f32 %v2758, %v2760
      %v2766 = vmax.f32 %v2762, %v2764
      %v2767 = vmax.f32 %v2765, %v2766
      %v2768 = vpack.c.bf16 %v2767, %v2767
      %v2770 = vshrl.u32 %v2768, 16
      %v2772 = vrot.slane %v2770, 6
      %v2773 = vshll.u32 %v2768, 16
      %v2775 = vrot.slane %v2773, 7
      %v2776 = vor.u32 %v2772, %v2775
      %v2777 = vrot.slane %v2776, 4
      %vm2780 = vcmask 519169
      %vm2781 = vsmask.f32 7942
      %vm2782 = vmand %vm2780, %vm2781
      %v2783 = vld [vmem:[%s170 + $0x10] sm:$0xe]
      %v2784 = vsel %vm2782, %v2776, %v2783
      %2785 = vst [vmem:[%s170 + $0x10] sm:$0xe] %v2784
      %vm2786 = vcmask 516096
      %2787 = vst.msk [vmem:[%s170 + $0x14] sm:$0x1] %vm2786, %v2777
      %s2788 = scalar_lea.vmem [#allocation2], 192
      %v2789 = vld [vmem:[%s2788] ss:$2 sm:$0x7f]
      %s2790 = scalar_lea.vmem [#allocation2], 193
      %v2791 = vld [vmem:[%s2790] ss:$2 sm:$0x7f]
      %s2792 = scalar_lea.vmem [#allocation2], 208
      %v2793 = vld [vmem:[%s2792] ss:$2 sm:$0x7f]
      %s2794 = scalar_lea.vmem [#allocation2], 209
      %v2795 = vld [vmem:[%s2794] ss:$2 sm:$0x7f]
      %v2796 = vmax.f32 %v2789, %v2791
      %v2797 = vmax.f32 %v2793, %v2795
      %v2798 = vmax.f32 %v2796, %v2797
      %v2799 = vpack.c.bf16 %v2798, %v2798
      %v2801 = vrot.slane %v2799, 7
      %v2802 = vrot.slane %v2801, 4
      %vm2805 = vcmask 519169
      %2806 = vst.msk [vmem:[%s170 + $0x14] sm:$0xe] %vm2805, %v2801
      %vm2807 = vcmask 516096
      %vm2808 = vsmask.f32 256
      %vm2809 = vmand %vm2807, %vm2808
      %v2810 = vld [vmem:[%s170 + $0x18] sm:$0x1]
      %v2811 = vsel %vm2809, %v2802, %v2810
      %2812 = vst [vmem:[%s170 + $0x18] sm:$0x1] %v2811
      %p2813 = scmp.lt.s32.totalorder %s14, 1
      %s2814 = scalar_select %p2813, %s14, 1
      %s2815 = smul.addr %s2814, 7
      %s2816 = smul.addr %s2815, 4
      %s2817 = scalar_lea.vmem %s3, %s2816
      // Predicated region
      $region33: #{convnet_forward.4} parent=31 // pred_check
        %p2818 = pneg %p100
      $region34: #{convnet_forward.4} parent=31 // pred_check_branch
        %2820 = sbr.rel (%p2818) target = $region36
      $region35: #{convnet_forward.4} parent=31 // pred_region
        _
      $region36: #{convnet_forward.4} parent=31 // pred_fallthru
        _
    $region32: #{convnet_forward.4} parent=5 // pred_fallthru
      _
    %p2821 = scmp.le.s32.totalorder 2, %s9
    // Predicated region
    $region37: #{convnet_forward.4} parent=5 // pred_check
      %p2822 = pneg %p2821
    $region38: #{convnet_forward.4} parent=5 // pred_check_branch
      %2824 = sbr.rel (%p2822) target = $region40
    $region39: #{convnet_forward.4} parent=5 // pred_region
      %s2825 = ssub.s32 %s9, 2
      // Predicated region
      $region41: #{convnet_forward.4} parent=39 // pred_check
        %p2826 = pneg %p106
      $region42: #{convnet_forward.4} parent=39 // pred_check_branch
        %2828 = sbr.rel (%p2826) target = $region44
      $region43: #{convnet_forward.4} parent=39 // pred_region
        %p2829 = scmp.lt.s32.totalorder %s15, 1
        %s2830 = scalar_select %p2829, %s15, 1
        %s2831 = smul.addr %s2830, 7
        %s2832 = smul.addr %s2831, 4
        %s2833 = scalar_lea.vmem %s3, %s2832
      $region44: #{convnet_forward.4} parent=39 // pred_fallthru
        _
    $region40: #{convnet_forward.4} parent=5 // pred_fallthru
      _
  $region6: #{convnet_forward.4} parent=0 // loop_footer
    %s13 = sadd.s32 1, %s9
  $region7: #{convnet_forward.4} parent=0 // loop_footer_branch
    %8 = sbr.rel target = $region3
  $region8: #{convnet_forward.4} parent=0 // loop_exit
    _

// kernel: convnet_forward.3
$region0: #{convnet_forward.3}
  #allocation0 [shape = 'u32[]', space=smem, size = 0x4, offset = 0x4, fixed_abs, tag = 'smem constant byte address 0x4 - core index']
  #allocation1 [shape = 'u32[72,128]{1,0:T(1,128)}', space=vmem, size = 0x9000, scoped, tag = 'internal scratch']
  #allocation2 [shape = 'f32[840,32]{1,0:T(8,128)}', space=vmem, size = 0x69000, scoped, tag = 'scratch operand']
  %s0 = inlined_call_operand.vmem [shape: bf16[2,960,1], index: 0, kind: input, shape index: {}]
  %s1 = inlined_call_operand.vmem [shape: bf16[9,32], index: 1, kind: input, shape index: {}]
  %s2 = inlined_call_operand.vmem [shape: f32[1,32], index: 2, kind: input, shape index: {}]
  %s3 = inlined_call_operand.vmem [shape: bf16[2,196,32], index: 3, kind: output, shape index: {}]
  %s4 = sld [smem:[#allocation0]]
  $region45: #{convnet_forward.3} parent=0
    _
  %s6 = ssub.s32 1, %s4
  %s7 = scalar_select 0, %s6, %s4
  loop: start=0, step=1, limit=4
  $region2: #{convnet_forward.3} parent=0 // loop_pre_header
    _
  $region3: #{convnet_forward.3} parent=0 // loop_header
    %s9 = sphi 0, %s13
    %p10 = scmp.ge.s32.totalorder %s9, 4
    %s19 = sphi 0, %s21
    %s22 = sphi 0, %s19
    %s23 = sphi 0, %s22
    %s39 = sphi 0, %s23
    %s43 = sphi 0, %s43
    %s45 = sphi 0, %s43
    %s46 = sphi 0, %s45
    %s60 = sphi 0, %s46
    %s64 = sphi 0, %s64
    %s66 = sphi 0, %s64
    %s67 = sphi 0, %s66
    %s81 = sphi 0, %s67
    %s87 = sphi 0, %s89
    %s90 = sphi 0, %s87
    %s91 = sphi 0, %s90
    %s107 = sphi 0, %s91
  $region4: #{convnet_forward.3} parent=0 // loop_header_branch
    %12 = sbr.rel (%p10) target = $region8
  $region5: #{convnet_forward.3} parent=0 // loop_body
    %s14 = ssub.s32 %s9, 1
    %s15 = ssub.s32 %s9, 2
    %s16 = sadd.s32 %s9, 1
    %s17 = ssub.s32 %s9, %s16
    %p18 = scmp.eq.s32.totalorder %s17, 0
    %s20 = sadd.s32 %s19, 1
    %s21 = scalar_select %p18, %s19, %s20
    %p24 = pneg %p18
    %p25 = scmp.eq.s32.totalorder %s9, 1
    %p26 = por %p24, %p25
    %p27 = scmp.ne.s32.totalorder %s19, %s22
    %p28 = scmp.eq.s32.totalorder %s9, 0
    %p29 = por %p27, %p28
    %p30 = scmp.ne.s32.totalorder %s19, %s22
    %p31 = scmp.eq.s32.totalorder %s14, 1
    %p32 = por %p30, %p31
    %p33 = scmp.ne.s32.totalorder %s22, %s23
    %p34 = scmp.eq.s32.totalorder %s14, 0
    %p35 = por %p33, %p34
    %p36 = scmp.ne.s32.totalorder %s22, %s23
    %p37 = scmp.eq.s32.totalorder %s15, 1
    %p38 = por %p36, %p37
    %p40 = scmp.ne.s32.totalorder %s23, %s39
    %p41 = scmp.eq.s32.totalorder %s15, 0
    %p42 = por %p40, %p41
    %s44 = sadd.s32 %s43, 1
    %p47 = scmp.eq.s32.totalorder %s9, 1
    %p48 = scmp.ne.s32.totalorder %s43, %s45
    %p49 = scmp.eq.s32.totalorder %s9, 0
    %p50 = por %p48, %p49
    %p51 = scmp.ne.s32.totalorder %s43, %s45
    %p52 = scmp.eq.s32.totalorder %s14, 1
    %p53 = por %p51, %p52
    %p54 = scmp.ne.s32.totalorder %s45, %s46
    %p55 = scmp.eq.s32.totalorder %s14, 0
    %p56 = por %p54, %p55
    %p57 = scmp.ne.s32.totalorder %s45, %s46
    %p58 = scmp.eq.s32.totalorder %s15, 1
    %p59 = por %p57, %p58
    %p61 = scmp.ne.s32.totalorder %s46, %s60
    %p62 = scmp.eq.s32.totalorder %s15, 0
    %p63 = por %p61, %p62
    %s65 = sadd.s32 %s64, 1
    %p68 = scmp.eq.s32.totalorder %s9, 1
    %p69 = scmp.ne.s32.totalorder %s64, %s66
    %p70 = scmp.eq.s32.totalorder %s9, 0
    %p71 = por %p69, %p70
    %p72 = scmp.ne.s32.totalorder %s64, %s66
    %p73 = scmp.eq.s32.totalorder %s14, 1
    %p74 = por %p72, %p73
    %p75 = scmp.ne.s32.totalorder %s66, %s67
    %p76 = scmp.eq.s32.totalorder %s14, 0
    %p77 = por %p75, %p76
    %p78 = scmp.ne.s32.totalorder %s66, %s67
    %p79 = scmp.eq.s32.totalorder %s15, 1
    %p80 = por %p78, %p79
    %p82 = scmp.ne.s32.totalorder %s67, %s81
    %p83 = scmp.eq.s32.totalorder %s15, 0
    %p84 = por %p82, %p83
    %s85 = ssub.s32 %s9, %s16
    %p86 = scmp.eq.s32.totalorder %s85, 0
    %s88 = sadd.s32 %s87, 1
    %s89 = scalar_select %p86, %s87, %s88
    %p92 = pneg %p86
    %p93 = scmp.eq.s32.totalorder %s9, 1
    %p94 = por %p92, %p93
    %p95 = scmp.ne.s32.totalorder %s87, %s90
    %p96 = scmp.eq.s32.totalorder %s9, 0
    %p97 = por %p95, %p96
    %p98 = scmp.ne.s32.totalorder %s87, %s90
    %p99 = scmp.eq.s32.totalorder %s14, 1
    %p100 = por %p98, %p99
    %p101 = scmp.ne.s32.totalorder %s90, %s91
    %p102 = scmp.eq.s32.totalorder %s14, 0
    %p103 = por %p101, %p102
    %p104 = scmp.ne.s32.totalorder %s90, %s91
    %p105 = scmp.eq.s32.totalorder %s15, 1
    %p106 = por %p104, %p105
    %p108 = scmp.ne.s32.totalorder %s91, %s107
    %p109 = scmp.eq.s32.totalorder %s15, 0
    %p110 = por %p108, %p109
    %p111 = scmp.le.s32.totalorder 1, %s9
    %p112 = scmp.lt.s32.totalorder %s9, 3
    %p113 = pnand %p111, %p112
    %p114 = pneg %p113
    // Predicated region
    $region9: #{convnet_forward.3} parent=5 // pred_check
      _
    $region10: #{convnet_forward.3} parent=5 // pred_check_branch
      %116 = sbr.rel (%p113) target = $region12
    $region11: #{convnet_forward.3} parent=5 // pred_region
      %s117 = ssub.s32 %s9, 1
      // Predicated region
      $region13: #{convnet_forward.3} parent=11 // pred_check
        %p118 = pneg %p56
      $region14: #{convnet_forward.3} parent=11 // pred_check_branch
        %120 = sbr.rel (%p118) target = $region16
      $region15: #{convnet_forward.3} parent=11 // pred_region
        _
      $region16: #{convnet_forward.3} parent=11 // pred_fallthru
        _
      // Predicated region
      $region17: #{convnet_forward.3} parent=11 // pred_check
        %p121 = pneg %p77
      $region18: #{convnet_forward.3} parent=11 // pred_check_branch
        %123 = sbr.rel (%p121) target = $region20
      $region19: #{convnet_forward.3} parent=11 // pred_region
        _
      $region20: #{convnet_forward.3} parent=11 // pred_fallthru
        _
    $region12: #{convnet_forward.3} parent=5 // pred_fallthru
      _
    %p124 = scmp.lt.s32.totalorder %s9, 2
    // Predicated region
    $region21: #{convnet_forward.3} parent=5 // pred_check
      %p125 = pneg %p124
    $region22: #{convnet_forward.3} parent=5 // pred_check_branch
      %127 = sbr.rel (%p125) target = $region24
    $region23: #{convnet_forward.3} parent=5 // pred_region
      // Predicated region
      $region25: #{convnet_forward.3} parent=23 // pred_check
        %p128 = pneg %p29
      $region26: #{convnet_forward.3} parent=23 // pred_check_branch
        %130 = sbr.rel (%p128) target = $region28
      $region27: #{convnet_forward.3} parent=23 // pred_region
        %p131 = scmp.lt.s32.totalorder %s9, 1
        %s132 = scalar_select %p131, %s9, 1
        %s133 = smul.addr %s132, 120
        %s134 = smul.addr %s133, 4
        %s135 = scalar_lea.vmem %s0, %s134
      $region28: #{convnet_forward.3} parent=23 // pred_fallthru
        _
    $region24: #{convnet_forward.3} parent=5 // pred_fallthru
      _
    %p136 = scmp.le.s32.totalorder 1, %s9
    %p137 = scmp.lt.s32.totalorder %s9, 3
    %p138 = pnand %p136, %p137
    %p139 = pneg %p138
    // Predicated region
    $region29: #{convnet_forward.3} parent=5 // pred_check
      _
    $region30: #{convnet_forward.3} parent=5 // pred_check_branch
      %141 = sbr.rel (%p138) target = $region32
    $region31: #{convnet_forward.3} parent=5 // pred_region
      %s142 = ssub.s32 %s9, 1
      %p143 = scmp.lt.s32.totalorder %s14, 1
      %s144 = scalar_select %p143, %s14, 1
      %s145 = smul.addr %s144, 120
      %s146 = smul.addr %s145, 4
      %s147 = scalar_lea.vmem %s0, %s146
      %p148 = pneg %p35
      %p149 = pneg %p32
      %p150 = pneg %p56
      %p151 = pneg %p53
      %p152 = pneg %p77
      %p153 = pneg %p74
      %p154 = pneg %p103
      %p155 = pneg %p100
      %p156 = scmp.lt.s32.totalorder %s14, 1
      %s157 = scalar_select %p156, %s14, 1
      %s158 = smul.addr %s157, 25
      %s159 = smul.addr %s158, 4
      %s160 = scalar_lea.vmem %s3, %s159
      %p161 = scmp.lt.s32.totalorder %s14, 1
      %s162 = scalar_select %p161, %s14, 1
      %s163 = smul.addr %s162, 120
      %s164 = smul.addr %s163, 4
      %s165 = scalar_lea.vmem %s0, %s164
      %p166 = scmp.lt.s32.totalorder %s14, 1
      %s167 = scalar_select %p166, %s14, 1
      %s168 = smul.addr %s167, 25
      %s169 = smul.addr %s168, 4
      %s170 = scalar_lea.vmem %s3, %s169
      %v171 = vld [vmem:[%s165] sm:$0xf]
      %v172 = vld [vmem:[%s165 + $0x4] sm:$0xf]
      %v173 = vld [vmem:[%s165 + $0x8] sm:$0xf]
      %v174 = vld [vmem:[%s165 + $0xc] sm:$0xf]
      %v175 = vld [vmem:[%s165 + $0x10] sm:$0xf]
      %v176 = vld [vmem:[%s165 + $0x14] sm:$0xf]
      %v177 = vld [vmem:[%s165 + $0x18] sm:$0xf]
      %v178 = vld [vmem:[%s165 + $0x1c] sm:$0xf]
      %v179 = vld [vmem:[%s165 + $0x20] sm:$0xf]
      %v180 = vld [vmem:[%s165 + $0x24] sm:$0xf]
      %v181 = vld [vmem:[%s165 + $0x28] sm:$0xf]
      %v182 = vld [vmem:[%s165 + $0x2c] sm:$0xf]
      %v183 = vld [vmem:[%s165 + $0x30] sm:$0xf]
      %v184 = vld [vmem:[%s165 + $0x34] sm:$0xf]
      %v185 = vld [vmem:[%s165 + $0x38] sm:$0xf]
      %v186 = vld [vmem:[%s165 + $0x3c] sm:$0xf]
      %v187 = vld [vmem:[%s165 + $0x40] sm:$0xf]
      %v188 = vld [vmem:[%s165 + $0x44] sm:$0xf]
      %v189 = vld [vmem:[%s165 + $0x48] sm:$0xf]
      %v190 = vld [vmem:[%s165 + $0x4c] sm:$0xf]
      %v191 = vld [vmem:[%s165 + $0x50] sm:$0xf]
      %v192 = vld [vmem:[%s165 + $0x54] sm:$0xf]
      %v193 = vld [vmem:[%s165 + $0x58] sm:$0xf]
      %v194 = vld [vmem:[%s165 + $0x5c] sm:$0xf]
      %v195 = vld [vmem:[%s165 + $0x60] sm:$0xf]
      %v196 = vld [vmem:[%s165 + $0x64] sm:$0xf]
      %v197 = vld [vmem:[%s165 + $0x68] sm:$0xf]
      %v198 = vld [vmem:[%s165 + $0x6c] sm:$0xf]
      %v199 = vld [vmem:[%s165 + $0x70] sm:$0xf]
      %v200 = vld [vmem:[%s165 + $0x74] sm:$0xf]
      %v201 = vld [vmem:[%s165 + $0x78] sm:$0xf]
      %v202 = vld [vmem:[%s165 + $0x7c] sm:$0xf]
      %v203 = vld [vmem:[%s165 + $0x80] sm:$0xf]
      %v204 = vld [vmem:[%s165 + $0x84] sm:$0xf]
      %v205 = vld [vmem:[%s165 + $0x88] sm:$0xf]
      %v206 = vld [vmem:[%s165 + $0x8c] sm:$0xf]
      %v207 = vld [vmem:[%s165 + $0x90] sm:$0xf]
      %v208 = vld [vmem:[%s165 + $0x94] sm:$0xf]
      %v209 = vld [vmem:[%s165 + $0x98] sm:$0xf]
      %v210 = vld [vmem:[%s165 + $0x9c] sm:$0xf]
      %v211 = vld [vmem:[%s165 + $0xa0] sm:$0xf]
      %v212 = vld [vmem:[%s165 + $0xa4] sm:$0xf]
      %v213 = vld [vmem:[%s165 + $0xa8] sm:$0xf]
      %v214 = vld [vmem:[%s165 + $0xac] sm:$0xf]
      %v215 = vld [vmem:[%s165 + $0xb0] sm:$0xf]
      %v216 = vld [vmem:[%s165 + $0xb4] sm:$0xf]
      %v217 = vld [vmem:[%s165 + $0xb8] sm:$0xf]
      %v218 = vld [vmem:[%s165 + $0xbc] sm:$0xf]
      %v219 = vld [vmem:[%s165 + $0xc0] sm:$0xf]
      %v220 = vld [vmem:[%s165 + $0xc4] sm:$0xf]
      %v221 = vld [vmem:[%s165 + $0xc8] sm:$0xf]
      %v222 = vld [vmem:[%s165 + $0xcc] sm:$0xf]
      %v223 = vld [vmem:[%s165 + $0xd0] sm:$0xf]
      %v224 = vld [vmem:[%s165 + $0xd4] sm:$0xf]
      %v225 = vld [vmem:[%s165 + $0xd8] sm:$0xf]
      %v226 = vld [vmem:[%s165 + $0xdc] sm:$0xf]
      %v227 = vld [vmem:[%s165 + $0xe0] sm:$0xf]
      %v228 = vld [vmem:[%s165 + $0xe4] sm:$0xf]
      %v229 = vld [vmem:[%s165 + $0xe8] sm:$0xf]
      %v230 = vld [vmem:[%s165 + $0xec] sm:$0xf]
      %v231 = vld [vmem:[%s165 + $0xf0] sm:$0xf]
      %v232 = vld [vmem:[%s165 + $0xf4] sm:$0xf]
      %v233 = vld [vmem:[%s165 + $0xf8] sm:$0xf]
      %v234 = vld [vmem:[%s165 + $0xfc] sm:$0xf]
      %v235 = vld [vmem:[%s165 + $0x100] sm:$0xf]
      %v236 = vld [vmem:[%s165 + $0x104] sm:$0xf]
      %v237 = vld [vmem:[%s165 + $0x108] sm:$0xf]
      %v238 = vld [vmem:[%s165 + $0x10c] sm:$0xf]
      %v239 = vld [vmem:[%s165 + $0x110] sm:$0xf]
      %v240 = vld [vmem:[%s165 + $0x114] sm:$0xf]
      %v241 = vld [vmem:[%s165 + $0x118] sm:$0xf]
      %v242 = vld [vmem:[%s165 + $0x11c] sm:$0xf]
      %v243 = vld [vmem:[%s165 + $0x120] sm:$0xf]
      %v244 = vld [vmem:[%s165 + $0x124] sm:$0xf]
      %v245 = vld [vmem:[%s165 + $0x128] sm:$0xf]
      %v246 = vld [vmem:[%s165 + $0x12c] sm:$0xf]
      %v247 = vld [vmem:[%s165 + $0x130] sm:$0xf]
      %v248 = vld [vmem:[%s165 + $0x134] sm:$0xf]
      %v249 = vld [vmem:[%s165 + $0x138] sm:$0xf]
      %v250 = vld [vmem:[%s165 + $0x13c] sm:$0xf]
      %v251 = vld [vmem:[%s165 + $0x140] sm:$0xf]
      %v252 = vld [vmem:[%s165 + $0x144] sm:$0xf]
      %v253 = vld [vmem:[%s165 + $0x148] sm:$0xf]
      %v254 = vld [vmem:[%s165 + $0x14c] sm:$0xf]
      %v255 = vld [vmem:[%s165 + $0x150] sm:$0xf]
      %v256 = vld [vmem:[%s165 + $0x154] sm:$0xf]
      %v257 = vld [vmem:[%s165 + $0x158] sm:$0xf]
      %v258 = vld [vmem:[%s165 + $0x15c] sm:$0xf]
      %v259 = vld [vmem:[%s165 + $0x160] sm:$0xf]
      %v260 = vld [vmem:[%s165 + $0x164] sm:$0xf]
      %v261 = vld [vmem:[%s165 + $0x168] sm:$0xf]
      %v262 = vld [vmem:[%s165 + $0x16c] sm:$0xf]
      %v263 = vld [vmem:[%s165 + $0x170] sm:$0xf]
      %v264 = vld [vmem:[%s165 + $0x174] sm:$0xf]
      %v265 = vld [vmem:[%s165 + $0x178] sm:$0xf]
      %v266 = vld [vmem:[%s165 + $0x17c] sm:$0xf]
      %v267 = vld [vmem:[%s165 + $0x180] sm:$0xf]
      %v268 = vld [vmem:[%s165 + $0x184] sm:$0xf]
      %v269 = vld [vmem:[%s165 + $0x188] sm:$0xf]
      %v270 = vld [vmem:[%s165 + $0x18c] sm:$0xf]
      %v271 = vld [vmem:[%s165 + $0x190] sm:$0xf]
      %v272 = vld [vmem:[%s165 + $0x194] sm:$0xf]
      %v273 = vld [vmem:[%s165 + $0x198] sm:$0xf]
      %v274 = vld [vmem:[%s165 + $0x19c] sm:$0xf]
      %v275 = vld [vmem:[%s165 + $0x1a0] sm:$0xf]
      %v276 = vld [vmem:[%s1] sm:$0x1]
      %v277 = vunpack.c.l.bf16 %v171
      %v278 = vunpack.c.l.bf16 %v172
      %v279 = vunpack.c.l.bf16 %v173
      %v280 = vunpack.c.l.bf16 %v174
      %v281 = vunpack.c.l.bf16 %v175
      %v282 = vunpack.c.l.bf16 %v176
      %v283 = vunpack.c.l.bf16 %v177
      %v284 = vunpack.c.l.bf16 %v178
      %v285 = vunpack.c.l.bf16 %v179
      %v286 = vunpack.c.l.bf16 %v180
      %v287 = vunpack.c.l.bf16 %v181
      %v288 = vunpack.c.l.bf16 %v182
      %v289 = vunpack.c.l.bf16 %v183
      %v290 = vunpack.c.l.bf16 %v184
      %v291 = vunpack.c.l.bf16 %v185
      %v292 = vunpack.c.l.bf16 %v186
      %v293 = vunpack.c.l.bf16 %v187
      %v294 = vunpack.c.l.bf16 %v188
      %v295 = vunpack.c.l.bf16 %v189
      %v296 = vunpack.c.l.bf16 %v190
      %v297 = vunpack.c.l.bf16 %v191
      %v298 = vunpack.c.l.bf16 %v192
      %v299 = vunpack.c.l.bf16 %v193
      %v300 = vunpack.c.l.bf16 %v194
      %v301 = vunpack.c.l.bf16 %v195
      %v302 = vunpack.c.l.bf16 %v196
      %v303 = vunpack.c.l.bf16 %v197
      %v304 = vunpack.c.l.bf16 %v198
      %v305 = vunpack.c.l.bf16 %v199
      %v306 = vunpack.c.l.bf16 %v200
      %v307 = vunpack.c.l.bf16 %v201
      %v308 = vunpack.c.l.bf16 %v202
      %v309 = vunpack.c.l.bf16 %v203
      %v310 = vunpack.c.l.bf16 %v204
      %v311 = vunpack.c.l.bf16 %v205
      %v312 = vunpack.c.l.bf16 %v206
      %v313 = vunpack.c.l.bf16 %v207
      %v314 = vunpack.c.l.bf16 %v208
      %v315 = vunpack.c.l.bf16 %v209
      %v316 = vunpack.c.l.bf16 %v210
      %v317 = vunpack.c.l.bf16 %v211
      %v318 = vunpack.c.l.bf16 %v212
      %v319 = vunpack.c.l.bf16 %v213
      %v320 = vunpack.c.l.bf16 %v214
      %v321 = vunpack.c.l.bf16 %v215
      %v322 = vunpack.c.l.bf16 %v216
      %v323 = vunpack.c.l.bf16 %v217
      %v324 = vunpack.c.l.bf16 %v218
      %v325 = vunpack.c.l.bf16 %v219
      %v326 = vunpack.c.l.bf16 %v220
      %v327 = vunpack.c.l.bf16 %v221
      %v328 = vunpack.c.l.bf16 %v222
      %v329 = vunpack.c.l.bf16 %v223
      %v330 = vunpack.c.l.bf16 %v224
      %v331 = vunpack.c.l.bf16 %v225
      %v332 = vunpack.c.l.bf16 %v226
      %v333 = vunpack.c.l.bf16 %v227
      %v334 = vunpack.c.l.bf16 %v228
      %v335 = vunpack.c.l.bf16 %v229
      %v336 = vunpack.c.l.bf16 %v230
      %v337 = vunpack.c.l.bf16 %v231
      %v338 = vunpack.c.l.bf16 %v232
      %v339 = vunpack.c.l.bf16 %v233
      %v340 = vunpack.c.l.bf16 %v234
      %v341 = vunpack.c.l.bf16 %v235
      %v342 = vunpack.c.l.bf16 %v236
      %v343 = vunpack.c.l.bf16 %v237
      %v344 = vunpack.c.l.bf16 %v238
      %v345 = vunpack.c.l.bf16 %v239
      %v346 = vunpack.c.l.bf16 %v240
      %v347 = vunpack.c.l.bf16 %v241
      %v348 = vunpack.c.l.bf16 %v242
      %v349 = vunpack.c.l.bf16 %v243
      %v350 = vunpack.c.l.bf16 %v244
      %v351 = vunpack.c.l.bf16 %v245
      %v352 = vunpack.c.l.bf16 %v246
      %v353 = vunpack.c.l.bf16 %v247
      %v354 = vunpack.c.l.bf16 %v248
      %v355 = vunpack.c.l.bf16 %v249
      %v356 = vunpack.c.l.bf16 %v250
      %v357 = vunpack.c.l.bf16 %v251
      %v358 = vunpack.c.l.bf16 %v252
      %v359 = vunpack.c.l.bf16 %v253
      %v360 = vunpack.c.l.bf16 %v254
      %v361 = vunpack.c.l.bf16 %v255
      %v362 = vunpack.c.l.bf16 %v256
      %v363 = vunpack.c.l.bf16 %v257
      %v364 = vunpack.c.l.bf16 %v258
      %v365 = vunpack.c.l.bf16 %v259
      %v366 = vunpack.c.l.bf16 %v260
      %v367 = vunpack.c.l.bf16 %v261
      %v368 = vunpack.c.l.bf16 %v262
      %v369 = vunpack.c.l.bf16 %v263
      %v370 = vunpack.c.l.bf16 %v264
      %v371 = vunpack.c.l.bf16 %v265
      %v372 = vunpack.c.l.bf16 %v266
      %v373 = vunpack.c.l.bf16 %v267
      %v374 = vunpack.c.l.bf16 %v268
      %v375 = vunpack.c.l.bf16 %v269
      %v376 = vunpack.c.l.bf16 %v270
      %v377 = vunpack.c.l.bf16 %v271
      %v378 = vunpack.c.l.bf16 %v272
      %v379 = vunpack.c.l.bf16 %v273
      %v380 = vunpack.c.l.bf16 %v274
      %v381 = vunpack.c.l.bf16 %v275
      %v382 = vunpack.c.l.bf16 %v276
      %384 = vset.pattern.permute.xlu0 0
      %385 = vperm.xlu0 %384, %v277
      %v386 = vpop.permute.xlu0 %385
      %389 = vset.pattern.permute.xlu0 0
      %390 = vperm.xlu0 %389, %v278
      %v391 = vpop.permute.xlu0 %390
      %394 = vset.pattern.permute.xlu0 0
      %395 = vperm.xlu0 %394, %v279
      %v396 = vpop.permute.xlu0 %395
      %399 = vset.pattern.permute.xlu0 0
      %400 = vperm.xlu0 %399, %v280
      %v401 = vpop.permute.xlu0 %400
      %404 = vset.pattern.permute.xlu0 0
      %405 = vperm.xlu0 %404, %v281
      %v406 = vpop.permute.xlu0 %405
      %409 = vset.pattern.permute.xlu0 0
      %410 = vperm.xlu0 %409, %v282
      %v411 = vpop.permute.xlu0 %410
      %414 = vset.pattern.permute.xlu0 0
      %415 = vperm.xlu0 %414, %v283
      %v416 = vpop.permute.xlu0 %415
      %419 = vset.pattern.permute.xlu0 0
      %420 = vperm.xlu0 %419, %v284
      %v421 = vpop.permute.xlu0 %420
      %424 = vset.pattern.permute.xlu0 0
      %425 = vperm.xlu0 %424, %v285
      %v426 = vpop.permute.xlu0 %425
      %429 = vset.pattern.permute.xlu0 0
      %430 = vperm.xlu0 %429, %v286
      %v431 = vpop.permute.xlu0 %430
      %434 = vset.pattern.permute.xlu0 0
      %435 = vperm.xlu0 %434, %v287
      %v436 = vpop.permute.xlu0 %435
      %439 = vset.pattern.permute.xlu0 0
      %440 = vperm.xlu0 %439, %v288
      %v441 = vpop.permute.xlu0 %440
      %444 = vset.pattern.permute.xlu0 0
      %445 = vperm.xlu0 %444, %v289
      %v446 = vpop.permute.xlu0 %445
      %449 = vset.pattern.permute.xlu0 0
      %450 = vperm.xlu0 %449, %v290
      %v451 = vpop.permute.xlu0 %450
      %454 = vset.pattern.permute.xlu0 0
      %455 = vperm.xlu0 %454, %v291
      %v456 = vpop.permute.xlu0 %455
      %459 = vset.pattern.permute.xlu0 0
      %460 = vperm.xlu0 %459, %v292
      %v461 = vpop.permute.xlu0 %460
      %464 = vset.pattern.permute.xlu0 0
      %465 = vperm.xlu0 %464, %v293
      %v466 = vpop.permute.xlu0 %465
      %469 = vset.pattern.permute.xlu0 0
      %470 = vperm.xlu0 %469, %v294
      %v471 = vpop.permute.xlu0 %470
      %474 = vset.pattern.permute.xlu0 0
      %475 = vperm.xlu0 %474, %v295
      %v476 = vpop.permute.xlu0 %475
      %479 = vset.pattern.permute.xlu0 0
      %480 = vperm.xlu0 %479, %v296
      %v481 = vpop.permute.xlu0 %480
      %484 = vset.pattern.permute.xlu0 0
      %485 = vperm.xlu0 %484, %v297
      %v486 = vpop.permute.xlu0 %485
      %489 = vset.pattern.permute.xlu0 0
      %490 = vperm.xlu0 %489, %v298
      %v491 = vpop.permute.xlu0 %490
      %494 = vset.pattern.permute.xlu0 0
      %495 = vperm.xlu0 %494, %v299
      %v496 = vpop.permute.xlu0 %495
      %499 = vset.pattern.permute.xlu0 0
      %500 = vperm.xlu0 %499, %v300
      %v501 = vpop.permute.xlu0 %500
      %504 = vset.pattern.permute.xlu0 0
      %505 = vperm.xlu0 %504, %v301
      %v506 = vpop.permute.xlu0 %505
      %509 = vset.pattern.permute.xlu0 0
      %510 = vperm.xlu0 %509, %v302
      %v511 = vpop.permute.xlu0 %510
      %514 = vset.pattern.permute.xlu0 0
      %515 = vperm.xlu0 %514, %v303
      %v516 = vpop.permute.xlu0 %515
      %519 = vset.pattern.permute.xlu0 0
      %520 = vperm.xlu0 %519, %v304
      %v521 = vpop.permute.xlu0 %520
      %524 = vset.pattern.permute.xlu0 0
      %525 = vperm.xlu0 %524, %v305
      %v526 = vpop.permute.xlu0 %525
      %529 = vset.pattern.permute.xlu0 0
      %530 = vperm.xlu0 %529, %v306
      %v531 = vpop.permute.xlu0 %530
      %534 = vset.pattern.permute.xlu0 0
      %535 = vperm.xlu0 %534, %v307
      %v536 = vpop.permute.xlu0 %535
      %539 = vset.pattern.permute.xlu0 0
      %540 = vperm.xlu0 %539, %v308
      %v541 = vpop.permute.xlu0 %540
      %544 = vset.pattern.permute.xlu0 0
      %545 = vperm.xlu0 %544, %v309
      %v546 = vpop.permute.xlu0 %545
      %549 = vset.pattern.permute.xlu0 0
      %550 = vperm.xlu0 %549, %v310
      %v551 = vpop.permute.xlu0 %550
      %554 = vset.pattern.permute.xlu0 0
      %555 = vperm.xlu0 %554, %v311
      %v556 = vpop.permute.xlu0 %555
      %559 = vset.pattern.permute.xlu0 0
      %560 = vperm.xlu0 %559, %v312
      %v561 = vpop.permute.xlu0 %560
      %564 = vset.pattern.permute.xlu0 0
      %565 = vperm.xlu0 %564, %v313
      %v566 = vpop.permute.xlu0 %565
      %569 = vset.pattern.permute.xlu0 0
      %570 = vperm.xlu0 %569, %v314
      %v571 = vpop.permute.xlu0 %570
      %574 = vset.pattern.permute.xlu0 0
      %575 = vperm.xlu0 %574, %v315
      %v576 = vpop.permute.xlu0 %575
      %579 = vset.pattern.permute.xlu0 0
      %580 = vperm.xlu0 %579, %v316
      %v581 = vpop.permute.xlu0 %580
      %584 = vset.pattern.permute.xlu0 0
      %585 = vperm.xlu0 %584, %v317
      %v586 = vpop.permute.xlu0 %585
      %589 = vset.pattern.permute.xlu0 0
      %590 = vperm.xlu0 %589, %v318
      %v591 = vpop.permute.xlu0 %590
      %594 = vset.pattern.permute.xlu0 0
      %595 = vperm.xlu0 %594, %v319
      %v596 = vpop.permute.xlu0 %595
      %599 = vset.pattern.permute.xlu0 0
      %600 = vperm.xlu0 %599, %v320
      %v601 = vpop.permute.xlu0 %600
      %604 = vset.pattern.permute.xlu0 0
      %605 = vperm.xlu0 %604, %v321
      %v606 = vpop.permute.xlu0 %605
      %609 = vset.pattern.permute.xlu0 0
      %610 = vperm.xlu0 %609, %v322
      %v611 = vpop.permute.xlu0 %610
      %614 = vset.pattern.permute.xlu0 0
      %615 = vperm.xlu0 %614, %v323
      %v616 = vpop.permute.xlu0 %615
      %619 = vset.pattern.permute.xlu0 0
      %620 = vperm.xlu0 %619, %v324
      %v621 = vpop.permute.xlu0 %620
      %624 = vset.pattern.permute.xlu0 0
      %625 = vperm.xlu0 %624, %v325
      %v626 = vpop.permute.xlu0 %625
      %629 = vset.pattern.permute.xlu0 0
      %630 = vperm.xlu0 %629, %v326
      %v631 = vpop.permute.xlu0 %630
      %634 = vset.pattern.permute.xlu0 0
      %635 = vperm.xlu0 %634, %v327
      %v636 = vpop.permute.xlu0 %635
      %639 = vset.pattern.permute.xlu0 0
      %640 = vperm.xlu0 %639, %v328
      %v641 = vpop.permute.xlu0 %640
      %644 = vset.pattern.permute.xlu0 0
      %645 = vperm.xlu0 %644, %v329
      %v646 = vpop.permute.xlu0 %645
      %649 = vset.pattern.permute.xlu0 0
      %650 = vperm.xlu0 %649, %v330
      %v651 = vpop.permute.xlu0 %650
      %654 = vset.pattern.permute.xlu0 0
      %655 = vperm.xlu0 %654, %v331
      %v656 = vpop.permute.xlu0 %655
      %659 = vset.pattern.permute.xlu0 0
      %660 = vperm.xlu0 %659, %v332
      %v661 = vpop.permute.xlu0 %660
      %664 = vset.pattern.permute.xlu0 0
      %665 = vperm.xlu0 %664, %v333
      %v666 = vpop.permute.xlu0 %665
      %669 = vset.pattern.permute.xlu0 0
      %670 = vperm.xlu0 %669, %v334
      %v671 = vpop.permute.xlu0 %670
      %674 = vset.pattern.permute.xlu0 0
      %675 = vperm.xlu0 %674, %v335
      %v676 = vpop.permute.xlu0 %675
      %679 = vset.pattern.permute.xlu0 0
      %680 = vperm.xlu0 %679, %v336
      %v681 = vpop.permute.xlu0 %680
      %684 = vset.pattern.permute.xlu0 0
      %685 = vperm.xlu0 %684, %v337
      %v686 = vpop.permute.xlu0 %685
      %689 = vset.pattern.permute.xlu0 0
      %690 = vperm.xlu0 %689, %v338
      %v691 = vpop.permute.xlu0 %690
      %694 = vset.pattern.permute.xlu0 0
      %695 = vperm.xlu0 %694, %v339
      %v696 = vpop.permute.xlu0 %695
      %699 = vset.pattern.permute.xlu0 0
      %700 = vperm.xlu0 %699, %v340
      %v701 = vpop.permute.xlu0 %700
      %704 = vset.pattern.permute.xlu0 0
      %705 = vperm.xlu0 %704, %v341
      %v706 = vpop.permute.xlu0 %705
      %709 = vset.pattern.permute.xlu0 0
      %710 = vperm.xlu0 %709, %v342
      %v711 = vpop.permute.xlu0 %710
      %714 = vset.pattern.permute.xlu0 0
      %715 = vperm.xlu0 %714, %v343
      %v716 = vpop.permute.xlu0 %715
      %719 = vset.pattern.permute.xlu0 0
      %720 = vperm.xlu0 %719, %v344
      %v721 = vpop.permute.xlu0 %720
      %724 = vset.pattern.permute.xlu0 0
      %725 = vperm.xlu0 %724, %v345
      %v726 = vpop.permute.xlu0 %725
      %729 = vset.pattern.permute.xlu0 0
      %730 = vperm.xlu0 %729, %v346
      %v731 = vpop.permute.xlu0 %730
      %734 = vset.pattern.permute.xlu0 0
      %735 = vperm.xlu0 %734, %v347
      %v736 = vpop.permute.xlu0 %735
      %739 = vset.pattern.permute.xlu0 0
      %740 = vperm.xlu0 %739, %v348
      %v741 = vpop.permute.xlu0 %740
      %744 = vset.pattern.permute.xlu0 0
      %745 = vperm.xlu0 %744, %v349
      %v746 = vpop.permute.xlu0 %745
      %749 = vset.pattern.permute.xlu0 0
      %750 = vperm.xlu0 %749, %v350
      %v751 = vpop.permute.xlu0 %750
      %754 = vset.pattern.permute.xlu0 0
      %755 = vperm.xlu0 %754, %v351
      %v756 = vpop.permute.xlu0 %755
      %759 = vset.pattern.permute.xlu0 0
      %760 = vperm.xlu0 %759, %v352
      %v761 = vpop.permute.xlu0 %760
      %764 = vset.pattern.permute.xlu0 0
      %765 = vperm.xlu0 %764, %v353
      %v766 = vpop.permute.xlu0 %765
      %769 = vset.pattern.permute.xlu0 0
      %770 = vperm.xlu0 %769, %v354
      %v771 = vpop.permute.xlu0 %770
      %774 = vset.pattern.permute.xlu0 0
      %775 = vperm.xlu0 %774, %v355
      %v776 = vpop.permute.xlu0 %775
      %779 = vset.pattern.permute.xlu0 0
      %780 = vperm.xlu0 %779, %v356
      %v781 = vpop.permute.xlu0 %780
      %784 = vset.pattern.permute.xlu0 0
      %785 = vperm.xlu0 %784, %v357
      %v786 = vpop.permute.xlu0 %785
      %789 = vset.pattern.permute.xlu0 0
      %790 = vperm.xlu0 %789, %v358
      %v791 = vpop.permute.xlu0 %790
      %794 = vset.pattern.permute.xlu0 0
      %795 = vperm.xlu0 %794, %v359
      %v796 = vpop.permute.xlu0 %795
      %799 = vset.pattern.permute.xlu0 0
      %800 = vperm.xlu0 %799, %v360
      %v801 = vpop.permute.xlu0 %800
      %804 = vset.pattern.permute.xlu0 0
      %805 = vperm.xlu0 %804, %v361
      %v806 = vpop.permute.xlu0 %805
      %809 = vset.pattern.permute.xlu0 0
      %810 = vperm.xlu0 %809, %v362
      %v811 = vpop.permute.xlu0 %810
      %814 = vset.pattern.permute.xlu0 0
      %815 = vperm.xlu0 %814, %v363
      %v816 = vpop.permute.xlu0 %815
      %819 = vset.pattern.permute.xlu0 0
      %820 = vperm.xlu0 %819, %v364
      %v821 = vpop.permute.xlu0 %820
      %824 = vset.pattern.permute.xlu0 0
      %825 = vperm.xlu0 %824, %v365
      %v826 = vpop.permute.xlu0 %825
      %829 = vset.pattern.permute.xlu0 0
      %830 = vperm.xlu0 %829, %v366
      %v831 = vpop.permute.xlu0 %830
      %834 = vset.pattern.permute.xlu0 0
      %835 = vperm.xlu0 %834, %v367
      %v836 = vpop.permute.xlu0 %835
      %839 = vset.pattern.permute.xlu0 0
      %840 = vperm.xlu0 %839, %v368
      %v841 = vpop.permute.xlu0 %840
      %844 = vset.pattern.permute.xlu0 0
      %845 = vperm.xlu0 %844, %v369
      %v846 = vpop.permute.xlu0 %845
      %849 = vset.pattern.permute.xlu0 0
      %850 = vperm.xlu0 %849, %v370
      %v851 = vpop.permute.xlu0 %850
      %854 = vset.pattern.permute.xlu0 0
      %855 = vperm.xlu0 %854, %v371
      %v856 = vpop.permute.xlu0 %855
      %859 = vset.pattern.permute.xlu0 0
      %860 = vperm.xlu0 %859, %v372
      %v861 = vpop.permute.xlu0 %860
      %864 = vset.pattern.permute.xlu0 0
      %865 = vperm.xlu0 %864, %v373
      %v866 = vpop.permute.xlu0 %865
      %869 = vset.pattern.permute.xlu0 0
      %870 = vperm.xlu0 %869, %v374
      %v871 = vpop.permute.xlu0 %870
      %874 = vset.pattern.permute.xlu0 0
      %875 = vperm.xlu0 %874, %v375
      %v876 = vpop.permute.xlu0 %875
      %879 = vset.pattern.permute.xlu0 0
      %880 = vperm.xlu0 %879, %v376
      %v881 = vpop.permute.xlu0 %880
      %884 = vset.pattern.permute.xlu0 0
      %885 = vperm.xlu0 %884, %v377
      %v886 = vpop.permute.xlu0 %885
      %889 = vset.pattern.permute.xlu0 0
      %890 = vperm.xlu0 %889, %v378
      %v891 = vpop.permute.xlu0 %890
      %894 = vset.pattern.permute.xlu0 0
      %895 = vperm.xlu0 %894, %v379
      %v896 = vpop.permute.xlu0 %895
      %899 = vset.pattern.permute.xlu0 0
      %900 = vperm.xlu0 %899, %v380
      %v901 = vpop.permute.xlu0 %900
      %904 = vset.pattern.permute.xlu0 0
      %905 = vperm.xlu0 %904, %v381
      %v906 = vpop.permute.xlu0 %905
      %v908 = vperm.slane %v382, 0
      %v909 = vmul.f32 %v386, %v908
      %v910 = vmul.f32 %v391, %v908
      %v911 = vmul.f32 %v396, %v908
      %v912 = vmul.f32 %v401, %v908
      %v913 = vmul.f32 %v406, %v908
      %v914 = vmul.f32 %v411, %v908
      %v915 = vmul.f32 %v416, %v908
      %v916 = vmul.f32 %v421, %v908
      %v917 = vmul.f32 %v426, %v908
      %v918 = vmul.f32 %v431, %v908
      %v919 = vmul.f32 %v436, %v908
      %v920 = vmul.f32 %v441, %v908
      %v921 = vmul.f32 %v446, %v908
      %v922 = vmul.f32 %v451, %v908
      %v923 = vmul.f32 %v456, %v908
      %v924 = vmul.f32 %v461, %v908
      %v925 = vmul.f32 %v466, %v908
      %v926 = vmul.f32 %v471, %v908
      %v927 = vmul.f32 %v476, %v908
      %v928 = vmul.f32 %v481, %v908
      %v929 = vmul.f32 %v486, %v908
      %v930 = vmul.f32 %v491, %v908
      %v931 = vmul.f32 %v496, %v908
      %v932 = vmul.f32 %v501, %v908
      %v933 = vmul.f32 %v506, %v908
      %v934 = vmul.f32 %v511, %v908
      %v935 = vmul.f32 %v516, %v908
      %v936 = vmul.f32 %v521, %v908
      %v937 = vmul.f32 %v526, %v908
      %v938 = vmul.f32 %v531, %v908
      %v939 = vmul.f32 %v536, %v908
      %v940 = vmul.f32 %v541, %v908
      %v941 = vmul.f32 %v546, %v908
      %v942 = vmul.f32 %v551, %v908
      %v943 = vmul.f32 %v556, %v908
      %v944 = vmul.f32 %v561, %v908
      %v945 = vmul.f32 %v566, %v908
      %v946 = vmul.f32 %v571, %v908
      %v947 = vmul.f32 %v576, %v908
      %v948 = vmul.f32 %v581, %v908
      %v949 = vmul.f32 %v586, %v908
      %v950 = vmul.f32 %v591, %v908
      %v951 = vmul.f32 %v596, %v908
      %v952 = vmul.f32 %v601, %v908
      %v953 = vmul.f32 %v606, %v908
      %v954 = vmul.f32 %v611, %v908
      %v955 = vmul.f32 %v616, %v908
      %v956 = vmul.f32 %v621, %v908
      %v957 = vmul.f32 %v626, %v908
      %v958 = vmul.f32 %v631, %v908
      %v959 = vmul.f32 %v636, %v908
      %v960 = vmul.f32 %v641, %v908
      %v961 = vmul.f32 %v646, %v908
      %v962 = vmul.f32 %v651, %v908
      %v963 = vmul.f32 %v656, %v908
      %v964 = vmul.f32 %v661, %v908
      %v965 = vmul.f32 %v666, %v908
      %v966 = vmul.f32 %v671, %v908
      %v967 = vmul.f32 %v676, %v908
      %v968 = vmul.f32 %v681, %v908
      %v969 = vmul.f32 %v686, %v908
      %v970 = vmul.f32 %v691, %v908
      %v971 = vmul.f32 %v696, %v908
      %v972 = vmul.f32 %v701, %v908
      %v973 = vmul.f32 %v706, %v908
      %v974 = vmul.f32 %v711, %v908
      %v975 = vmul.f32 %v716, %v908
      %v976 = vmul.f32 %v721, %v908
      %v977 = vmul.f32 %v726, %v908
      %v978 = vmul.f32 %v731, %v908
      %v979 = vmul.f32 %v736, %v908
      %v980 = vmul.f32 %v741, %v908
      %v981 = vmul.f32 %v746, %v908
      %v982 = vmul.f32 %v751, %v908
      %v983 = vmul.f32 %v756, %v908
      %v984 = vmul.f32 %v761, %v908
      %v985 = vmul.f32 %v766, %v908
      %v986 = vmul.f32 %v771, %v908
      %v987 = vmul.f32 %v776, %v908
      %v988 = vmul.f32 %v781, %v908
      %v989 = vmul.f32 %v786, %v908
      %v990 = vmul.f32 %v791, %v908
      %v991 = vmul.f32 %v796, %v908
      %v992 = vmul.f32 %v801, %v908
      %v993 = vmul.f32 %v806, %v908
      %v994 = vmul.f32 %v811, %v908
      %v995 = vmul.f32 %v816, %v908
      %v996 = vmul.f32 %v821, %v908
      %v997 = vmul.f32 %v826, %v908
      %v998 = vmul.f32 %v831, %v908
      %v999 = vmul.f32 %v836, %v908
      %v1000 = vmul.f32 %v841, %v908
      %v1001 = vmul.f32 %v846, %v908
      %v1002 = vmul.f32 %v851, %v908
      %v1003 = vmul.f32 %v856, %v908
      %v1004 = vmul.f32 %v861, %v908
      %v1005 = vmul.f32 %v866, %v908
      %v1006 = vmul.f32 %v871, %v908
      %v1007 = vmul.f32 %v876, %v908
      %v1008 = vmul.f32 %v881, %v908
      %v1009 = vmul.f32 %v886, %v908
      %v1010 = vmul.f32 %v891, %v908
      %v1011 = vmul.f32 %v896, %v908
      %v1012 = vmul.f32 %v901, %v908
      %v1013 = vmul.f32 %v906, %v908
      %v1014 = vadd.f32 %v909, 0.0
      %v1015 = vadd.f32 %v910, 0.0
      %v1016 = vadd.f32 %v911, 0.0
      %v1017 = vadd.f32 %v912, 0.0
      %v1018 = vadd.f32 %v913, 0.0
      %v1019 = vadd.f32 %v914, 0.0
      %v1020 = vadd.f32 %v915, 0.0
      %v1021 = vadd.f32 %v916, 0.0
      %v1022 = vadd.f32 %v917, 0.0
      %v1023 = vadd.f32 %v918, 0.0
      %v1024 = vadd.f32 %v919, 0.0
      %v1025 = vadd.f32 %v920, 0.0
      %v1026 = vadd.f32 %v921, 0.0
      %v1027 = vadd.f32 %v922, 0.0
      %v1028 = vadd.f32 %v923, 0.0
      %v1029 = vadd.f32 %v924, 0.0
      %v1030 = vadd.f32 %v925, 0.0
      %v1031 = vadd.f32 %v926, 0.0
      %v1032 = vadd.f32 %v927, 0.0
      %v1033 = vadd.f32 %v928, 0.0
      %v1034 = vadd.f32 %v929, 0.0
      %v1035 = vadd.f32 %v930, 0.0
      %v1036 = vadd.f32 %v931, 0.0
      %v1037 = vadd.f32 %v932, 0.0
      %v1038 = vadd.f32 %v933, 0.0
      %v1039 = vadd.f32 %v934, 0.0
      %v1040 = vadd.f32 %v935, 0.0
      %v1041 = vadd.f32 %v936, 0.0
      %v1042 = vadd.f32 %v937, 0.0
      %v1043 = vadd.f32 %v938, 0.0
      %v1044 = vadd.f32 %v939, 0.0
      %v1045 = vadd.f32 %v940, 0.0
      %v1046 = vadd.f32 %v941, 0.0
      %v1047 = vadd.f32 %v942, 0.0
      %v1048 = vadd.f32 %v943, 0.0
      %v1049 = vadd.f32 %v944, 0.0
      %v1050 = vadd.f32 %v945, 0.0
      %v1051 = vadd.f32 %v946, 0.0
      %v1052 = vadd.f32 %v947, 0.0
      %v1053 = vadd.f32 %v948, 0.0
      %v1054 = vadd.f32 %v949, 0.0
      %v1055 = vadd.f32 %v950, 0.0
      %v1056 = vadd.f32 %v951, 0.0
      %v1057 = vadd.f32 %v952, 0.0
      %v1058 = vadd.f32 %v953, 0.0
      %v1059 = vadd.f32 %v954, 0.0
      %v1060 = vadd.f32 %v955, 0.0
      %v1061 = vadd.f32 %v956, 0.0
      %v1062 = vadd.f32 %v957, 0.0
      %v1063 = vadd.f32 %v958, 0.0
      %v1064 = vadd.f32 %v959, 0.0
      %v1065 = vadd.f32 %v960, 0.0
      %v1066 = vadd.f32 %v961, 0.0
      %v1067 = vadd.f32 %v962, 0.0
      %v1068 = vadd.f32 %v963, 0.0
      %v1069 = vadd.f32 %v964, 0.0
      %v1070 = vadd.f32 %v965, 0.0
      %v1071 = vadd.f32 %v966, 0.0
      %v1072 = vadd.f32 %v967, 0.0
      %v1073 = vadd.f32 %v968, 0.0
      %v1074 = vadd.f32 %v969, 0.0
      %v1075 = vadd.f32 %v970, 0.0
      %v1076 = vadd.f32 %v971, 0.0
      %v1077 = vadd.f32 %v972, 0.0
      %v1078 = vadd.f32 %v973, 0.0
      %v1079 = vadd.f32 %v974, 0.0
      %v1080 = vadd.f32 %v975, 0.0
      %v1081 = vadd.f32 %v976, 0.0
      %v1082 = vadd.f32 %v977, 0.0
      %v1083 = vadd.f32 %v978, 0.0
      %v1084 = vadd.f32 %v979, 0.0
      %v1085 = vadd.f32 %v980, 0.0
      %v1086 = vadd.f32 %v981, 0.0
      %v1087 = vadd.f32 %v982, 0.0
      %v1088 = vadd.f32 %v983, 0.0
      %v1089 = vadd.f32 %v984, 0.0
      %v1090 = vadd.f32 %v985, 0.0
      %v1091 = vadd.f32 %v986, 0.0
      %v1092 = vadd.f32 %v987, 0.0
      %v1093 = vadd.f32 %v988, 0.0
      %v1094 = vadd.f32 %v989, 0.0
      %v1095 = vadd.f32 %v990, 0.0
      %v1096 = vadd.f32 %v991, 0.0
      %v1097 = vadd.f32 %v992, 0.0
      %v1098 = vadd.f32 %v993, 0.0
      %v1099 = vadd.f32 %v994, 0.0
      %v1100 = vadd.f32 %v995, 0.0
      %v1101 = vadd.f32 %v996, 0.0
      %v1102 = vadd.f32 %v997, 0.0
      %v1103 = vadd.f32 %v998, 0.0
      %v1104 = vadd.f32 %v999, 0.0
      %v1105 = vadd.f32 %v1000, 0.0
      %v1106 = vadd.f32 %v1001, 0.0
      %v1107 = vadd.f32 %v1002, 0.0
      %v1108 = vadd.f32 %v1003, 0.0
      %v1109 = vadd.f32 %v1004, 0.0
      %v1110 = vadd.f32 %v1005, 0.0
      %v1111 = vadd.f32 %v1006, 0.0
      %v1112 = vadd.f32 %v1007, 0.0
      %v1113 = vadd.f32 %v1008, 0.0
      %v1114 = vadd.f32 %v1009, 0.0
      %v1115 = vadd.f32 %v1010, 0.0
      %v1116 = vadd.f32 %v1011, 0.0
      %v1117 = vadd.f32 %v1012, 0.0
      %v1118 = vadd.f32 %v1013, 0.0
      %v1119 = vld [vmem:[%s165] sm:$0xf]
      %v1120 = vld [vmem:[%s165 + $0x4] sm:$0xf]
      %v1121 = vld [vmem:[%s165 + $0x8] sm:$0xf]
      %v1122 = vld [vmem:[%s165 + $0xc] sm:$0xf]
      %v1123 = vld [vmem:[%s165 + $0x10] sm:$0xf]
      %v1124 = vld [vmem:[%s165 + $0x14] sm:$0xf]
      %v1125 = vld [vmem:[%s165 + $0x18] sm:$0xf]
      %v1126 = vld [vmem:[%s165 + $0x1c] sm:$0xf]
      %v1127 = vld [vmem:[%s165 + $0x20] sm:$0xf]
      %v1128 = vld [vmem:[%s165 + $0x24] sm:$0xf]
      %v1129 = vld [vmem:[%s165 + $0x28] sm:$0xf]
      %v1130 = vld [vmem:[%s165 + $0x2c] sm:$0xf]
      %v1131 = vld [vmem:[%s165 + $0x30] sm:$0xf]
      %v1132 = vld [vmem:[%s165 + $0x34] sm:$0xf]
      %v1133 = vld [vmem:[%s165 + $0x38] sm:$0xf]
      %v1134 = vld [vmem:[%s165 + $0x3c] sm:$0xf]
      %v1135 = vld [vmem:[%s165 + $0x40] sm:$0xf]
      %v1136 = vld [vmem:[%s165 + $0x44] sm:$0xf]
      %v1137 = vld [vmem:[%s165 + $0x48] sm:$0xf]
      %v1138 = vld [vmem:[%s165 + $0x4c] sm:$0xf]
      %v1139 = vld [vmem:[%s165 + $0x50] sm:$0xf]
      %v1140 = vld [vmem:[%s165 + $0x54] sm:$0xf]
      %v1141 = vld [vmem:[%s165 + $0x58] sm:$0xf]
      %v1142 = vld [vmem:[%s165 + $0x5c] sm:$0xf]
      %v1143 = vld [vmem:[%s165 + $0x60] sm:$0xf]
      %v1144 = vld [vmem:[%s165 + $0x64] sm:$0xf]
      %v1145 = vld [vmem:[%s165 + $0x68] sm:$0xf]
      %v1146 = vld [vmem:[%s165 + $0x6c] sm:$0xf]
      %v1147 = vld [vmem:[%s165 + $0x70] sm:$0xf]
      %v1148 = vld [vmem:[%s165 + $0x74] sm:$0xf]
      %v1149 = vld [vmem:[%s165 + $0x78] sm:$0xf]
      %v1150 = vld [vmem:[%s165 + $0x7c] sm:$0xf]
      %v1151 = vld [vmem:[%s165 + $0x80] sm:$0xf]
      %v1152 = vld [vmem:[%s165 + $0x84] sm:$0xf]
      %v1153 = vld [vmem:[%s165 + $0x88] sm:$0xf]
      %v1154 = vld [vmem:[%s165 + $0x8c] sm:$0xf]
      %v1155 = vld [vmem:[%s165 + $0x90] sm:$0xf]
      %v1156 = vld [vmem:[%s165 + $0x94] sm:$0xf]
      %v1157 = vld [vmem:[%s165 + $0x98] sm:$0xf]
      %v1158 = vld [vmem:[%s165 + $0x9c] sm:$0xf]
      %v1159 = vld [vmem:[%s165 + $0xa0] sm:$0xf]
      %v1160 = vld [vmem:[%s165 + $0xa4] sm:$0xf]
      %v1161 = vld [vmem:[%s165 + $0xa8] sm:$0xf]
      %v1162 = vld [vmem:[%s165 + $0xac] sm:$0xf]
      %v1163 = vld [vmem:[%s165 + $0xb0] sm:$0xf]
      %v1164 = vld [vmem:[%s165 + $0xb4] sm:$0xf]
      %v1165 = vld [vmem:[%s165 + $0xb8] sm:$0xf]
      %v1166 = vld [vmem:[%s165 + $0xbc] sm:$0xf]
      %v1167 = vld [vmem:[%s165 + $0xc0] sm:$0xf]
      %v1168 = vld [vmem:[%s165 + $0xc4] sm:$0xf]
      %v1169 = vld [vmem:[%s165 + $0xc8] sm:$0xf]
      %v1170 = vld [vmem:[%s165 + $0xcc] sm:$0xf]
      %v1171 = vld [vmem:[%s165 + $0xd0] sm:$0xf]
      %v1172 = vld [vmem:[%s165 + $0xd4] sm:$0xf]
      %v1173 = vld [vmem:[%s165 + $0xd8] sm:$0xf]
      %v1174 = vld [vmem:[%s165 + $0xdc] sm:$0xf]
      %v1175 = vld [vmem:[%s165 + $0xe0] sm:$0xf]
      %v1176 = vld [vmem:[%s165 + $0xe4] sm:$0xf]
      %v1177 = vld [vmem:[%s165 + $0xe8] sm:$0xf]
      %v1178 = vld [vmem:[%s165 + $0xec] sm:$0xf]
      %v1179 = vld [vmem:[%s165 + $0xf0] sm:$0xf]
      %v1180 = vld [vmem:[%s165 + $0xf4] sm:$0xf]
      %v1181 = vld [vmem:[%s165 + $0xf8] sm:$0xf]
      %v1182 = vld [vmem:[%s165 + $0xfc] sm:$0xf]
      %v1183 = vld [vmem:[%s165 + $0x100] sm:$0xf]
      %v1184 = vld [vmem:[%s165 + $0x104] sm:$0xf]
      %v1185 = vld [vmem:[%s165 + $0x108] sm:$0xf]
      %v1186 = vld [vmem:[%s165 + $0x10c] sm:$0xf]
      %v1187 = vld [vmem:[%s165 + $0x110] sm:$0xf]
      %v1188 = vld [vmem:[%s165 + $0x114] sm:$0xf]
      %v1189 = vld [vmem:[%s165 + $0x118] sm:$0xf]
      %v1190 = vld [vmem:[%s165 + $0x11c] sm:$0xf]
      %v1191 = vld [vmem:[%s165 + $0x120] sm:$0xf]
      %v1192 = vld [vmem:[%s165 + $0x124] sm:$0xf]
      %v1193 = vld [vmem:[%s165 + $0x128] sm:$0xf]
      %v1194 = vld [vmem:[%s165 + $0x12c] sm:$0xf]
      %v1195 = vld [vmem:[%s165 + $0x130] sm:$0xf]
      %v1196 = vld [vmem:[%s165 + $0x134] sm:$0xf]
      %v1197 = vld [vmem:[%s165 + $0x138] sm:$0xf]
      %v1198 = vld [vmem:[%s165 + $0x13c] sm:$0xf]
      %v1199 = vld [vmem:[%s165 + $0x140] sm:$0xf]
      %v1200 = vld [vmem:[%s165 + $0x144] sm:$0xf]
      %v1201 = vld [vmem:[%s165 + $0x148] sm:$0xf]
      %v1202 = vld [vmem:[%s165 + $0x14c] sm:$0xf]
      %v1203 = vld [vmem:[%s165 + $0x150] sm:$0xf]
      %v1204 = vld [vmem:[%s165 + $0x154] sm:$0xf]
      %v1205 = vld [vmem:[%s165 + $0x158] sm:$0xf]
      %v1206 = vld [vmem:[%s165 + $0x15c] sm:$0xf]
      %v1207 = vld [vmem:[%s165 + $0x160] sm:$0xf]
      %v1208 = vld [vmem:[%s165 + $0x164] sm:$0xf]
      %v1209 = vld [vmem:[%s165 + $0x168] sm:$0xf]
      %v1210 = vld [vmem:[%s165 + $0x16c] sm:$0xf]
      %v1211 = vld [vmem:[%s165 + $0x170] sm:$0xf]
      %v1212 = vld [vmem:[%s165 + $0x174] sm:$0xf]
      %v1213 = vld [vmem:[%s165 + $0x178] sm:$0xf]
      %v1214 = vld [vmem:[%s165 + $0x17c] sm:$0xf]
      %v1215 = vld [vmem:[%s165 + $0x180] sm:$0xf]
      %v1216 = vld [vmem:[%s165 + $0x184] sm:$0xf]
      %v1217 = vld [vmem:[%s165 + $0x188] sm:$0xf]
      %v1218 = vld [vmem:[%s165 + $0x18c] sm:$0xf]
      %v1219 = vld [vmem:[%s165 + $0x190] sm:$0xf]
      %v1220 = vld [vmem:[%s165 + $0x194] sm:$0xf]
      %v1221 = vld [vmem:[%s165 + $0x198] sm:$0xf]
      %v1222 = vld [vmem:[%s165 + $0x19c] sm:$0xf]
      %v1223 = vld [vmem:[%s165 + $0x1a0] sm:$0xf]
      %v1224 = vld [vmem:[%s165 + $0x1a4] sm:$0x1]
      %v1225 = vunpack.c.l.bf16 %v1119
      %v1226 = vunpack.c.l.bf16 %v1120
      %v1227 = vunpack.c.l.bf16 %v1121
      %v1228 = vunpack.c.l.bf16 %v1122
      %v1229 = vunpack.c.l.bf16 %v1123
      %v1230 = vunpack.c.l.bf16 %v1124
      %v1231 = vunpack.c.l.bf16 %v1125
      %v1232 = vunpack.c.l.bf16 %v1126
      %v1233 = vunpack.c.l.bf16 %v1127
      %v1234 = vunpack.c.l.bf16 %v1128
      %v1235 = vunpack.c.l.bf16 %v1129
      %v1236 = vunpack.c.l.bf16 %v1130
      %v1237 = vunpack.c.l.bf16 %v1131
      %v1238 = vunpack.c.l.bf16 %v1132
      %v1239 = vunpack.c.l.bf16 %v1133
      %v1240 = vunpack.c.l.bf16 %v1134
      %v1241 = vunpack.c.l.bf16 %v1135
      %v1242 = vunpack.c.l.bf16 %v1136
      %v1243 = vunpack.c.l.bf16 %v1137
      %v1244 = vunpack.c.l.bf16 %v1138
      %v1245 = vunpack.c.l.bf16 %v1139
      %v1246 = vunpack.c.l.bf16 %v1140
      %v1247 = vunpack.c.l.bf16 %v1141
      %v1248 = vunpack.c.l.bf16 %v1142
      %v1249 = vunpack.c.l.bf16 %v1143
      %v1250 = vunpack.c.l.bf16 %v1144
      %v1251 = vunpack.c.l.bf16 %v1145
      %v1252 = vunpack.c.l.bf16 %v1146
      %v1253 = vunpack.c.l.bf16 %v1147
      %v1254 = vunpack.c.l.bf16 %v1148
      %v1255 = vunpack.c.l.bf16 %v1149
      %v1256 = vunpack.c.l.bf16 %v1150
      %v1257 = vunpack.c.l.bf16 %v1151
      %v1258 = vunpack.c.l.bf16 %v1152
      %v1259 = vunpack.c.l.bf16 %v1153
      %v1260 = vunpack.c.l.bf16 %v1154
      %v1261 = vunpack.c.l.bf16 %v1155
      %v1262 = vunpack.c.l.bf16 %v1156
      %v1263 = vunpack.c.l.bf16 %v1157
      %v1264 = vunpack.c.l.bf16 %v1158
      %v1265 = vunpack.c.l.bf16 %v1159
      %v1266 = vunpack.c.l.bf16 %v1160
      %v1267 = vunpack.c.l.bf16 %v1161
      %v1268 = vunpack.c.l.bf16 %v1162
      %v1269 = vunpack.c.l.bf16 %v1163
      %v1270 = vunpack.c.l.bf16 %v1164
      %v1271 = vunpack.c.l.bf16 %v1165
      %v1272 = vunpack.c.l.bf16 %v1166
      %v1273 = vunpack.c.l.bf16 %v1167
      %v1274 = vunpack.c.l.bf16 %v1168
      %v1275 = vunpack.c.l.bf16 %v1169
      %v1276 = vunpack.c.l.bf16 %v1170
      %v1277 = vunpack.c.l.bf16 %v1171
      %v1278 = vunpack.c.l.bf16 %v1172
      %v1279 = vunpack.c.l.bf16 %v1173
      %v1280 = vunpack.c.l.bf16 %v1174
      %v1281 = vunpack.c.l.bf16 %v1175
      %v1282 = vunpack.c.l.bf16 %v1176
      %v1283 = vunpack.c.l.bf16 %v1177
      %v1284 = vunpack.c.l.bf16 %v1178
      %v1285 = vunpack.c.l.bf16 %v1179
      %v1286 = vunpack.c.l.bf16 %v1180
      %v1287 = vunpack.c.l.bf16 %v1181
      %v1288 = vunpack.c.l.bf16 %v1182
      %v1289 = vunpack.c.l.bf16 %v1183
      %v1290 = vunpack.c.l.bf16 %v1184
      %v1291 = vunpack.c.l.bf16 %v1185
      %v1292 = vunpack.c.l.bf16 %v1186
      %v1293 = vunpack.c.l.bf16 %v1187
      %v1294 = vunpack.c.l.bf16 %v1188
      %v1295 = vunpack.c.l.bf16 %v1189
      %v1296 = vunpack.c.l.bf16 %v1190
      %v1297 = vunpack.c.l.bf16 %v1191
      %v1298 = vunpack.c.l.bf16 %v1192
      %v1299 = vunpack.c.l.bf16 %v1193
      %v1300 = vunpack.c.l.bf16 %v1194
      %v1301 = vunpack.c.l.bf16 %v1195
      %v1302 = vunpack.c.l.bf16 %v1196
      %v1303 = vunpack.c.l.bf16 %v1197
      %v1304 = vunpack.c.l.bf16 %v1198
      %v1305 = vunpack.c.l.bf16 %v1199
      %v1306 = vunpack.c.l.bf16 %v1200
      %v1307 = vunpack.c.l.bf16 %v1201
      %v1308 = vunpack.c.l.bf16 %v1202
      %v1309 = vunpack.c.l.bf16 %v1203
      %v1310 = vunpack.c.l.bf16 %v1204
      %v1311 = vunpack.c.l.bf16 %v1205
      %v1312 = vunpack.c.l.bf16 %v1206
      %v1313 = vunpack.c.l.bf16 %v1207
      %v1314 = vunpack.c.l.bf16 %v1208
      %v1315 = vunpack.c.l.bf16 %v1209
      %v1316 = vunpack.c.l.bf16 %v1210
      %v1317 = vunpack.c.l.bf16 %v1211
      %v1318 = vunpack.c.l.bf16 %v1212
      %v1319 = vunpack.c.l.bf16 %v1213
      %v1320 = vunpack.c.l.bf16 %v1214
      %v1321 = vunpack.c.l.bf16 %v1215
      %v1322 = vunpack.c.l.bf16 %v1216
      %v1323 = vunpack.c.l.bf16 %v1217
      %v1324 = vunpack.c.l.bf16 %v1218
      %v1325 = vunpack.c.l.bf16 %v1219
      %v1326 = vunpack.c.l.bf16 %v1220
      %v1327 = vunpack.c.l.bf16 %v1221
      %v1328 = vunpack.c.l.bf16 %v1222
      %v1329 = vunpack.c.l.bf16 %v1223
      %v1330 = vunpack.c.l.bf16 %v1224
      %1332 = vset.pattern.permute.xlu0 0
      %1333 = vperm.xlu0 %1332, %v1225
      %v1334 = vpop.permute.xlu0 %1333
      %1337 = vset.pattern.permute.xlu0 0
      %1338 = vperm.xlu0 %1337, %v1226
      %v1339 = vpop.permute.xlu0 %1338
      %1342 = vset.pattern.permute.xlu0 0
      %1343 = vperm.xlu0 %1342, %v1227
      %v1344 = vpop.permute.xlu0 %1343
      %1347 = vset.pattern.permute.xlu0 0
      %1348 = vperm.xlu0 %1347, %v1228
      %v1349 = vpop.permute.xlu0 %1348
      %1352 = vset.pattern.permute.xlu0 0
      %1353 = vperm.xlu0 %1352, %v1229
      %v1354 = vpop.permute.xlu0 %1353
      %1357 = vset.pattern.permute.xlu0 0
      %1358 = vperm.xlu0 %1357, %v1230
      %v1359 = vpop.permute.xlu0 %1358
      %1362 = vset.pattern.permute.xlu0 0
      %1363 = vperm.xlu0 %1362, %v1231
      %v1364 = vpop.permute.xlu0 %1363
      %1367 = vset.pattern.permute.xlu0 0
      %1368 = vperm.xlu0 %1367, %v1232
      %v1369 = vpop.permute.xlu0 %1368
      %1372 = vset.pattern.permute.xlu0 0
      %1373 = vperm.xlu0 %1372, %v1233
      %v1374 = vpop.permute.xlu0 %1373
      %1377 = vset.pattern.permute.xlu0 0
      %1378 = vperm.xlu0 %1377, %v1234
      %v1379 = vpop.permute.xlu0 %1378
      %1382 = vset.pattern.permute.xlu0 0
      %1383 = vperm.xlu0 %1382, %v1235
      %v1384 = vpop.permute.xlu0 %1383
      %1387 = vset.pattern.permute.xlu0 0
      %1388 = vperm.xlu0 %1387, %v1236
      %v1389 = vpop.permute.xlu0 %1388
      %1392 = vset.pattern.permute.xlu0 0
      %1393 = vperm.xlu0 %1392, %v1237
      %v1394 = vpop.permute.xlu0 %1393
      %1397 = vset.pattern.permute.xlu0 0
      %1398 = vperm.xlu0 %1397, %v1238
      %v1399 = vpop.permute.xlu0 %1398
      %1402 = vset.pattern.permute.xlu0 0
      %1403 = vperm.xlu0 %1402, %v1239
      %v1404 = vpop.permute.xlu0 %1403
      %1407 = vset.pattern.permute.xlu0 0
      %1408 = vperm.xlu0 %1407, %v1240
      %v1409 = vpop.permute.xlu0 %1408
      %1412 = vset.pattern.permute.xlu0 0
      %1413 = vperm.xlu0 %1412, %v1241
      %v1414 = vpop.permute.xlu0 %1413
      %1417 = vset.pattern.permute.xlu0 0
      %1418 = vperm.xlu0 %1417, %v1242
      %v1419 = vpop.permute.xlu0 %1418
      %1422 = vset.pattern.permute.xlu0 0
      %1423 = vperm.xlu0 %1422, %v1243
      %v1424 = vpop.permute.xlu0 %1423
      %1427 = vset.pattern.permute.xlu0 0
      %1428 = vperm.xlu0 %1427, %v1244
      %v1429 = vpop.permute.xlu0 %1428
      %1432 = vset.pattern.permute.xlu0 0
      %1433 = vperm.xlu0 %1432, %v1245
      %v1434 = vpop.permute.xlu0 %1433
      %1437 = vset.pattern.permute.xlu0 0
      %1438 = vperm.xlu0 %1437, %v1246
      %v1439 = vpop.permute.xlu0 %1438
      %1442 = vset.pattern.permute.xlu0 0
      %1443 = vperm.xlu0 %1442, %v1247
      %v1444 = vpop.permute.xlu0 %1443
      %1447 = vset.pattern.permute.xlu0 0
      %1448 = vperm.xlu0 %1447, %v1248
      %v1449 = vpop.permute.xlu0 %1448
      %1452 = vset.pattern.permute.xlu0 0
      %1453 = vperm.xlu0 %1452, %v1249
      %v1454 = vpop.permute.xlu0 %1453
      %1457 = vset.pattern.permute.xlu0 0
      %1458 = vperm.xlu0 %1457, %v1250
      %v1459 = vpop.permute.xlu0 %1458
      %1462 = vset.pattern.permute.xlu0 0
      %1463 = vperm.xlu0 %1462, %v1251
      %v1464 = vpop.permute.xlu0 %1463
      %1467 = vset.pattern.permute.xlu0 0
      %1468 = vperm.xlu0 %1467, %v1252
      %v1469 = vpop.permute.xlu0 %1468
      %1472 = vset.pattern.permute.xlu0 0
      %1473 = vperm.xlu0 %1472, %v1253
      %v1474 = vpop.permute.xlu0 %1473
      %1477 = vset.pattern.permute.xlu0 0
      %1478 = vperm.xlu0 %1477, %v1254
      %v1479 = vpop.permute.xlu0 %1478
      %1482 = vset.pattern.permute.xlu0 0
      %1483 = vperm.xlu0 %1482, %v1255
      %v1484 = vpop.permute.xlu0 %1483
      %1487 = vset.pattern.permute.xlu0 0
      %1488 = vperm.xlu0 %1487, %v1256
      %v1489 = vpop.permute.xlu0 %1488
      %1492 = vset.pattern.permute.xlu0 0
      %1493 = vperm.xlu0 %1492, %v1257
      %v1494 = vpop.permute.xlu0 %1493
      %1497 = vset.pattern.permute.xlu0 0
      %1498 = vperm.xlu0 %1497, %v1258
      %v1499 = vpop.permute.xlu0 %1498
      %1502 = vset.pattern.permute.xlu0 0
      %1503 = vperm.xlu0 %1502, %v1259
      %v1504 = vpop.permute.xlu0 %1503
      %1507 = vset.pattern.permute.xlu0 0
      %1508 = vperm.xlu0 %1507, %v1260
      %v1509 = vpop.permute.xlu0 %1508
      %1512 = vset.pattern.permute.xlu0 0
      %1513 = vperm.xlu0 %1512, %v1261
      %v1514 = vpop.permute.xlu0 %1513
      %1517 = vset.pattern.permute.xlu0 0
      %1518 = vperm.xlu0 %1517, %v1262
      %v1519 = vpop.permute.xlu0 %1518
      %1522 = vset.pattern.permute.xlu0 0
      %1523 = vperm.xlu0 %1522, %v1263
      %v1524 = vpop.permute.xlu0 %1523
      %1527 = vset.pattern.permute.xlu0 0
      %1528 = vperm.xlu0 %1527, %v1264
      %v1529 = vpop.permute.xlu0 %1528
      %1532 = vset.pattern.permute.xlu0 0
      %1533 = vperm.xlu0 %1532, %v1265
      %v1534 = vpop.permute.xlu0 %1533
      %1537 = vset.pattern.permute.xlu0 0
      %1538 = vperm.xlu0 %1537, %v1266
      %v1539 = vpop.permute.xlu0 %1538
      %1542 = vset.pattern.permute.xlu0 0
      %1543 = vperm.xlu0 %1542, %v1267
      %v1544 = vpop.permute.xlu0 %1543
      %1547 = vset.pattern.permute.xlu0 0
      %1548 = vperm.xlu0 %1547, %v1268
      %v1549 = vpop.permute.xlu0 %1548
      %1552 = vset.pattern.permute.xlu0 0
      %1553 = vperm.xlu0 %1552, %v1269
      %v1554 = vpop.permute.xlu0 %1553
      %1557 = vset.pattern.permute.xlu0 0
      %1558 = vperm.xlu0 %1557, %v1270
      %v1559 = vpop.permute.xlu0 %1558
      %1562 = vset.pattern.permute.xlu0 0
      %1563 = vperm.xlu0 %1562, %v1271
      %v1564 = vpop.permute.xlu0 %1563
      %1567 = vset.pattern.permute.xlu0 0
      %1568 = vperm.xlu0 %1567, %v1272
      %v1569 = vpop.permute.xlu0 %1568
      %1572 = vset.pattern.permute.xlu0 0
      %1573 = vperm.xlu0 %1572, %v1273
      %v1574 = vpop.permute.xlu0 %1573
      %1577 = vset.pattern.permute.xlu0 0
      %1578 = vperm.xlu0 %1577, %v1274
      %v1579 = vpop.permute.xlu0 %1578
      %1582 = vset.pattern.permute.xlu0 0
      %1583 = vperm.xlu0 %1582, %v1275
      %v1584 = vpop.permute.xlu0 %1583
      %1587 = vset.pattern.permute.xlu0 0
      %1588 = vperm.xlu0 %1587, %v1276
      %v1589 = vpop.permute.xlu0 %1588
      %1592 = vset.pattern.permute.xlu0 0
      %1593 = vperm.xlu0 %1592, %v1277
      %v1594 = vpop.permute.xlu0 %1593
      %1597 = vset.pattern.permute.xlu0 0
      %1598 = vperm.xlu0 %1597, %v1278
      %v1599 = vpop.permute.xlu0 %1598
      %1602 = vset.pattern.permute.xlu0 0
      %1603 = vperm.xlu0 %1602, %v1279
      %v1604 = vpop.permute.xlu0 %1603
      %1607 = vset.pattern.permute.xlu0 0
      %1608 = vperm.xlu0 %1607, %v1280
      %v1609 = vpop.permute.xlu0 %1608
      %1612 = vset.pattern.permute.xlu0 0
      %1613 = vperm.xlu0 %1612, %v1281
      %v1614 = vpop.permute.xlu0 %1613
      %1617 = vset.pattern.permute.xlu0 0
      %1618 = vperm.xlu0 %1617, %v1282
      %v1619 = vpop.permute.xlu0 %1618
      %1622 = vset.pattern.permute.xlu0 0
      %1623 = vperm.xlu0 %1622, %v1283
      %v1624 = vpop.permute.xlu0 %1623
      %1627 = vset.pattern.permute.xlu0 0
      %1628 = vperm.xlu0 %1627, %v1284
      %v1629 = vpop.permute.xlu0 %1628
      %1632 = vset.pattern.permute.xlu0 0
      %1633 = vperm.xlu0 %1632, %v1285
      %v1634 = vpop.permute.xlu0 %1633
      %1637 = vset.pattern.permute.xlu0 0
      %1638 = vperm.xlu0 %1637, %v1286
      %v1639 = vpop.permute.xlu0 %1638
      %1642 = vset.pattern.permute.xlu0 0
      %1643 = vperm.xlu0 %1642, %v1287
      %v1644 = vpop.permute.xlu0 %1643
      %1647 = vset.pattern.permute.xlu0 0
      %1648 = vperm.xlu0 %1647, %v1288
      %v1649 = vpop.permute.xlu0 %1648
      %1652 = vset.pattern.permute.xlu0 0
      %1653 = vperm.xlu0 %1652, %v1289
      %v1654 = vpop.permute.xlu0 %1653
      %1657 = vset.pattern.permute.xlu0 0
      %1658 = vperm.xlu0 %1657, %v1290
      %v1659 = vpop.permute.xlu0 %1658
      %1662 = vset.pattern.permute.xlu0 0
      %1663 = vperm.xlu0 %1662, %v1291
      %v1664 = vpop.permute.xlu0 %1663
      %1667 = vset.pattern.permute.xlu0 0
      %1668 = vperm.xlu0 %1667, %v1292
      %v1669 = vpop.permute.xlu0 %1668
      %1672 = vset.pattern.permute.xlu0 0
      %1673 = vperm.xlu0 %1672, %v1293
      %v1674 = vpop.permute.xlu0 %1673
      %1677 = vset.pattern.permute.xlu0 0
      %1678 = vperm.xlu0 %1677, %v1294
      %v1679 = vpop.permute.xlu0 %1678
      %1682 = vset.pattern.permute.xlu0 0
      %1683 = vperm.xlu0 %1682, %v1295
      %v1684 = vpop.permute.xlu0 %1683
      %1687 = vset.pattern.permute.xlu0 0
      %1688 = vperm.xlu0 %1687, %v1296
      %v1689 = vpop.permute.xlu0 %1688
      %1692 = vset.pattern.permute.xlu0 0
      %1693 = vperm.xlu0 %1692, %v1297
      %v1694 = vpop.permute.xlu0 %1693
      %1697 = vset.pattern.permute.xlu0 0
      %1698 = vperm.xlu0 %1697, %v1298
      %v1699 = vpop.permute.xlu0 %1698
      %1702 = vset.pattern.permute.xlu0 0
      %1703 = vperm.xlu0 %1702, %v1299
      %v1704 = vpop.permute.xlu0 %1703
      %1707 = vset.pattern.permute.xlu0 0
      %1708 = vperm.xlu0 %1707, %v1300
      %v1709 = vpop.permute.xlu0 %1708
      %1712 = vset.pattern.permute.xlu0 0
      %1713 = vperm.xlu0 %1712, %v1301
      %v1714 = vpop.permute.xlu0 %1713
      %1717 = vset.pattern.permute.xlu0 0
      %1718 = vperm.xlu0 %1717, %v1302
      %v1719 = vpop.permute.xlu0 %1718
      %1722 = vset.pattern.permute.xlu0 0
      %1723 = vperm.xlu0 %1722, %v1303
      %v1724 = vpop.permute.xlu0 %1723
      %1727 = vset.pattern.permute.xlu0 0
      %1728 = vperm.xlu0 %1727, %v1304
      %v1729 = vpop.permute.xlu0 %1728
      %1732 = vset.pattern.permute.xlu0 0
      %1733 = vperm.xlu0 %1732, %v1305
      %v1734 = vpop.permute.xlu0 %1733
      %1737 = vset.pattern.permute.xlu0 0
      %1738 = vperm.xlu0 %1737, %v1306
      %v1739 = vpop.permute.xlu0 %1738
      %1742 = vset.pattern.permute.xlu0 0
      %1743 = vperm.xlu0 %1742, %v1307
      %v1744 = vpop.permute.xlu0 %1743
      %1747 = vset.pattern.permute.xlu0 0
      %1748 = vperm.xlu0 %1747, %v1308
      %v1749 = vpop.permute.xlu0 %1748
      %1752 = vset.pattern.permute.xlu0 0
      %1753 = vperm.xlu0 %1752, %v1309
      %v1754 = vpop.permute.xlu0 %1753
      %1757 = vset.pattern.permute.xlu0 0
      %1758 = vperm.xlu0 %1757, %v1310
      %v1759 = vpop.permute.xlu0 %1758
      %1762 = vset.pattern.permute.xlu0 0
      %1763 = vperm.xlu0 %1762, %v1311
      %v1764 = vpop.permute.xlu0 %1763
      %1767 = vset.pattern.permute.xlu0 0
      %1768 = vperm.xlu0 %1767, %v1312
      %v1769 = vpop.permute.xlu0 %1768
      %1772 = vset.pattern.permute.xlu0 0
      %1773 = vperm.xlu0 %1772, %v1313
      %v1774 = vpop.permute.xlu0 %1773
      %1777 = vset.pattern.permute.xlu0 0
      %1778 = vperm.xlu0 %1777, %v1314
      %v1779 = vpop.permute.xlu0 %1778
      %1782 = vset.pattern.permute.xlu0 0
      %1783 = vperm.xlu0 %1782, %v1315
      %v1784 = vpop.permute.xlu0 %1783
      %1787 = vset.pattern.permute.xlu0 0
      %1788 = vperm.xlu0 %1787, %v1316
      %v1789 = vpop.permute.xlu0 %1788
      %1792 = vset.pattern.permute.xlu0 0
      %1793 = vperm.xlu0 %1792, %v1317
      %v1794 = vpop.permute.xlu0 %1793
      %1797 = vset.pattern.permute.xlu0 0
      %1798 = vperm.xlu0 %1797, %v1318
      %v1799 = vpop.permute.xlu0 %1798
      %1802 = vset.pattern.permute.xlu0 0
      %1803 = vperm.xlu0 %1802, %v1319
      %v1804 = vpop.permute.xlu0 %1803
      %1807 = vset.pattern.permute.xlu0 0
      %1808 = vperm.xlu0 %1807, %v1320
      %v1809 = vpop.permute.xlu0 %1808
      %1812 = vset.pattern.permute.xlu0 0
      %1813 = vperm.xlu0 %1812, %v1321
      %v1814 = vpop.permute.xlu0 %1813
      %1817 = vset.pattern.permute.xlu0 0
      %1818 = vperm.xlu0 %1817, %v1322
      %v1819 = vpop.permute.xlu0 %1818
      %1822 = vset.pattern.permute.xlu0 0
      %1823 = vperm.xlu0 %1822, %v1323
      %v1824 = vpop.permute.xlu0 %1823
      %1827 = vset.pattern.permute.xlu0 0
      %1828 = vperm.xlu0 %1827, %v1324
      %v1829 = vpop.permute.xlu0 %1828
      %1832 = vset.pattern.permute.xlu0 0
      %1833 = vperm.xlu0 %1832, %v1325
      %v1834 = vpop.permute.xlu0 %1833
      %1837 = vset.pattern.permute.xlu0 0
      %1838 = vperm.xlu0 %1837, %v1326
      %v1839 = vpop.permute.xlu0 %1838
      %1842 = vset.pattern.permute.xlu0 0
      %1843 = vperm.xlu0 %1842, %v1327
      %v1844 = vpop.permute.xlu0 %1843
      %1847 = vset.pattern.permute.xlu0 0
      %1848 = vperm.xlu0 %1847, %v1328
      %v1849 = vpop.permute.xlu0 %1848
      %1852 = vset.pattern.permute.xlu0 0
      %1853 = vperm.xlu0 %1852, %v1329
      %v1854 = vpop.permute.xlu0 %1853
      %1857 = vset.pattern.permute.xlu0 0
      %1858 = vperm.xlu0 %1857, %v1330
      %v1859 = vpop.permute.xlu0 %1858
      %v1861 = vperm.slane %v382, 1
      %v1862 = vmul.f32 %v1334, %v1861
      %v1863 = vmul.f32 %v1339, %v1861
      %v1864 = vmul.f32 %v1344, %v1861
      %v1865 = vmul.f32 %v1349, %v1861
      %v1866 = vmul.f32 %v1354, %v1861
      %v1867 = vmul.f32 %v1359, %v1861
      %v1868 = vmul.f32 %v1364, %v1861
      %v1869 = vmul.f32 %v1369, %v1861
      %v1870 = vmul.f32 %v1374, %v1861
      %v1871 = vmul.f32 %v1379, %v1861
      %v1872 = vmul.f32 %v1384, %v1861
      %v1873 = vmul.f32 %v1389, %v1861
      %v1874 = vmul.f32 %v1394, %v1861
      %v1875 = vmul.f32 %v1399, %v1861
      %v1876 = vmul.f32 %v1404, %v1861
      %v1877 = vmul.f32 %v1409, %v1861
      %v1878 = vmul.f32 %v1414, %v1861
      %v1879 = vmul.f32 %v1419, %v1861
      %v1880 = vmul.f32 %v1424, %v1861
      %v1881 = vmul.f32 %v1429, %v1861
      %v1882 = vmul.f32 %v1434, %v1861
      %v1883 = vmul.f32 %v1439, %v1861
      %v1884 = vmul.f32 %v1444, %v1861
      %v1885 = vmul.f32 %v1449, %v1861
      %v1886 = vmul.f32 %v1454, %v1861
      %v1887 = vmul.f32 %v1459, %v1861
      %v1888 = vmul.f32 %v1464, %v1861
      %v1889 = vmul.f32 %v1469, %v1861
      %v1890 = vmul.f32 %v1474, %v1861
      %v1891 = vmul.f32 %v1479, %v1861
      %v1892 = vmul.f32 %v1484, %v1861
      %v1893 = vmul.f32 %v1489, %v1861
      %v1894 = vmul.f32 %v1494, %v1861
      %v1895 = vmul.f32 %v1499, %v1861
      %v1896 = vmul.f32 %v1504, %v1861
      %v1897 = vmul.f32 %v1509, %v1861
      %v1898 = vmul.f32 %v1514, %v1861
      %v1899 = vmul.f32 %v1519, %v1861
      %v1900 = vmul.f32 %v1524, %v1861
      %v1901 = vmul.f32 %v1529, %v1861
      %v1902 = vmul.f32 %v1534, %v1861
      %v1903 = vmul.f32 %v1539, %v1861
      %v1904 = vmul.f32 %v1544, %v1861
      %v1905 = vmul.f32 %v1549, %v1861
      %v1906 = vmul.f32 %v1554, %v1861
      %v1907 = vmul.f32 %v1559, %v1861
      %v1908 = vmul.f32 %v1564, %v1861
      %v1909 = vmul.f32 %v1569, %v1861
      %v1910 = vmul.f32 %v1574, %v1861
      %v1911 = vmul.f32 %v1579, %v1861
      %v1912 = vmul.f32 %v1584, %v1861
      %v1913 = vmul.f32 %v1589, %v1861
      %v1914 = vmul.f32 %v1594, %v1861
      %v1915 = vmul.f32 %v1599, %v1861
      %v1916 = vmul.f32 %v1604, %v1861
      %v1917 = vmul.f32 %v1609, %v1861
      %v1918 = vmul.f32 %v1614, %v1861
      %v1919 = vmul.f32 %v1619, %v1861
      %v1920 = vmul.f32 %v1624, %v1861
      %v1921 = vmul.f32 %v1629, %v1861
      %v1922 = vmul.f32 %v1634, %v1861
      %v1923 = vmul.f32 %v1639, %v1861
      %v1924 = vmul.f32 %v1644, %v1861
      %v1925 = vmul.f32 %v1649, %v1861
      %v1926 = vmul.f32 %v1654, %v1861
      %v1927 = vmul.f32 %v1659, %v1861
      %v1928 = vmul.f32 %v1664, %v1861
      %v1929 = vmul.f32 %v1669, %v1861
      %v1930 = vmul.f32 %v1674, %v1861
      %v1931 = vmul.f32 %v1679, %v1861
      %v1932 = vmul.f32 %v1684, %v1861
      %v1933 = vmul.f32 %v1689, %v1861
      %v1934 = vmul.f32 %v1694, %v1861
      %v1935 = vmul.f32 %v1699, %v1861
      %v1936 = vmul.f32 %v1704, %v1861
      %v1937 = vmul.f32 %v1709, %v1861
      %v1938 = vmul.f32 %v1714, %v1861
      %v1939 = vmul.f32 %v1719, %v1861
      %v1940 = vmul.f32 %v1724, %v1861
      %v1941 = vmul.f32 %v1729, %v1861
      %v1942 = vmul.f32 %v1734, %v1861
      %v1943 = vmul.f32 %v1739, %v1861
      %v1944 = vmul.f32 %v1744, %v1861
      %v1945 = vmul.f32 %v1749, %v1861
      %v1946 = vmul.f32 %v1754, %v1861
      %v1947 = vmul.f32 %v1759, %v1861
      %v1948 = vmul.f32 %v1764, %v1861
      %v1949 = vmul.f32 %v1769, %v1861
      %v1950 = vmul.f32 %v1774, %v1861
      %v1951 = vmul.f32 %v1779, %v1861
      %v1952 = vmul.f32 %v1784, %v1861
      %v1953 = vmul.f32 %v1789, %v1861
      %v1954 = vmul.f32 %v1794, %v1861
      %v1955 = vmul.f32 %v1799, %v1861
      %v1956 = vmul.f32 %v1804, %v1861
      %v1957 = vmul.f32 %v1809, %v1861
      %v1958 = vmul.f32 %v1814, %v1861
      %v1959 = vmul.f32 %v1819, %v1861
      %v1960 = vmul.f32 %v1824, %v1861
      %v1961 = vmul.f32 %v1829, %v1861
      %v1962 = vmul.f32 %v1834, %v1861
      %v1963 = vmul.f32 %v1839, %v1861
      %v1964 = vmul.f32 %v1844, %v1861
      %v1965 = vmul.f32 %v1849, %v1861
      %v1966 = vmul.f32 %v1854, %v1861
      %v1967 = vmul.f32 %v1859, %v1861
      %vm2074 = vcmask 1046528
      %v2075 = vrot.slane %v1862, 1
      %v2076 = vrot.slane %v1863, 1
      %v2077 = vsel %vm2074, %v2075, %v2076
      %v2078 = vrot.slane %v1864, 1
      %v2079 = vsel %vm2074, %v2076, %v2078
      %v2080 = vrot.slane %v1865, 1
      %v2081 = vsel %vm2074, %v2078, %v2080
      %v2082 = vrot.slane %v1866, 1
      %v2083 = vsel %vm2074, %v2080, %v2082
      %v2084 = vrot.slane %v1867, 1
      %v2085 = vsel %vm2074, %v2082, %v2084
      %v2086 = vrot.slane %v1868, 1
      %v2087 = vsel %vm2074, %v2084, %v2086
      %v2088 = vrot.slane %v1869, 1
      %v2089 = vsel %vm2074, %v2086, %v2088
      %v2090 = vrot.slane %v1870, 1
      %v2091 = vsel %vm2074, %v2088, %v2090
      %v2092 = vrot.slane %v1871, 1
      %v2093 = vsel %vm2074, %v2090, %v2092
      %v2094 = vrot.slane %v1872, 1
      %v2095 = vsel %vm2074, %v2092, %v2094
      %v2096 = vrot.slane %v1873, 1
      %v2097 = vsel %vm2074, %v2094, %v2096
      %v2098 = vrot.slane %v1874, 1
      %v2099 = vsel %vm2074, %v2096, %v2098
      %v2100 = vrot.slane %v1875, 1
      %v2101 = vsel %vm2074, %v2098, %v2100
      %v2102 = vrot.slane %v1876, 1
      %v2103 = vsel %vm2074, %v2100, %v2102
      %v2104 = vrot.slane %v1877, 1
      %v2105 = vsel %vm2074, %v2102, %v2104
      %v2106 = vrot.slane %v1878, 1
      %v2107 = vsel %vm2074, %v2104, %v2106
      %v2108 = vrot.slane %v1879, 1
      %v2109 = vsel %vm2074, %v2106, %v2108
      %v2110 = vrot.slane %v1880, 1
      %v2111 = vsel %vm2074, %v2108, %v2110
      %v2112 = vrot.slane %v1881, 1
      %v2113 = vsel %vm2074, %v2110, %v2112
      %v2114 = vrot.slane %v1882, 1
      %v2115 = vsel %vm2074, %v2112, %v2114
      %v2116 = vrot.slane %v1883, 1
      %v2117 = vsel %vm2074, %v2114, %v2116
      %v2118 = vrot.slane %v1884, 1
      %v2119 = vsel %vm2074, %v2116, %v2118
      %v2120 = vrot.slane %v1885, 1
      %v2121 = vsel %vm2074, %v2118, %v2120
      %v2122 = vrot.slane %v1886, 1
      %v2123 = vsel %vm2074, %v2120, %v2122
      %v2124 = vrot.slane %v1887, 1
      %v2125 = vsel %vm2074, %v2122, %v2124
      %v2126 = vrot.slane %v1888, 1
      %v2127 = vsel %vm2074, %v2124, %v2126
      %v2128 = vrot.slane %v1889, 1
      %v2129 = vsel %vm2074, %v2126, %v2128
      %v2130 = vrot.slane %v1890, 1
      %v2131 = vsel %vm2074, %v2128, %v2130
      %v2132 = vrot.slane %v1891, 1
      %v2133 = vsel %vm2074, %v2130, %v2132
      %v2134 = vrot.slane %v1892, 1
      %v2135 = vsel %vm2074, %v2132, %v2134
      %v2136 = vrot.slane %v1893, 1
      %v2137 = vsel %vm2074, %v2134, %v2136
      %v2138 = vrot.slane %v1894, 1
      %v2139 = vsel %vm2074, %v2136, %v2138
      %v2140 = vrot.slane %v1895, 1
      %v2141 = vsel %vm2074, %v2138, %v2140
      %v2142 = vrot.slane %v1896, 1
      %v2143 = vsel %vm2074, %v2140, %v2142
      %v2144 = vrot.slane %v1897, 1
      %v2145 = vsel %vm2074, %v2142, %v2144
      %v2146 = vrot.slane %v1898, 1
      %v2147 = vsel %vm2074, %v2144, %v2146
      %v2148 = vrot.slane %v1899, 1
      %v2149 = vsel %vm2074, %v2146, %v2148
      %v2150 = vrot.slane %v1900, 1
      %v2151 = vsel %vm2074, %v2148, %v2150
      %v2152 = vrot.slane %v1901, 1
      %v2153 = vsel %vm2074, %v2150, %v2152
      %v2154 = vrot.slane %v1902, 1
      %v2155 = vsel %vm2074, %v2152, %v2154
      %v2156 = vrot.slane %v1903, 1
      %v2157 = vsel %vm2074, %v2154, %v2156
      %v2158 = vrot.slane %v1904, 1
      %v2159 = vsel %vm2074, %v2156, %v2158
      %v2160 = vrot.slane %v1905, 1
      %v2161 = vsel %vm2074, %v2158, %v2160
      %v2162 = vrot.slane %v1906, 1
      %v2163 = vsel %vm2074, %v2160, %v2162
      %v2164 = vrot.slane %v1907, 1
      %v2165 = vsel %vm2074, %v2162, %v2164
      %v2166 = vrot.slane %v1908, 1
      %v2167 = vsel %vm2074, %v2164, %v2166
      %v2168 = vrot.slane %v1909, 1
      %v2169 = vsel %vm2074, %v2166, %v2168
      %v2170 = vrot.slane %v1910, 1
      %v2171 = vsel %vm2074, %v2168, %v2170
      %v2172 = vrot.slane %v1911, 1
      %v2173 = vsel %vm2074, %v2170, %v2172
      %v2174 = vrot.slane %v1912, 1
      %v2175 = vsel %vm2074, %v2172, %v2174
      %v2176 = vrot.slane %v1913, 1
      %v2177 = vsel %vm2074, %v2174, %v2176
      %v2178 = vrot.slane %v1914, 1
      %v2179 = vsel %vm2074, %v2176, %v2178
      %v2180 = vrot.slane %v1915, 1
      %v2181 = vsel %vm2074, %v2178, %v2180
      %v2182 = vrot.slane %v1916, 1
      %v2183 = vsel %vm2074, %v2180, %v2182
      %v2184 = vrot.slane %v1917, 1
      %v2185 = vsel %vm2074, %v2182, %v2184
      %v2186 = vrot.slane %v1918, 1
      %v2187 = vsel %vm2074, %v2184, %v2186
      %v2188 = vrot.slane %v1919, 1
      %v2189 = vsel %vm2074, %v2186, %v2188
      %v2190 = vrot.slane %v1920, 1
      %v2191 = vsel %vm2074, %v2188, %v2190
      %v2192 = vrot.slane %v1921, 1
      %v2193 = vsel %vm2074, %v2190, %v2192
      %v2194 = vrot.slane %v1922, 1
      %v2195 = vsel %vm2074, %v2192, %v2194
      %v2196 = vrot.slane %v1923, 1
      %v2197 = vsel %vm2074, %v2194, %v2196
      %v2198 = vrot.slane %v1924, 1
      %v2199 = vsel %vm2074, %v2196, %v2198
      %v2200 = vrot.slane %v1925, 1
      %v2201 = vsel %vm2074, %v2198, %v2200
      %v2202 = vrot.slane %v1926, 1
      %v2203 = vsel %vm2074, %v2200, %v2202
      %v2204 = vrot.slane %v1927, 1
      %v2205 = vsel %vm2074, %v2202, %v2204
      %v2206 = vrot.slane %v1928, 1
      %v2207 = vsel %vm2074, %v2204, %v2206
      %v2208 = vrot.slane %v1929, 1
      %v2209 = vsel %vm2074, %v2206, %v2208
      %v2210 = vrot.slane %v1930, 1
      %v2211 = vsel %vm2074, %v2208, %v2210
      %v2212 = vrot.slane %v1931, 1
      %v2213 = vsel %vm2074, %v2210, %v2212
      %v2214 = vrot.slane %v1932, 1
      %v2215 = vsel %vm2074, %v2212, %v2214
      %v2216 = vrot.slane %v1933, 1
      %v2217 = vsel %vm2074, %v2214, %v2216
      %v2218 = vrot.slane %v1934, 1
      %v2219 = vsel %vm2074, %v2216, %v2218
      %v2220 = vrot.slane %v1935, 1
      %v2221 = vsel %vm2074, %v2218, %v2220
      %v2222 = vrot.slane %v1936, 1
      %v2223 = vsel %vm2074, %v2220, %v2222
      %v2224 = vrot.slane %v1937, 1
      %v2225 = vsel %vm2074, %v2222, %v2224
      %v2226 = vrot.slane %v1938, 1
      %v2227 = vsel %vm2074, %v2224, %v2226
      %v2228 = vrot.slane %v1939, 1
      %v2229 = vsel %vm2074, %v2226, %v2228
      %v2230 = vrot.slane %v1940, 1
      %v2231 = vsel %vm2074, %v2228, %v2230
      %v2232 = vrot.slane %v1941, 1
      %v2233 = vsel %vm2074, %v2230, %v2232
      %v2234 = vrot.slane %v1942, 1
      %v2235 = vsel %vm2074, %v2232, %v2234
      %v2236 = vrot.slane %v1943, 1
      %v2237 = vsel %vm2074, %v2234, %v2236
      %v2238 = vrot.slane %v1944, 1
      %v2239 = vsel %vm2074, %v2236, %v2238
      %v2240 = vrot.slane %v1945, 1
      %v2241 = vsel %vm2074, %v2238, %v2240
      %v2242 = vrot.slane %v1946, 1
      %v2243 = vsel %vm2074, %v2240, %v2242
      %v2244 = vrot.slane %v1947, 1
      %v2245 = vsel %vm2074, %v2242, %v2244
      %v2246 = vrot.slane %v1948, 1
      %v2247 = vsel %vm2074, %v2244, %v2246
      %v2248 = vrot.slane %v1949, 1
      %v2249 = vsel %vm2074, %v2246, %v2248
      %v2250 = vrot.slane %v1950, 1
      %v2251 = vsel %vm2074, %v2248, %v2250
      %v2252 = vrot.slane %v1951, 1
      %v2253 = vsel %vm2074, %v2250, %v2252
      %v2254 = vrot.slane %v1952, 1
      %v2255 = vsel %vm2074, %v2252, %v2254
      %v2256 = vrot.slane %v1953, 1
      %v2257 = vsel %vm2074, %v2254, %v2256
      %v2258 = vrot.slane %v1954, 1
      %v2259 = vsel %vm2074, %v2256, %v2258
      %v2260 = vrot.slane %v1955, 1
      %v2261 = vsel %vm2074, %v2258, %v2260
      %v2262 = vrot.slane %v1956, 1
      %v2263 = vsel %vm2074, %v2260, %v2262
      %v2264 = vrot.slane %v1957, 1
      %v2265 = vsel %vm2074, %v2262, %v2264
      %v2266 = vrot.slane %v1958, 1
      %v2267 = vsel %vm2074, %v2264, %v2266
      %v2268 = vrot.slane %v1959, 1
      %v2269 = vsel %vm2074, %v2266, %v2268
      %v2270 = vrot.slane %v1960, 1
      %v2271 = vsel %vm2074, %v2268, %v2270
      %v2272 = vrot.slane %v1961, 1
      %v2273 = vsel %vm2074, %v2270, %v2272
      %v2274 = vrot.slane %v1962, 1
      %v2275 = vsel %vm2074, %v2272, %v2274
      %v2276 = vrot.slane %v1963, 1
      %v2277 = vsel %vm2074, %v2274, %v2276
      %v2278 = vrot.slane %v1964, 1
      %v2279 = vsel %vm2074, %v2276, %v2278
      %v2280 = vrot.slane %v1965, 1
      %v2281 = vsel %vm2074, %v2278, %v2280
      %v2282 = vrot.slane %v1966, 1
      %v2283 = vsel %vm2074, %v2280, %v2282
      %v2284 = vrot.slane %v1967, 1
      %v2285 = vsel %vm2074, %v2282, %v2284
      %v2391 = vadd.f32 %v1014, %v2077
      %v2392 = vadd.f32 %v1015, %v2079
      %v2393 = vadd.f32 %v1016, %v2081
      %v2394 = vadd.f32 %v1017, %v2083
      %v2395 = vadd.f32 %v1018, %v2085
      %v2396 = vadd.f32 %v1019, %v2087
      %v2397 = vadd.f32 %v1020, %v2089
      %v2398 = vadd.f32 %v1021, %v2091
      %v2399 = vadd.f32 %v1022, %v2093
      %v2400 = vadd.f32 %v1023, %v2095
      %v2401 = vadd.f32 %v1024, %v2097
      %v2402 = vadd.f32 %v1025, %v2099
      %v2403 = vadd.f32 %v1026, %v2101
      %v2404 = vadd.f32 %v1027, %v2103
      %v2405 = vadd.f32 %v1028, %v2105
      %v2406 = vadd.f32 %v1029, %v2107
      %v2407 = vadd.f32 %v1030, %v2109
      %v2408 = vadd.f32 %v1031, %v2111
      %v2409 = vadd.f32 %v1032, %v2113
      %v2410 = vadd.f32 %v1033, %v2115
      %v2411 = vadd.f32 %v1034, %v2117
      %v2412 = vadd.f32 %v1035, %v2119
      %v2413 = vadd.f32 %v1036, %v2121
      %v2414 = vadd.f32 %v1037, %v2123
      %v2415 = vadd.f32 %v1038, %v2125
      %v2416 = vadd.f32 %v1039, %v2127
      %v2417 = vadd.f32 %v1040, %v2129
      %v2418 = vadd.f32 %v1041, %v2131
      %v2419 = vadd.f32 %v1042, %v2133
      %v2420 = vadd.f32 %v1043, %v2135
      %v2421 = vadd.f32 %v1044, %v2137
      %v2422 = vadd.f32 %v1045, %v2139
      %v2423 = vadd.f32 %v1046, %v2141
      %v2424 = vadd.f32 %v1047, %v2143
      %v2425 = vadd.f32 %v1048, %v2145
      %v2426 = vadd.f32 %v1049, %v2147
      %v2427 = vadd.f32 %v1050, %v2149
      %v2428 = vadd.f32 %v1051, %v2151
      %v2429 = vadd.f32 %v1052, %v2153
      %v2430 = vadd.f32 %v1053, %v2155
      %v2431 = vadd.f32 %v1054, %v2157
      %v2432 = vadd.f32 %v1055, %v2159
      %v2433 = vadd.f32 %v1056, %v2161
      %v2434 = vadd.f32 %v1057, %v2163
      %v2435 = vadd.f32 %v1058, %v2165
      %v2436 = vadd.f32 %v1059, %v2167
      %v2437 = vadd.f32 %v1060, %v2169
      %v2438 = vadd.f32 %v1061, %v2171
      %v2439 = vadd.f32 %v1062, %v2173
      %v2440 = vadd.f32 %v1063, %v2175
      %v2441 = vadd.f32 %v1064, %v2177
      %v2442 = vadd.f32 %v1065, %v2179
      %v2443 = vadd.f32 %v1066, %v2181
      %v2444 = vadd.f32 %v1067, %v2183
      %v2445 = vadd.f32 %v1068, %v2185
      %v2446 = vadd.f32 %v1069, %v2187
      %v2447 = vadd.f32 %v1070, %v2189
      %v2448 = vadd.f32 %v1071, %v2191
      %v2449 = vadd.f32 %v1072, %v2193
      %v2450 = vadd.f32 %v1073, %v2195
      %v2451 = vadd.f32 %v1074, %v2197
      %v2452 = vadd.f32 %v1075, %v2199
      %v2453 = vadd.f32 %v1076, %v2201
      %v2454 = vadd.f32 %v1077, %v2203
      %v2455 = vadd.f32 %v1078, %v2205
      %v2456 = vadd.f32 %v1079, %v2207
      %v2457 = vadd.f32 %v1080, %v2209
      %v2458 = vadd.f32 %v1081, %v2211
      %v2459 = vadd.f32 %v1082, %v2213
      %v2460 = vadd.f32 %v1083, %v2215
      %v2461 = vadd.f32 %v1084, %v2217
      %v2462 = vadd.f32 %v1085, %v2219
      %v2463 = vadd.f32 %v1086, %v2221
      %v2464 = vadd.f32 %v1087, %v2223
      %v2465 = vadd.f32 %v1088, %v2225
      %v2466 = vadd.f32 %v1089, %v2227
      %v2467 = vadd.f32 %v1090, %v2229
      %v2468 = vadd.f32 %v1091, %v2231
      %v2469 = vadd.f32 %v1092, %v2233
      %v2470 = vadd.f32 %v1093, %v2235
      %v2471 = vadd.f32 %v1094, %v2237
      %v2472 = vadd.f32 %v1095, %v2239
      %v2473 = vadd.f32 %v1096, %v2241
      %v2474 = vadd.f32 %v1097, %v2243
      %v2475 = vadd.f32 %v1098, %v2245
      %v2476 = vadd.f32 %v1099, %v2247
      %v2477 = vadd.f32 %v1100, %v2249
      %v2478 = vadd.f32 %v1101, %v2251
      %v2479 = vadd.f32 %v1102, %v2253
      %v2480 = vadd.f32 %v1103, %v2255
      %v2481 = vadd.f32 %v1104, %v2257
      %v2482 = vadd.f32 %v1105, %v2259
      %v2483 = vadd.f32 %v1106, %v2261
      %v2484 = vadd.f32 %v1107, %v2263
      %v2485 = vadd.f32 %v1108, %v2265
      %v2486 = vadd.f32 %v1109, %v2267
      %v2487 = vadd.f32 %v1110, %v2269
      %v2488 = vadd.f32 %v1111, %v2271
      %v2489 = vadd.f32 %v1112, %v2273
      %v2490 = vadd.f32 %v1113, %v2275
      %v2491 = vadd.f32 %v1114, %v2277
      %v2492 = vadd.f32 %v1115, %v2279
      %v2493 = vadd.f32 %v1116, %v2281
      %v2494 = vadd.f32 %v1117, %v2283
      %v2495 = vadd.f32 %v1118, %v2285
      %v2496 = vld [vmem:[%s165] sm:$0xe]
      %v2497 = vld [vmem:[%s1] sm:$0x2]
      %v2498 = vunpack.c.l.bf16 %v2496
      %v2499 = vunpack.c.l.bf16 %v2497
      %2501 = vset.pattern.permute.xlu0 0
      %2502 = vperm.xlu0 %2501, %v2498
      %v2503 = vpop.permute.xlu0 %2502
      %v2505 = vperm.slane %v2499, 2
      %v2506 = vmul.f32 %v2503, %v2505
      %v2507 = vmul.f32 %v1339, %v2505
      %v2508 = vmul.f32 %v1344, %v2505
      %v2509 = vmul.f32 %v1349, %v2505
      %v2510 = vmul.f32 %v1354, %v2505
      %v2511 = vmul.f32 %v1359, %v2505
      %v2512 = vmul.f32 %v1364, %v2505
      %v2513 = vmul.f32 %v1369, %v2505
      %v2514 = vmul.f32 %v1374, %v2505
      %v2515 = vmul.f32 %v1379, %v2505
      %v2516 = vmul.f32 %v1384, %v2505
      %v2517 = vmul.f32 %v1389, %v2505
      %v2518 = vmul.f32 %v1394, %v2505
      %v2519 = vmul.f32 %v1399, %v2505
      %v2520 = vmul.f32 %v1404, %v2505
      %v2521 = vmul.f32 %v1409, %v2505
      %v2522 = vmul.f32 %v1414, %v2505
      %v2523 = vmul.f32 %v1419, %v2505
      %v2524 = vmul.f32 %v1424, %v2505
      %v2525 = vmul.f32 %v1429, %v2505
      %v2526 = vmul.f32 %v1434, %v2505
      %v2527 = vmul.f32 %v1439, %v2505
      %v2528 = vmul.f32 %v1444, %v2505
      %v2529 = vmul.f32 %v1449, %v2505
      %v2530 = vmul.f32 %v1454, %v2505
      %v2531 = vmul.f32 %v1459, %v2505
      %v2532 = vmul.f32 %v1464, %v2505
      %v2533 = vmul.f32 %v1469, %v2505
      %v2534 = vmul.f32 %v1474, %v2505
      %v2535 = vmul.f32 %v1479, %v2505
      %v2536 = vmul.f32 %v1484, %v2505
      %v2537 = vmul.f32 %v1489, %v2505
      %v2538 = vmul.f32 %v1494, %v2505
      %v2539 = vmul.f32 %v1499, %v2505
      %v2540 = vmul.f32 %v1504, %v2505
      %v2541 = vmul.f32 %v1509, %v2505
      %v2542 = vmul.f32 %v1514, %v2505
      %v2543 = vmul.f32 %v1519, %v2505
      %v2544 = vmul.f32 %v1524, %v2505
      %v2545 = vmul.f32 %v1529, %v2505
      %v2546 = vmul.f32 %v1534, %v2505
      %v2547 = vmul.f32 %v1539, %v2505
      %v2548 = vmul.f32 %v1544, %v2505
      %v2549 = vmul.f32 %v1549, %v2505
      %v2550 = vmul.f32 %v1554, %v2505
      %v2551 = vmul.f32 %v1559, %v2505
      %v2552 = vmul.f32 %v1564, %v2505
      %v2553 = vmul.f32 %v1569, %v2505
      %v2554 = vmul.f32 %v1574, %v2505
      %v2555 = vmul.f32 %v1579, %v2505
      %v2556 = vmul.f32 %v1584, %v2505
      %v2557 = vmul.f32 %v1589, %v2505
      %v2558 = vmul.f32 %v1594, %v2505
      %v2559 = vmul.f32 %v1599, %v2505
      %v2560 = vmul.f32 %v1604, %v2505
      %v2561 = vmul.f32 %v1609, %v2505
      %v2562 = vmul.f32 %v1614, %v2505
      %v2563 = vmul.f32 %v1619, %v2505
      %v2564 = vmul.f32 %v1624, %v2505
      %v2565 = vmul.f32 %v1629, %v2505
      %v2566 = vmul.f32 %v1634, %v2505
      %v2567 = vmul.f32 %v1639, %v2505
      %v2568 = vmul.f32 %v1644, %v2505
      %v2569 = vmul.f32 %v1649, %v2505
      %v2570 = vmul.f32 %v1654, %v2505
      %v2571 = vmul.f32 %v1659, %v2505
      %v2572 = vmul.f32 %v1664, %v2505
      %v2573 = vmul.f32 %v1669, %v2505
      %v2574 = vmul.f32 %v1674, %v2505
      %v2575 = vmul.f32 %v1679, %v2505
      %v2576 = vmul.f32 %v1684, %v2505
      %v2577 = vmul.f32 %v1689, %v2505
      %v2578 = vmul.f32 %v1694, %v2505
      %v2579 = vmul.f32 %v1699, %v2505
      %v2580 = vmul.f32 %v1704, %v2505
      %v2581 = vmul.f32 %v1709, %v2505
      %v2582 = vmul.f32 %v1714, %v2505
      %v2583 = vmul.f32 %v1719, %v2505
      %v2584 = vmul.f32 %v1724, %v2505
      %v2585 = vmul.f32 %v1729, %v2505
      %v2586 = vmul.f32 %v1734, %v2505
      %v2587 = vmul.f32 %v1739, %v2505
      %v2588 = vmul.f32 %v1744, %v2505
      %v2589 = vmul.f32 %v1749, %v2505
      %v2590 = vmul.f32 %v1754, %v2505
      %v2591 = vmul.f32 %v1759, %v2505
      %v2592 = vmul.f32 %v1764, %v2505
      %v2593 = vmul.f32 %v1769, %v2505
      %v2594 = vmul.f32 %v1774, %v2505
      %v2595 = vmul.f32 %v1779, %v2505
      %v2596 = vmul.f32 %v1784, %v2505
      %v2597 = vmul.f32 %v1789, %v2505
      %v2598 = vmul.f32 %v1794, %v2505
      %v2599 = vmul.f32 %v1799, %v2505
      %v2600 = vmul.f32 %v1804, %v2505
      %v2601 = vmul.f32 %v1809, %v2505
      %v2602 = vmul.f32 %v1814, %v2505
      %v2603 = vmul.f32 %v1819, %v2505
      %v2604 = vmul.f32 %v1824, %v2505
      %v2605 = vmul.f32 %v1829, %v2505
      %v2606 = vmul.f32 %v1834, %v2505
      %v2607 = vmul.f32 %v1839, %v2505
      %v2608 = vmul.f32 %v1844, %v2505
      %v2609 = vmul.f32 %v1849, %v2505
      %v2610 = vmul.f32 %v1854, %v2505
      %v2611 = vmul.f32 %v1859, %v2505
      %vm2718 = vcmask 1045504
      %v2719 = vrot.slane %v2506, 2
      %v2720 = vrot.slane %v2507, 2
      %v2721 = vsel %vm2718, %v2719, %v2720
      %v2722 = vrot.slane %v2508, 2
      %v2723 = vsel %vm2718, %v2720, %v2722
      %v2724 = vrot.slane %v2509, 2
      %v2725 = vsel %vm2718, %v2722, %v2724
      %v2726 = vrot.slane %v2510, 2
      %v2727 = vsel %vm2718, %v2724, %v2726
      %v2728 = vrot.slane %v2511, 2
      %v2729 = vsel %vm2718, %v2726, %v2728
      %v2730 = vrot.slane %v2512, 2
      %v2731 = vsel %vm2718, %v2728, %v2730
      %v2732 = vrot.slane %v2513, 2
      %v2733 = vsel %vm2718, %v2730, %v2732
      %v2734 = vrot.slane %v2514, 2
      %v2735 = vsel %vm2718, %v2732, %v2734
      %v2736 = vrot.slane %v2515, 2
      %v2737 = vsel %vm2718, %v2734, %v2736
      %v2738 = vrot.slane %v2516, 2
      %v2739 = vsel %vm2718, %v2736, %v2738
      %v2740 = vrot.slane %v2517, 2
      %v2741 = vsel %vm2718, %v2738, %v2740
      %v2742 = vrot.slane %v2518, 2
      %v2743 = vsel %vm2718, %v2740, %v2742
      %v2744 = vrot.slane %v2519, 2
      %v2745 = vsel %vm2718, %v2742, %v2744
      %v2746 = vrot.slane %v2520, 2
      %v2747 = vsel %vm2718, %v2744, %v2746
      %v2748 = vrot.slane %v2521, 2
      %v2749 = vsel %vm2718, %v2746, %v2748
      %v2750 = vrot.slane %v2522, 2
      %v2751 = vsel %vm2718, %v2748, %v2750
      %v2752 = vrot.slane %v2523, 2
      %v2753 = vsel %vm2718, %v2750, %v2752
      %v2754 = vrot.slane %v2524, 2
      %v2755 = vsel %vm2718, %v2752, %v2754
      %v2756 = vrot.slane %v2525, 2
      %v2757 = vsel %vm2718, %v2754, %v2756
      %v2758 = vrot.slane %v2526, 2
      %v2759 = vsel %vm2718, %v2756, %v2758
      %v2760 = vrot.slane %v2527, 2
      %v2761 = vsel %vm2718, %v2758, %v2760
      %v2762 = vrot.slane %v2528, 2
      %v2763 = vsel %vm2718, %v2760, %v2762
      %v2764 = vrot.slane %v2529, 2
      %v2765 = vsel %vm2718, %v2762, %v2764
      %v2766 = vrot.slane %v2530, 2
      %v2767 = vsel %vm2718, %v2764, %v2766
      %v2768 = vrot.slane %v2531, 2
      %v2769 = vsel %vm2718, %v2766, %v2768
      %v2770 = vrot.slane %v2532, 2
      %v2771 = vsel %vm2718, %v2768, %v2770
      %v2772 = vrot.slane %v2533, 2
      %v2773 = vsel %vm2718, %v2770, %v2772
      %v2774 = vrot.slane %v2534, 2
      %v2775 = vsel %vm2718, %v2772, %v2774
      %v2776 = vrot.slane %v2535, 2
      %v2777 = vsel %vm2718, %v2774, %v2776
      %v2778 = vrot.slane %v2536, 2
      %v2779 = vsel %vm2718, %v2776, %v2778
      %v2780 = vrot.slane %v2537, 2
      %v2781 = vsel %vm2718, %v2778, %v2780
      %v2782 = vrot.slane %v2538, 2
      %v2783 = vsel %vm2718, %v2780, %v2782
      %v2784 = vrot.slane %v2539, 2
      %v2785 = vsel %vm2718, %v2782, %v2784
      %v2786 = vrot.slane %v2540, 2
      %v2787 = vsel %vm2718, %v2784, %v2786
      %v2788 = vrot.slane %v2541, 2
      %v2789 = vsel %vm2718, %v2786, %v2788
      %v2790 = vrot.slane %v2542, 2
      %v2791 = vsel %vm2718, %v2788, %v2790
      %v2792 = vrot.slane %v2543, 2
      %v2793 = vsel %vm2718, %v2790, %v2792
      %v2794 = vrot.slane %v2544, 2
      %v2795 = vsel %vm2718, %v2792, %v2794
      %v2796 = vrot.slane %v2545, 2
      %v2797 = vsel %vm2718, %v2794, %v2796
      %v2798 = vrot.slane %v2546, 2
      %v2799 = vsel %vm2718, %v2796, %v2798
      %v2800 = vrot.slane %v2547, 2
      %v2801 = vsel %vm2718, %v2798, %v2800
      %v2802 = vrot.slane %v2548, 2
      %v2803 = vsel %vm2718, %v2800, %v2802
      %v2804 = vrot.slane %v2549, 2
      %v2805 = vsel %vm2718, %v2802, %v2804
      %v2806 = vrot.slane %v2550, 2
      %v2807 = vsel %vm2718, %v2804, %v2806
      %v2808 = vrot.slane %v2551, 2
      %v2809 = vsel %vm2718, %v2806, %v2808
      %v2810 = vrot.slane %v2552, 2
      %v2811 = vsel %vm2718, %v2808, %v2810
      %v2812 = vrot.slane %v2553, 2
      %v2813 = vsel %vm2718, %v2810, %v2812
      %v2814 = vrot.slane %v2554, 2
      %v2815 = vsel %vm2718, %v2812, %v2814
      %v2816 = vrot.slane %v2555, 2
      %v2817 = vsel %vm2718, %v2814, %v2816
      %v2818 = vrot.slane %v2556, 2
      %v2819 = vsel %vm2718, %v2816, %v2818
      %v2820 = vrot.slane %v2557, 2
      %v2821 = vsel %vm2718, %v2818, %v2820
      %v2822 = vrot.slane %v2558, 2
      %v2823 = vsel %vm2718, %v2820, %v2822
      %v2824 = vrot.slane %v2559, 2
      %v2825 = vsel %vm2718, %v2822, %v2824
      %v2826 = vrot.slane %v2560, 2
      %v2827 = vsel %vm2718, %v2824, %v2826
      %v2828 = vrot.slane %v2561, 2
      %v2829 = vsel %vm2718, %v2826, %v2828
      %v2830 = vrot.slane %v2562, 2
      %v2831 = vsel %vm2718, %v2828, %v2830
      %v2832 = vrot.slane %v2563, 2
      %v2833 = vsel %vm2718, %v2830, %v2832
      %v2834 = vrot.slane %v2564, 2
      %v2835 = vsel %vm2718, %v2832, %v2834
      %v2836 = vrot.slane %v2565, 2
      %v2837 = vsel %vm2718, %v2834, %v2836
      %v2838 = vrot.slane %v2566, 2
      %v2839 = vsel %vm2718, %v2836, %v2838
      %v2840 = vrot.slane %v2567, 2
      %v2841 = vsel %vm2718, %v2838, %v2840
      %v2842 = vrot.slane %v2568, 2
      %v2843 = vsel %vm2718, %v2840, %v2842
      %v2844 = vrot.slane %v2569, 2
      %v2845 = vsel %vm2718, %v2842, %v2844
      %v2846 = vrot.slane %v2570, 2
      %v2847 = vsel %vm2718, %v2844, %v2846
      %v2848 = vrot.slane %v2571, 2
      %v2849 = vsel %vm2718, %v2846, %v2848
      %v2850 = vrot.slane %v2572, 2
      %v2851 = vsel %vm2718, %v2848, %v2850
      %v2852 = vrot.slane %v2573, 2
      %v2853 = vsel %vm2718, %v2850, %v2852
      %v2854 = vrot.slane %v2574, 2
      %v2855 = vsel %vm2718, %v2852, %v2854
      %v2856 = vrot.slane %v2575, 2
      %v2857 = vsel %vm2718, %v2854, %v2856
      %v2858 = vrot.slane %v2576, 2
      %v2859 = vsel %vm2718, %v2856, %v2858
      %v2860 = vrot.slane %v2577, 2
      %v2861 = vsel %vm2718, %v2858, %v2860
      %v2862 = vrot.slane %v2578, 2
      %v2863 = vsel %vm2718, %v2860, %v2862
      %v2864 = vrot.slane %v2579, 2
      %v2865 = vsel %vm2718, %v2862, %v2864
      %v2866 = vrot.slane %v2580, 2
      %v2867 = vsel %vm2718, %v2864, %v2866
      %v2868 = vrot.slane %v2581, 2
      %v2869 = vsel %vm2718, %v2866, %v2868
      %v2870 = vrot.slane %v2582, 2
      %v2871 = vsel %vm2718, %v2868, %v2870
      %v2872 = vrot.slane %v2583, 2
      %v2873 = vsel %vm2718, %v2870, %v2872
      %v2874 = vrot.slane %v2584, 2
      %v2875 = vsel %vm2718, %v2872, %v2874
      %v2876 = vrot.slane %v2585, 2
      %v2877 = vsel %vm2718, %v2874, %v2876
      %v2878 = vrot.slane %v2586, 2
      %v2879 = vsel %vm2718, %v2876, %v2878
      %v2880 = vrot.slane %v2587, 2
      %v2881 = vsel %vm2718, %v2878, %v2880
      %v2882 = vrot.slane %v2588, 2
      %v2883 = vsel %vm2718, %v2880, %v2882
      %v2884 = vrot.slane %v2589, 2
      %v2885 = vsel %vm2718, %v2882, %v2884
      %v2886 = vrot.slane %v2590, 2
      %v2887 = vsel %vm2718, %v2884, %v2886
      %v2888 = vrot.slane %v2591, 2
      %v2889 = vsel %vm2718, %v2886, %v2888
      %v2890 = vrot.slane %v2592, 2
      %v2891 = vsel %vm2718, %v2888, %v2890
      %v2892 = vrot.slane %v2593, 2
      %v2893 = vsel %vm2718, %v2890, %v2892
      %v2894 = vrot.slane %v2594, 2
      %v2895 = vsel %vm2718, %v2892, %v2894
      %v2896 = vrot.slane %v2595, 2
      %v2897 = vsel %vm2718, %v2894, %v2896
      %v2898 = vrot.slane %v2596, 2
      %v2899 = vsel %vm2718, %v2896, %v2898
      %v2900 = vrot.slane %v2597, 2
      %v2901 = vsel %vm2718, %v2898, %v2900
      %v2902 = vrot.slane %v2598, 2
      %v2903 = vsel %vm2718, %v2900, %v2902
      %v2904 = vrot.slane %v2599, 2
      %v2905 = vsel %vm2718, %v2902, %v2904
      %v2906 = vrot.slane %v2600, 2
      %v2907 = vsel %vm2718, %v2904, %v2906
      %v2908 = vrot.slane %v2601, 2
      %v2909 = vsel %vm2718, %v2906, %v2908
      %v2910 = vrot.slane %v2602, 2
      %v2911 = vsel %vm2718, %v2908, %v2910
      %v2912 = vrot.slane %v2603, 2
      %v2913 = vsel %vm2718, %v2910, %v2912
      %v2914 = vrot.slane %v2604, 2
      %v2915 = vsel %vm2718, %v2912, %v2914
      %v2916 = vrot.slane %v2605, 2
      %v2917 = vsel %vm2718, %v2914, %v2916
      %v2918 = vrot.slane %v2606, 2
      %v2919 = vsel %vm2718, %v2916, %v2918
      %v2920 = vrot.slane %v2607, 2
      %v2921 = vsel %vm2718, %v2918, %v2920
      %v2922 = vrot.slane %v2608, 2
      %v2923 = vsel %vm2718, %v2920, %v2922
      %v2924 = vrot.slane %v2609, 2
      %v2925 = vsel %vm2718, %v2922, %v2924
      %v2926 = vrot.slane %v2610, 2
      %v2927 = vsel %vm2718, %v2924, %v2926
      %v2928 = vrot.slane %v2611, 2
      %v2929 = vsel %vm2718, %v2926, %v2928
      %v3035 = vadd.f32 %v2391, %v2721
      %v3036 = vadd.f32 %v2392, %v2723
      %v3037 = vadd.f32 %v2393, %v2725
      %v3038 = vadd.f32 %v2394, %v2727
      %v3039 = vadd.f32 %v2395, %v2729
      %v3040 = vadd.f32 %v2396, %v2731
      %v3041 = vadd.f32 %v2397, %v2733
      %v3042 = vadd.f32 %v2398, %v2735
      %v3043 = vadd.f32 %v2399, %v2737
      %v3044 = vadd.f32 %v2400, %v2739
      %v3045 = vadd.f32 %v2401, %v2741
      %v3046 = vadd.f32 %v2402, %v2743
      %v3047 = vadd.f32 %v2403, %v2745
      %v3048 = vadd.f32 %v2404, %v2747
      %v3049 = vadd.f32 %v2405, %v2749
      %v3050 = vadd.f32 %v2406, %v2751
      %v3051 = vadd.f32 %v2407, %v2753
      %v3052 = vadd.f32 %v2408, %v2755
      %v3053 = vadd.f32 %v2409, %v2757
      %v3054 = vadd.f32 %v2410, %v2759
      %v3055 = vadd.f32 %v2411, %v2761
      %v3056 = vadd.f32 %v2412, %v2763
      %v3057 = vadd.f32 %v2413, %v2765
      %v3058 = vadd.f32 %v2414, %v2767
      %v3059 = vadd.f32 %v2415, %v2769
      %v3060 = vadd.f32 %v2416, %v2771
      %v3061 = vadd.f32 %v2417, %v2773
      %v3062 = vadd.f32 %v2418, %v2775
      %v3063 = vadd.f32 %v2419, %v2777
      %v3064 = vadd.f32 %v2420, %v2779
      %v3065 = vadd.f32 %v2421, %v2781
      %v3066 = vadd.f32 %v2422, %v2783
      %v3067 = vadd.f32 %v2423, %v2785
      %v3068 = vadd.f32 %v2424, %v2787
      %v3069 = vadd.f32 %v2425, %v2789
      %v3070 = vadd.f32 %v2426, %v2791
      %v3071 = vadd.f32 %v2427, %v2793
      %v3072 = vadd.f32 %v2428, %v2795
      %v3073 = vadd.f32 %v2429, %v2797
      %v3074 = vadd.f32 %v2430, %v2799
      %v3075 = vadd.f32 %v2431, %v2801
      %v3076 = vadd.f32 %v2432, %v2803
      %v3077 = vadd.f32 %v2433, %v2805
      %v3078 = vadd.f32 %v2434, %v2807
      %v3079 = vadd.f32 %v2435, %v2809
      %v3080 = vadd.f32 %v2436, %v2811
      %v3081 = vadd.f32 %v2437, %v2813
      %v3082 = vadd.f32 %v2438, %v2815
      %v3083 = vadd.f32 %v2439, %v2817
      %v3084 = vadd.f32 %v2440, %v2819
      %v3085 = vadd.f32 %v2441, %v2821
      %v3086 = vadd.f32 %v2442, %v2823
      %v3087 = vadd.f32 %v2443, %v2825
      %v3088 = vadd.f32 %v2444, %v2827
      %v3089 = vadd.f32 %v2445, %v2829
      %v3090 = vadd.f32 %v2446, %v2831
      %v3091 = vadd.f32 %v2447, %v2833
      %v3092 = vadd.f32 %v2448, %v2835
      %v3093 = vadd.f32 %v2449, %v2837
      %v3094 = vadd.f32 %v2450, %v2839
      %v3095 = vadd.f32 %v2451, %v2841
      %v3096 = vadd.f32 %v2452, %v2843
      %v3097 = vadd.f32 %v2453, %v2845
      %v3098 = vadd.f32 %v2454, %v2847
      %v3099 = vadd.f32 %v2455, %v2849
      %v3100 = vadd.f32 %v2456, %v2851
      %v3101 = vadd.f32 %v2457, %v2853
      %v3102 = vadd.f32 %v2458, %v2855
      %v3103 = vadd.f32 %v2459, %v2857
      %v3104 = vadd.f32 %v2460, %v2859
      %v3105 = vadd.f32 %v2461, %v2861
      %v3106 = vadd.f32 %v2462, %v2863
      %v3107 = vadd.f32 %v2463, %v2865
      %v3108 = vadd.f32 %v2464, %v2867
      %v3109 = vadd.f32 %v2465, %v2869
      %v3110 = vadd.f32 %v2466, %v2871
      %v3111 = vadd.f32 %v2467, %v2873
      %v3112 = vadd.f32 %v2468, %v2875
      %v3113 = vadd.f32 %v2469, %v2877
      %v3114 = vadd.f32 %v2470, %v2879
      %v3115 = vadd.f32 %v2471, %v2881
      %v3116 = vadd.f32 %v2472, %v2883
      %v3117 = vadd.f32 %v2473, %v2885
      %v3118 = vadd.f32 %v2474, %v2887
      %v3119 = vadd.f32 %v2475, %v2889
      %v3120 = vadd.f32 %v2476, %v2891
      %v3121 = vadd.f32 %v2477, %v2893
      %v3122 = vadd.f32 %v2478, %v2895
      %v3123 = vadd.f32 %v2479, %v2897
      %v3124 = vadd.f32 %v2480, %v2899
      %v3125 = vadd.f32 %v2481, %v2901
      %v3126 = vadd.f32 %v2482, %v2903
      %v3127 = vadd.f32 %v2483, %v2905
      %v3128 = vadd.f32 %v2484, %v2907
      %v3129 = vadd.f32 %v2485, %v2909
      %v3130 = vadd.f32 %v2486, %v2911
      %v3131 = vadd.f32 %v2487, %v2913
      %v3132 = vadd.f32 %v2488, %v2915
      %v3133 = vadd.f32 %v2489, %v2917
      %v3134 = vadd.f32 %v2490, %v2919
      %v3135 = vadd.f32 %v2491, %v2921
      %v3136 = vadd.f32 %v2492, %v2923
      %v3137 = vadd.f32 %v2493, %v2925
      %v3138 = vadd.f32 %v2494, %v2927
      %v3139 = vadd.f32 %v2495, %v2929
      %v3140 = vld [vmem:[%s165 + $0xc] sm:$0x8]
      %v3141 = vld [vmem:[%s165 + $0x10] sm:$0xf]
      %v3142 = vld [vmem:[%s165 + $0x14] sm:$0xf]
      %v3143 = vld [vmem:[%s165 + $0x18] sm:$0xf]
      %v3144 = vld [vmem:[%s165 + $0x1c] sm:$0xf]
      %v3145 = vld [vmem:[%s165 + $0x20] sm:$0xf]
      %v3146 = vld [vmem:[%s165 + $0x24] sm:$0xf]
      %v3147 = vld [vmem:[%s165 + $0x28] sm:$0xf]
      %v3148 = vld [vmem:[%s165 + $0x2c] sm:$0xf]
      %v3149 = vld [vmem:[%s165 + $0x30] sm:$0xf]
      %v3150 = vld [vmem:[%s165 + $0x34] sm:$0xf]
      %v3151 = vld [vmem:[%s165 + $0x38] sm:$0xf]
      %v3152 = vld [vmem:[%s165 + $0x3c] sm:$0xf]
      %v3153 = vld [vmem:[%s165 + $0x40] sm:$0xf]
      %v3154 = vld [vmem:[%s165 + $0x44] sm:$0xf]
      %v3155 = vld [vmem:[%s165 + $0x48] sm:$0xf]
      %v3156 = vld [vmem:[%s165 + $0x4c] sm:$0xf]
      %v3157 = vld [vmem:[%s165 + $0x50] sm:$0xf]
      %v3158 = vld [vmem:[%s165 + $0x54] sm:$0xf]
      %v3159 = vld [vmem:[%s165 + $0x58] sm:$0xf]
      %v3160 = vld [vmem:[%s165 + $0x5c] sm:$0xf]
      %v3161 = vld [vmem:[%s165 + $0x60] sm:$0xf]
      %v3162 = vld [vmem:[%s165 + $0x64] sm:$0xf]
      %v3163 = vld [vmem:[%s165 + $0x68] sm:$0xf]
      %v3164 = vld [vmem:[%s165 + $0x6c] sm:$0xf]
      %v3165 = vld [vmem:[%s165 + $0x70] sm:$0xf]
      %v3166 = vld [vmem:[%s165 + $0x74] sm:$0xf]
      %v3167 = vld [vmem:[%s165 + $0x78] sm:$0xf]
      %v3168 = vld [vmem:[%s165 + $0x7c] sm:$0xf]
      %v3169 = vld [vmem:[%s165 + $0x80] sm:$0xf]
      %v3170 = vld [vmem:[%s165 + $0x84] sm:$0xf]
      %v3171 = vld [vmem:[%s165 + $0x88] sm:$0xf]
      %v3172 = vld [vmem:[%s165 + $0x8c] sm:$0xf]
      %v3173 = vld [vmem:[%s165 + $0x90] sm:$0xf]
      %v3174 = vld [vmem:[%s165 + $0x94] sm:$0xf]
      %v3175 = vld [vmem:[%s165 + $0x98] sm:$0xf]
      %v3176 = vld [vmem:[%s165 + $0x9c] sm:$0xf]
      %v3177 = vld [vmem:[%s165 + $0xa0] sm:$0xf]
      %v3178 = vld [vmem:[%s165 + $0xa4] sm:$0xf]
      %v3179 = vld [vmem:[%s165 + $0xa8] sm:$0xf]
      %v3180 = vld [vmem:[%s165 + $0xac] sm:$0xf]
      %v3181 = vld [vmem:[%s165 + $0xb0] sm:$0xf]
      %v3182 = vld [vmem:[%s165 + $0xb4] sm:$0xf]
      %v3183 = vld [vmem:[%s165 + $0xb8] sm:$0xf]
      %v3184 = vld [vmem:[%s165 + $0xbc] sm:$0xf]
      %v3185 = vld [vmem:[%s165 + $0xc0] sm:$0xf]
      %v3186 = vld [vmem:[%s165 + $0xc4] sm:$0xf]
      %v3187 = vld [vmem:[%s165 + $0xc8] sm:$0xf]
      %v3188 = vld [vmem:[%s165 + $0xcc] sm:$0xf]
      %v3189 = vld [vmem:[%s165 + $0xd0] sm:$0xf]
      %v3190 = vld [vmem:[%s165 + $0xd4] sm:$0xf]
      %v3191 = vld [vmem:[%s165 + $0xd8] sm:$0xf]
      %v3192 = vld [vmem:[%s165 + $0xdc] sm:$0xf]
      %v3193 = vld [vmem:[%s165 + $0xe0] sm:$0xf]
      %v3194 = vld [vmem:[%s165 + $0xe4] sm:$0xf]
      %v3195 = vld [vmem:[%s165 + $0xe8] sm:$0xf]
      %v3196 = vld [vmem:[%s165 + $0xec] sm:$0xf]
      %v3197 = vld [vmem:[%s165 + $0xf0] sm:$0xf]
      %v3198 = vld [vmem:[%s165 + $0xf4] sm:$0xf]
      %v3199 = vld [vmem:[%s165 + $0xf8] sm:$0xf]
      %v3200 = vld [vmem:[%s165 + $0xfc] sm:$0xf]
      %v3201 = vld [vmem:[%s165 + $0x100] sm:$0xf]
      %v3202 = vld [vmem:[%s165 + $0x104] sm:$0xf]
      %v3203 = vld [vmem:[%s165 + $0x108] sm:$0xf]
      %v3204 = vld [vmem:[%s165 + $0x10c] sm:$0xf]
      %v3205 = vld [vmem:[%s165 + $0x110] sm:$0xf]
      %v3206 = vld [vmem:[%s165 + $0x114] sm:$0xf]
      %v3207 = vld [vmem:[%s165 + $0x118] sm:$0xf]
      %v3208 = vld [vmem:[%s165 + $0x11c] sm:$0xf]
      %v3209 = vld [vmem:[%s165 + $0x120] sm:$0xf]
      %v3210 = vld [vmem:[%s165 + $0x124] sm:$0xf]
      %v3211 = vld [vmem:[%s165 + $0x128] sm:$0xf]
      %v3212 = vld [vmem:[%s165 + $0x12c] sm:$0xf]
      %v3213 = vld [vmem:[%s165 + $0x130] sm:$0xf]
      %v3214 = vld [vmem:[%s165 + $0x134] sm:$0xf]
      %v3215 = vld [vmem:[%s165 + $0x138] sm:$0xf]
      %v3216 = vld [vmem:[%s165 + $0x13c] sm:$0xf]
      %v3217 = vld [vmem:[%s165 + $0x140] sm:$0xf]
      %v3218 = vld [vmem:[%s165 + $0x144] sm:$0xf]
      %v3219 = vld [vmem:[%s165 + $0x148] sm:$0xf]
      %v3220 = vld [vmem:[%s165 + $0x14c] sm:$0xf]
      %v3221 = vld [vmem:[%s165 + $0x150] sm:$0xf]
      %v3222 = vld [vmem:[%s165 + $0x154] sm:$0xf]
      %v3223 = vld [vmem:[%s165 + $0x158] sm:$0xf]
      %v3224 = vld [vmem:[%s165 + $0x15c] sm:$0xf]
      %v3225 = vld [vmem:[%s165 + $0x160] sm:$0xf]
      %v3226 = vld [vmem:[%s165 + $0x164] sm:$0xf]
      %v3227 = vld [vmem:[%s165 + $0x168] sm:$0xf]
      %v3228 = vld [vmem:[%s165 + $0x16c] sm:$0xf]
      %v3229 = vld [vmem:[%s165 + $0x170] sm:$0xf]
      %v3230 = vld [vmem:[%s165 + $0x174] sm:$0xf]
      %v3231 = vld [vmem:[%s165 + $0x178] sm:$0xf]
      %v3232 = vld [vmem:[%s165 + $0x17c] sm:$0xf]
      %v3233 = vld [vmem:[%s165 + $0x180] sm:$0xf]
      %v3234 = vld [vmem:[%s165 + $0x184] sm:$0xf]
      %v3235 = vld [vmem:[%s165 + $0x188] sm:$0xf]
      %v3236 = vld [vmem:[%s165 + $0x18c] sm:$0xf]
      %v3237 = vld [vmem:[%s165 + $0x190] sm:$0xf]
      %v3238 = vld [vmem:[%s165 + $0x194] sm:$0xf]
      %v3239 = vld [vmem:[%s165 + $0x198] sm:$0xf]
      %v3240 = vld [vmem:[%s165 + $0x19c] sm:$0xf]
      %v3241 = vld [vmem:[%s165 + $0x1a0] sm:$0xf]
      %v3242 = vld [vmem:[%s165 + $0x1a4] sm:$0xf]
      %v3243 = vld [vmem:[%s165 + $0x1a8] sm:$0xf]
      %v3244 = vld [vmem:[%s165 + $0x1ac] sm:$0xf]
      %v3245 = vld [vmem:[%s165 + $0x1b0] sm:$0x7]
      %v3246 = vunpack.c.l.bf16 %v3140
      %v3247 = vunpack.c.l.bf16 %v3141
      %v3248 = vunpack.c.l.bf16 %v3142
      %v3249 = vunpack.c.l.bf16 %v3143
      %v3250 = vunpack.c.l.bf16 %v3144
      %v3251 = vunpack.c.l.bf16 %v3145
      %v3252 = vunpack.c.l.bf16 %v3146
      %v3253 = vunpack.c.l.bf16 %v3147
      %v3254 = vunpack.c.l.bf16 %v3148
      %v3255 = vunpack.c.l.bf16 %v3149
      %v3256 = vunpack.c.l.bf16 %v3150
      %v3257 = vunpack.c.l.bf16 %v3151
      %v3258 = vunpack.c.l.bf16 %v3152
      %v3259 = vunpack.c.l.bf16 %v3153
      %v3260 = vunpack.c.l.bf16 %v3154
      %v3261 = vunpack.c.l.bf16 %v3155
      %v3262 = vunpack.c.l.bf16 %v3156
      %v3263 = vunpack.c.l.bf16 %v3157
      %v3264 = vunpack.c.l.bf16 %v3158
      %v3265 = vunpack.c.l.bf16 %v3159
      %v3266 = vunpack.c.l.bf16 %v3160
      %v3267 = vunpack.c.l.bf16 %v3161
      %v3268 = vunpack.c.l.bf16 %v3162
      %v3269 = vunpack.c.l.bf16 %v3163
      %v3270 = vunpack.c.l.bf16 %v3164
      %v3271 = vunpack.c.l.bf16 %v3165
      %v3272 = vunpack.c.l.bf16 %v3166
      %v3273 = vunpack.c.l.bf16 %v3167
      %v3274 = vunpack.c.l.bf16 %v3168
      %v3275 = vunpack.c.l.bf16 %v3169
      %v3276 = vunpack.c.l.bf16 %v3170
      %v3277 = vunpack.c.l.bf16 %v3171
      %v3278 = vunpack.c.l.bf16 %v3172
      %v3279 = vunpack.c.l.bf16 %v3173
      %v3280 = vunpack.c.l.bf16 %v3174
      %v3281 = vunpack.c.l.bf16 %v3175
      %v3282 = vunpack.c.l.bf16 %v3176
      %v3283 = vunpack.c.l.bf16 %v3177
      %v3284 = vunpack.c.l.bf16 %v3178
      %v3285 = vunpack.c.l.bf16 %v3179
      %v3286 = vunpack.c.l.bf16 %v3180
      %v3287 = vunpack.c.l.bf16 %v3181
      %v3288 = vunpack.c.l.bf16 %v3182
      %v3289 = vunpack.c.l.bf16 %v3183
      %v3290 = vunpack.c.l.bf16 %v3184
      %v3291 = vunpack.c.l.bf16 %v3185
      %v3292 = vunpack.c.l.bf16 %v3186
      %v3293 = vunpack.c.l.bf16 %v3187
      %v3294 = vunpack.c.l.bf16 %v3188
      %v3295 = vunpack.c.l.bf16 %v3189
      %v3296 = vunpack.c.l.bf16 %v3190
      %v3297 = vunpack.c.l.bf16 %v3191
      %v3298 = vunpack.c.l.bf16 %v3192
      %v3299 = vunpack.c.l.bf16 %v3193
      %v3300 = vunpack.c.l.bf16 %v3194
      %v3301 = vunpack.c.l.bf16 %v3195
      %v3302 = vunpack.c.l.bf16 %v3196
      %v3303 = vunpack.c.l.bf16 %v3197
      %v3304 = vunpack.c.l.bf16 %v3198
      %v3305 = vunpack.c.l.bf16 %v3199
      %v3306 = vunpack.c.l.bf16 %v3200
      %v3307 = vunpack.c.l.bf16 %v3201
      %v3308 = vunpack.c.l.bf16 %v3202
      %v3309 = vunpack.c.l.bf16 %v3203
      %v3310 = vunpack.c.l.bf16 %v3204
      %v3311 = vunpack.c.l.bf16 %v3205
      %v3312 = vunpack.c.l.bf16 %v3206
      %v3313 = vunpack.c.l.bf16 %v3207
      %v3314 = vunpack.c.l.bf16 %v3208
      %v3315 = vunpack.c.l.bf16 %v3209
      %v3316 = vunpack.c.l.bf16 %v3210
      %v3317 = vunpack.c.l.bf16 %v3211
      %v3318 = vunpack.c.l.bf16 %v3212
      %v3319 = vunpack.c.l.bf16 %v3213
      %v3320 = vunpack.c.l.bf16 %v3214
      %v3321 = vunpack.c.l.bf16 %v3215
      %v3322 = vunpack.c.l.bf16 %v3216
      %v3323 = vunpack.c.l.bf16 %v3217
      %v3324 = vunpack.c.l.bf16 %v3218
      %v3325 = vunpack.c.l.bf16 %v3219
      %v3326 = vunpack.c.l.bf16 %v3220
      %v3327 = vunpack.c.l.bf16 %v3221
      %v3328 = vunpack.c.l.bf16 %v3222
      %v3329 = vunpack.c.l.bf16 %v3223
      %v3330 = vunpack.c.l.bf16 %v3224
      %v3331 = vunpack.c.l.bf16 %v3225
      %v3332 = vunpack.c.l.bf16 %v3226
      %v3333 = vunpack.c.l.bf16 %v3227
      %v3334 = vunpack.c.l.bf16 %v3228
      %v3335 = vunpack.c.l.bf16 %v3229
      %v3336 = vunpack.c.l.bf16 %v3230
      %v3337 = vunpack.c.l.bf16 %v3231
      %v3338 = vunpack.c.l.bf16 %v3232
      %v3339 = vunpack.c.l.bf16 %v3233
      %v3340 = vunpack.c.l.bf16 %v3234
      %v3341 = vunpack.c.l.bf16 %v3235
      %v3342 = vunpack.c.l.bf16 %v3236
      %v3343 = vunpack.c.l.bf16 %v3237
      %v3344 = vunpack.c.l.bf16 %v3238
      %v3345 = vunpack.c.l.bf16 %v3239
      %v3346 = vunpack.c.l.bf16 %v3240
      %v3347 = vunpack.c.l.bf16 %v3241
      %v3348 = vunpack.c.l.bf16 %v3242
      %v3349 = vunpack.c.l.bf16 %v3243
      %v3350 = vunpack.c.l.bf16 %v3244
      %v3351 = vunpack.c.l.bf16 %v3245
      %3353 = vset.pattern.permute.xlu0 0
      %3354 = vperm.xlu0 %3353, %v3246
      %v3355 = vpop.permute.xlu0 %3354
      %3358 = vset.pattern.permute.xlu0 0
      %3359 = vperm.xlu0 %3358, %v3247
      %v3360 = vpop.permute.xlu0 %3359
      %3363 = vset.pattern.permute.xlu0 0
      %3364 = vperm.xlu0 %3363, %v3248
      %v3365 = vpop.permute.xlu0 %3364
      %3368 = vset.pattern.permute.xlu0 0
      %3369 = vperm.xlu0 %3368, %v3249
      %v3370 = vpop.permute.xlu0 %3369
      %3373 = vset.pattern.permute.xlu0 0
      %3374 = vperm.xlu0 %3373, %v3250
      %v3375 = vpop.permute.xlu0 %3374
      %3378 = vset.pattern.permute.xlu0 0
      %3379 = vperm.xlu0 %3378, %v3251
      %v3380 = vpop.permute.xlu0 %3379
      %3383 = vset.pattern.permute.xlu0 0
      %3384 = vperm.xlu0 %3383, %v3252
      %v3385 = vpop.permute.xlu0 %3384
      %3388 = vset.pattern.permute.xlu0 0
      %3389 = vperm.xlu0 %3388, %v3253
      %v3390 = vpop.permute.xlu0 %3389
      %3393 = vset.pattern.permute.xlu0 0
      %3394 = vperm.xlu0 %3393, %v3254
      %v3395 = vpop.permute.xlu0 %3394
      %3398 = vset.pattern.permute.xlu0 0
      %3399 = vperm.xlu0 %3398, %v3255
      %v3400 = vpop.permute.xlu0 %3399
      %3403 = vset.pattern.permute.xlu0 0
      %3404 = vperm.xlu0 %3403, %v3256
      %v3405 = vpop.permute.xlu0 %3404
      %3408 = vset.pattern.permute.xlu0 0
      %3409 = vperm.xlu0 %3408, %v3257
      %v3410 = vpop.permute.xlu0 %3409
      %3413 = vset.pattern.permute.xlu0 0
      %3414 = vperm.xlu0 %3413, %v3258
      %v3415 = vpop.permute.xlu0 %3414
      %3418 = vset.pattern.permute.xlu0 0
      %3419 = vperm.xlu0 %3418, %v3259
      %v3420 = vpop.permute.xlu0 %3419
      %3423 = vset.pattern.permute.xlu0 0
      %3424 = vperm.xlu0 %3423, %v3260
      %v3425 = vpop.permute.xlu0 %3424
      %3428 = vset.pattern.permute.xlu0 0
      %3429 = vperm.xlu0 %3428, %v3261
      %v3430 = vpop.permute.xlu0 %3429
      %3433 = vset.pattern.permute.xlu0 0
      %3434 = vperm.xlu0 %3433, %v3262
      %v3435 = vpop.permute.xlu0 %3434
      %3438 = vset.pattern.permute.xlu0 0
      %3439 = vperm.xlu0 %3438, %v3263
      %v3440 = vpop.permute.xlu0 %3439
      %3443 = vset.pattern.permute.xlu0 0
      %3444 = vperm.xlu0 %3443, %v3264
      %v3445 = vpop.permute.xlu0 %3444
      %3448 = vset.pattern.permute.xlu0 0
      %3449 = vperm.xlu0 %3448, %v3265
      %v3450 = vpop.permute.xlu0 %3449
      %3453 = vset.pattern.permute.xlu0 0
      %3454 = vperm.xlu0 %3453, %v3266
      %v3455 = vpop.permute.xlu0 %3454
      %3458 = vset.pattern.permute.xlu0 0
      %3459 = vperm.xlu0 %3458, %v3267
      %v3460 = vpop.permute.xlu0 %3459
      %3463 = vset.pattern.permute.xlu0 0
      %3464 = vperm.xlu0 %3463, %v3268
      %v3465 = vpop.permute.xlu0 %3464
      %3468 = vset.pattern.permute.xlu0 0
      %3469 = vperm.xlu0 %3468, %v3269
      %v3470 = vpop.permute.xlu0 %3469
      %3473 = vset.pattern.permute.xlu0 0
      %3474 = vperm.xlu0 %3473, %v3270
      %v3475 = vpop.permute.xlu0 %3474
      %3478 = vset.pattern.permute.xlu0 0
      %3479 = vperm.xlu0 %3478, %v3271
      %v3480 = vpop.permute.xlu0 %3479
      %3483 = vset.pattern.permute.xlu0 0
      %3484 = vperm.xlu0 %3483, %v3272
      %v3485 = vpop.permute.xlu0 %3484
      %3488 = vset.pattern.permute.xlu0 0
      %3489 = vperm.xlu0 %3488, %v3273
      %v3490 = vpop.permute.xlu0 %3489
      %3493 = vset.pattern.permute.xlu0 0
      %3494 = vperm.xlu0 %3493, %v3274
      %v3495 = vpop.permute.xlu0 %3494
      %3498 = vset.pattern.permute.xlu0 0
      %3499 = vperm.xlu0 %3498, %v3275
      %v3500 = vpop.permute.xlu0 %3499
      %3503 = vset.pattern.permute.xlu0 0
      %3504 = vperm.xlu0 %3503, %v3276
      %v3505 = vpop.permute.xlu0 %3504
      %3508 = vset.pattern.permute.xlu0 0
      %3509 = vperm.xlu0 %3508, %v3277
      %v3510 = vpop.permute.xlu0 %3509
      %3513 = vset.pattern.permute.xlu0 0
      %3514 = vperm.xlu0 %3513, %v3278
      %v3515 = vpop.permute.xlu0 %3514
      %3518 = vset.pattern.permute.xlu0 0
      %3519 = vperm.xlu0 %3518, %v3279
      %v3520 = vpop.permute.xlu0 %3519
      %3523 = vset.pattern.permute.xlu0 0
      %3524 = vperm.xlu0 %3523, %v3280
      %v3525 = vpop.permute.xlu0 %3524
      %3528 = vset.pattern.permute.xlu0 0
      %3529 = vperm.xlu0 %3528, %v3281
      %v3530 = vpop.permute.xlu0 %3529
      %3533 = vset.pattern.permute.xlu0 0
      %3534 = vperm.xlu0 %3533, %v3282
      %v3535 = vpop.permute.xlu0 %3534
      %3538 = vset.pattern.permute.xlu0 0
      %3539 = vperm.xlu0 %3538, %v3283
      %v3540 = vpop.permute.xlu0 %3539
      %3543 = vset.pattern.permute.xlu0 0
      %3544 = vperm.xlu0 %3543, %v3284
      %v3545 = vpop.permute.xlu0 %3544
      %3548 = vset.pattern.permute.xlu0 0
      %3549 = vperm.xlu0 %3548, %v3285
      %v3550 = vpop.permute.xlu0 %3549
      %3553 = vset.pattern.permute.xlu0 0
      %3554 = vperm.xlu0 %3553, %v3286
      %v3555 = vpop.permute.xlu0 %3554
      %3558 = vset.pattern.permute.xlu0 0
      %3559 = vperm.xlu0 %3558, %v3287
      %v3560 = vpop.permute.xlu0 %3559
      %3563 = vset.pattern.permute.xlu0 0
      %3564 = vperm.xlu0 %3563, %v3288
      %v3565 = vpop.permute.xlu0 %3564
      %3568 = vset.pattern.permute.xlu0 0
      %3569 = vperm.xlu0 %3568, %v3289
      %v3570 = vpop.permute.xlu0 %3569
      %3573 = vset.pattern.permute.xlu0 0
      %3574 = vperm.xlu0 %3573, %v3290
      %v3575 = vpop.permute.xlu0 %3574
      %3578 = vset.pattern.permute.xlu0 0
      %3579 = vperm.xlu0 %3578, %v3291
      %v3580 = vpop.permute.xlu0 %3579
      %3583 = vset.pattern.permute.xlu0 0
      %3584 = vperm.xlu0 %3583, %v3292
      %v3585 = vpop.permute.xlu0 %3584
      %3588 = vset.pattern.permute.xlu0 0
      %3589 = vperm.xlu0 %3588, %v3293
      %v3590 = vpop.permute.xlu0 %3589
      %3593 = vset.pattern.permute.xlu0 0
      %3594 = vperm.xlu0 %3593, %v3294
      %v3595 = vpop.permute.xlu0 %3594
      %3598 = vset.pattern.permute.xlu0 0
      %3599 = vperm.xlu0 %3598, %v3295
      %v3600 = vpop.permute.xlu0 %3599
      %3603 = vset.pattern.permute.xlu0 0
      %3604 = vperm.xlu0 %3603, %v3296
      %v3605 = vpop.permute.xlu0 %3604
      %3608 = vset.pattern.permute.xlu0 0
      %3609 = vperm.xlu0 %3608, %v3297
      %v3610 = vpop.permute.xlu0 %3609
      %3613 = vset.pattern.permute.xlu0 0
      %3614 = vperm.xlu0 %3613, %v3298
      %v3615 = vpop.permute.xlu0 %3614
      %3618 = vset.pattern.permute.xlu0 0
      %3619 = vperm.xlu0 %3618, %v3299
      %v3620 = vpop.permute.xlu0 %3619
      %3623 = vset.pattern.permute.xlu0 0
      %3624 = vperm.xlu0 %3623, %v3300
      %v3625 = vpop.permute.xlu0 %3624
      %3628 = vset.pattern.permute.xlu0 0
      %3629 = vperm.xlu0 %3628, %v3301
      %v3630 = vpop.permute.xlu0 %3629
      %3633 = vset.pattern.permute.xlu0 0
      %3634 = vperm.xlu0 %3633, %v3302
      %v3635 = vpop.permute.xlu0 %3634
      %3638 = vset.pattern.permute.xlu0 0
      %3639 = vperm.xlu0 %3638, %v3303
      %v3640 = vpop.permute.xlu0 %3639
      %3643 = vset.pattern.permute.xlu0 0
      %3644 = vperm.xlu0 %3643, %v3304
      %v3645 = vpop.permute.xlu0 %3644
      %3648 = vset.pattern.permute.xlu0 0
      %3649 = vperm.xlu0 %3648, %v3305
      %v3650 = vpop.permute.xlu0 %3649
      %3653 = vset.pattern.permute.xlu0 0
      %3654 = vperm.xlu0 %3653, %v3306
      %v3655 = vpop.permute.xlu0 %3654
      %3658 = vset.pattern.permute.xlu0 0
      %3659 = vperm.xlu0 %3658, %v3307
      %v3660 = vpop.permute.xlu0 %3659
      %3663 = vset.pattern.permute.xlu0 0
      %3664 = vperm.xlu0 %3663, %v3308
      %v3665 = vpop.permute.xlu0 %3664
      %3668 = vset.pattern.permute.xlu0 0
      %3669 = vperm.xlu0 %3668, %v3309
      %v3670 = vpop.permute.xlu0 %3669
      %3673 = vset.pattern.permute.xlu0 0
      %3674 = vperm.xlu0 %3673, %v3310
      %v3675 = vpop.permute.xlu0 %3674
      %3678 = vset.pattern.permute.xlu0 0
      %3679 = vperm.xlu0 %3678, %v3311
      %v3680 = vpop.permute.xlu0 %3679
      %3683 = vset.pattern.permute.xlu0 0
      %3684 = vperm.xlu0 %3683, %v3312
      %v3685 = vpop.permute.xlu0 %3684
      %3688 = vset.pattern.permute.xlu0 0
      %3689 = vperm.xlu0 %3688, %v3313
      %v3690 = vpop.permute.xlu0 %3689
      %3693 = vset.pattern.permute.xlu0 0
      %3694 = vperm.xlu0 %3693, %v3314
      %v3695 = vpop.permute.xlu0 %3694
      %3698 = vset.pattern.permute.xlu0 0
      %3699 = vperm.xlu0 %3698, %v3315
      %v3700 = vpop.permute.xlu0 %3699
      %3703 = vset.pattern.permute.xlu0 0
      %3704 = vperm.xlu0 %3703, %v3316
      %v3705 = vpop.permute.xlu0 %3704
      %3708 = vset.pattern.permute.xlu0 0
      %3709 = vperm.xlu0 %3708, %v3317
      %v3710 = vpop.permute.xlu0 %3709
      %3713 = vset.pattern.permute.xlu0 0
      %3714 = vperm.xlu0 %3713, %v3318
      %v3715 = vpop.permute.xlu0 %3714
      %3718 = vset.pattern.permute.xlu0 0
      %3719 = vperm.xlu0 %3718, %v3319
      %v3720 = vpop.permute.xlu0 %3719
      %3723 = vset.pattern.permute.xlu0 0
      %3724 = vperm.xlu0 %3723, %v3320
      %v3725 = vpop.permute.xlu0 %3724
      %3728 = vset.pattern.permute.xlu0 0
      %3729 = vperm.xlu0 %3728, %v3321
      %v3730 = vpop.permute.xlu0 %3729
      %3733 = vset.pattern.permute.xlu0 0
      %3734 = vperm.xlu0 %3733, %v3322
      %v3735 = vpop.permute.xlu0 %3734
      %3738 = vset.pattern.permute.xlu0 0
      %3739 = vperm.xlu0 %3738, %v3323
      %v3740 = vpop.permute.xlu0 %3739
      %3743 = vset.pattern.permute.xlu0 0
      %3744 = vperm.xlu0 %3743, %v3324
      %v3745 = vpop.permute.xlu0 %3744
      %3748 = vset.pattern.permute.xlu0 0
      %3749 = vperm.xlu0 %3748, %v3325
      %v3750 = vpop.permute.xlu0 %3749
      %3753 = vset.pattern.permute.xlu0 0
      %3754 = vperm.xlu0 %3753, %v3326
      %v3755 = vpop.permute.xlu0 %3754
      %3758 = vset.pattern.permute.xlu0 0
      %3759 = vperm.xlu0 %3758, %v3327
      %v3760 = vpop.permute.xlu0 %3759
      %3763 = vset.pattern.permute.xlu0 0
      %3764 = vperm.xlu0 %3763, %v3328
      %v3765 = vpop.permute.xlu0 %3764
      %3768 = vset.pattern.permute.xlu0 0
      %3769 = vperm.xlu0 %3768, %v3329
      %v3770 = vpop.permute.xlu0 %3769
      %3773 = vset.pattern.permute.xlu0 0
      %3774 = vperm.xlu0 %3773, %v3330
      %v3775 = vpop.permute.xlu0 %3774
      %3778 = vset.pattern.permute.xlu0 0
      %3779 = vperm.xlu0 %3778, %v3331
      %v3780 = vpop.permute.xlu0 %3779
      %3783 = vset.pattern.permute.xlu0 0
      %3784 = vperm.xlu0 %3783, %v3332
      %v3785 = vpop.permute.xlu0 %3784
      %3788 = vset.pattern.permute.xlu0 0
      %3789 = vperm.xlu0 %3788, %v3333
      %v3790 = vpop.permute.xlu0 %3789
      %3793 = vset.pattern.permute.xlu0 0
      %3794 = vperm.xlu0 %3793, %v3334
      %v3795 = vpop.permute.xlu0 %3794
      %3798 = vset.pattern.permute.xlu0 0
      %3799 = vperm.xlu0 %3798, %v3335
      %v3800 = vpop.permute.xlu0 %3799
      %3803 = vset.pattern.permute.xlu0 0
      %3804 = vperm.xlu0 %3803, %v3336
      %v3805 = vpop.permute.xlu0 %3804
      %3808 = vset.pattern.permute.xlu0 0
      %3809 = vperm.xlu0 %3808, %v3337
      %v3810 = vpop.permute.xlu0 %3809
      %3813 = vset.pattern.permute.xlu0 0
      %3814 = vperm.xlu0 %3813, %v3338
      %v3815 = vpop.permute.xlu0 %3814
      %3818 = vset.pattern.permute.xlu0 0
      %3819 = vperm.xlu0 %3818, %v3339
      %v3820 = vpop.permute.xlu0 %3819
      %3823 = vset.pattern.permute.xlu0 0
      %3824 = vperm.xlu0 %3823, %v3340
      %v3825 = vpop.permute.xlu0 %3824
      %3828 = vset.pattern.permute.xlu0 0
      %3829 = vperm.xlu0 %3828, %v3341
      %v3830 = vpop.permute.xlu0 %3829
      %3833 = vset.pattern.permute.xlu0 0
      %3834 = vperm.xlu0 %3833, %v3342
      %v3835 = vpop.permute.xlu0 %3834
      %3838 = vset.pattern.permute.xlu0 0
      %3839 = vperm.xlu0 %3838, %v3343
      %v3840 = vpop.permute.xlu0 %3839
      %3843 = vset.pattern.permute.xlu0 0
      %3844 = vperm.xlu0 %3843, %v3344
      %v3845 = vpop.permute.xlu0 %3844
      %3848 = vset.pattern.permute.xlu0 0
      %3849 = vperm.xlu0 %3848, %v3345
      %v3850 = vpop.permute.xlu0 %3849
      %3853 = vset.pattern.permute.xlu0 0
      %3854 = vperm.xlu0 %3853, %v3346
      %v3855 = vpop.permute.xlu0 %3854
      %3858 = vset.pattern.permute.xlu0 0
      %3859 = vperm.xlu0 %3858, %v3347
      %v3860 = vpop.permute.xlu0 %3859
      %3863 = vset.pattern.permute.xlu0 0
      %3864 = vperm.xlu0 %3863, %v3348
      %v3865 = vpop.permute.xlu0 %3864
      %3868 = vset.pattern.permute.xlu0 0
      %3869 = vperm.xlu0 %3868, %v3349
      %v3870 = vpop.permute.xlu0 %3869
      %3873 = vset.pattern.permute.xlu0 0
      %3874 = vperm.xlu0 %3873, %v3350
      %v3875 = vpop.permute.xlu0 %3874
      %3878 = vset.pattern.permute.xlu0 0
      %3879 = vperm.xlu0 %3878, %v3351
      %v3880 = vpop.permute.xlu0 %3879
      %v3882 = vperm.slane %v2499, 3
      %v3883 = vmul.f32 %v3355, %v3882
      %v3884 = vmul.f32 %v3360, %v3882
      %v3885 = vmul.f32 %v3365, %v3882
      %v3886 = vmul.f32 %v3370, %v3882
      %v3887 = vmul.f32 %v3375, %v3882
      %v3888 = vmul.f32 %v3380, %v3882
      %v3889 = vmul.f32 %v3385, %v3882
      %v3890 = vmul.f32 %v3390, %v3882
      %v3891 = vmul.f32 %v3395, %v3882
      %v3892 = vmul.f32 %v3400, %v3882
      %v3893 = vmul.f32 %v3405, %v3882
      %v3894 = vmul.f32 %v3410, %v3882
      %v3895 = vmul.f32 %v3415, %v3882
      %v3896 = vmul.f32 %v3420, %v3882
      %v3897 = vmul.f32 %v3425, %v3882
      %v3898 = vmul.f32 %v3430, %v3882
      %v3899 = vmul.f32 %v3435, %v3882
      %v3900 = vmul.f32 %v3440, %v3882
      %v3901 = vmul.f32 %v3445, %v3882
      %v3902 = vmul.f32 %v3450, %v3882
      %v3903 = vmul.f32 %v3455, %v3882
      %v3904 = vmul.f32 %v3460, %v3882
      %v3905 = vmul.f32 %v3465, %v3882
      %v3906 = vmul.f32 %v3470, %v3882
      %v3907 = vmul.f32 %v3475, %v3882
      %v3908 = vmul.f32 %v3480, %v3882
      %v3909 = vmul.f32 %v3485, %v3882
      %v3910 = vmul.f32 %v3490, %v3882
      %v3911 = vmul.f32 %v3495, %v3882
      %v3912 = vmul.f32 %v3500, %v3882
      %v3913 = vmul.f32 %v3505, %v3882
      %v3914 = vmul.f32 %v3510, %v3882
      %v3915 = vmul.f32 %v3515, %v3882
      %v3916 = vmul.f32 %v3520, %v3882
      %v3917 = vmul.f32 %v3525, %v3882
      %v3918 = vmul.f32 %v3530, %v3882
      %v3919 = vmul.f32 %v3535, %v3882
      %v3920 = vmul.f32 %v3540, %v3882
      %v3921 = vmul.f32 %v3545, %v3882
      %v3922 = vmul.f32 %v3550, %v3882
      %v3923 = vmul.f32 %v3555, %v3882
      %v3924 = vmul.f32 %v3560, %v3882
      %v3925 = vmul.f32 %v3565, %v3882
      %v3926 = vmul.f32 %v3570, %v3882
      %v3927 = vmul.f32 %v3575, %v3882
      %v3928 = vmul.f32 %v3580, %v3882
      %v3929 = vmul.f32 %v3585, %v3882
      %v3930 = vmul.f32 %v3590, %v3882
      %v3931 = vmul.f32 %v3595, %v3882
      %v3932 = vmul.f32 %v3600, %v3882
      %v3933 = vmul.f32 %v3605, %v3882
      %v3934 = vmul.f32 %v3610, %v3882
      %v3935 = vmul.f32 %v3615, %v3882
      %v3936 = vmul.f32 %v3620, %v3882
      %v3937 = vmul.f32 %v3625, %v3882
      %v3938 = vmul.f32 %v3630, %v3882
      %v3939 = vmul.f32 %v3635, %v3882
      %v3940 = vmul.f32 %v3640, %v3882
      %v3941 = vmul.f32 %v3645, %v3882
      %v3942 = vmul.f32 %v3650, %v3882
      %v3943 = vmul.f32 %v3655, %v3882
      %v3944 = vmul.f32 %v3660, %v3882
      %v3945 = vmul.f32 %v3665, %v3882
      %v3946 = vmul.f32 %v3670, %v3882
      %v3947 = vmul.f32 %v3675, %v3882
      %v3948 = vmul.f32 %v3680, %v3882
      %v3949 = vmul.f32 %v3685, %v3882
      %v3950 = vmul.f32 %v3690, %v3882
      %v3951 = vmul.f32 %v3695, %v3882
      %v3952 = vmul.f32 %v3700, %v3882
      %v3953 = vmul.f32 %v3705, %v3882
      %v3954 = vmul.f32 %v3710, %v3882
      %v3955 = vmul.f32 %v3715, %v3882
      %v3956 = vmul.f32 %v3720, %v3882
      %v3957 = vmul.f32 %v3725, %v3882
      %v3958 = vmul.f32 %v3730, %v3882
      %v3959 = vmul.f32 %v3735, %v3882
      %v3960 = vmul.f32 %v3740, %v3882
      %v3961 = vmul.f32 %v3745, %v3882
      %v3962 = vmul.f32 %v3750, %v3882
      %v3963 = vmul.f32 %v3755, %v3882
      %v3964 = vmul.f32 %v3760, %v3882
      %v3965 = vmul.f32 %v3765, %v3882
      %v3966 = vmul.f32 %v3770, %v3882
      %v3967 = vmul.f32 %v3775, %v3882
      %v3968 = vmul.f32 %v3780, %v3882
      %v3969 = vmul.f32 %v3785, %v3882
      %v3970 = vmul.f32 %v3790, %v3882
      %v3971 = vmul.f32 %v3795, %v3882
      %v3972 = vmul.f32 %v3800, %v3882
      %v3973 = vmul.f32 %v3805, %v3882
      %v3974 = vmul.f32 %v3810, %v3882
      %v3975 = vmul.f32 %v3815, %v3882
      %v3976 = vmul.f32 %v3820, %v3882
      %v3977 = vmul.f32 %v3825, %v3882
      %v3978 = vmul.f32 %v3830, %v3882
      %v3979 = vmul.f32 %v3835, %v3882
      %v3980 = vmul.f32 %v3840, %v3882
      %v3981 = vmul.f32 %v3845, %v3882
      %v3982 = vmul.f32 %v3850, %v3882
      %v3983 = vmul.f32 %v3855, %v3882
      %v3984 = vmul.f32 %v3860, %v3882
      %v3985 = vmul.f32 %v3865, %v3882
      %v3986 = vmul.f32 %v3870, %v3882
      %v3987 = vmul.f32 %v3875, %v3882
      %v3988 = vmul.f32 %v3880, %v3882
      %vm4095 = vcmask 1041408
      %v4096 = vrot.slane %v3883, 6
      %v4097 = vrot.slane %v3884, 6
      %v4098 = vsel %vm4095, %v4096, %v4097
      %v4099 = vrot.slane %v3885, 6
      %v4100 = vsel %vm4095, %v4097, %v4099
      %v4101 = vrot.slane %v3886, 6
      %v4102 = vsel %vm4095, %v4099, %v4101
      %v4103 = vrot.slane %v3887, 6
      %v4104 = vsel %vm4095, %v4101, %v4103
      %v4105 = vrot.slane %v3888, 6
      %v4106 = vsel %vm4095, %v4103, %v4105
      %v4107 = vrot.slane %v3889, 6
      %v4108 = vsel %vm4095, %v4105, %v4107
      %v4109 = vrot.slane %v3890, 6
      %v4110 = vsel %vm4095, %v4107, %v4109
      %v4111 = vrot.slane %v3891, 6
      %v4112 = vsel %vm4095, %v4109, %v4111
      %v4113 = vrot.slane %v3892, 6
      %v4114 = vsel %vm4095, %v4111, %v4113
      %v4115 = vrot.slane %v3893, 6
      %v4116 = vsel %vm4095, %v4113, %v4115
      %v4117 = vrot.slane %v3894, 6
      %v4118 = vsel %vm4095, %v4115, %v4117
      %v4119 = vrot.slane %v3895, 6
      %v4120 = vsel %vm4095, %v4117, %v4119
      %v4121 = vrot.slane %v3896, 6
      %v4122 = vsel %vm4095, %v4119, %v4121
      %v4123 = vrot.slane %v3897, 6
      %v4124 = vsel %vm4095, %v4121, %v4123
      %v4125 = vrot.slane %v3898, 6
      %v4126 = vsel %vm4095, %v4123, %v4125
      %v4127 = vrot.slane %v3899, 6
      %v4128 = vsel %vm4095, %v4125, %v4127
      %v4129 = vrot.slane %v3900, 6
      %v4130 = vsel %vm4095, %v4127, %v4129
      %v4131 = vrot.slane %v3901, 6
      %v4132 = vsel %vm4095, %v4129, %v4131
      %v4133 = vrot.slane %v3902, 6
      %v4134 = vsel %vm4095, %v4131, %v4133
      %v4135 = vrot.slane %v3903, 6
      %v4136 = vsel %vm4095, %v4133, %v4135
      %v4137 = vrot.slane %v3904, 6
      %v4138 = vsel %vm4095, %v4135, %v4137
      %v4139 = vrot.slane %v3905, 6
      %v4140 = vsel %vm4095, %v4137, %v4139
      %v4141 = vrot.slane %v3906, 6
      %v4142 = vsel %vm4095, %v4139, %v4141
      %v4143 = vrot.slane %v3907, 6
      %v4144 = vsel %vm4095, %v4141, %v4143
      %v4145 = vrot.slane %v3908, 6
      %v4146 = vsel %vm4095, %v4143, %v4145
      %v4147 = vrot.slane %v3909, 6
      %v4148 = vsel %vm4095, %v4145, %v4147
      %v4149 = vrot.slane %v3910, 6
      %v4150 = vsel %vm4095, %v4147, %v4149
      %v4151 = vrot.slane %v3911, 6
      %v4152 = vsel %vm4095, %v4149, %v4151
      %v4153 = vrot.slane %v3912, 6
      %v4154 = vsel %vm4095, %v4151, %v4153
      %v4155 = vrot.slane %v3913, 6
      %v4156 = vsel %vm4095, %v4153, %v4155
      %v4157 = vrot.slane %v3914, 6
      %v4158 = vsel %vm4095, %v4155, %v4157
      %v4159 = vrot.slane %v3915, 6
      %v4160 = vsel %vm4095, %v4157, %v4159
      %v4161 = vrot.slane %v3916, 6
      %v4162 = vsel %vm4095, %v4159, %v4161
      %v4163 = vrot.slane %v3917, 6
      %v4164 = vsel %vm4095, %v4161, %v4163
      %v4165 = vrot.slane %v3918, 6
      %v4166 = vsel %vm4095, %v4163, %v4165
      %v4167 = vrot.slane %v3919, 6
      %v4168 = vsel %vm4095, %v4165, %v4167
      %v4169 = vrot.slane %v3920, 6
      %v4170 = vsel %vm4095, %v4167, %v4169
      %v4171 = vrot.slane %v3921, 6
      %v4172 = vsel %vm4095, %v4169, %v4171
      %v4173 = vrot.slane %v3922, 6
      %v4174 = vsel %vm4095, %v4171, %v4173
      %v4175 = vrot.slane %v3923, 6
      %v4176 = vsel %vm4095, %v4173, %v4175
      %v4177 = vrot.slane %v3924, 6
      %v4178 = vsel %vm4095, %v4175, %v4177
      %v4179 = vrot.slane %v3925, 6
      %v4180 = vsel %vm4095, %v4177, %v4179
      %v4181 = vrot.slane %v3926, 6
      %v4182 = vsel %vm4095, %v4179, %v4181
      %v4183 = vrot.slane %v3927, 6
      %v4184 = vsel %vm4095, %v4181, %v4183
      %v4185 = vrot.slane %v3928, 6
      %v4186 = vsel %vm4095, %v4183, %v4185
      %v4187 = vrot.slane %v3929, 6
      %v4188 = vsel %vm4095, %v4185, %v4187
      %v4189 = vrot.slane %v3930, 6
      %v4190 = vsel %vm4095, %v4187, %v4189
      %v4191 = vrot.slane %v3931, 6
      %v4192 = vsel %vm4095, %v4189, %v4191
      %v4193 = vrot.slane %v3932, 6
      %v4194 = vsel %vm4095, %v4191, %v4193
      %v4195 = vrot.slane %v3933, 6
      %v4196 = vsel %vm4095, %v4193, %v4195
      %v4197 = vrot.slane %v3934, 6
      %v4198 = vsel %vm4095, %v4195, %v4197
      %v4199 = vrot.slane %v3935, 6
      %v4200 = vsel %vm4095, %v4197, %v4199
      %v4201 = vrot.slane %v3936, 6
      %v4202 = vsel %vm4095, %v4199, %v4201
      %v4203 = vrot.slane %v3937, 6
      %v4204 = vsel %vm4095, %v4201, %v4203
      %v4205 = vrot.slane %v3938, 6
      %v4206 = vsel %vm4095, %v4203, %v4205
      %v4207 = vrot.slane %v3939, 6
      %v4208 = vsel %vm4095, %v4205, %v4207
      %v4209 = vrot.slane %v3940, 6
      %v4210 = vsel %vm4095, %v4207, %v4209
      %v4211 = vrot.slane %v3941, 6
      %v4212 = vsel %vm4095, %v4209, %v4211
      %v4213 = vrot.slane %v3942, 6
      %v4214 = vsel %vm4095, %v4211, %v4213
      %v4215 = vrot.slane %v3943, 6
      %v4216 = vsel %vm4095, %v4213, %v4215
      %v4217 = vrot.slane %v3944, 6
      %v4218 = vsel %vm4095, %v4215, %v4217
      %v4219 = vrot.slane %v3945, 6
      %v4220 = vsel %vm4095, %v4217, %v4219
      %v4221 = vrot.slane %v3946, 6
      %v4222 = vsel %vm4095, %v4219, %v4221
      %v4223 = vrot.slane %v3947, 6
      %v4224 = vsel %vm4095, %v4221, %v4223
      %v4225 = vrot.slane %v3948, 6
      %v4226 = vsel %vm4095, %v4223, %v4225
      %v4227 = vrot.slane %v3949, 6
      %v4228 = vsel %vm4095, %v4225, %v4227
      %v4229 = vrot.slane %v3950, 6
      %v4230 = vsel %vm4095, %v4227, %v4229
      %v4231 = vrot.slane %v3951, 6
      %v4232 = vsel %vm4095, %v4229, %v4231
      %v4233 = vrot.slane %v3952, 6
      %v4234 = vsel %vm4095, %v4231, %v4233
      %v4235 = vrot.slane %v3953, 6
      %v4236 = vsel %vm4095, %v4233, %v4235
      %v4237 = vrot.slane %v3954, 6
      %v4238 = vsel %vm4095, %v4235, %v4237
      %v4239 = vrot.slane %v3955, 6
      %v4240 = vsel %vm4095, %v4237, %v4239
      %v4241 = vrot.slane %v3956, 6
      %v4242 = vsel %vm4095, %v4239, %v4241
      %v4243 = vrot.slane %v3957, 6
      %v4244 = vsel %vm4095, %v4241, %v4243
      %v4245 = vrot.slane %v3958, 6
      %v4246 = vsel %vm4095, %v4243, %v4245
      %v4247 = vrot.slane %v3959, 6
      %v4248 = vsel %vm4095, %v4245, %v4247
      %v4249 = vrot.slane %v3960, 6
      %v4250 = vsel %vm4095, %v4247, %v4249
      %v4251 = vrot.slane %v3961, 6
      %v4252 = vsel %vm4095, %v4249, %v4251
      %v4253 = vrot.slane %v3962, 6
      %v4254 = vsel %vm4095, %v4251, %v4253
      %v4255 = vrot.slane %v3963, 6
      %v4256 = vsel %vm4095, %v4253, %v4255
      %v4257 = vrot.slane %v3964, 6
      %v4258 = vsel %vm4095, %v4255, %v4257
      %v4259 = vrot.slane %v3965, 6
      %v4260 = vsel %vm4095, %v4257, %v4259
      %v4261 = vrot.slane %v3966, 6
      %v4262 = vsel %vm4095, %v4259, %v4261
      %v4263 = vrot.slane %v3967, 6
      %v4264 = vsel %vm4095, %v4261, %v4263
      %v4265 = vrot.slane %v3968, 6
      %v4266 = vsel %vm4095, %v4263, %v4265
      %v4267 = vrot.slane %v3969, 6
      %v4268 = vsel %vm4095, %v4265, %v4267
      %v4269 = vrot.slane %v3970, 6
      %v4270 = vsel %vm4095, %v4267, %v4269
      %v4271 = vrot.slane %v3971, 6
      %v4272 = vsel %vm4095, %v4269, %v4271
      %v4273 = vrot.slane %v3972, 6
      %v4274 = vsel %vm4095, %v4271, %v4273
      %v4275 = vrot.slane %v3973, 6
      %v4276 = vsel %vm4095, %v4273, %v4275
      %v4277 = vrot.slane %v3974, 6
      %v4278 = vsel %vm4095, %v4275, %v4277
      %v4279 = vrot.slane %v3975, 6
      %v4280 = vsel %vm4095, %v4277, %v4279
      %v4281 = vrot.slane %v3976, 6
      %v4282 = vsel %vm4095, %v4279, %v4281
      %v4283 = vrot.slane %v3977, 6
      %v4284 = vsel %vm4095, %v4281, %v4283
      %v4285 = vrot.slane %v3978, 6
      %v4286 = vsel %vm4095, %v4283, %v4285
      %v4287 = vrot.slane %v3979, 6
      %v4288 = vsel %vm4095, %v4285, %v4287
      %v4289 = vrot.slane %v3980, 6
      %v4290 = vsel %vm4095, %v4287, %v4289
      %v4291 = vrot.slane %v3981, 6
      %v4292 = vsel %vm4095, %v4289, %v4291
      %v4293 = vrot.slane %v3982, 6
      %v4294 = vsel %vm4095, %v4291, %v4293
      %v4295 = vrot.slane %v3983, 6
      %v4296 = vsel %vm4095, %v4293, %v4295
      %v4297 = vrot.slane %v3984, 6
      %v4298 = vsel %vm4095, %v4295, %v4297
      %v4299 = vrot.slane %v3985, 6
      %v4300 = vsel %vm4095, %v4297, %v4299
      %v4301 = vrot.slane %v3986, 6
      %v4302 = vsel %vm4095, %v4299, %v4301
      %v4303 = vrot.slane %v3987, 6
      %v4304 = vsel %vm4095, %v4301, %v4303
      %v4305 = vrot.slane %v3988, 6
      %v4306 = vsel %vm4095, %v4303, %v4305
      %v4412 = vadd.f32 %v3035, %v4098
      %v4413 = vadd.f32 %v3036, %v4100
      %v4414 = vadd.f32 %v3037, %v4102
      %v4415 = vadd.f32 %v3038, %v4104
      %v4416 = vadd.f32 %v3039, %v4106
      %v4417 = vadd.f32 %v3040, %v4108
      %v4418 = vadd.f32 %v3041, %v4110
      %v4419 = vadd.f32 %v3042, %v4112
      %v4420 = vadd.f32 %v3043, %v4114
      %v4421 = vadd.f32 %v3044, %v4116
      %v4422 = vadd.f32 %v3045, %v4118
      %v4423 = vadd.f32 %v3046, %v4120
      %v4424 = vadd.f32 %v3047, %v4122
      %v4425 = vadd.f32 %v3048, %v4124
      %v4426 = vadd.f32 %v3049, %v4126
      %v4427 = vadd.f32 %v3050, %v4128
      %v4428 = vadd.f32 %v3051, %v4130
      %v4429 = vadd.f32 %v3052, %v4132
      %v4430 = vadd.f32 %v3053, %v4134
      %v4431 = vadd.f32 %v3054, %v4136
      %v4432 = vadd.f32 %v3055, %v4138
      %v4433 = vadd.f32 %v3056, %v4140
      %v4434 = vadd.f32 %v3057, %v4142
      %v4435 = vadd.f32 %v3058, %v4144
      %v4436 = vadd.f32 %v3059, %v4146
      %v4437 = vadd.f32 %v3060, %v4148
      %v4438 = vadd.f32 %v3061, %v4150
      %v4439 = vadd.f32 %v3062, %v4152
      %v4440 = vadd.f32 %v3063, %v4154
      %v4441 = vadd.f32 %v3064, %v4156
      %v4442 = vadd.f32 %v3065, %v4158
      %v4443 = vadd.f32 %v3066, %v4160
      %v4444 = vadd.f32 %v3067, %v4162
      %v4445 = vadd.f32 %v3068, %v4164
      %v4446 = vadd.f32 %v3069, %v4166
      %v4447 = vadd.f32 %v3070, %v4168
      %v4448 = vadd.f32 %v3071, %v4170
      %v4449 = vadd.f32 %v3072, %v4172
      %v4450 = vadd.f32 %v3073, %v4174
      %v4451 = vadd.f32 %v3074, %v4176
      %v4452 = vadd.f32 %v3075, %v4178
      %v4453 = vadd.f32 %v3076, %v4180
      %v4454 = vadd.f32 %v3077, %v4182
      %v4455 = vadd.f32 %v3078, %v4184
      %v4456 = vadd.f32 %v3079, %v4186
      %v4457 = vadd.f32 %v3080, %v4188
      %v4458 = vadd.f32 %v3081, %v4190
      %v4459 = vadd.f32 %v3082, %v4192
      %v4460 = vadd.f32 %v3083, %v4194
      %v4461 = vadd.f32 %v3084, %v4196
      %v4462 = vadd.f32 %v3085, %v4198
      %v4463 = vadd.f32 %v3086, %v4200
      %v4464 = vadd.f32 %v3087, %v4202
      %v4465 = vadd.f32 %v3088, %v4204
      %v4466 = vadd.f32 %v3089, %v4206
      %v4467 = vadd.f32 %v3090, %v4208
      %v4468 = vadd.f32 %v3091, %v4210
      %v4469 = vadd.f32 %v3092, %v4212
      %v4470 = vadd.f32 %v3093, %v4214
      %v4471 = vadd.f32 %v3094, %v4216
      %v4472 = vadd.f32 %v3095, %v4218
      %v4473 = vadd.f32 %v3096, %v4220
      %v4474 = vadd.f32 %v3097, %v4222
      %v4475 = vadd.f32 %v3098, %v4224
      %v4476 = vadd.f32 %v3099, %v4226
      %v4477 = vadd.f32 %v3100, %v4228
      %v4478 = vadd.f32 %v3101, %v4230
      %v4479 = vadd.f32 %v3102, %v4232
      %v4480 = vadd.f32 %v3103, %v4234
      %v4481 = vadd.f32 %v3104, %v4236
      %v4482 = vadd.f32 %v3105, %v4238
      %v4483 = vadd.f32 %v3106, %v4240
      %v4484 = vadd.f32 %v3107, %v4242
      %v4485 = vadd.f32 %v3108, %v4244
      %v4486 = vadd.f32 %v3109, %v4246
      %v4487 = vadd.f32 %v3110, %v4248
      %v4488 = vadd.f32 %v3111, %v4250
      %v4489 = vadd.f32 %v3112, %v4252
      %v4490 = vadd.f32 %v3113, %v4254
      %v4491 = vadd.f32 %v3114, %v4256
      %v4492 = vadd.f32 %v3115, %v4258
      %v4493 = vadd.f32 %v3116, %v4260
      %v4494 = vadd.f32 %v3117, %v4262
      %v4495 = vadd.f32 %v3118, %v4264
      %v4496 = vadd.f32 %v3119, %v4266
      %v4497 = vadd.f32 %v3120, %v4268
      %v4498 = vadd.f32 %v3121, %v4270
      %v4499 = vadd.f32 %v3122, %v4272
      %v4500 = vadd.f32 %v3123, %v4274
      %v4501 = vadd.f32 %v3124, %v4276
      %v4502 = vadd.f32 %v3125, %v4278
      %v4503 = vadd.f32 %v3126, %v4280
      %v4504 = vadd.f32 %v3127, %v4282
      %v4505 = vadd.f32 %v3128, %v4284
      %v4506 = vadd.f32 %v3129, %v4286
      %v4507 = vadd.f32 %v3130, %v4288
      %v4508 = vadd.f32 %v3131, %v4290
      %v4509 = vadd.f32 %v3132, %v4292
      %v4510 = vadd.f32 %v3133, %v4294
      %v4511 = vadd.f32 %v3134, %v4296
      %v4512 = vadd.f32 %v3135, %v4298
      %v4513 = vadd.f32 %v3136, %v4300
      %v4514 = vadd.f32 %v3137, %v4302
      %v4515 = vadd.f32 %v3138, %v4304
      %v4516 = vadd.f32 %v3139, %v4306
      %v4517 = vld [vmem:[%s165 + $0x1b0] sm:$0xf]
      %v4518 = vld [vmem:[%s1] sm:$0x4]
      %v4519 = vunpack.c.l.bf16 %v4517
      %v4520 = vunpack.c.l.bf16 %v4518
      %4522 = vset.pattern.permute.xlu0 0
      %4523 = vperm.xlu0 %4522, %v4519
      %v4524 = vpop.permute.xlu0 %4523
      %v4526 = vperm.slane %v4520, 4
      %v4527 = vmul.f32 %v3355, %v4526
      %v4528 = vmul.f32 %v3360, %v4526
      %v4529 = vmul.f32 %v3365, %v4526
      %v4530 = vmul.f32 %v3370, %v4526
      %v4531 = vmul.f32 %v3375, %v4526
      %v4532 = vmul.f32 %v3380, %v4526
      %v4533 = vmul.f32 %v3385, %v4526
      %v4534 = vmul.f32 %v3390, %v4526
      %v4535 = vmul.f32 %v3395, %v4526
      %v4536 = vmul.f32 %v3400, %v4526
      %v4537 = vmul.f32 %v3405, %v4526
      %v4538 = vmul.f32 %v3410, %v4526
      %v4539 = vmul.f32 %v3415, %v4526
      %v4540 = vmul.f32 %v3420, %v4526
      %v4541 = vmul.f32 %v3425, %v4526
      %v4542 = vmul.f32 %v3430, %v4526
      %v4543 = vmul.f32 %v3435, %v4526
      %v4544 = vmul.f32 %v3440, %v4526
      %v4545 = vmul.f32 %v3445, %v4526
      %v4546 = vmul.f32 %v3450, %v4526
      %v4547 = vmul.f32 %v3455, %v4526
      %v4548 = vmul.f32 %v3460, %v4526
      %v4549 = vmul.f32 %v3465, %v4526
      %v4550 = vmul.f32 %v3470, %v4526
      %v4551 = vmul.f32 %v3475, %v4526
      %v4552 = vmul.f32 %v3480, %v4526
      %v4553 = vmul.f32 %v3485, %v4526
      %v4554 = vmul.f32 %v3490, %v4526
      %v4555 = vmul.f32 %v3495, %v4526
      %v4556 = vmul.f32 %v3500, %v4526
      %v4557 = vmul.f32 %v3505, %v4526
      %v4558 = vmul.f32 %v3510, %v4526
      %v4559 = vmul.f32 %v3515, %v4526
      %v4560 = vmul.f32 %v3520, %v4526
      %v4561 = vmul.f32 %v3525, %v4526
      %v4562 = vmul.f32 %v3530, %v4526
      %v4563 = vmul.f32 %v3535, %v4526
      %v4564 = vmul.f32 %v3540, %v4526
      %v4565 = vmul.f32 %v3545, %v4526
      %v4566 = vmul.f32 %v3550, %v4526
      %v4567 = vmul.f32 %v3555, %v4526
      %v4568 = vmul.f32 %v3560, %v4526
      %v4569 = vmul.f32 %v3565, %v4526
      %v4570 = vmul.f32 %v3570, %v4526
      %v4571 = vmul.f32 %v3575, %v4526
      %v4572 = vmul.f32 %v3580, %v4526
      %v4573 = vmul.f32 %v3585, %v4526
      %v4574 = vmul.f32 %v3590, %v4526
      %v4575 = vmul.f32 %v3595, %v4526
      %v4576 = vmul.f32 %v3600, %v4526
      %v4577 = vmul.f32 %v3605, %v4526
      %v4578 = vmul.f32 %v3610, %v4526
      %v4579 = vmul.f32 %v3615, %v4526
      %v4580 = vmul.f32 %v3620, %v4526
      %v4581 = vmul.f32 %v3625, %v4526
      %v4582 = vmul.f32 %v3630, %v4526
      %v4583 = vmul.f32 %v3635, %v4526
      %v4584 = vmul.f32 %v3640, %v4526
      %v4585 = vmul.f32 %v3645, %v4526
      %v4586 = vmul.f32 %v3650, %v4526
      %v4587 = vmul.f32 %v3655, %v4526
      %v4588 = vmul.f32 %v3660, %v4526
      %v4589 = vmul.f32 %v3665, %v4526
      %v4590 = vmul.f32 %v3670, %v4526
      %v4591 = vmul.f32 %v3675, %v4526
      %v4592 = vmul.f32 %v3680, %v4526
      %v4593 = vmul.f32 %v3685, %v4526
      %v4594 = vmul.f32 %v3690, %v4526
      %v4595 = vmul.f32 %v3695, %v4526
      %v4596 = vmul.f32 %v3700, %v4526
      %v4597 = vmul.f32 %v3705, %v4526
      %v4598 = vmul.f32 %v3710, %v4526
      %v4599 = vmul.f32 %v3715, %v4526
      %v4600 = vmul.f32 %v3720, %v4526
      %v4601 = vmul.f32 %v3725, %v4526
      %v4602 = vmul.f32 %v3730, %v4526
      %v4603 = vmul.f32 %v3735, %v4526
      %v4604 = vmul.f32 %v3740, %v4526
      %v4605 = vmul.f32 %v3745, %v4526
      %v4606 = vmul.f32 %v3750, %v4526
      %v4607 = vmul.f32 %v3755, %v4526
      %v4608 = vmul.f32 %v3760, %v4526
      %v4609 = vmul.f32 %v3765, %v4526
      %v4610 = vmul.f32 %v3770, %v4526
      %v4611 = vmul.f32 %v3775, %v4526
      %v4612 = vmul.f32 %v3780, %v4526
      %v4613 = vmul.f32 %v3785, %v4526
      %v4614 = vmul.f32 %v3790, %v4526
      %v4615 = vmul.f32 %v3795, %v4526
      %v4616 = vmul.f32 %v3800, %v4526
      %v4617 = vmul.f32 %v3805, %v4526
      %v4618 = vmul.f32 %v3810, %v4526
      %v4619 = vmul.f32 %v3815, %v4526
      %v4620 = vmul.f32 %v3820, %v4526
      %v4621 = vmul.f32 %v3825, %v4526
      %v4622 = vmul.f32 %v3830, %v4526
      %v4623 = vmul.f32 %v3835, %v4526
      %v4624 = vmul.f32 %v3840, %v4526
      %v4625 = vmul.f32 %v3845, %v4526
      %v4626 = vmul.f32 %v3850, %v4526
      %v4627 = vmul.f32 %v3855, %v4526
      %v4628 = vmul.f32 %v3860, %v4526
      %v4629 = vmul.f32 %v3865, %v4526
      %v4630 = vmul.f32 %v3870, %v4526
      %v4631 = vmul.f32 %v3875, %v4526
      %v4632 = vmul.f32 %v4524, %v4526
      %vm4739 = vcmask 1040384
      %v4740 = vrot.slane %v4527, 7
      %v4741 = vrot.slane %v4528, 7
      %v4742 = vsel %vm4739, %v4740, %v4741
      %v4743 = vrot.slane %v4529, 7
      %v4744 = vsel %vm4739, %v4741, %v4743
      %v4745 = vrot.slane %v4530, 7
      %v4746 = vsel %vm4739, %v4743, %v4745
      %v4747 = vrot.slane %v4531, 7
      %v4748 = vsel %vm4739, %v4745, %v4747
      %v4749 = vrot.slane %v4532, 7
      %v4750 = vsel %vm4739, %v4747, %v4749
      %v4751 = vrot.slane %v4533, 7
      %v4752 = vsel %vm4739, %v4749, %v4751
      %v4753 = vrot.slane %v4534, 7
      %v4754 = vsel %vm4739, %v4751, %v4753
      %v4755 = vrot.slane %v4535, 7
      %v4756 = vsel %vm4739, %v4753, %v4755
      %v4757 = vrot.slane %v4536, 7
      %v4758 = vsel %vm4739, %v4755, %v4757
      %v4759 = vrot.slane %v4537, 7
      %v4760 = vsel %vm4739, %v4757, %v4759
      %v4761 = vrot.slane %v4538, 7
      %v4762 = vsel %vm4739, %v4759, %v4761
      %v4763 = vrot.slane %v4539, 7
      %v4764 = vsel %vm4739, %v4761, %v4763
      %v4765 = vrot.slane %v4540, 7
      %v4766 = vsel %vm4739, %v4763, %v4765
      %v4767 = vrot.slane %v4541, 7
      %v4768 = vsel %vm4739, %v4765, %v4767
      %v4769 = vrot.slane %v4542, 7
      %v4770 = vsel %vm4739, %v4767, %v4769
      %v4771 = vrot.slane %v4543, 7
      %v4772 = vsel %vm4739, %v4769, %v4771
      %v4773 = vrot.slane %v4544, 7
      %v4774 = vsel %vm4739, %v4771, %v4773
      %v4775 = vrot.slane %v4545, 7
      %v4776 = vsel %vm4739, %v4773, %v4775
      %v4777 = vrot.slane %v4546, 7
      %v4778 = vsel %vm4739, %v4775, %v4777
      %v4779 = vrot.slane %v4547, 7
      %v4780 = vsel %vm4739, %v4777, %v4779
      %v4781 = vrot.slane %v4548, 7
      %v4782 = vsel %vm4739, %v4779, %v4781
      %v4783 = vrot.slane %v4549, 7
      %v4784 = vsel %vm4739, %v4781, %v4783
      %v4785 = vrot.slane %v4550, 7
      %v4786 = vsel %vm4739, %v4783, %v4785
      %v4787 = vrot.slane %v4551, 7
      %v4788 = vsel %vm4739, %v4785, %v4787
      %v4789 = vrot.slane %v4552, 7
      %v4790 = vsel %vm4739, %v4787, %v4789
      %v4791 = vrot.slane %v4553, 7
      %v4792 = vsel %vm4739, %v4789, %v4791
      %v4793 = vrot.slane %v4554, 7
      %v4794 = vsel %vm4739, %v4791, %v4793
      %v4795 = vrot.slane %v4555, 7
      %v4796 = vsel %vm4739, %v4793, %v4795
      %v4797 = vrot.slane %v4556, 7
      %v4798 = vsel %vm4739, %v4795, %v4797
      %v4799 = vrot.slane %v4557, 7
      %v4800 = vsel %vm4739, %v4797, %v4799
      %v4801 = vrot.slane %v4558, 7
      %v4802 = vsel %vm4739, %v4799, %v4801
      %v4803 = vrot.slane %v4559, 7
      %v4804 = vsel %vm4739, %v4801, %v4803
      %v4805 = vrot.slane %v4560, 7
      %v4806 = vsel %vm4739, %v4803, %v4805
      %v4807 = vrot.slane %v4561, 7
      %v4808 = vsel %vm4739, %v4805, %v4807
      %v4809 = vrot.slane %v4562, 7
      %v4810 = vsel %vm4739, %v4807, %v4809
      %v4811 = vrot.slane %v4563, 7
      %v4812 = vsel %vm4739, %v4809, %v4811
      %v4813 = vrot.slane %v4564, 7
      %v4814 = vsel %vm4739, %v4811, %v4813
      %v4815 = vrot.slane %v4565, 7
      %v4816 = vsel %vm4739, %v4813, %v4815
      %v4817 = vrot.slane %v4566, 7
      %v4818 = vsel %vm4739, %v4815, %v4817
      %v4819 = vrot.slane %v4567, 7
      %v4820 = vsel %vm4739, %v4817, %v4819
      %v4821 = vrot.slane %v4568, 7
      %v4822 = vsel %vm4739, %v4819, %v4821
      %v4823 = vrot.slane %v4569, 7
      %v4824 = vsel %vm4739, %v4821, %v4823
      %v4825 = vrot.slane %v4570, 7
      %v4826 = vsel %vm4739, %v4823, %v4825
      %v4827 = vrot.slane %v4571, 7
      %v4828 = vsel %vm4739, %v4825, %v4827
      %v4829 = vrot.slane %v4572, 7
      %v4830 = vsel %vm4739, %v4827, %v4829
      %v4831 = vrot.slane %v4573, 7
      %v4832 = vsel %vm4739, %v4829, %v4831
      %v4833 = vrot.slane %v4574, 7
      %v4834 = vsel %vm4739, %v4831, %v4833
      %v4835 = vrot.slane %v4575, 7
      %v4836 = vsel %vm4739, %v4833, %v4835
      %v4837 = vrot.slane %v4576, 7
      %v4838 = vsel %vm4739, %v4835, %v4837
      %v4839 = vrot.slane %v4577, 7
      %v4840 = vsel %vm4739, %v4837, %v4839
      %v4841 = vrot.slane %v4578, 7
      %v4842 = vsel %vm4739, %v4839, %v4841
      %v4843 = vrot.slane %v4579, 7
      %v4844 = vsel %vm4739, %v4841, %v4843
      %v4845 = vrot.slane %v4580, 7
      %v4846 = vsel %vm4739, %v4843, %v4845
      %v4847 = vrot.slane %v4581, 7
      %v4848 = vsel %vm4739, %v4845, %v4847
      %v4849 = vrot.slane %v4582, 7
      %v4850 = vsel %vm4739, %v4847, %v4849
      %v4851 = vrot.slane %v4583, 7
      %v4852 = vsel %vm4739, %v4849, %v4851
      %v4853 = vrot.slane %v4584, 7
      %v4854 = vsel %vm4739, %v4851, %v4853
      %v4855 = vrot.slane %v4585, 7
      %v4856 = vsel %vm4739, %v4853, %v4855
      %v4857 = vrot.slane %v4586, 7
      %v4858 = vsel %vm4739, %v4855, %v4857
      %v4859 = vrot.slane %v4587, 7
      %v4860 = vsel %vm4739, %v4857, %v4859
      %v4861 = vrot.slane %v4588, 7
      %v4862 = vsel %vm4739, %v4859, %v4861
      %v4863 = vrot.slane %v4589, 7
      %v4864 = vsel %vm4739, %v4861, %v4863
      %v4865 = vrot.slane %v4590, 7
      %v4866 = vsel %vm4739, %v4863, %v4865
      %v4867 = vrot.slane %v4591, 7
      %v4868 = vsel %vm4739, %v4865, %v4867
      %v4869 = vrot.slane %v4592, 7
      %v4870 = vsel %vm4739, %v4867, %v4869
      %v4871 = vrot.slane %v4593, 7
      %v4872 = vsel %vm4739, %v4869, %v4871
      %v4873 = vrot.slane %v4594, 7
      %v4874 = vsel %vm4739, %v4871, %v4873
      %v4875 = vrot.slane %v4595, 7
      %v4876 = vsel %vm4739, %v4873, %v4875
      %v4877 = vrot.slane %v4596, 7
      %v4878 = vsel %vm4739, %v4875, %v4877
      %v4879 = vrot.slane %v4597, 7
      %v4880 = vsel %vm4739, %v4877, %v4879
      %v4881 = vrot.slane %v4598, 7
      %v4882 = vsel %vm4739, %v4879, %v4881
      %v4883 = vrot.slane %v4599, 7
      %v4884 = vsel %vm4739, %v4881, %v4883
      %v4885 = vrot.slane %v4600, 7
      %v4886 = vsel %vm4739, %v4883, %v4885
      %v4887 = vrot.slane %v4601, 7
      %v4888 = vsel %vm4739, %v4885, %v4887
      %v4889 = vrot.slane %v4602, 7
      %v4890 = vsel %vm4739, %v4887, %v4889
      %v4891 = vrot.slane %v4603, 7
      %v4892 = vsel %vm4739, %v4889, %v4891
      %v4893 = vrot.slane %v4604, 7
      %v4894 = vsel %vm4739, %v4891, %v4893
      %v4895 = vrot.slane %v4605, 7
      %v4896 = vsel %vm4739, %v4893, %v4895
      %v4897 = vrot.slane %v4606, 7
      %v4898 = vsel %vm4739, %v4895, %v4897
      %v4899 = vrot.slane %v4607, 7
      %v4900 = vsel %vm4739, %v4897, %v4899
      %v4901 = vrot.slane %v4608, 7
      %v4902 = vsel %vm4739, %v4899, %v4901
      %v4903 = vrot.slane %v4609, 7
      %v4904 = vsel %vm4739, %v4901, %v4903
      %v4905 = vrot.slane %v4610, 7
      %v4906 = vsel %vm4739, %v4903, %v4905
      %v4907 = vrot.slane %v4611, 7
      %v4908 = vsel %vm4739, %v4905, %v4907
      %v4909 = vrot.slane %v4612, 7
      %v4910 = vsel %vm4739, %v4907, %v4909
      %v4911 = vrot.slane %v4613, 7
      %v4912 = vsel %vm4739, %v4909, %v4911
      %v4913 = vrot.slane %v4614, 7
      %v4914 = vsel %vm4739, %v4911, %v4913
      %v4915 = vrot.slane %v4615, 7
      %v4916 = vsel %vm4739, %v4913, %v4915
      %v4917 = vrot.slane %v4616, 7
      %v4918 = vsel %vm4739, %v4915, %v4917
      %v4919 = vrot.slane %v4617, 7
      %v4920 = vsel %vm4739, %v4917, %v4919
      %v4921 = vrot.slane %v4618, 7
      %v4922 = vsel %vm4739, %v4919, %v4921
      %v4923 = vrot.slane %v4619, 7
      %v4924 = vsel %vm4739, %v4921, %v4923
      %v4925 = vrot.slane %v4620, 7
      %v4926 = vsel %vm4739, %v4923, %v4925
      %v4927 = vrot.slane %v4621, 7
      %v4928 = vsel %vm4739, %v4925, %v4927
      %v4929 = vrot.slane %v4622, 7
      %v4930 = vsel %vm4739, %v4927, %v4929
      %v4931 = vrot.slane %v4623, 7
      %v4932 = vsel %vm4739, %v4929, %v4931
      %v4933 = vrot.slane %v4624, 7
      %v4934 = vsel %vm4739, %v4931, %v4933
      %v4935 = vrot.slane %v4625, 7
      %v4936 = vsel %vm4739, %v4933, %v4935
      %v4937 = vrot.slane %v4626, 7
      %v4938 = vsel %vm4739, %v4935, %v4937
      %v4939 = vrot.slane %v4627, 7
      %v4940 = vsel %vm4739, %v4937, %v4939
      %v4941 = vrot.slane %v4628, 7
      %v4942 = vsel %vm4739, %v4939, %v4941
      %v4943 = vrot.slane %v4629, 7
      %v4944 = vsel %vm4739, %v4941, %v4943
      %v4945 = vrot.slane %v4630, 7
      %v4946 = vsel %vm4739, %v4943, %v4945
      %v4947 = vrot.slane %v4631, 7
      %v4948 = vsel %vm4739, %v4945, %v4947
      %v4949 = vrot.slane %v4632, 7
      %v4950 = vsel %vm4739, %v4947, %v4949
      %v5056 = vadd.f32 %v4412, %v4742
      %v5057 = vadd.f32 %v4413, %v4744
      %v5058 = vadd.f32 %v4414, %v4746
      %v5059 = vadd.f32 %v4415, %v4748
      %v5060 = vadd.f32 %v4416, %v4750
      %v5061 = vadd.f32 %v4417, %v4752
      %v5062 = vadd.f32 %v4418, %v4754
      %v5063 = vadd.f32 %v4419, %v4756
      %v5064 = vadd.f32 %v4420, %v4758
      %v5065 = vadd.f32 %v4421, %v4760
      %v5066 = vadd.f32 %v4422, %v4762
      %v5067 = vadd.f32 %v4423, %v4764
      %v5068 = vadd.f32 %v4424, %v4766
      %v5069 = vadd.f32 %v4425, %v4768
      %v5070 = vadd.f32 %v4426, %v4770
      %v5071 = vadd.f32 %v4427, %v4772
      %v5072 = vadd.f32 %v4428, %v4774
      %v5073 = vadd.f32 %v4429, %v4776
      %v5074 = vadd.f32 %v4430, %v4778
      %v5075 = vadd.f32 %v4431, %v4780
      %v5076 = vadd.f32 %v4432, %v4782
      %v5077 = vadd.f32 %v4433, %v4784
      %v5078 = vadd.f32 %v4434, %v4786
      %v5079 = vadd.f32 %v4435, %v4788
      %v5080 = vadd.f32 %v4436, %v4790
      %v5081 = vadd.f32 %v4437, %v4792
      %v5082 = vadd.f32 %v4438, %v4794
      %v5083 = vadd.f32 %v4439, %v4796
      %v5084 = vadd.f32 %v4440, %v4798
      %v5085 = vadd.f32 %v4441, %v4800
      %v5086 = vadd.f32 %v4442, %v4802
      %v5087 = vadd.f32 %v4443, %v4804
      %v5088 = vadd.f32 %v4444, %v4806
      %v5089 = vadd.f32 %v4445, %v4808
      %v5090 = vadd.f32 %v4446, %v4810
      %v5091 = vadd.f32 %v4447, %v4812
      %v5092 = vadd.f32 %v4448, %v4814
      %v5093 = vadd.f32 %v4449, %v4816
      %v5094 = vadd.f32 %v4450, %v4818
      %v5095 = vadd.f32 %v4451, %v4820
      %v5096 = vadd.f32 %v4452, %v4822
      %v5097 = vadd.f32 %v4453, %v4824
      %v5098 = vadd.f32 %v4454, %v4826
      %v5099 = vadd.f32 %v4455, %v4828
      %v5100 = vadd.f32 %v4456, %v4830
      %v5101 = vadd.f32 %v4457, %v4832
      %v5102 = vadd.f32 %v4458, %v4834
      %v5103 = vadd.f32 %v4459, %v4836
      %v5104 = vadd.f32 %v4460, %v4838
      %v5105 = vadd.f32 %v4461, %v4840
      %v5106 = vadd.f32 %v4462, %v4842
      %v5107 = vadd.f32 %v4463, %v4844
      %v5108 = vadd.f32 %v4464, %v4846
      %v5109 = vadd.f32 %v4465, %v4848
      %v5110 = vadd.f32 %v4466, %v4850
      %v5111 = vadd.f32 %v4467, %v4852
      %v5112 = vadd.f32 %v4468, %v4854
      %v5113 = vadd.f32 %v4469, %v4856
      %v5114 = vadd.f32 %v4470, %v4858
      %v5115 = vadd.f32 %v4471, %v4860
      %v5116 = vadd.f32 %v4472, %v4862
      %v5117 = vadd.f32 %v4473, %v4864
      %v5118 = vadd.f32 %v4474, %v4866
      %v5119 = vadd.f32 %v4475, %v4868
      %v5120 = vadd.f32 %v4476, %v4870
      %v5121 = vadd.f32 %v4477, %v4872
      %v5122 = vadd.f32 %v4478, %v4874
      %v5123 = vadd.f32 %v4479, %v4876
      %v5124 = vadd.f32 %v4480, %v4878
      %v5125 = vadd.f32 %v4481, %v4880
      %v5126 = vadd.f32 %v4482, %v4882
      %v5127 = vadd.f32 %v4483, %v4884
      %v5128 = vadd.f32 %v4484, %v4886
      %v5129 = vadd.f32 %v4485, %v4888
      %v5130 = vadd.f32 %v4486, %v4890
      %v5131 = vadd.f32 %v4487, %v4892
      %v5132 = vadd.f32 %v4488, %v4894
      %v5133 = vadd.f32 %v4489, %v4896
      %v5134 = vadd.f32 %v4490, %v4898
      %v5135 = vadd.f32 %v4491, %v4900
      %v5136 = vadd.f32 %v4492, %v4902
      %v5137 = vadd.f32 %v4493, %v4904
      %v5138 = vadd.f32 %v4494, %v4906
      %v5139 = vadd.f32 %v4495, %v4908
      %v5140 = vadd.f32 %v4496, %v4910
      %v5141 = vadd.f32 %v4497, %v4912
      %v5142 = vadd.f32 %v4498, %v4914
      %v5143 = vadd.f32 %v4499, %v4916
      %v5144 = vadd.f32 %v4500, %v4918
      %v5145 = vadd.f32 %v4501, %v4920
      %v5146 = vadd.f32 %v4502, %v4922
      %v5147 = vadd.f32 %v4503, %v4924
      %v5148 = vadd.f32 %v4504, %v4926
      %v5149 = vadd.f32 %v4505, %v4928
      %v5150 = vadd.f32 %v4506, %v4930
      %v5151 = vadd.f32 %v4507, %v4932
      %v5152 = vadd.f32 %v4508, %v4934
      %v5153 = vadd.f32 %v4509, %v4936
      %v5154 = vadd.f32 %v4510, %v4938
      %v5155 = vadd.f32 %v4511, %v4940
      %v5156 = vadd.f32 %v4512, %v4942
      %v5157 = vadd.f32 %v4513, %v4944
      %v5158 = vadd.f32 %v4514, %v4946
      %v5159 = vadd.f32 %v4515, %v4948
      %v5160 = vadd.f32 %v4516, %v4950
      %v5161 = vperm.slane %v4520, 5
      %v5162 = vmul.f32 %v3360, %v5161
      %v5163 = vmul.f32 %v3365, %v5161
      %v5164 = vmul.f32 %v3370, %v5161
      %v5165 = vmul.f32 %v3375, %v5161
      %v5166 = vmul.f32 %v3380, %v5161
      %v5167 = vmul.f32 %v3385, %v5161
      %v5168 = vmul.f32 %v3390, %v5161
      %v5169 = vmul.f32 %v3395, %v5161
      %v5170 = vmul.f32 %v3400, %v5161
      %v5171 = vmul.f32 %v3405, %v5161
      %v5172 = vmul.f32 %v3410, %v5161
      %v5173 = vmul.f32 %v3415, %v5161
      %v5174 = vmul.f32 %v3420, %v5161
      %v5175 = vmul.f32 %v3425, %v5161
      %v5176 = vmul.f32 %v3430, %v5161
      %v5177 = vmul.f32 %v3435, %v5161
      %v5178 = vmul.f32 %v3440, %v5161
      %v5179 = vmul.f32 %v3445, %v5161
      %v5180 = vmul.f32 %v3450, %v5161
      %v5181 = vmul.f32 %v3455, %v5161
      %v5182 = vmul.f32 %v3460, %v5161
      %v5183 = vmul.f32 %v3465, %v5161
      %v5184 = vmul.f32 %v3470, %v5161
      %v5185 = vmul.f32 %v3475, %v5161
      %v5186 = vmul.f32 %v3480, %v5161
      %v5187 = vmul.f32 %v3485, %v5161
      %v5188 = vmul.f32 %v3490, %v5161
      %v5189 = vmul.f32 %v3495, %v5161
      %v5190 = vmul.f32 %v3500, %v5161
      %v5191 = vmul.f32 %v3505, %v5161
      %v5192 = vmul.f32 %v3510, %v5161
      %v5193 = vmul.f32 %v3515, %v5161
      %v5194 = vmul.f32 %v3520, %v5161
      %v5195 = vmul.f32 %v3525, %v5161
      %v5196 = vmul.f32 %v3530, %v5161
      %v5197 = vmul.f32 %v3535, %v5161
      %v5198 = vmul.f32 %v3540, %v5161
      %v5199 = vmul.f32 %v3545, %v5161
      %v5200 = vmul.f32 %v3550, %v5161
      %v5201 = vmul.f32 %v3555, %v5161
      %v5202 = vmul.f32 %v3560, %v5161
      %v5203 = vmul.f32 %v3565, %v5161
      %v5204 = vmul.f32 %v3570, %v5161
      %v5205 = vmul.f32 %v3575, %v5161
      %v5206 = vmul.f32 %v3580, %v5161
      %v5207 = vmul.f32 %v3585, %v5161
      %v5208 = vmul.f32 %v3590, %v5161
      %v5209 = vmul.f32 %v3595, %v5161
      %v5210 = vmul.f32 %v3600, %v5161
      %v5211 = vmul.f32 %v3605, %v5161
      %v5212 = vmul.f32 %v3610, %v5161
      %v5213 = vmul.f32 %v3615, %v5161
      %v5214 = vmul.f32 %v3620, %v5161
      %v5215 = vmul.f32 %v3625, %v5161
      %v5216 = vmul.f32 %v3630, %v5161
      %v5217 = vmul.f32 %v3635, %v5161
      %v5218 = vmul.f32 %v3640, %v5161
      %v5219 = vmul.f32 %v3645, %v5161
      %v5220 = vmul.f32 %v3650, %v5161
      %v5221 = vmul.f32 %v3655, %v5161
      %v5222 = vmul.f32 %v3660, %v5161
      %v5223 = vmul.f32 %v3665, %v5161
      %v5224 = vmul.f32 %v3670, %v5161
      %v5225 = vmul.f32 %v3675, %v5161
      %v5226 = vmul.f32 %v3680, %v5161
      %v5227 = vmul.f32 %v3685, %v5161
      %v5228 = vmul.f32 %v3690, %v5161
      %v5229 = vmul.f32 %v3695, %v5161
      %v5230 = vmul.f32 %v3700, %v5161
      %v5231 = vmul.f32 %v3705, %v5161
      %v5232 = vmul.f32 %v3710, %v5161
      %v5233 = vmul.f32 %v3715, %v5161
      %v5234 = vmul.f32 %v3720, %v5161
      %v5235 = vmul.f32 %v3725, %v5161
      %v5236 = vmul.f32 %v3730, %v5161
      %v5237 = vmul.f32 %v3735, %v5161
      %v5238 = vmul.f32 %v3740, %v5161
      %v5239 = vmul.f32 %v3745, %v5161
      %v5240 = vmul.f32 %v3750, %v5161
      %v5241 = vmul.f32 %v3755, %v5161
      %v5242 = vmul.f32 %v3760, %v5161
      %v5243 = vmul.f32 %v3765, %v5161
      %v5244 = vmul.f32 %v3770, %v5161
      %v5245 = vmul.f32 %v3775, %v5161
      %v5246 = vmul.f32 %v3780, %v5161
      %v5247 = vmul.f32 %v3785, %v5161
      %v5248 = vmul.f32 %v3790, %v5161
      %v5249 = vmul.f32 %v3795, %v5161
      %v5250 = vmul.f32 %v3800, %v5161
      %v5251 = vmul.f32 %v3805, %v5161
      %v5252 = vmul.f32 %v3810, %v5161
      %v5253 = vmul.f32 %v3815, %v5161
      %v5254 = vmul.f32 %v3820, %v5161
      %v5255 = vmul.f32 %v3825, %v5161
      %v5256 = vmul.f32 %v3830, %v5161
      %v5257 = vmul.f32 %v3835, %v5161
      %v5258 = vmul.f32 %v3840, %v5161
      %v5259 = vmul.f32 %v3845, %v5161
      %v5260 = vmul.f32 %v3850, %v5161
      %v5261 = vmul.f32 %v3855, %v5161
      %v5262 = vmul.f32 %v3860, %v5161
      %v5263 = vmul.f32 %v3865, %v5161
      %v5264 = vmul.f32 %v3870, %v5161
      %v5265 = vmul.f32 %v3875, %v5161
      %v5266 = vmul.f32 %v4524, %v5161
      %v5267 = vadd.f32 %v5056, %v5162
      %v5268 = vadd.f32 %v5057, %v5163
      %v5269 = vadd.f32 %v5058, %v5164
      %v5270 = vadd.f32 %v5059, %v5165
      %v5271 = vadd.f32 %v5060, %v5166
      %v5272 = vadd.f32 %v5061, %v5167
      %v5273 = vadd.f32 %v5062, %v5168
      %v5274 = vadd.f32 %v5063, %v5169
      %v5275 = vadd.f32 %v5064, %v5170
      %v5276 = vadd.f32 %v5065, %v5171
      %v5277 = vadd.f32 %v5066, %v5172
      %v5278 = vadd.f32 %v5067, %v5173
      %v5279 = vadd.f32 %v5068, %v5174
      %v5280 = vadd.f32 %v5069, %v5175
      %v5281 = vadd.f32 %v5070, %v5176
      %v5282 = vadd.f32 %v5071, %v5177
      %v5283 = vadd.f32 %v5072, %v5178
      %v5284 = vadd.f32 %v5073, %v5179
      %v5285 = vadd.f32 %v5074, %v5180
      %v5286 = vadd.f32 %v5075, %v5181
      %v5287 = vadd.f32 %v5076, %v5182
      %v5288 = vadd.f32 %v5077, %v5183
      %v5289 = vadd.f32 %v5078, %v5184
      %v5290 = vadd.f32 %v5079, %v5185
      %v5291 = vadd.f32 %v5080, %v5186
      %v5292 = vadd.f32 %v5081, %v5187
      %v5293 = vadd.f32 %v5082, %v5188
      %v5294 = vadd.f32 %v5083, %v5189
      %v5295 = vadd.f32 %v5084, %v5190
      %v5296 = vadd.f32 %v5085, %v5191
      %v5297 = vadd.f32 %v5086, %v5192
      %v5298 = vadd.f32 %v5087, %v5193
      %v5299 = vadd.f32 %v5088, %v5194
      %v5300 = vadd.f32 %v5089, %v5195
      %v5301 = vadd.f32 %v5090, %v5196
      %v5302 = vadd.f32 %v5091, %v5197
      %v5303 = vadd.f32 %v5092, %v5198
      %v5304 = vadd.f32 %v5093, %v5199
      %v5305 = vadd.f32 %v5094, %v5200
      %v5306 = vadd.f32 %v5095, %v5201
      %v5307 = vadd.f32 %v5096, %v5202
      %v5308 = vadd.f32 %v5097, %v5203
      %v5309 = vadd.f32 %v5098, %v5204
      %v5310 = vadd.f32 %v5099, %v5205
      %v5311 = vadd.f32 %v5100, %v5206
      %v5312 = vadd.f32 %v5101, %v5207
      %v5313 = vadd.f32 %v5102, %v5208
      %v5314 = vadd.f32 %v5103, %v5209
      %v5315 = vadd.f32 %v5104, %v5210
      %v5316 = vadd.f32 %v5105, %v5211
      %v5317 = vadd.f32 %v5106, %v5212
      %v5318 = vadd.f32 %v5107, %v5213
      %v5319 = vadd.f32 %v5108, %v5214
      %v5320 = vadd.f32 %v5109, %v5215
      %v5321 = vadd.f32 %v5110, %v5216
      %v5322 = vadd.f32 %v5111, %v5217
      %v5323 = vadd.f32 %v5112, %v5218
      %v5324 = vadd.f32 %v5113, %v5219
      %v5325 = vadd.f32 %v5114, %v5220
      %v5326 = vadd.f32 %v5115, %v5221
      %v5327 = vadd.f32 %v5116, %v5222
      %v5328 = vadd.f32 %v5117, %v5223
      %v5329 = vadd.f32 %v5118, %v5224
      %v5330 = vadd.f32 %v5119, %v5225
      %v5331 = vadd.f32 %v5120, %v5226
      %v5332 = vadd.f32 %v5121, %v5227
      %v5333 = vadd.f32 %v5122, %v5228
      %v5334 = vadd.f32 %v5123, %v5229
      %v5335 = vadd.f32 %v5124, %v5230
      %v5336 = vadd.f32 %v5125, %v5231
      %v5337 = vadd.f32 %v5126, %v5232
      %v5338 = vadd.f32 %v5127, %v5233
      %v5339 = vadd.f32 %v5128, %v5234
      %v5340 = vadd.f32 %v5129, %v5235
      %v5341 = vadd.f32 %v5130, %v5236
      %v5342 = vadd.f32 %v5131, %v5237
      %v5343 = vadd.f32 %v5132, %v5238
      %v5344 = vadd.f32 %v5133, %v5239
      %v5345 = vadd.f32 %v5134, %v5240
      %v5346 = vadd.f32 %v5135, %v5241
      %v5347 = vadd.f32 %v5136, %v5242
      %v5348 = vadd.f32 %v5137, %v5243
      %v5349 = vadd.f32 %v5138, %v5244
      %v5350 = vadd.f32 %v5139, %v5245
      %v5351 = vadd.f32 %v5140, %v5246
      %v5352 = vadd.f32 %v5141, %v5247
      %v5353 = vadd.f32 %v5142, %v5248
      %v5354 = vadd.f32 %v5143, %v5249
      %v5355 = vadd.f32 %v5144, %v5250
      %v5356 = vadd.f32 %v5145, %v5251
      %v5357 = vadd.f32 %v5146, %v5252
      %v5358 = vadd.f32 %v5147, %v5253
      %v5359 = vadd.f32 %v5148, %v5254
      %v5360 = vadd.f32 %v5149, %v5255
      %v5361 = vadd.f32 %v5150, %v5256
      %v5362 = vadd.f32 %v5151, %v5257
      %v5363 = vadd.f32 %v5152, %v5258
      %v5364 = vadd.f32 %v5153, %v5259
      %v5365 = vadd.f32 %v5154, %v5260
      %v5366 = vadd.f32 %v5155, %v5261
      %v5367 = vadd.f32 %v5156, %v5262
      %v5368 = vadd.f32 %v5157, %v5263
      %v5369 = vadd.f32 %v5158, %v5264
      %v5370 = vadd.f32 %v5159, %v5265
      %v5371 = vadd.f32 %v5160, %v5266
      %v5372 = vld [vmem:[%s165 + $0x1c] sm:$0xc]
      %v5373 = vld [vmem:[%s165 + $0x20] sm:$0xf]
      %v5374 = vld [vmem:[%s165 + $0x24] sm:$0xf]
      %v5375 = vld [vmem:[%s165 + $0x28] sm:$0xf]
      %v5376 = vld [vmem:[%s165 + $0x2c] sm:$0xf]
      %v5377 = vld [vmem:[%s165 + $0x30] sm:$0xf]
      %v5378 = vld [vmem:[%s165 + $0x34] sm:$0xf]
      %v5379 = vld [vmem:[%s165 + $0x38] sm:$0xf]
      %v5380 = vld [vmem:[%s165 + $0x3c] sm:$0xf]
      %v5381 = vld [vmem:[%s165 + $0x40] sm:$0xf]
      %v5382 = vld [vmem:[%s165 + $0x44] sm:$0xf]
      %v5383 = vld [vmem:[%s165 + $0x48] sm:$0xf]
      %v5384 = vld [vmem:[%s165 + $0x4c] sm:$0xf]
      %v5385 = vld [vmem:[%s165 + $0x50] sm:$0xf]
      %v5386 = vld [vmem:[%s165 + $0x54] sm:$0xf]
      %v5387 = vld [vmem:[%s165 + $0x58] sm:$0xf]
      %v5388 = vld [vmem:[%s165 + $0x5c] sm:$0xf]
      %v5389 = vld [vmem:[%s165 + $0x60] sm:$0xf]
      %v5390 = vld [vmem:[%s165 + $0x64] sm:$0xf]
      %v5391 = vld [vmem:[%s165 + $0x68] sm:$0xf]
      %v5392 = vld [vmem:[%s165 + $0x6c] sm:$0xf]
      %v5393 = vld [vmem:[%s165 + $0x70] sm:$0xf]
      %v5394 = vld [vmem:[%s165 + $0x74] sm:$0xf]
      %v5395 = vld [vmem:[%s165 + $0x78] sm:$0xf]
      %v5396 = vld [vmem:[%s165 + $0x7c] sm:$0xf]
      %v5397 = vld [vmem:[%s165 + $0x80] sm:$0xf]
      %v5398 = vld [vmem:[%s165 + $0x84] sm:$0xf]
      %v5399 = vld [vmem:[%s165 + $0x88] sm:$0xf]
      %v5400 = vld [vmem:[%s165 + $0x8c] sm:$0xf]
      %v5401 = vld [vmem:[%s165 + $0x90] sm:$0xf]
      %v5402 = vld [vmem:[%s165 + $0x94] sm:$0xf]
      %v5403 = vld [vmem:[%s165 + $0x98] sm:$0xf]
      %v5404 = vld [vmem:[%s165 + $0x9c] sm:$0xf]
      %v5405 = vld [vmem:[%s165 + $0xa0] sm:$0xf]
      %v5406 = vld [vmem:[%s165 + $0xa4] sm:$0xf]
      %v5407 = vld [vmem:[%s165 + $0xa8] sm:$0xf]
      %v5408 = vld [vmem:[%s165 + $0xac] sm:$0xf]
      %v5409 = vld [vmem:[%s165 + $0xb0] sm:$0xf]
      %v5410 = vld [vmem:[%s165 + $0xb4] sm:$0xf]
      %v5411 = vld [vmem:[%s165 + $0xb8] sm:$0xf]
      %v5412 = vld [vmem:[%s165 + $0xbc] sm:$0xf]
      %v5413 = vld [vmem:[%s165 + $0xc0] sm:$0xf]
      %v5414 = vld [vmem:[%s165 + $0xc4] sm:$0xf]
      %v5415 = vld [vmem:[%s165 + $0xc8] sm:$0xf]
      %v5416 = vld [vmem:[%s165 + $0xcc] sm:$0xf]
      %v5417 = vld [vmem:[%s165 + $0xd0] sm:$0xf]
      %v5418 = vld [vmem:[%s165 + $0xd4] sm:$0xf]
      %v5419 = vld [vmem:[%s165 + $0xd8] sm:$0xf]
      %v5420 = vld [vmem:[%s165 + $0xdc] sm:$0xf]
      %v5421 = vld [vmem:[%s165 + $0xe0] sm:$0xf]
      %v5422 = vld [vmem:[%s165 + $0xe4] sm:$0xf]
      %v5423 = vld [vmem:[%s165 + $0xe8] sm:$0xf]
      %v5424 = vld [vmem:[%s165 + $0xec] sm:$0xf]
      %v5425 = vld [vmem:[%s165 + $0xf0] sm:$0xf]
      %v5426 = vld [vmem:[%s165 + $0xf4] sm:$0xf]
      %v5427 = vld [vmem:[%s165 + $0xf8] sm:$0xf]
      %v5428 = vld [vmem:[%s165 + $0xfc] sm:$0xf]
      %v5429 = vld [vmem:[%s165 + $0x100] sm:$0xf]
      %v5430 = vld [vmem:[%s165 + $0x104] sm:$0xf]
      %v5431 = vld [vmem:[%s165 + $0x108] sm:$0xf]
      %v5432 = vld [vmem:[%s165 + $0x10c] sm:$0xf]
      %v5433 = vld [vmem:[%s165 + $0x110] sm:$0xf]
      %v5434 = vld [vmem:[%s165 + $0x114] sm:$0xf]
      %v5435 = vld [vmem:[%s165 + $0x118] sm:$0xf]
      %v5436 = vld [vmem:[%s165 + $0x11c] sm:$0xf]
      %v5437 = vld [vmem:[%s165 + $0x120] sm:$0xf]
      %v5438 = vld [vmem:[%s165 + $0x124] sm:$0xf]
      %v5439 = vld [vmem:[%s165 + $0x128] sm:$0xf]
      %v5440 = vld [vmem:[%s165 + $0x12c] sm:$0xf]
      %v5441 = vld [vmem:[%s165 + $0x130] sm:$0xf]
      %v5442 = vld [vmem:[%s165 + $0x134] sm:$0xf]
      %v5443 = vld [vmem:[%s165 + $0x138] sm:$0xf]
      %v5444 = vld [vmem:[%s165 + $0x13c] sm:$0xf]
      %v5445 = vld [vmem:[%s165 + $0x140] sm:$0xf]
      %v5446 = vld [vmem:[%s165 + $0x144] sm:$0xf]
      %v5447 = vld [vmem:[%s165 + $0x148] sm:$0xf]
      %v5448 = vld [vmem:[%s165 + $0x14c] sm:$0xf]
      %v5449 = vld [vmem:[%s165 + $0x150] sm:$0xf]
      %v5450 = vld [vmem:[%s165 + $0x154] sm:$0xf]
      %v5451 = vld [vmem:[%s165 + $0x158] sm:$0xf]
      %v5452 = vld [vmem:[%s165 + $0x15c] sm:$0xf]
      %v5453 = vld [vmem:[%s165 + $0x160] sm:$0xf]
      %v5454 = vld [vmem:[%s165 + $0x164] sm:$0xf]
      %v5455 = vld [vmem:[%s165 + $0x168] sm:$0xf]
      %v5456 = vld [vmem:[%s165 + $0x16c] sm:$0xf]
      %v5457 = vld [vmem:[%s165 + $0x170] sm:$0xf]
      %v5458 = vld [vmem:[%s165 + $0x174] sm:$0xf]
      %v5459 = vld [vmem:[%s165 + $0x178] sm:$0xf]
      %v5460 = vld [vmem:[%s165 + $0x17c] sm:$0xf]
      %v5461 = vld [vmem:[%s165 + $0x180] sm:$0xf]
      %v5462 = vld [vmem:[%s165 + $0x184] sm:$0xf]
      %v5463 = vld [vmem:[%s165 + $0x188] sm:$0xf]
      %v5464 = vld [vmem:[%s165 + $0x18c] sm:$0xf]
      %v5465 = vld [vmem:[%s165 + $0x190] sm:$0xf]
      %v5466 = vld [vmem:[%s165 + $0x194] sm:$0xf]
      %v5467 = vld [vmem:[%s165 + $0x198] sm:$0xf]
      %v5468 = vld [vmem:[%s165 + $0x19c] sm:$0xf]
      %v5469 = vld [vmem:[%s165 + $0x1a0] sm:$0xf]
      %v5470 = vld [vmem:[%s165 + $0x1a4] sm:$0xf]
      %v5471 = vld [vmem:[%s165 + $0x1a8] sm:$0xf]
      %v5472 = vld [vmem:[%s165 + $0x1ac] sm:$0xf]
      %v5473 = vld [vmem:[%s165 + $0x1b0] sm:$0xf]
      %v5474 = vld [vmem:[%s165 + $0x1b4] sm:$0xf]
      %v5475 = vld [vmem:[%s165 + $0x1b8] sm:$0xf]
      %v5476 = vld [vmem:[%s165 + $0x1bc] sm:$0xf]
      %v5477 = vld [vmem:[%s165 + $0x1c0] sm:$0x3]
      %v5478 = vld [vmem:[%s1] sm:$0x8]
      %v5479 = vunpack.c.l.bf16 %v5372
      %v5480 = vunpack.c.l.bf16 %v5373
      %v5481 = vunpack.c.l.bf16 %v5374
      %v5482 = vunpack.c.l.bf16 %v5375
      %v5483 = vunpack.c.l.bf16 %v5376
      %v5484 = vunpack.c.l.bf16 %v5377
      %v5485 = vunpack.c.l.bf16 %v5378
      %v5486 = vunpack.c.l.bf16 %v5379
      %v5487 = vunpack.c.l.bf16 %v5380
      %v5488 = vunpack.c.l.bf16 %v5381
      %v5489 = vunpack.c.l.bf16 %v5382
      %v5490 = vunpack.c.l.bf16 %v5383
      %v5491 = vunpack.c.l.bf16 %v5384
      %v5492 = vunpack.c.l.bf16 %v5385
      %v5493 = vunpack.c.l.bf16 %v5386
      %v5494 = vunpack.c.l.bf16 %v5387
      %v5495 = vunpack.c.l.bf16 %v5388
      %v5496 = vunpack.c.l.bf16 %v5389
      %v5497 = vunpack.c.l.bf16 %v5390
      %v5498 = vunpack.c.l.bf16 %v5391
      %v5499 = vunpack.c.l.bf16 %v5392
      %v5500 = vunpack.c.l.bf16 %v5393
      %v5501 = vunpack.c.l.bf16 %v5394
      %v5502 = vunpack.c.l.bf16 %v5395
      %v5503 = vunpack.c.l.bf16 %v5396
      %v5504 = vunpack.c.l.bf16 %v5397
      %v5505 = vunpack.c.l.bf16 %v5398
      %v5506 = vunpack.c.l.bf16 %v5399
      %v5507 = vunpack.c.l.bf16 %v5400
      %v5508 = vunpack.c.l.bf16 %v5401
      %v5509 = vunpack.c.l.bf16 %v5402
      %v5510 = vunpack.c.l.bf16 %v5403
      %v5511 = vunpack.c.l.bf16 %v5404
      %v5512 = vunpack.c.l.bf16 %v5405
      %v5513 = vunpack.c.l.bf16 %v5406
      %v5514 = vunpack.c.l.bf16 %v5407
      %v5515 = vunpack.c.l.bf16 %v5408
      %v5516 = vunpack.c.l.bf16 %v5409
      %v5517 = vunpack.c.l.bf16 %v5410
      %v5518 = vunpack.c.l.bf16 %v5411
      %v5519 = vunpack.c.l.bf16 %v5412
      %v5520 = vunpack.c.l.bf16 %v5413
      %v5521 = vunpack.c.l.bf16 %v5414
      %v5522 = vunpack.c.l.bf16 %v5415
      %v5523 = vunpack.c.l.bf16 %v5416
      %v5524 = vunpack.c.l.bf16 %v5417
      %v5525 = vunpack.c.l.bf16 %v5418
      %v5526 = vunpack.c.l.bf16 %v5419
      %v5527 = vunpack.c.l.bf16 %v5420
      %v5528 = vunpack.c.l.bf16 %v5421
      %v5529 = vunpack.c.l.bf16 %v5422
      %v5530 = vunpack.c.l.bf16 %v5423
      %v5531 = vunpack.c.l.bf16 %v5424
      %v5532 = vunpack.c.l.bf16 %v5425
      %v5533 = vunpack.c.l.bf16 %v5426
      %v5534 = vunpack.c.l.bf16 %v5427
      %v5535 = vunpack.c.l.bf16 %v5428
      %v5536 = vunpack.c.l.bf16 %v5429
      %v5537 = vunpack.c.l.bf16 %v5430
      %v5538 = vunpack.c.l.bf16 %v5431
      %v5539 = vunpack.c.l.bf16 %v5432
      %v5540 = vunpack.c.l.bf16 %v5433
      %v5541 = vunpack.c.l.bf16 %v5434
      %v5542 = vunpack.c.l.bf16 %v5435
      %v5543 = vunpack.c.l.bf16 %v5436
      %v5544 = vunpack.c.l.bf16 %v5437
      %v5545 = vunpack.c.l.bf16 %v5438
      %v5546 = vunpack.c.l.bf16 %v5439
      %v5547 = vunpack.c.l.bf16 %v5440
      %v5548 = vunpack.c.l.bf16 %v5441
      %v5549 = vunpack.c.l.bf16 %v5442
      %v5550 = vunpack.c.l.bf16 %v5443
      %v5551 = vunpack.c.l.bf16 %v5444
      %v5552 = vunpack.c.l.bf16 %v5445
      %v5553 = vunpack.c.l.bf16 %v5446
      %v5554 = vunpack.c.l.bf16 %v5447
      %v5555 = vunpack.c.l.bf16 %v5448
      %v5556 = vunpack.c.l.bf16 %v5449
      %v5557 = vunpack.c.l.bf16 %v5450
      %v5558 = vunpack.c.l.bf16 %v5451
      %v5559 = vunpack.c.l.bf16 %v5452
      %v5560 = vunpack.c.l.bf16 %v5453
      %v5561 = vunpack.c.l.bf16 %v5454
      %v5562 = vunpack.c.l.bf16 %v5455
      %v5563 = vunpack.c.l.bf16 %v5456
      %v5564 = vunpack.c.l.bf16 %v5457
      %v5565 = vunpack.c.l.bf16 %v5458
      %v5566 = vunpack.c.l.bf16 %v5459
      %v5567 = vunpack.c.l.bf16 %v5460
      %v5568 = vunpack.c.l.bf16 %v5461
      %v5569 = vunpack.c.l.bf16 %v5462
      %v5570 = vunpack.c.l.bf16 %v5463
      %v5571 = vunpack.c.l.bf16 %v5464
      %v5572 = vunpack.c.l.bf16 %v5465
      %v5573 = vunpack.c.l.bf16 %v5466
      %v5574 = vunpack.c.l.bf16 %v5467
      %v5575 = vunpack.c.l.bf16 %v5468
      %v5576 = vunpack.c.l.bf16 %v5469
      %v5577 = vunpack.c.l.bf16 %v5470
      %v5578 = vunpack.c.l.bf16 %v5471
      %v5579 = vunpack.c.l.bf16 %v5472
      %v5580 = vunpack.c.l.bf16 %v5473
      %v5581 = vunpack.c.l.bf16 %v5474
      %v5582 = vunpack.c.l.bf16 %v5475
      %v5583 = vunpack.c.l.bf16 %v5476
      %v5584 = vunpack.c.l.bf16 %v5477
      %v5585 = vunpack.c.l.bf16 %v5478
      %5587 = vset.pattern.permute.xlu0 0
      %5588 = vperm.xlu0 %5587, %v5479
      %v5589 = vpop.permute.xlu0 %5588
      %5592 = vset.pattern.permute.xlu0 0
      %5593 = vperm.xlu0 %5592, %v5480
      %v5594 = vpop.permute.xlu0 %5593
      %5597 = vset.pattern.permute.xlu0 0
      %5598 = vperm.xlu0 %5597, %v5481
      %v5599 = vpop.permute.xlu0 %5598
      %5602 = vset.pattern.permute.xlu0 0
      %5603 = vperm.xlu0 %5602, %v5482
      %v5604 = vpop.permute.xlu0 %5603
      %5607 = vset.pattern.permute.xlu0 0
      %5608 = vperm.xlu0 %5607, %v5483
      %v5609 = vpop.permute.xlu0 %5608
      %5612 = vset.pattern.permute.xlu0 0
      %5613 = vperm.xlu0 %5612, %v5484
      %v5614 = vpop.permute.xlu0 %5613
      %5617 = vset.pattern.permute.xlu0 0
      %5618 = vperm.xlu0 %5617, %v5485
      %v5619 = vpop.permute.xlu0 %5618
      %5622 = vset.pattern.permute.xlu0 0
      %5623 = vperm.xlu0 %5622, %v5486
      %v5624 = vpop.permute.xlu0 %5623
      %5627 = vset.pattern.permute.xlu0 0
      %5628 = vperm.xlu0 %5627, %v5487
      %v5629 = vpop.permute.xlu0 %5628
      %5632 = vset.pattern.permute.xlu0 0
      %5633 = vperm.xlu0 %5632, %v5488
      %v5634 = vpop.permute.xlu0 %5633
      %5637 = vset.pattern.permute.xlu0 0
      %5638 = vperm.xlu0 %5637, %v5489
      %v5639 = vpop.permute.xlu0 %5638
      %5642 = vset.pattern.permute.xlu0 0
      %5643 = vperm.xlu0 %5642, %v5490
      %v5644 = vpop.permute.xlu0 %5643
      %5647 = vset.pattern.permute.xlu0 0
      %5648 = vperm.xlu0 %5647, %v5491
      %v5649 = vpop.permute.xlu0 %5648
      %5652 = vset.pattern.permute.xlu0 0
      %5653 = vperm.xlu0 %5652, %v5492
      %v5654 = vpop.permute.xlu0 %5653
      %5657 = vset.pattern.permute.xlu0 0
      %5658 = vperm.xlu0 %5657, %v5493
      %v5659 = vpop.permute.xlu0 %5658
      %5662 = vset.pattern.permute.xlu0 0
      %5663 = vperm.xlu0 %5662, %v5494
      %v5664 = vpop.permute.xlu0 %5663
      %5667 = vset.pattern.permute.xlu0 0
      %5668 = vperm.xlu0 %5667, %v5495
      %v5669 = vpop.permute.xlu0 %5668
      %5672 = vset.pattern.permute.xlu0 0
      %5673 = vperm.xlu0 %5672, %v5496
      %v5674 = vpop.permute.xlu0 %5673
      %5677 = vset.pattern.permute.xlu0 0
      %5678 = vperm.xlu0 %5677, %v5497
      %v5679 = vpop.permute.xlu0 %5678
      %5682 = vset.pattern.permute.xlu0 0
      %5683 = vperm.xlu0 %5682, %v5498
      %v5684 = vpop.permute.xlu0 %5683
      %5687 = vset.pattern.permute.xlu0 0
      %5688 = vperm.xlu0 %5687, %v5499
      %v5689 = vpop.permute.xlu0 %5688
      %5692 = vset.pattern.permute.xlu0 0
      %5693 = vperm.xlu0 %5692, %v5500
      %v5694 = vpop.permute.xlu0 %5693
      %5697 = vset.pattern.permute.xlu0 0
      %5698 = vperm.xlu0 %5697, %v5501
      %v5699 = vpop.permute.xlu0 %5698
      %5702 = vset.pattern.permute.xlu0 0
      %5703 = vperm.xlu0 %5702, %v5502
      %v5704 = vpop.permute.xlu0 %5703
      %5707 = vset.pattern.permute.xlu0 0
      %5708 = vperm.xlu0 %5707, %v5503
      %v5709 = vpop.permute.xlu0 %5708
      %5712 = vset.pattern.permute.xlu0 0
      %5713 = vperm.xlu0 %5712, %v5504
      %v5714 = vpop.permute.xlu0 %5713
      %5717 = vset.pattern.permute.xlu0 0
      %5718 = vperm.xlu0 %5717, %v5505
      %v5719 = vpop.permute.xlu0 %5718
      %5722 = vset.pattern.permute.xlu0 0
      %5723 = vperm.xlu0 %5722, %v5506
      %v5724 = vpop.permute.xlu0 %5723
      %5727 = vset.pattern.permute.xlu0 0
      %5728 = vperm.xlu0 %5727, %v5507
      %v5729 = vpop.permute.xlu0 %5728
      %5732 = vset.pattern.permute.xlu0 0
      %5733 = vperm.xlu0 %5732, %v5508
      %v5734 = vpop.permute.xlu0 %5733
      %5737 = vset.pattern.permute.xlu0 0
      %5738 = vperm.xlu0 %5737, %v5509
      %v5739 = vpop.permute.xlu0 %5738
      %5742 = vset.pattern.permute.xlu0 0
      %5743 = vperm.xlu0 %5742, %v5510
      %v5744 = vpop.permute.xlu0 %5743
      %5747 = vset.pattern.permute.xlu0 0
      %5748 = vperm.xlu0 %5747, %v5511
      %v5749 = vpop.permute.xlu0 %5748
      %5752 = vset.pattern.permute.xlu0 0
      %5753 = vperm.xlu0 %5752, %v5512
      %v5754 = vpop.permute.xlu0 %5753
      %5757 = vset.pattern.permute.xlu0 0
      %5758 = vperm.xlu0 %5757, %v5513
      %v5759 = vpop.permute.xlu0 %5758
      %5762 = vset.pattern.permute.xlu0 0
      %5763 = vperm.xlu0 %5762, %v5514
      %v5764 = vpop.permute.xlu0 %5763
      %5767 = vset.pattern.permute.xlu0 0
      %5768 = vperm.xlu0 %5767, %v5515
      %v5769 = vpop.permute.xlu0 %5768
      %5772 = vset.pattern.permute.xlu0 0
      %5773 = vperm.xlu0 %5772, %v5516
      %v5774 = vpop.permute.xlu0 %5773
      %5777 = vset.pattern.permute.xlu0 0
      %5778 = vperm.xlu0 %5777, %v5517
      %v5779 = vpop.permute.xlu0 %5778
      %5782 = vset.pattern.permute.xlu0 0
      %5783 = vperm.xlu0 %5782, %v5518
      %v5784 = vpop.permute.xlu0 %5783
      %5787 = vset.pattern.permute.xlu0 0
      %5788 = vperm.xlu0 %5787, %v5519
      %v5789 = vpop.permute.xlu0 %5788
      %5792 = vset.pattern.permute.xlu0 0
      %5793 = vperm.xlu0 %5792, %v5520
      %v5794 = vpop.permute.xlu0 %5793
      %5797 = vset.pattern.permute.xlu0 0
      %5798 = vperm.xlu0 %5797, %v5521
      %v5799 = vpop.permute.xlu0 %5798
      %5802 = vset.pattern.permute.xlu0 0
      %5803 = vperm.xlu0 %5802, %v5522
      %v5804 = vpop.permute.xlu0 %5803
      %5807 = vset.pattern.permute.xlu0 0
      %5808 = vperm.xlu0 %5807, %v5523
      %v5809 = vpop.permute.xlu0 %5808
      %5812 = vset.pattern.permute.xlu0 0
      %5813 = vperm.xlu0 %5812, %v5524
      %v5814 = vpop.permute.xlu0 %5813
      %5817 = vset.pattern.permute.xlu0 0
      %5818 = vperm.xlu0 %5817, %v5525
      %v5819 = vpop.permute.xlu0 %5818
      %5822 = vset.pattern.permute.xlu0 0
      %5823 = vperm.xlu0 %5822, %v5526
      %v5824 = vpop.permute.xlu0 %5823
      %5827 = vset.pattern.permute.xlu0 0
      %5828 = vperm.xlu0 %5827, %v5527
      %v5829 = vpop.permute.xlu0 %5828
      %5832 = vset.pattern.permute.xlu0 0
      %5833 = vperm.xlu0 %5832, %v5528
      %v5834 = vpop.permute.xlu0 %5833
      %5837 = vset.pattern.permute.xlu0 0
      %5838 = vperm.xlu0 %5837, %v5529
      %v5839 = vpop.permute.xlu0 %5838
      %5842 = vset.pattern.permute.xlu0 0
      %5843 = vperm.xlu0 %5842, %v5530
      %v5844 = vpop.permute.xlu0 %5843
      %5847 = vset.pattern.permute.xlu0 0
      %5848 = vperm.xlu0 %5847, %v5531
      %v5849 = vpop.permute.xlu0 %5848
      %5852 = vset.pattern.permute.xlu0 0
      %5853 = vperm.xlu0 %5852, %v5532
      %v5854 = vpop.permute.xlu0 %5853
      %5857 = vset.pattern.permute.xlu0 0
      %5858 = vperm.xlu0 %5857, %v5533
      %v5859 = vpop.permute.xlu0 %5858
      %5862 = vset.pattern.permute.xlu0 0
      %5863 = vperm.xlu0 %5862, %v5534
      %v5864 = vpop.permute.xlu0 %5863
      %5867 = vset.pattern.permute.xlu0 0
      %5868 = vperm.xlu0 %5867, %v5535
      %v5869 = vpop.permute.xlu0 %5868
      %5872 = vset.pattern.permute.xlu0 0
      %5873 = vperm.xlu0 %5872, %v5536
      %v5874 = vpop.permute.xlu0 %5873
      %5877 = vset.pattern.permute.xlu0 0
      %5878 = vperm.xlu0 %5877, %v5537
      %v5879 = vpop.permute.xlu0 %5878
      %5882 = vset.pattern.permute.xlu0 0
      %5883 = vperm.xlu0 %5882, %v5538
      %v5884 = vpop.permute.xlu0 %5883
      %5887 = vset.pattern.permute.xlu0 0
      %5888 = vperm.xlu0 %5887, %v5539
      %v5889 = vpop.permute.xlu0 %5888
      %5892 = vset.pattern.permute.xlu0 0
      %5893 = vperm.xlu0 %5892, %v5540
      %v5894 = vpop.permute.xlu0 %5893
      %5897 = vset.pattern.permute.xlu0 0
      %5898 = vperm.xlu0 %5897, %v5541
      %v5899 = vpop.permute.xlu0 %5898
      %5902 = vset.pattern.permute.xlu0 0
      %5903 = vperm.xlu0 %5902, %v5542
      %v5904 = vpop.permute.xlu0 %5903
      %5907 = vset.pattern.permute.xlu0 0
      %5908 = vperm.xlu0 %5907, %v5543
      %v5909 = vpop.permute.xlu0 %5908
      %5912 = vset.pattern.permute.xlu0 0
      %5913 = vperm.xlu0 %5912, %v5544
      %v5914 = vpop.permute.xlu0 %5913
      %5917 = vset.pattern.permute.xlu0 0
      %5918 = vperm.xlu0 %5917, %v5545
      %v5919 = vpop.permute.xlu0 %5918
      %5922 = vset.pattern.permute.xlu0 0
      %5923 = vperm.xlu0 %5922, %v5546
      %v5924 = vpop.permute.xlu0 %5923
      %5927 = vset.pattern.permute.xlu0 0
      %5928 = vperm.xlu0 %5927, %v5547
      %v5929 = vpop.permute.xlu0 %5928
      %5932 = vset.pattern.permute.xlu0 0
      %5933 = vperm.xlu0 %5932, %v5548
      %v5934 = vpop.permute.xlu0 %5933
      %5937 = vset.pattern.permute.xlu0 0
      %5938 = vperm.xlu0 %5937, %v5549
      %v5939 = vpop.permute.xlu0 %5938
      %5942 = vset.pattern.permute.xlu0 0
      %5943 = vperm.xlu0 %5942, %v5550
      %v5944 = vpop.permute.xlu0 %5943
      %5947 = vset.pattern.permute.xlu0 0
      %5948 = vperm.xlu0 %5947, %v5551
      %v5949 = vpop.permute.xlu0 %5948
      %5952 = vset.pattern.permute.xlu0 0
      %5953 = vperm.xlu0 %5952, %v5552
      %v5954 = vpop.permute.xlu0 %5953
      %5957 = vset.pattern.permute.xlu0 0
      %5958 = vperm.xlu0 %5957, %v5553
      %v5959 = vpop.permute.xlu0 %5958
      %5962 = vset.pattern.permute.xlu0 0
      %5963 = vperm.xlu0 %5962, %v5554
      %v5964 = vpop.permute.xlu0 %5963
      %5967 = vset.pattern.permute.xlu0 0
      %5968 = vperm.xlu0 %5967, %v5555
      %v5969 = vpop.permute.xlu0 %5968
      %5972 = vset.pattern.permute.xlu0 0
      %5973 = vperm.xlu0 %5972, %v5556
      %v5974 = vpop.permute.xlu0 %5973
      %5977 = vset.pattern.permute.xlu0 0
      %5978 = vperm.xlu0 %5977, %v5557
      %v5979 = vpop.permute.xlu0 %5978
      %5982 = vset.pattern.permute.xlu0 0
      %5983 = vperm.xlu0 %5982, %v5558
      %v5984 = vpop.permute.xlu0 %5983
      %5987 = vset.pattern.permute.xlu0 0
      %5988 = vperm.xlu0 %5987, %v5559
      %v5989 = vpop.permute.xlu0 %5988
      %5992 = vset.pattern.permute.xlu0 0
      %5993 = vperm.xlu0 %5992, %v5560
      %v5994 = vpop.permute.xlu0 %5993
      %5997 = vset.pattern.permute.xlu0 0
      %5998 = vperm.xlu0 %5997, %v5561
      %v5999 = vpop.permute.xlu0 %5998
      %6002 = vset.pattern.permute.xlu0 0
      %6003 = vperm.xlu0 %6002, %v5562
      %v6004 = vpop.permute.xlu0 %6003
      %6007 = vset.pattern.permute.xlu0 0
      %6008 = vperm.xlu0 %6007, %v5563
      %v6009 = vpop.permute.xlu0 %6008
      %6012 = vset.pattern.permute.xlu0 0
      %6013 = vperm.xlu0 %6012, %v5564
      %v6014 = vpop.permute.xlu0 %6013
      %6017 = vset.pattern.permute.xlu0 0
      %6018 = vperm.xlu0 %6017, %v5565
      %v6019 = vpop.permute.xlu0 %6018
      %6022 = vset.pattern.permute.xlu0 0
      %6023 = vperm.xlu0 %6022, %v5566
      %v6024 = vpop.permute.xlu0 %6023
      %6027 = vset.pattern.permute.xlu0 0
      %6028 = vperm.xlu0 %6027, %v5567
      %v6029 = vpop.permute.xlu0 %6028
      %6032 = vset.pattern.permute.xlu0 0
      %6033 = vperm.xlu0 %6032, %v5568
      %v6034 = vpop.permute.xlu0 %6033
      %6037 = vset.pattern.permute.xlu0 0
      %6038 = vperm.xlu0 %6037, %v5569
      %v6039 = vpop.permute.xlu0 %6038
      %6042 = vset.pattern.permute.xlu0 0
      %6043 = vperm.xlu0 %6042, %v5570
      %v6044 = vpop.permute.xlu0 %6043
      %6047 = vset.pattern.permute.xlu0 0
      %6048 = vperm.xlu0 %6047, %v5571
      %v6049 = vpop.permute.xlu0 %6048
      %6052 = vset.pattern.permute.xlu0 0
      %6053 = vperm.xlu0 %6052, %v5572
      %v6054 = vpop.permute.xlu0 %6053
      %6057 = vset.pattern.permute.xlu0 0
      %6058 = vperm.xlu0 %6057, %v5573
      %v6059 = vpop.permute.xlu0 %6058
      %6062 = vset.pattern.permute.xlu0 0
      %6063 = vperm.xlu0 %6062, %v5574
      %v6064 = vpop.permute.xlu0 %6063
      %6067 = vset.pattern.permute.xlu0 0
      %6068 = vperm.xlu0 %6067, %v5575
      %v6069 = vpop.permute.xlu0 %6068
      %6072 = vset.pattern.permute.xlu0 0
      %6073 = vperm.xlu0 %6072, %v5576
      %v6074 = vpop.permute.xlu0 %6073
      %6077 = vset.pattern.permute.xlu0 0
      %6078 = vperm.xlu0 %6077, %v5577
      %v6079 = vpop.permute.xlu0 %6078
      %6082 = vset.pattern.permute.xlu0 0
      %6083 = vperm.xlu0 %6082, %v5578
      %v6084 = vpop.permute.xlu0 %6083
      %6087 = vset.pattern.permute.xlu0 0
      %6088 = vperm.xlu0 %6087, %v5579
      %v6089 = vpop.permute.xlu0 %6088
      %6092 = vset.pattern.permute.xlu0 0
      %6093 = vperm.xlu0 %6092, %v5580
      %v6094 = vpop.permute.xlu0 %6093
      %6097 = vset.pattern.permute.xlu0 0
      %6098 = vperm.xlu0 %6097, %v5581
      %v6099 = vpop.permute.xlu0 %6098
      %6102 = vset.pattern.permute.xlu0 0
      %6103 = vperm.xlu0 %6102, %v5582
      %v6104 = vpop.permute.xlu0 %6103
      %6107 = vset.pattern.permute.xlu0 0
      %6108 = vperm.xlu0 %6107, %v5583
      %v6109 = vpop.permute.xlu0 %6108
      %6112 = vset.pattern.permute.xlu0 0
      %6113 = vperm.xlu0 %6112, %v5584
      %v6114 = vpop.permute.xlu0 %6113
      %v6116 = vperm.slane %v5585, 6
      %v6117 = vmul.f32 %v5589, %v6116
      %v6118 = vmul.f32 %v5594, %v6116
      %v6119 = vmul.f32 %v5599, %v6116
      %v6120 = vmul.f32 %v5604, %v6116
      %v6121 = vmul.f32 %v5609, %v6116
      %v6122 = vmul.f32 %v5614, %v6116
      %v6123 = vmul.f32 %v5619, %v6116
      %v6124 = vmul.f32 %v5624, %v6116
      %v6125 = vmul.f32 %v5629, %v6116
      %v6126 = vmul.f32 %v5634, %v6116
      %v6127 = vmul.f32 %v5639, %v6116
      %v6128 = vmul.f32 %v5644, %v6116
      %v6129 = vmul.f32 %v5649, %v6116
      %v6130 = vmul.f32 %v5654, %v6116
      %v6131 = vmul.f32 %v5659, %v6116
      %v6132 = vmul.f32 %v5664, %v6116
      %v6133 = vmul.f32 %v5669, %v6116
      %v6134 = vmul.f32 %v5674, %v6116
      %v6135 = vmul.f32 %v5679, %v6116
      %v6136 = vmul.f32 %v5684, %v6116
      %v6137 = vmul.f32 %v5689, %v6116
      %v6138 = vmul.f32 %v5694, %v6116
      %v6139 = vmul.f32 %v5699, %v6116
      %v6140 = vmul.f32 %v5704, %v6116
      %v6141 = vmul.f32 %v5709, %v6116
      %v6142 = vmul.f32 %v5714, %v6116
      %v6143 = vmul.f32 %v5719, %v6116
      %v6144 = vmul.f32 %v5724, %v6116
      %v6145 = vmul.f32 %v5729, %v6116
      %v6146 = vmul.f32 %v5734, %v6116
      %v6147 = vmul.f32 %v5739, %v6116
      %v6148 = vmul.f32 %v5744, %v6116
      %v6149 = vmul.f32 %v5749, %v6116
      %v6150 = vmul.f32 %v5754, %v6116
      %v6151 = vmul.f32 %v5759, %v6116
      %v6152 = vmul.f32 %v5764, %v6116
      %v6153 = vmul.f32 %v5769, %v6116
      %v6154 = vmul.f32 %v5774, %v6116
      %v6155 = vmul.f32 %v5779, %v6116
      %v6156 = vmul.f32 %v5784, %v6116
      %v6157 = vmul.f32 %v5789, %v6116
      %v6158 = vmul.f32 %v5794, %v6116
      %v6159 = vmul.f32 %v5799, %v6116
      %v6160 = vmul.f32 %v5804, %v6116
      %v6161 = vmul.f32 %v5809, %v6116
      %v6162 = vmul.f32 %v5814, %v6116
      %v6163 = vmul.f32 %v5819, %v6116
      %v6164 = vmul.f32 %v5824, %v6116
      %v6165 = vmul.f32 %v5829, %v6116
      %v6166 = vmul.f32 %v5834, %v6116
      %v6167 = vmul.f32 %v5839, %v6116
      %v6168 = vmul.f32 %v5844, %v6116
      %v6169 = vmul.f32 %v5849, %v6116
      %v6170 = vmul.f32 %v5854, %v6116
      %v6171 = vmul.f32 %v5859, %v6116
      %v6172 = vmul.f32 %v5864, %v6116
      %v6173 = vmul.f32 %v5869, %v6116
      %v6174 = vmul.f32 %v5874, %v6116
      %v6175 = vmul.f32 %v5879, %v6116
      %v6176 = vmul.f32 %v5884, %v6116
      %v6177 = vmul.f32 %v5889, %v6116
      %v6178 = vmul.f32 %v5894, %v6116
      %v6179 = vmul.f32 %v5899, %v6116
      %v6180 = vmul.f32 %v5904, %v6116
      %v6181 = vmul.f32 %v5909, %v6116
      %v6182 = vmul.f32 %v5914, %v6116
      %v6183 = vmul.f32 %v5919, %v6116
      %v6184 = vmul.f32 %v5924, %v6116
      %v6185 = vmul.f32 %v5929, %v6116
      %v6186 = vmul.f32 %v5934, %v6116
      %v6187 = vmul.f32 %v5939, %v6116
      %v6188 = vmul.f32 %v5944, %v6116
      %v6189 = vmul.f32 %v5949, %v6116
      %v6190 = vmul.f32 %v5954, %v6116
      %v6191 = vmul.f32 %v5959, %v6116
      %v6192 = vmul.f32 %v5964, %v6116
      %v6193 = vmul.f32 %v5969, %v6116
      %v6194 = vmul.f32 %v5974, %v6116
      %v6195 = vmul.f32 %v5979, %v6116
      %v6196 = vmul.f32 %v5984, %v6116
      %v6197 = vmul.f32 %v5989, %v6116
      %v6198 = vmul.f32 %v5994, %v6116
      %v6199 = vmul.f32 %v5999, %v6116
      %v6200 = vmul.f32 %v6004, %v6116
      %v6201 = vmul.f32 %v6009, %v6116
      %v6202 = vmul.f32 %v6014, %v6116
      %v6203 = vmul.f32 %v6019, %v6116
      %v6204 = vmul.f32 %v6024, %v6116
      %v6205 = vmul.f32 %v6029, %v6116
      %v6206 = vmul.f32 %v6034, %v6116
      %v6207 = vmul.f32 %v6039, %v6116
      %v6208 = vmul.f32 %v6044, %v6116
      %v6209 = vmul.f32 %v6049, %v6116
      %v6210 = vmul.f32 %v6054, %v6116
      %v6211 = vmul.f32 %v6059, %v6116
      %v6212 = vmul.f32 %v6064, %v6116
      %v6213 = vmul.f32 %v6069, %v6116
      %v6214 = vmul.f32 %v6074, %v6116
      %v6215 = vmul.f32 %v6079, %v6116
      %v6216 = vmul.f32 %v6084, %v6116
      %v6217 = vmul.f32 %v6089, %v6116
      %v6218 = vmul.f32 %v6094, %v6116
      %v6219 = vmul.f32 %v6099, %v6116
      %v6220 = vmul.f32 %v6104, %v6116
      %v6221 = vmul.f32 %v6109, %v6116
      %v6222 = vmul.f32 %v6114, %v6116
      %vm6329 = vcmask 1043456
      %v6330 = vrot.slane %v6117, 4
      %v6331 = vrot.slane %v6118, 4
      %v6332 = vsel %vm6329, %v6330, %v6331
      %v6333 = vrot.slane %v6119, 4
      %v6334 = vsel %vm6329, %v6331, %v6333
      %v6335 = vrot.slane %v6120, 4
      %v6336 = vsel %vm6329, %v6333, %v6335
      %v6337 = vrot.slane %v6121, 4
      %v6338 = vsel %vm6329, %v6335, %v6337
      %v6339 = vrot.slane %v6122, 4
      %v6340 = vsel %vm6329, %v6337, %v6339
      %v6341 = vrot.slane %v6123, 4
      %v6342 = vsel %vm6329, %v6339, %v6341
      %v6343 = vrot.slane %v6124, 4
      %v6344 = vsel %vm6329, %v6341, %v6343
      %v6345 = vrot.slane %v6125, 4
      %v6346 = vsel %vm6329, %v6343, %v6345
      %v6347 = vrot.slane %v6126, 4
      %v6348 = vsel %vm6329, %v6345, %v6347
      %v6349 = vrot.slane %v6127, 4
      %v6350 = vsel %vm6329, %v6347, %v6349
      %v6351 = vrot.slane %v6128, 4
      %v6352 = vsel %vm6329, %v6349, %v6351
      %v6353 = vrot.slane %v6129, 4
      %v6354 = vsel %vm6329, %v6351, %v6353
      %v6355 = vrot.slane %v6130, 4
      %v6356 = vsel %vm6329, %v6353, %v6355
      %v6357 = vrot.slane %v6131, 4
      %v6358 = vsel %vm6329, %v6355, %v6357
      %v6359 = vrot.slane %v6132, 4
      %v6360 = vsel %vm6329, %v6357, %v6359
      %v6361 = vrot.slane %v6133, 4
      %v6362 = vsel %vm6329, %v6359, %v6361
      %v6363 = vrot.slane %v6134, 4
      %v6364 = vsel %vm6329, %v6361, %v6363
      %v6365 = vrot.slane %v6135, 4
      %v6366 = vsel %vm6329, %v6363, %v6365
      %v6367 = vrot.slane %v6136, 4
      %v6368 = vsel %vm6329, %v6365, %v6367
      %v6369 = vrot.slane %v6137, 4
      %v6370 = vsel %vm6329, %v6367, %v6369
      %v6371 = vrot.slane %v6138, 4
      %v6372 = vsel %vm6329, %v6369, %v6371
      %v6373 = vrot.slane %v6139, 4
      %v6374 = vsel %vm6329, %v6371, %v6373
      %v6375 = vrot.slane %v6140, 4
      %v6376 = vsel %vm6329, %v6373, %v6375
      %v6377 = vrot.slane %v6141, 4
      %v6378 = vsel %vm6329, %v6375, %v6377
      %v6379 = vrot.slane %v6142, 4
      %v6380 = vsel %vm6329, %v6377, %v6379
      %v6381 = vrot.slane %v6143, 4
      %v6382 = vsel %vm6329, %v6379, %v6381
      %v6383 = vrot.slane %v6144, 4
      %v6384 = vsel %vm6329, %v6381, %v6383
      %v6385 = vrot.slane %v6145, 4
      %v6386 = vsel %vm6329, %v6383, %v6385
      %v6387 = vrot.slane %v6146, 4
      %v6388 = vsel %vm6329, %v6385, %v6387
      %v6389 = vrot.slane %v6147, 4
      %v6390 = vsel %vm6329, %v6387, %v6389
      %v6391 = vrot.slane %v6148, 4
      %v6392 = vsel %vm6329, %v6389, %v6391
      %v6393 = vrot.slane %v6149, 4
      %v6394 = vsel %vm6329, %v6391, %v6393
      %v6395 = vrot.slane %v6150, 4
      %v6396 = vsel %vm6329, %v6393, %v6395
      %v6397 = vrot.slane %v6151, 4
      %v6398 = vsel %vm6329, %v6395, %v6397
      %v6399 = vrot.slane %v6152, 4
      %v6400 = vsel %vm6329, %v6397, %v6399
      %v6401 = vrot.slane %v6153, 4
      %v6402 = vsel %vm6329, %v6399, %v6401
      %v6403 = vrot.slane %v6154, 4
      %v6404 = vsel %vm6329, %v6401, %v6403
      %v6405 = vrot.slane %v6155, 4
      %v6406 = vsel %vm6329, %v6403, %v6405
      %v6407 = vrot.slane %v6156, 4
      %v6408 = vsel %vm6329, %v6405, %v6407
      %v6409 = vrot.slane %v6157, 4
      %v6410 = vsel %vm6329, %v6407, %v6409
      %v6411 = vrot.slane %v6158, 4
      %v6412 = vsel %vm6329, %v6409, %v6411
      %v6413 = vrot.slane %v6159, 4
      %v6414 = vsel %vm6329, %v6411, %v6413
      %v6415 = vrot.slane %v6160, 4
      %v6416 = vsel %vm6329, %v6413, %v6415
      %v6417 = vrot.slane %v6161, 4
      %v6418 = vsel %vm6329, %v6415, %v6417
      %v6419 = vrot.slane %v6162, 4
      %v6420 = vsel %vm6329, %v6417, %v6419
      %v6421 = vrot.slane %v6163, 4
      %v6422 = vsel %vm6329, %v6419, %v6421
      %v6423 = vrot.slane %v6164, 4
      %v6424 = vsel %vm6329, %v6421, %v6423
      %v6425 = vrot.slane %v6165, 4
      %v6426 = vsel %vm6329, %v6423, %v6425
      %v6427 = vrot.slane %v6166, 4
      %v6428 = vsel %vm6329, %v6425, %v6427
      %v6429 = vrot.slane %v6167, 4
      %v6430 = vsel %vm6329, %v6427, %v6429
      %v6431 = vrot.slane %v6168, 4
      %v6432 = vsel %vm6329, %v6429, %v6431
      %v6433 = vrot.slane %v6169, 4
      %v6434 = vsel %vm6329, %v6431, %v6433
      %v6435 = vrot.slane %v6170, 4
      %v6436 = vsel %vm6329, %v6433, %v6435
      %v6437 = vrot.slane %v6171, 4
      %v6438 = vsel %vm6329, %v6435, %v6437
      %v6439 = vrot.slane %v6172, 4
      %v6440 = vsel %vm6329, %v6437, %v6439
      %v6441 = vrot.slane %v6173, 4
      %v6442 = vsel %vm6329, %v6439, %v6441
      %v6443 = vrot.slane %v6174, 4
      %v6444 = vsel %vm6329, %v6441, %v6443
      %v6445 = vrot.slane %v6175, 4
      %v6446 = vsel %vm6329, %v6443, %v6445
      %v6447 = vrot.slane %v6176, 4
      %v6448 = vsel %vm6329, %v6445, %v6447
      %v6449 = vrot.slane %v6177, 4
      %v6450 = vsel %vm6329, %v6447, %v6449
      %v6451 = vrot.slane %v6178, 4
      %v6452 = vsel %vm6329, %v6449, %v6451
      %v6453 = vrot.slane %v6179, 4
      %v6454 = vsel %vm6329, %v6451, %v6453
      %v6455 = vrot.slane %v6180, 4
      %v6456 = vsel %vm6329, %v6453, %v6455
      %v6457 = vrot.slane %v6181, 4
      %v6458 = vsel %vm6329, %v6455, %v6457
      %v6459 = vrot.slane %v6182, 4
      %v6460 = vsel %vm6329, %v6457, %v6459
      %v6461 = vrot.slane %v6183, 4
      %v6462 = vsel %vm6329, %v6459, %v6461
      %v6463 = vrot.slane %v6184, 4
      %v6464 = vsel %vm6329, %v6461, %v6463
      %v6465 = vrot.slane %v6185, 4
      %v6466 = vsel %vm6329, %v6463, %v6465
      %v6467 = vrot.slane %v6186, 4
      %v6468 = vsel %vm6329, %v6465, %v6467
      %v6469 = vrot.slane %v6187, 4
      %v6470 = vsel %vm6329, %v6467, %v6469
      %v6471 = vrot.slane %v6188, 4
      %v6472 = vsel %vm6329, %v6469, %v6471
      %v6473 = vrot.slane %v6189, 4
      %v6474 = vsel %vm6329, %v6471, %v6473
      %v6475 = vrot.slane %v6190, 4
      %v6476 = vsel %vm6329, %v6473, %v6475
      %v6477 = vrot.slane %v6191, 4
      %v6478 = vsel %vm6329, %v6475, %v6477
      %v6479 = vrot.slane %v6192, 4
      %v6480 = vsel %vm6329, %v6477, %v6479
      %v6481 = vrot.slane %v6193, 4
      %v6482 = vsel %vm6329, %v6479, %v6481
      %v6483 = vrot.slane %v6194, 4
      %v6484 = vsel %vm6329, %v6481, %v6483
      %v6485 = vrot.slane %v6195, 4
      %v6486 = vsel %vm6329, %v6483, %v6485
      %v6487 = vrot.slane %v6196, 4
      %v6488 = vsel %vm6329, %v6485, %v6487
      %v6489 = vrot.slane %v6197, 4
      %v6490 = vsel %vm6329, %v6487, %v6489
      %v6491 = vrot.slane %v6198, 4
      %v6492 = vsel %vm6329, %v6489, %v6491
      %v6493 = vrot.slane %v6199, 4
      %v6494 = vsel %vm6329, %v6491, %v6493
      %v6495 = vrot.slane %v6200, 4
      %v6496 = vsel %vm6329, %v6493, %v6495
      %v6497 = vrot.slane %v6201, 4
      %v6498 = vsel %vm6329, %v6495, %v6497
      %v6499 = vrot.slane %v6202, 4
      %v6500 = vsel %vm6329, %v6497, %v6499
      %v6501 = vrot.slane %v6203, 4
      %v6502 = vsel %vm6329, %v6499, %v6501
      %v6503 = vrot.slane %v6204, 4
      %v6504 = vsel %vm6329, %v6501, %v6503
      %v6505 = vrot.slane %v6205, 4
      %v6506 = vsel %vm6329, %v6503, %v6505
      %v6507 = vrot.slane %v6206, 4
      %v6508 = vsel %vm6329, %v6505, %v6507
      %v6509 = vrot.slane %v6207, 4
      %v6510 = vsel %vm6329, %v6507, %v6509
      %v6511 = vrot.slane %v6208, 4
      %v6512 = vsel %vm6329, %v6509, %v6511
      %v6513 = vrot.slane %v6209, 4
      %v6514 = vsel %vm6329, %v6511, %v6513
      %v6515 = vrot.slane %v6210, 4
      %v6516 = vsel %vm6329, %v6513, %v6515
      %v6517 = vrot.slane %v6211, 4
      %v6518 = vsel %vm6329, %v6515, %v6517
      %v6519 = vrot.slane %v6212, 4
      %v6520 = vsel %vm6329, %v6517, %v6519
      %v6521 = vrot.slane %v6213, 4
      %v6522 = vsel %vm6329, %v6519, %v6521
      %v6523 = vrot.slane %v6214, 4
      %v6524 = vsel %vm6329, %v6521, %v6523
      %v6525 = vrot.slane %v6215, 4
      %v6526 = vsel %vm6329, %v6523, %v6525
      %v6527 = vrot.slane %v6216, 4
      %v6528 = vsel %vm6329, %v6525, %v6527
      %v6529 = vrot.slane %v6217, 4
      %v6530 = vsel %vm6329, %v6527, %v6529
      %v6531 = vrot.slane %v6218, 4
      %v6532 = vsel %vm6329, %v6529, %v6531
      %v6533 = vrot.slane %v6219, 4
      %v6534 = vsel %vm6329, %v6531, %v6533
      %v6535 = vrot.slane %v6220, 4
      %v6536 = vsel %vm6329, %v6533, %v6535
      %v6537 = vrot.slane %v6221, 4
      %v6538 = vsel %vm6329, %v6535, %v6537
      %v6539 = vrot.slane %v6222, 4
      %v6540 = vsel %vm6329, %v6537, %v6539
      %v6646 = vadd.f32 %v5267, %v6332
      %v6647 = vadd.f32 %v5268, %v6334
      %v6648 = vadd.f32 %v5269, %v6336
      %v6649 = vadd.f32 %v5270, %v6338
      %v6650 = vadd.f32 %v5271, %v6340
      %v6651 = vadd.f32 %v5272, %v6342
      %v6652 = vadd.f32 %v5273, %v6344
      %v6653 = vadd.f32 %v5274, %v6346
      %v6654 = vadd.f32 %v5275, %v6348
      %v6655 = vadd.f32 %v5276, %v6350
      %v6656 = vadd.f32 %v5277, %v6352
      %v6657 = vadd.f32 %v5278, %v6354
      %v6658 = vadd.f32 %v5279, %v6356
      %v6659 = vadd.f32 %v5280, %v6358
      %v6660 = vadd.f32 %v5281, %v6360
      %v6661 = vadd.f32 %v5282, %v6362
      %v6662 = vadd.f32 %v5283, %v6364
      %v6663 = vadd.f32 %v5284, %v6366
      %v6664 = vadd.f32 %v5285, %v6368
      %v6665 = vadd.f32 %v5286, %v6370
      %v6666 = vadd.f32 %v5287, %v6372
      %v6667 = vadd.f32 %v5288, %v6374
      %v6668 = vadd.f32 %v5289, %v6376
      %v6669 = vadd.f32 %v5290, %v6378
      %v6670 = vadd.f32 %v5291, %v6380
      %v6671 = vadd.f32 %v5292, %v6382
      %v6672 = vadd.f32 %v5293, %v6384
      %v6673 = vadd.f32 %v5294, %v6386
      %v6674 = vadd.f32 %v5295, %v6388
      %v6675 = vadd.f32 %v5296, %v6390
      %v6676 = vadd.f32 %v5297, %v6392
      %v6677 = vadd.f32 %v5298, %v6394
      %v6678 = vadd.f32 %v5299, %v6396
      %v6679 = vadd.f32 %v5300, %v6398
      %v6680 = vadd.f32 %v5301, %v6400
      %v6681 = vadd.f32 %v5302, %v6402
      %v6682 = vadd.f32 %v5303, %v6404
      %v6683 = vadd.f32 %v5304, %v6406
      %v6684 = vadd.f32 %v5305, %v6408
      %v6685 = vadd.f32 %v5306, %v6410
      %v6686 = vadd.f32 %v5307, %v6412
      %v6687 = vadd.f32 %v5308, %v6414
      %v6688 = vadd.f32 %v5309, %v6416
      %v6689 = vadd.f32 %v5310, %v6418
      %v6690 = vadd.f32 %v5311, %v6420
      %v6691 = vadd.f32 %v5312, %v6422
      %v6692 = vadd.f32 %v5313, %v6424
      %v6693 = vadd.f32 %v5314, %v6426
      %v6694 = vadd.f32 %v5315, %v6428
      %v6695 = vadd.f32 %v5316, %v6430
      %v6696 = vadd.f32 %v5317, %v6432
      %v6697 = vadd.f32 %v5318, %v6434
      %v6698 = vadd.f32 %v5319, %v6436
      %v6699 = vadd.f32 %v5320, %v6438
      %v6700 = vadd.f32 %v5321, %v6440
      %v6701 = vadd.f32 %v5322, %v6442
      %v6702 = vadd.f32 %v5323, %v6444
      %v6703 = vadd.f32 %v5324, %v6446
      %v6704 = vadd.f32 %v5325, %v6448
      %v6705 = vadd.f32 %v5326, %v6450
      %v6706 = vadd.f32 %v5327, %v6452
      %v6707 = vadd.f32 %v5328, %v6454
      %v6708 = vadd.f32 %v5329, %v6456
      %v6709 = vadd.f32 %v5330, %v6458
      %v6710 = vadd.f32 %v5331, %v6460
      %v6711 = vadd.f32 %v5332, %v6462
      %v6712 = vadd.f32 %v5333, %v6464
      %v6713 = vadd.f32 %v5334, %v6466
      %v6714 = vadd.f32 %v5335, %v6468
      %v6715 = vadd.f32 %v5336, %v6470
      %v6716 = vadd.f32 %v5337, %v6472
      %v6717 = vadd.f32 %v5338, %v6474
      %v6718 = vadd.f32 %v5339, %v6476
      %v6719 = vadd.f32 %v5340, %v6478
      %v6720 = vadd.f32 %v5341, %v6480
      %v6721 = vadd.f32 %v5342, %v6482
      %v6722 = vadd.f32 %v5343, %v6484
      %v6723 = vadd.f32 %v5344, %v6486
      %v6724 = vadd.f32 %v5345, %v6488
      %v6725 = vadd.f32 %v5346, %v6490
      %v6726 = vadd.f32 %v5347, %v6492
      %v6727 = vadd.f32 %v5348, %v6494
      %v6728 = vadd.f32 %v5349, %v6496
      %v6729 = vadd.f32 %v5350, %v6498
      %v6730 = vadd.f32 %v5351, %v6500
      %v6731 = vadd.f32 %v5352, %v6502
      %v6732 = vadd.f32 %v5353, %v6504
      %v6733 = vadd.f32 %v5354, %v6506
      %v6734 = vadd.f32 %v5355, %v6508
      %v6735 = vadd.f32 %v5356, %v6510
      %v6736 = vadd.f32 %v5357, %v6512
      %v6737 = vadd.f32 %v5358, %v6514
      %v6738 = vadd.f32 %v5359, %v6516
      %v6739 = vadd.f32 %v5360, %v6518
      %v6740 = vadd.f32 %v5361, %v6520
      %v6741 = vadd.f32 %v5362, %v6522
      %v6742 = vadd.f32 %v5363, %v6524
      %v6743 = vadd.f32 %v5364, %v6526
      %v6744 = vadd.f32 %v5365, %v6528
      %v6745 = vadd.f32 %v5366, %v6530
      %v6746 = vadd.f32 %v5367, %v6532
      %v6747 = vadd.f32 %v5368, %v6534
      %v6748 = vadd.f32 %v5369, %v6536
      %v6749 = vadd.f32 %v5370, %v6538
      %v6750 = vadd.f32 %v5371, %v6540
      %v6751 = vld [vmem:[%s165 + $0x1c0] sm:$0x7]
      %v6752 = vunpack.c.l.bf16 %v6751
      %6754 = vset.pattern.permute.xlu0 0
      %6755 = vperm.xlu0 %6754, %v6752
      %v6756 = vpop.permute.xlu0 %6755
      %v6758 = vperm.slane %v5585, 7
      %v6759 = vmul.f32 %v5589, %v6758
      %v6760 = vmul.f32 %v5594, %v6758
      %v6761 = vmul.f32 %v5599, %v6758
      %v6762 = vmul.f32 %v5604, %v6758
      %v6763 = vmul.f32 %v5609, %v6758
      %v6764 = vmul.f32 %v5614, %v6758
      %v6765 = vmul.f32 %v5619, %v6758
      %v6766 = vmul.f32 %v5624, %v6758
      %v6767 = vmul.f32 %v5629, %v6758
      %v6768 = vmul.f32 %v5634, %v6758
      %v6769 = vmul.f32 %v5639, %v6758
      %v6770 = vmul.f32 %v5644, %v6758
      %v6771 = vmul.f32 %v5649, %v6758
      %v6772 = vmul.f32 %v5654, %v6758
      %v6773 = vmul.f32 %v5659, %v6758
      %v6774 = vmul.f32 %v5664, %v6758
      %v6775 = vmul.f32 %v5669, %v6758
      %v6776 = vmul.f32 %v5674, %v6758
      %v6777 = vmul.f32 %v5679, %v6758
      %v6778 = vmul.f32 %v5684, %v6758
      %v6779 = vmul.f32 %v5689, %v6758
      %v6780 = vmul.f32 %v5694, %v6758
      %v6781 = vmul.f32 %v5699, %v6758
      %v6782 = vmul.f32 %v5704, %v6758
      %v6783 = vmul.f32 %v5709, %v6758
      %v6784 = vmul.f32 %v5714, %v6758
      %v6785 = vmul.f32 %v5719, %v6758
      %v6786 = vmul.f32 %v5724, %v6758
      %v6787 = vmul.f32 %v5729, %v6758
      %v6788 = vmul.f32 %v5734, %v6758
      %v6789 = vmul.f32 %v5739, %v6758
      %v6790 = vmul.f32 %v5744, %v6758
      %v6791 = vmul.f32 %v5749, %v6758
      %v6792 = vmul.f32 %v5754, %v6758
      %v6793 = vmul.f32 %v5759, %v6758
      %v6794 = vmul.f32 %v5764, %v6758
      %v6795 = vmul.f32 %v5769, %v6758
      %v6796 = vmul.f32 %v5774, %v6758
      %v6797 = vmul.f32 %v5779, %v6758
      %v6798 = vmul.f32 %v5784, %v6758
      %v6799 = vmul.f32 %v5789, %v6758
      %v6800 = vmul.f32 %v5794, %v6758
      %v6801 = vmul.f32 %v5799, %v6758
      %v6802 = vmul.f32 %v5804, %v6758
      %v6803 = vmul.f32 %v5809, %v6758
      %v6804 = vmul.f32 %v5814, %v6758
      %v6805 = vmul.f32 %v5819, %v6758
      %v6806 = vmul.f32 %v5824, %v6758
      %v6807 = vmul.f32 %v5829, %v6758
      %v6808 = vmul.f32 %v5834, %v6758
      %v6809 = vmul.f32 %v5839, %v6758
      %v6810 = vmul.f32 %v5844, %v6758
      %v6811 = vmul.f32 %v5849, %v6758
      %v6812 = vmul.f32 %v5854, %v6758
      %v6813 = vmul.f32 %v5859, %v6758
      %v6814 = vmul.f32 %v5864, %v6758
      %v6815 = vmul.f32 %v5869, %v6758
      %v6816 = vmul.f32 %v5874, %v6758
      %v6817 = vmul.f32 %v5879, %v6758
      %v6818 = vmul.f32 %v5884, %v6758
      %v6819 = vmul.f32 %v5889, %v6758
      %v6820 = vmul.f32 %v5894, %v6758
      %v6821 = vmul.f32 %v5899, %v6758
      %v6822 = vmul.f32 %v5904, %v6758
      %v6823 = vmul.f32 %v5909, %v6758
      %v6824 = vmul.f32 %v5914, %v6758
      %v6825 = vmul.f32 %v5919, %v6758
      %v6826 = vmul.f32 %v5924, %v6758
      %v6827 = vmul.f32 %v5929, %v6758
      %v6828 = vmul.f32 %v5934, %v6758
      %v6829 = vmul.f32 %v5939, %v6758
      %v6830 = vmul.f32 %v5944, %v6758
      %v6831 = vmul.f32 %v5949, %v6758
      %v6832 = vmul.f32 %v5954, %v6758
      %v6833 = vmul.f32 %v5959, %v6758
      %v6834 = vmul.f32 %v5964, %v6758
      %v6835 = vmul.f32 %v5969, %v6758
      %v6836 = vmul.f32 %v5974, %v6758
      %v6837 = vmul.f32 %v5979, %v6758
      %v6838 = vmul.f32 %v5984, %v6758
      %v6839 = vmul.f32 %v5989, %v6758
      %v6840 = vmul.f32 %v5994, %v6758
      %v6841 = vmul.f32 %v5999, %v6758
      %v6842 = vmul.f32 %v6004, %v6758
      %v6843 = vmul.f32 %v6009, %v6758
      %v6844 = vmul.f32 %v6014, %v6758
      %v6845 = vmul.f32 %v6019, %v6758
      %v6846 = vmul.f32 %v6024, %v6758
      %v6847 = vmul.f32 %v6029, %v6758
      %v6848 = vmul.f32 %v6034, %v6758
      %v6849 = vmul.f32 %v6039, %v6758
      %v6850 = vmul.f32 %v6044, %v6758
      %v6851 = vmul.f32 %v6049, %v6758
      %v6852 = vmul.f32 %v6054, %v6758
      %v6853 = vmul.f32 %v6059, %v6758
      %v6854 = vmul.f32 %v6064, %v6758
      %v6855 = vmul.f32 %v6069, %v6758
      %v6856 = vmul.f32 %v6074, %v6758
      %v6857 = vmul.f32 %v6079, %v6758
      %v6858 = vmul.f32 %v6084, %v6758
      %v6859 = vmul.f32 %v6089, %v6758
      %v6860 = vmul.f32 %v6094, %v6758
      %v6861 = vmul.f32 %v6099, %v6758
      %v6862 = vmul.f32 %v6104, %v6758
      %v6863 = vmul.f32 %v6109, %v6758
      %v6864 = vmul.f32 %v6756, %v6758
      %vm6971 = vcmask 1042432
      %v6972 = vrot.slane %v6759, 5
      %v6973 = vrot.slane %v6760, 5
      %v6974 = vsel %vm6971, %v6972, %v6973
      %v6975 = vrot.slane %v6761, 5
      %v6976 = vsel %vm6971, %v6973, %v6975
      %v6977 = vrot.slane %v6762, 5
      %v6978 = vsel %vm6971, %v6975, %v6977
      %v6979 = vrot.slane %v6763, 5
      %v6980 = vsel %vm6971, %v6977, %v6979
      %v6981 = vrot.slane %v6764, 5
      %v6982 = vsel %vm6971, %v6979, %v6981
      %v6983 = vrot.slane %v6765, 5
      %v6984 = vsel %vm6971, %v6981, %v6983
      %v6985 = vrot.slane %v6766, 5
      %v6986 = vsel %vm6971, %v6983, %v6985
      %v6987 = vrot.slane %v6767, 5
      %v6988 = vsel %vm6971, %v6985, %v6987
      %v6989 = vrot.slane %v6768, 5
      %v6990 = vsel %vm6971, %v6987, %v6989
      %v6991 = vrot.slane %v6769, 5
      %v6992 = vsel %vm6971, %v6989, %v6991
      %v6993 = vrot.slane %v6770, 5
      %v6994 = vsel %vm6971, %v6991, %v6993
      %v6995 = vrot.slane %v6771, 5
      %v6996 = vsel %vm6971, %v6993, %v6995
      %v6997 = vrot.slane %v6772, 5
      %v6998 = vsel %vm6971, %v6995, %v6997
      %v6999 = vrot.slane %v6773, 5
      %v7000 = vsel %vm6971, %v6997, %v6999
      %v7001 = vrot.slane %v6774, 5
      %v7002 = vsel %vm6971, %v6999, %v7001
      %v7003 = vrot.slane %v6775, 5
      %v7004 = vsel %vm6971, %v7001, %v7003
      %v7005 = vrot.slane %v6776, 5
      %v7006 = vsel %vm6971, %v7003, %v7005
      %v7007 = vrot.slane %v6777, 5
      %v7008 = vsel %vm6971, %v7005, %v7007
      %v7009 = vrot.slane %v6778, 5
      %v7010 = vsel %vm6971, %v7007, %v7009
      %v7011 = vrot.slane %v6779, 5
      %v7012 = vsel %vm6971, %v7009, %v7011
      %v7013 = vrot.slane %v6780, 5
      %v7014 = vsel %vm6971, %v7011, %v7013
      %v7015 = vrot.slane %v6781, 5
      %v7016 = vsel %vm6971, %v7013, %v7015
      %v7017 = vrot.slane %v6782, 5
      %v7018 = vsel %vm6971, %v7015, %v7017
      %v7019 = vrot.slane %v6783, 5
      %v7020 = vsel %vm6971, %v7017, %v7019
      %v7021 = vrot.slane %v6784, 5
      %v7022 = vsel %vm6971, %v7019, %v7021
      %v7023 = vrot.slane %v6785, 5
      %v7024 = vsel %vm6971, %v7021, %v7023
      %v7025 = vrot.slane %v6786, 5
      %v7026 = vsel %vm6971, %v7023, %v7025
      %v7027 = vrot.slane %v6787, 5
      %v7028 = vsel %vm6971, %v7025, %v7027
      %v7029 = vrot.slane %v6788, 5
      %v7030 = vsel %vm6971, %v7027, %v7029
      %v7031 = vrot.slane %v6789, 5
      %v7032 = vsel %vm6971, %v7029, %v7031
      %v7033 = vrot.slane %v6790, 5
      %v7034 = vsel %vm6971, %v7031, %v7033
      %v7035 = vrot.slane %v6791, 5
      %v7036 = vsel %vm6971, %v7033, %v7035
      %v7037 = vrot.slane %v6792, 5
      %v7038 = vsel %vm6971, %v7035, %v7037
      %v7039 = vrot.slane %v6793, 5
      %v7040 = vsel %vm6971, %v7037, %v7039
      %v7041 = vrot.slane %v6794, 5
      %v7042 = vsel %vm6971, %v7039, %v7041
      %v7043 = vrot.slane %v6795, 5
      %v7044 = vsel %vm6971, %v7041, %v7043
      %v7045 = vrot.slane %v6796, 5
      %v7046 = vsel %vm6971, %v7043, %v7045
      %v7047 = vrot.slane %v6797, 5
      %v7048 = vsel %vm6971, %v7045, %v7047
      %v7049 = vrot.slane %v6798, 5
      %v7050 = vsel %vm6971, %v7047, %v7049
      %v7051 = vrot.slane %v6799, 5
      %v7052 = vsel %vm6971, %v7049, %v7051
      %v7053 = vrot.slane %v6800, 5
      %v7054 = vsel %vm6971, %v7051, %v7053
      %v7055 = vrot.slane %v6801, 5
      %v7056 = vsel %vm6971, %v7053, %v7055
      %v7057 = vrot.slane %v6802, 5
      %v7058 = vsel %vm6971, %v7055, %v7057
      %v7059 = vrot.slane %v6803, 5
      %v7060 = vsel %vm6971, %v7057, %v7059
      %v7061 = vrot.slane %v6804, 5
      %v7062 = vsel %vm6971, %v7059, %v7061
      %v7063 = vrot.slane %v6805, 5
      %v7064 = vsel %vm6971, %v7061, %v7063
      %v7065 = vrot.slane %v6806, 5
      %v7066 = vsel %vm6971, %v7063, %v7065
      %v7067 = vrot.slane %v6807, 5
      %v7068 = vsel %vm6971, %v7065, %v7067
      %v7069 = vrot.slane %v6808, 5
      %v7070 = vsel %vm6971, %v7067, %v7069
      %v7071 = vrot.slane %v6809, 5
      %v7072 = vsel %vm6971, %v7069, %v7071
      %v7073 = vrot.slane %v6810, 5
      %v7074 = vsel %vm6971, %v7071, %v7073
      %v7075 = vrot.slane %v6811, 5
      %v7076 = vsel %vm6971, %v7073, %v7075
      %v7077 = vrot.slane %v6812, 5
      %v7078 = vsel %vm6971, %v7075, %v7077
      %v7079 = vrot.slane %v6813, 5
      %v7080 = vsel %vm6971, %v7077, %v7079
      %v7081 = vrot.slane %v6814, 5
      %v7082 = vsel %vm6971, %v7079, %v7081
      %v7083 = vrot.slane %v6815, 5
      %v7084 = vsel %vm6971, %v7081, %v7083
      %v7085 = vrot.slane %v6816, 5
      %v7086 = vsel %vm6971, %v7083, %v7085
      %v7087 = vrot.slane %v6817, 5
      %v7088 = vsel %vm6971, %v7085, %v7087
      %v7089 = vrot.slane %v6818, 5
      %v7090 = vsel %vm6971, %v7087, %v7089
      %v7091 = vrot.slane %v6819, 5
      %v7092 = vsel %vm6971, %v7089, %v7091
      %v7093 = vrot.slane %v6820, 5
      %v7094 = vsel %vm6971, %v7091, %v7093
      %v7095 = vrot.slane %v6821, 5
      %v7096 = vsel %vm6971, %v7093, %v7095
      %v7097 = vrot.slane %v6822, 5
      %v7098 = vsel %vm6971, %v7095, %v7097
      %v7099 = vrot.slane %v6823, 5
      %v7100 = vsel %vm6971, %v7097, %v7099
      %v7101 = vrot.slane %v6824, 5
      %v7102 = vsel %vm6971, %v7099, %v7101
      %v7103 = vrot.slane %v6825, 5
      %v7104 = vsel %vm6971, %v7101, %v7103
      %v7105 = vrot.slane %v6826, 5
      %v7106 = vsel %vm6971, %v7103, %v7105
      %v7107 = vrot.slane %v6827, 5
      %v7108 = vsel %vm6971, %v7105, %v7107
      %v7109 = vrot.slane %v6828, 5
      %v7110 = vsel %vm6971, %v7107, %v7109
      %v7111 = vrot.slane %v6829, 5
      %v7112 = vsel %vm6971, %v7109, %v7111
      %v7113 = vrot.slane %v6830, 5
      %v7114 = vsel %vm6971, %v7111, %v7113
      %v7115 = vrot.slane %v6831, 5
      %v7116 = vsel %vm6971, %v7113, %v7115
      %v7117 = vrot.slane %v6832, 5
      %v7118 = vsel %vm6971, %v7115, %v7117
      %v7119 = vrot.slane %v6833, 5
      %v7120 = vsel %vm6971, %v7117, %v7119
      %v7121 = vrot.slane %v6834, 5
      %v7122 = vsel %vm6971, %v7119, %v7121
      %v7123 = vrot.slane %v6835, 5
      %v7124 = vsel %vm6971, %v7121, %v7123
      %v7125 = vrot.slane %v6836, 5
      %v7126 = vsel %vm6971, %v7123, %v7125
      %v7127 = vrot.slane %v6837, 5
      %v7128 = vsel %vm6971, %v7125, %v7127
      %v7129 = vrot.slane %v6838, 5
      %v7130 = vsel %vm6971, %v7127, %v7129
      %v7131 = vrot.slane %v6839, 5
      %v7132 = vsel %vm6971, %v7129, %v7131
      %v7133 = vrot.slane %v6840, 5
      %v7134 = vsel %vm6971, %v7131, %v7133
      %v7135 = vrot.slane %v6841, 5
      %v7136 = vsel %vm6971, %v7133, %v7135
      %v7137 = vrot.slane %v6842, 5
      %v7138 = vsel %vm6971, %v7135, %v7137
      %v7139 = vrot.slane %v6843, 5
      %v7140 = vsel %vm6971, %v7137, %v7139
      %v7141 = vrot.slane %v6844, 5
      %v7142 = vsel %vm6971, %v7139, %v7141
      %v7143 = vrot.slane %v6845, 5
      %v7144 = vsel %vm6971, %v7141, %v7143
      %v7145 = vrot.slane %v6846, 5
      %v7146 = vsel %vm6971, %v7143, %v7145
      %v7147 = vrot.slane %v6847, 5
      %v7148 = vsel %vm6971, %v7145, %v7147
      %v7149 = vrot.slane %v6848, 5
      %v7150 = vsel %vm6971, %v7147, %v7149
      %v7151 = vrot.slane %v6849, 5
      %v7152 = vsel %vm6971, %v7149, %v7151
      %v7153 = vrot.slane %v6850, 5
      %v7154 = vsel %vm6971, %v7151, %v7153
      %v7155 = vrot.slane %v6851, 5
      %v7156 = vsel %vm6971, %v7153, %v7155
      %v7157 = vrot.slane %v6852, 5
      %v7158 = vsel %vm6971, %v7155, %v7157
      %v7159 = vrot.slane %v6853, 5
      %v7160 = vsel %vm6971, %v7157, %v7159
      %v7161 = vrot.slane %v6854, 5
      %v7162 = vsel %vm6971, %v7159, %v7161
      %v7163 = vrot.slane %v6855, 5
      %v7164 = vsel %vm6971, %v7161, %v7163
      %v7165 = vrot.slane %v6856, 5
      %v7166 = vsel %vm6971, %v7163, %v7165
      %v7167 = vrot.slane %v6857, 5
      %v7168 = vsel %vm6971, %v7165, %v7167
      %v7169 = vrot.slane %v6858, 5
      %v7170 = vsel %vm6971, %v7167, %v7169
      %v7171 = vrot.slane %v6859, 5
      %v7172 = vsel %vm6971, %v7169, %v7171
      %v7173 = vrot.slane %v6860, 5
      %v7174 = vsel %vm6971, %v7171, %v7173
      %v7175 = vrot.slane %v6861, 5
      %v7176 = vsel %vm6971, %v7173, %v7175
      %v7177 = vrot.slane %v6862, 5
      %v7178 = vsel %vm6971, %v7175, %v7177
      %v7179 = vrot.slane %v6863, 5
      %v7180 = vsel %vm6971, %v7177, %v7179
      %v7181 = vrot.slane %v6864, 5
      %v7182 = vsel %vm6971, %v7179, %v7181
      %v7288 = vadd.f32 %v6646, %v6974
      %v7289 = vadd.f32 %v6647, %v6976
      %v7290 = vadd.f32 %v6648, %v6978
      %v7291 = vadd.f32 %v6649, %v6980
      %v7292 = vadd.f32 %v6650, %v6982
      %v7293 = vadd.f32 %v6651, %v6984
      %v7294 = vadd.f32 %v6652, %v6986
      %v7295 = vadd.f32 %v6653, %v6988
      %v7296 = vadd.f32 %v6654, %v6990
      %v7297 = vadd.f32 %v6655, %v6992
      %v7298 = vadd.f32 %v6656, %v6994
      %v7299 = vadd.f32 %v6657, %v6996
      %v7300 = vadd.f32 %v6658, %v6998
      %v7301 = vadd.f32 %v6659, %v7000
      %v7302 = vadd.f32 %v6660, %v7002
      %v7303 = vadd.f32 %v6661, %v7004
      %v7304 = vadd.f32 %v6662, %v7006
      %v7305 = vadd.f32 %v6663, %v7008
      %v7306 = vadd.f32 %v6664, %v7010
      %v7307 = vadd.f32 %v6665, %v7012
      %v7308 = vadd.f32 %v6666, %v7014
      %v7309 = vadd.f32 %v6667, %v7016
      %v7310 = vadd.f32 %v6668, %v7018
      %v7311 = vadd.f32 %v6669, %v7020
      %v7312 = vadd.f32 %v6670, %v7022
      %v7313 = vadd.f32 %v6671, %v7024
      %v7314 = vadd.f32 %v6672, %v7026
      %v7315 = vadd.f32 %v6673, %v7028
      %v7316 = vadd.f32 %v6674, %v7030
      %v7317 = vadd.f32 %v6675, %v7032
      %v7318 = vadd.f32 %v6676, %v7034
      %v7319 = vadd.f32 %v6677, %v7036
      %v7320 = vadd.f32 %v6678, %v7038
      %v7321 = vadd.f32 %v6679, %v7040
      %v7322 = vadd.f32 %v6680, %v7042
      %v7323 = vadd.f32 %v6681, %v7044
      %v7324 = vadd.f32 %v6682, %v7046
      %v7325 = vadd.f32 %v6683, %v7048
      %v7326 = vadd.f32 %v6684, %v7050
      %v7327 = vadd.f32 %v6685, %v7052
      %v7328 = vadd.f32 %v6686, %v7054
      %v7329 = vadd.f32 %v6687, %v7056
      %v7330 = vadd.f32 %v6688, %v7058
      %v7331 = vadd.f32 %v6689, %v7060
      %v7332 = vadd.f32 %v6690, %v7062
      %v7333 = vadd.f32 %v6691, %v7064
      %v7334 = vadd.f32 %v6692, %v7066
      %v7335 = vadd.f32 %v6693, %v7068
      %v7336 = vadd.f32 %v6694, %v7070
      %v7337 = vadd.f32 %v6695, %v7072
      %v7338 = vadd.f32 %v6696, %v7074
      %v7339 = vadd.f32 %v6697, %v7076
      %v7340 = vadd.f32 %v6698, %v7078
      %v7341 = vadd.f32 %v6699, %v7080
      %v7342 = vadd.f32 %v6700, %v7082
      %v7343 = vadd.f32 %v6701, %v7084
      %v7344 = vadd.f32 %v6702, %v7086
      %v7345 = vadd.f32 %v6703, %v7088
      %v7346 = vadd.f32 %v6704, %v7090
      %v7347 = vadd.f32 %v6705, %v7092
      %v7348 = vadd.f32 %v6706, %v7094
      %v7349 = vadd.f32 %v6707, %v7096
      %v7350 = vadd.f32 %v6708, %v7098
      %v7351 = vadd.f32 %v6709, %v7100
      %v7352 = vadd.f32 %v6710, %v7102
      %v7353 = vadd.f32 %v6711, %v7104
      %v7354 = vadd.f32 %v6712, %v7106
      %v7355 = vadd.f32 %v6713, %v7108
      %v7356 = vadd.f32 %v6714, %v7110
      %v7357 = vadd.f32 %v6715, %v7112
      %v7358 = vadd.f32 %v6716, %v7114
      %v7359 = vadd.f32 %v6717, %v7116
      %v7360 = vadd.f32 %v6718, %v7118
      %v7361 = vadd.f32 %v6719, %v7120
      %v7362 = vadd.f32 %v6720, %v7122
      %v7363 = vadd.f32 %v6721, %v7124
      %v7364 = vadd.f32 %v6722, %v7126
      %v7365 = vadd.f32 %v6723, %v7128
      %v7366 = vadd.f32 %v6724, %v7130
      %v7367 = vadd.f32 %v6725, %v7132
      %v7368 = vadd.f32 %v6726, %v7134
      %v7369 = vadd.f32 %v6727, %v7136
      %v7370 = vadd.f32 %v6728, %v7138
      %v7371 = vadd.f32 %v6729, %v7140
      %v7372 = vadd.f32 %v6730, %v7142
      %v7373 = vadd.f32 %v6731, %v7144
      %v7374 = vadd.f32 %v6732, %v7146
      %v7375 = vadd.f32 %v6733, %v7148
      %v7376 = vadd.f32 %v6734, %v7150
      %v7377 = vadd.f32 %v6735, %v7152
      %v7378 = vadd.f32 %v6736, %v7154
      %v7379 = vadd.f32 %v6737, %v7156
      %v7380 = vadd.f32 %v6738, %v7158
      %v7381 = vadd.f32 %v6739, %v7160
      %v7382 = vadd.f32 %v6740, %v7162
      %v7383 = vadd.f32 %v6741, %v7164
      %v7384 = vadd.f32 %v6742, %v7166
      %v7385 = vadd.f32 %v6743, %v7168
      %v7386 = vadd.f32 %v6744, %v7170
      %v7387 = vadd.f32 %v6745, %v7172
      %v7388 = vadd.f32 %v6746, %v7174
      %v7389 = vadd.f32 %v6747, %v7176
      %v7390 = vadd.f32 %v6748, %v7178
      %v7391 = vadd.f32 %v6749, %v7180
      %v7392 = vadd.f32 %v6750, %v7182
      %v7393 = vld [vmem:[%s165 + $0x1c] sm:$0x8]
      %v7394 = vld [vmem:[%s1 + $0x4] sm:$0x1]
      %v7395 = vunpack.c.l.bf16 %v7393
      %v7396 = vunpack.c.l.bf16 %v7394
      %7398 = vset.pattern.permute.xlu0 0
      %7399 = vperm.xlu0 %7398, %v7395
      %v7400 = vpop.permute.xlu0 %7399
      %v7402 = vperm.slane %v7396, 0
      %v7403 = vmul.f32 %v7400, %v7402
      %v7404 = vmul.f32 %v5594, %v7402
      %v7405 = vmul.f32 %v5599, %v7402
      %v7406 = vmul.f32 %v5604, %v7402
      %v7407 = vmul.f32 %v5609, %v7402
      %v7408 = vmul.f32 %v5614, %v7402
      %v7409 = vmul.f32 %v5619, %v7402
      %v7410 = vmul.f32 %v5624, %v7402
      %v7411 = vmul.f32 %v5629, %v7402
      %v7412 = vmul.f32 %v5634, %v7402
      %v7413 = vmul.f32 %v5639, %v7402
      %v7414 = vmul.f32 %v5644, %v7402
      %v7415 = vmul.f32 %v5649, %v7402
      %v7416 = vmul.f32 %v5654, %v7402
      %v7417 = vmul.f32 %v5659, %v7402
      %v7418 = vmul.f32 %v5664, %v7402
      %v7419 = vmul.f32 %v5669, %v7402
      %v7420 = vmul.f32 %v5674, %v7402
      %v7421 = vmul.f32 %v5679, %v7402
      %v7422 = vmul.f32 %v5684, %v7402
      %v7423 = vmul.f32 %v5689, %v7402
      %v7424 = vmul.f32 %v5694, %v7402
      %v7425 = vmul.f32 %v5699, %v7402
      %v7426 = vmul.f32 %v5704, %v7402
      %v7427 = vmul.f32 %v5709, %v7402
      %v7428 = vmul.f32 %v5714, %v7402
      %v7429 = vmul.f32 %v5719, %v7402
      %v7430 = vmul.f32 %v5724, %v7402
      %v7431 = vmul.f32 %v5729, %v7402
      %v7432 = vmul.f32 %v5734, %v7402
      %v7433 = vmul.f32 %v5739, %v7402
      %v7434 = vmul.f32 %v5744, %v7402
      %v7435 = vmul.f32 %v5749, %v7402
      %v7436 = vmul.f32 %v5754, %v7402
      %v7437 = vmul.f32 %v5759, %v7402
      %v7438 = vmul.f32 %v5764, %v7402
      %v7439 = vmul.f32 %v5769, %v7402
      %v7440 = vmul.f32 %v5774, %v7402
      %v7441 = vmul.f32 %v5779, %v7402
      %v7442 = vmul.f32 %v5784, %v7402
      %v7443 = vmul.f32 %v5789, %v7402
      %v7444 = vmul.f32 %v5794, %v7402
      %v7445 = vmul.f32 %v5799, %v7402
      %v7446 = vmul.f32 %v5804, %v7402
      %v7447 = vmul.f32 %v5809, %v7402
      %v7448 = vmul.f32 %v5814, %v7402
      %v7449 = vmul.f32 %v5819, %v7402
      %v7450 = vmul.f32 %v5824, %v7402
      %v7451 = vmul.f32 %v5829, %v7402
      %v7452 = vmul.f32 %v5834, %v7402
      %v7453 = vmul.f32 %v5839, %v7402
      %v7454 = vmul.f32 %v5844, %v7402
      %v7455 = vmul.f32 %v5849, %v7402
      %v7456 = vmul.f32 %v5854, %v7402
      %v7457 = vmul.f32 %v5859, %v7402
      %v7458 = vmul.f32 %v5864, %v7402
      %v7459 = vmul.f32 %v5869, %v7402
      %v7460 = vmul.f32 %v5874, %v7402
      %v7461 = vmul.f32 %v5879, %v7402
      %v7462 = vmul.f32 %v5884, %v7402
      %v7463 = vmul.f32 %v5889, %v7402
      %v7464 = vmul.f32 %v5894, %v7402
      %v7465 = vmul.f32 %v5899, %v7402
      %v7466 = vmul.f32 %v5904, %v7402
      %v7467 = vmul.f32 %v5909, %v7402
      %v7468 = vmul.f32 %v5914, %v7402
      %v7469 = vmul.f32 %v5919, %v7402
      %v7470 = vmul.f32 %v5924, %v7402
      %v7471 = vmul.f32 %v5929, %v7402
      %v7472 = vmul.f32 %v5934, %v7402
      %v7473 = vmul.f32 %v5939, %v7402
      %v7474 = vmul.f32 %v5944, %v7402
      %v7475 = vmul.f32 %v5949, %v7402
      %v7476 = vmul.f32 %v5954, %v7402
      %v7477 = vmul.f32 %v5959, %v7402
      %v7478 = vmul.f32 %v5964, %v7402
      %v7479 = vmul.f32 %v5969, %v7402
      %v7480 = vmul.f32 %v5974, %v7402
      %v7481 = vmul.f32 %v5979, %v7402
      %v7482 = vmul.f32 %v5984, %v7402
      %v7483 = vmul.f32 %v5989, %v7402
      %v7484 = vmul.f32 %v5994, %v7402
      %v7485 = vmul.f32 %v5999, %v7402
      %v7486 = vmul.f32 %v6004, %v7402
      %v7487 = vmul.f32 %v6009, %v7402
      %v7488 = vmul.f32 %v6014, %v7402
      %v7489 = vmul.f32 %v6019, %v7402
      %v7490 = vmul.f32 %v6024, %v7402
      %v7491 = vmul.f32 %v6029, %v7402
      %v7492 = vmul.f32 %v6034, %v7402
      %v7493 = vmul.f32 %v6039, %v7402
      %v7494 = vmul.f32 %v6044, %v7402
      %v7495 = vmul.f32 %v6049, %v7402
      %v7496 = vmul.f32 %v6054, %v7402
      %v7497 = vmul.f32 %v6059, %v7402
      %v7498 = vmul.f32 %v6064, %v7402
      %v7499 = vmul.f32 %v6069, %v7402
      %v7500 = vmul.f32 %v6074, %v7402
      %v7501 = vmul.f32 %v6079, %v7402
      %v7502 = vmul.f32 %v6084, %v7402
      %v7503 = vmul.f32 %v6089, %v7402
      %v7504 = vmul.f32 %v6094, %v7402
      %v7505 = vmul.f32 %v6099, %v7402
      %v7506 = vmul.f32 %v6104, %v7402
      %v7507 = vmul.f32 %v6109, %v7402
      %v7508 = vmul.f32 %v6756, %v7402
      %v7615 = vrot.slane %v7403, 6
      %v7616 = vrot.slane %v7404, 6
      %v7617 = vsel %vm4095, %v7615, %v7616
      %v7618 = vrot.slane %v7405, 6
      %v7619 = vsel %vm4095, %v7616, %v7618
      %v7620 = vrot.slane %v7406, 6
      %v7621 = vsel %vm4095, %v7618, %v7620
      %v7622 = vrot.slane %v7407, 6
      %v7623 = vsel %vm4095, %v7620, %v7622
      %v7624 = vrot.slane %v7408, 6
      %v7625 = vsel %vm4095, %v7622, %v7624
      %v7626 = vrot.slane %v7409, 6
      %v7627 = vsel %vm4095, %v7624, %v7626
      %v7628 = vrot.slane %v7410, 6
      %v7629 = vsel %vm4095, %v7626, %v7628
      %v7630 = vrot.slane %v7411, 6
      %v7631 = vsel %vm4095, %v7628, %v7630
      %v7632 = vrot.slane %v7412, 6
      %v7633 = vsel %vm4095, %v7630, %v7632
      %v7634 = vrot.slane %v7413, 6
      %v7635 = vsel %vm4095, %v7632, %v7634
      %v7636 = vrot.slane %v7414, 6
      %v7637 = vsel %vm4095, %v7634, %v7636
      %v7638 = vrot.slane %v7415, 6
      %v7639 = vsel %vm4095, %v7636, %v7638
      %v7640 = vrot.slane %v7416, 6
      %v7641 = vsel %vm4095, %v7638, %v7640
      %v7642 = vrot.slane %v7417, 6
      %v7643 = vsel %vm4095, %v7640, %v7642
      %v7644 = vrot.slane %v7418, 6
      %v7645 = vsel %vm4095, %v7642, %v7644
      %v7646 = vrot.slane %v7419, 6
      %v7647 = vsel %vm4095, %v7644, %v7646
      %v7648 = vrot.slane %v7420, 6
      %v7649 = vsel %vm4095, %v7646, %v7648
      %v7650 = vrot.slane %v7421, 6
      %v7651 = vsel %vm4095, %v7648, %v7650
      %v7652 = vrot.slane %v7422, 6
      %v7653 = vsel %vm4095, %v7650, %v7652
      %v7654 = vrot.slane %v7423, 6
      %v7655 = vsel %vm4095, %v7652, %v7654
      %v7656 = vrot.slane %v7424, 6
      %v7657 = vsel %vm4095, %v7654, %v7656
      %v7658 = vrot.slane %v7425, 6
      %v7659 = vsel %vm4095, %v7656, %v7658
      %v7660 = vrot.slane %v7426, 6
      %v7661 = vsel %vm4095, %v7658, %v7660
      %v7662 = vrot.slane %v7427, 6
      %v7663 = vsel %vm4095, %v7660, %v7662
      %v7664 = vrot.slane %v7428, 6
      %v7665 = vsel %vm4095, %v7662, %v7664
      %v7666 = vrot.slane %v7429, 6
      %v7667 = vsel %vm4095, %v7664, %v7666
      %v7668 = vrot.slane %v7430, 6
      %v7669 = vsel %vm4095, %v7666, %v7668
      %v7670 = vrot.slane %v7431, 6
      %v7671 = vsel %vm4095, %v7668, %v7670
      %v7672 = vrot.slane %v7432, 6
      %v7673 = vsel %vm4095, %v7670, %v7672
      %v7674 = vrot.slane %v7433, 6
      %v7675 = vsel %vm4095, %v7672, %v7674
      %v7676 = vrot.slane %v7434, 6
      %v7677 = vsel %vm4095, %v7674, %v7676
      %v7678 = vrot.slane %v7435, 6
      %v7679 = vsel %vm4095, %v7676, %v7678
      %v7680 = vrot.slane %v7436, 6
      %v7681 = vsel %vm4095, %v7678, %v7680
      %v7682 = vrot.slane %v7437, 6
      %v7683 = vsel %vm4095, %v7680, %v7682
      %v7684 = vrot.slane %v7438, 6
      %v7685 = vsel %vm4095, %v7682, %v7684
      %v7686 = vrot.slane %v7439, 6
      %v7687 = vsel %vm4095, %v7684, %v7686
      %v7688 = vrot.slane %v7440, 6
      %v7689 = vsel %vm4095, %v7686, %v7688
      %v7690 = vrot.slane %v7441, 6
      %v7691 = vsel %vm4095, %v7688, %v7690
      %v7692 = vrot.slane %v7442, 6
      %v7693 = vsel %vm4095, %v7690, %v7692
      %v7694 = vrot.slane %v7443, 6
      %v7695 = vsel %vm4095, %v7692, %v7694
      %v7696 = vrot.slane %v7444, 6
      %v7697 = vsel %vm4095, %v7694, %v7696
      %v7698 = vrot.slane %v7445, 6
      %v7699 = vsel %vm4095, %v7696, %v7698
      %v7700 = vrot.slane %v7446, 6
      %v7701 = vsel %vm4095, %v7698, %v7700
      %v7702 = vrot.slane %v7447, 6
      %v7703 = vsel %vm4095, %v7700, %v7702
      %v7704 = vrot.slane %v7448, 6
      %v7705 = vsel %vm4095, %v7702, %v7704
      %v7706 = vrot.slane %v7449, 6
      %v7707 = vsel %vm4095, %v7704, %v7706
      %v7708 = vrot.slane %v7450, 6
      %v7709 = vsel %vm4095, %v7706, %v7708
      %v7710 = vrot.slane %v7451, 6
      %v7711 = vsel %vm4095, %v7708, %v7710
      %v7712 = vrot.slane %v7452, 6
      %v7713 = vsel %vm4095, %v7710, %v7712
      %v7714 = vrot.slane %v7453, 6
      %v7715 = vsel %vm4095, %v7712, %v7714
      %v7716 = vrot.slane %v7454, 6
      %v7717 = vsel %vm4095, %v7714, %v7716
      %v7718 = vrot.slane %v7455, 6
      %v7719 = vsel %vm4095, %v7716, %v7718
      %v7720 = vrot.slane %v7456, 6
      %v7721 = vsel %vm4095, %v7718, %v7720
      %v7722 = vrot.slane %v7457, 6
      %v7723 = vsel %vm4095, %v7720, %v7722
      %v7724 = vrot.slane %v7458, 6
      %v7725 = vsel %vm4095, %v7722, %v7724
      %v7726 = vrot.slane %v7459, 6
      %v7727 = vsel %vm4095, %v7724, %v7726
      %v7728 = vrot.slane %v7460, 6
      %v7729 = vsel %vm4095, %v7726, %v7728
      %v7730 = vrot.slane %v7461, 6
      %v7731 = vsel %vm4095, %v7728, %v7730
      %v7732 = vrot.slane %v7462, 6
      %v7733 = vsel %vm4095, %v7730, %v7732
      %v7734 = vrot.slane %v7463, 6
      %v7735 = vsel %vm4095, %v7732, %v7734
      %v7736 = vrot.slane %v7464, 6
      %v7737 = vsel %vm4095, %v7734, %v7736
      %v7738 = vrot.slane %v7465, 6
      %v7739 = vsel %vm4095, %v7736, %v7738
      %v7740 = vrot.slane %v7466, 6
      %v7741 = vsel %vm4095, %v7738, %v7740
      %v7742 = vrot.slane %v7467, 6
      %v7743 = vsel %vm4095, %v7740, %v7742
      %v7744 = vrot.slane %v7468, 6
      %v7745 = vsel %vm4095, %v7742, %v7744
      %v7746 = vrot.slane %v7469, 6
      %v7747 = vsel %vm4095, %v7744, %v7746
      %v7748 = vrot.slane %v7470, 6
      %v7749 = vsel %vm4095, %v7746, %v7748
      %v7750 = vrot.slane %v7471, 6
      %v7751 = vsel %vm4095, %v7748, %v7750
      %v7752 = vrot.slane %v7472, 6
      %v7753 = vsel %vm4095, %v7750, %v7752
      %v7754 = vrot.slane %v7473, 6
      %v7755 = vsel %vm4095, %v7752, %v7754
      %v7756 = vrot.slane %v7474, 6
      %v7757 = vsel %vm4095, %v7754, %v7756
      %v7758 = vrot.slane %v7475, 6
      %v7759 = vsel %vm4095, %v7756, %v7758
      %v7760 = vrot.slane %v7476, 6
      %v7761 = vsel %vm4095, %v7758, %v7760
      %v7762 = vrot.slane %v7477, 6
      %v7763 = vsel %vm4095, %v7760, %v7762
      %v7764 = vrot.slane %v7478, 6
      %v7765 = vsel %vm4095, %v7762, %v7764
      %v7766 = vrot.slane %v7479, 6
      %v7767 = vsel %vm4095, %v7764, %v7766
      %v7768 = vrot.slane %v7480, 6
      %v7769 = vsel %vm4095, %v7766, %v7768
      %v7770 = vrot.slane %v7481, 6
      %v7771 = vsel %vm4095, %v7768, %v7770
      %v7772 = vrot.slane %v7482, 6
      %v7773 = vsel %vm4095, %v7770, %v7772
      %v7774 = vrot.slane %v7483, 6
      %v7775 = vsel %vm4095, %v7772, %v7774
      %v7776 = vrot.slane %v7484, 6
      %v7777 = vsel %vm4095, %v7774, %v7776
      %v7778 = vrot.slane %v7485, 6
      %v7779 = vsel %vm4095, %v7776, %v7778
      %v7780 = vrot.slane %v7486, 6
      %v7781 = vsel %vm4095, %v7778, %v7780
      %v7782 = vrot.slane %v7487, 6
      %v7783 = vsel %vm4095, %v7780, %v7782
      %v7784 = vrot.slane %v7488, 6
      %v7785 = vsel %vm4095, %v7782, %v7784
      %v7786 = vrot.slane %v7489, 6
      %v7787 = vsel %vm4095, %v7784, %v7786
      %v7788 = vrot.slane %v7490, 6
      %v7789 = vsel %vm4095, %v7786, %v7788
      %v7790 = vrot.slane %v7491, 6
      %v7791 = vsel %vm4095, %v7788, %v7790
      %v7792 = vrot.slane %v7492, 6
      %v7793 = vsel %vm4095, %v7790, %v7792
      %v7794 = vrot.slane %v7493, 6
      %v7795 = vsel %vm4095, %v7792, %v7794
      %v7796 = vrot.slane %v7494, 6
      %v7797 = vsel %vm4095, %v7794, %v7796
      %v7798 = vrot.slane %v7495, 6
      %v7799 = vsel %vm4095, %v7796, %v7798
      %v7800 = vrot.slane %v7496, 6
      %v7801 = vsel %vm4095, %v7798, %v7800
      %v7802 = vrot.slane %v7497, 6
      %v7803 = vsel %vm4095, %v7800, %v7802
      %v7804 = vrot.slane %v7498, 6
      %v7805 = vsel %vm4095, %v7802, %v7804
      %v7806 = vrot.slane %v7499, 6
      %v7807 = vsel %vm4095, %v7804, %v7806
      %v7808 = vrot.slane %v7500, 6
      %v7809 = vsel %vm4095, %v7806, %v7808
      %v7810 = vrot.slane %v7501, 6
      %v7811 = vsel %vm4095, %v7808, %v7810
      %v7812 = vrot.slane %v7502, 6
      %v7813 = vsel %vm4095, %v7810, %v7812
      %v7814 = vrot.slane %v7503, 6
      %v7815 = vsel %vm4095, %v7812, %v7814
      %v7816 = vrot.slane %v7504, 6
      %v7817 = vsel %vm4095, %v7814, %v7816
      %v7818 = vrot.slane %v7505, 6
      %v7819 = vsel %vm4095, %v7816, %v7818
      %v7820 = vrot.slane %v7506, 6
      %v7821 = vsel %vm4095, %v7818, %v7820
      %v7822 = vrot.slane %v7507, 6
      %v7823 = vsel %vm4095, %v7820, %v7822
      %v7824 = vrot.slane %v7508, 6
      %v7825 = vsel %vm4095, %v7822, %v7824
      %v7931 = vadd.f32 %v7288, %v7617
      %v7932 = vadd.f32 %v7289, %v7619
      %v7933 = vadd.f32 %v7290, %v7621
      %v7934 = vadd.f32 %v7291, %v7623
      %v7935 = vadd.f32 %v7292, %v7625
      %v7936 = vadd.f32 %v7293, %v7627
      %v7937 = vadd.f32 %v7294, %v7629
      %v7938 = vadd.f32 %v7295, %v7631
      %v7939 = vadd.f32 %v7296, %v7633
      %v7940 = vadd.f32 %v7297, %v7635
      %v7941 = vadd.f32 %v7298, %v7637
      %v7942 = vadd.f32 %v7299, %v7639
      %v7943 = vadd.f32 %v7300, %v7641
      %v7944 = vadd.f32 %v7301, %v7643
      %v7945 = vadd.f32 %v7302, %v7645
      %v7946 = vadd.f32 %v7303, %v7647
      %v7947 = vadd.f32 %v7304, %v7649
      %v7948 = vadd.f32 %v7305, %v7651
      %v7949 = vadd.f32 %v7306, %v7653
      %v7950 = vadd.f32 %v7307, %v7655
      %v7951 = vadd.f32 %v7308, %v7657
      %v7952 = vadd.f32 %v7309, %v7659
      %v7953 = vadd.f32 %v7310, %v7661
      %v7954 = vadd.f32 %v7311, %v7663
      %v7955 = vadd.f32 %v7312, %v7665
      %v7956 = vadd.f32 %v7313, %v7667
      %v7957 = vadd.f32 %v7314, %v7669
      %v7958 = vadd.f32 %v7315, %v7671
      %v7959 = vadd.f32 %v7316, %v7673
      %v7960 = vadd.f32 %v7317, %v7675
      %v7961 = vadd.f32 %v7318, %v7677
      %v7962 = vadd.f32 %v7319, %v7679
      %v7963 = vadd.f32 %v7320, %v7681
      %v7964 = vadd.f32 %v7321, %v7683
      %v7965 = vadd.f32 %v7322, %v7685
      %v7966 = vadd.f32 %v7323, %v7687
      %v7967 = vadd.f32 %v7324, %v7689
      %v7968 = vadd.f32 %v7325, %v7691
      %v7969 = vadd.f32 %v7326, %v7693
      %v7970 = vadd.f32 %v7327, %v7695
      %v7971 = vadd.f32 %v7328, %v7697
      %v7972 = vadd.f32 %v7329, %v7699
      %v7973 = vadd.f32 %v7330, %v7701
      %v7974 = vadd.f32 %v7331, %v7703
      %v7975 = vadd.f32 %v7332, %v7705
      %v7976 = vadd.f32 %v7333, %v7707
      %v7977 = vadd.f32 %v7334, %v7709
      %v7978 = vadd.f32 %v7335, %v7711
      %v7979 = vadd.f32 %v7336, %v7713
      %v7980 = vadd.f32 %v7337, %v7715
      %v7981 = vadd.f32 %v7338, %v7717
      %v7982 = vadd.f32 %v7339, %v7719
      %v7983 = vadd.f32 %v7340, %v7721
      %v7984 = vadd.f32 %v7341, %v7723
      %v7985 = vadd.f32 %v7342, %v7725
      %v7986 = vadd.f32 %v7343, %v7727
      %v7987 = vadd.f32 %v7344, %v7729
      %v7988 = vadd.f32 %v7345, %v7731
      %v7989 = vadd.f32 %v7346, %v7733
      %v7990 = vadd.f32 %v7347, %v7735
      %v7991 = vadd.f32 %v7348, %v7737
      %v7992 = vadd.f32 %v7349, %v7739
      %v7993 = vadd.f32 %v7350, %v7741
      %v7994 = vadd.f32 %v7351, %v7743
      %v7995 = vadd.f32 %v7352, %v7745
      %v7996 = vadd.f32 %v7353, %v7747
      %v7997 = vadd.f32 %v7354, %v7749
      %v7998 = vadd.f32 %v7355, %v7751
      %v7999 = vadd.f32 %v7356, %v7753
      %v8000 = vadd.f32 %v7357, %v7755
      %v8001 = vadd.f32 %v7358, %v7757
      %v8002 = vadd.f32 %v7359, %v7759
      %v8003 = vadd.f32 %v7360, %v7761
      %v8004 = vadd.f32 %v7361, %v7763
      %v8005 = vadd.f32 %v7362, %v7765
      %v8006 = vadd.f32 %v7363, %v7767
      %v8007 = vadd.f32 %v7364, %v7769
      %v8008 = vadd.f32 %v7365, %v7771
      %v8009 = vadd.f32 %v7366, %v7773
      %v8010 = vadd.f32 %v7367, %v7775
      %v8011 = vadd.f32 %v7368, %v7777
      %v8012 = vadd.f32 %v7369, %v7779
      %v8013 = vadd.f32 %v7370, %v7781
      %v8014 = vadd.f32 %v7371, %v7783
      %v8015 = vadd.f32 %v7372, %v7785
      %v8016 = vadd.f32 %v7373, %v7787
      %v8017 = vadd.f32 %v7374, %v7789
      %v8018 = vadd.f32 %v7375, %v7791
      %v8019 = vadd.f32 %v7376, %v7793
      %v8020 = vadd.f32 %v7377, %v7795
      %v8021 = vadd.f32 %v7378, %v7797
      %v8022 = vadd.f32 %v7379, %v7799
      %v8023 = vadd.f32 %v7380, %v7801
      %v8024 = vadd.f32 %v7381, %v7803
      %v8025 = vadd.f32 %v7382, %v7805
      %v8026 = vadd.f32 %v7383, %v7807
      %v8027 = vadd.f32 %v7384, %v7809
      %v8028 = vadd.f32 %v7385, %v7811
      %v8029 = vadd.f32 %v7386, %v7813
      %v8030 = vadd.f32 %v7387, %v7815
      %v8031 = vadd.f32 %v7388, %v7817
      %v8032 = vadd.f32 %v7389, %v7819
      %v8033 = vadd.f32 %v7390, %v7821
      %v8034 = vadd.f32 %v7391, %v7823
      %v8035 = vadd.f32 %v7392, %v7825
      %v8036 = vld [vmem:[%s2] sm:$0x1]
      %v8038 = vperm.slane %v8036, 0
      %v8040 = vadd.f32 %v7931, %v8038
      %v8041 = vadd.f32 %v7932, %v8038
      %v8042 = vadd.f32 %v7933, %v8038
      %v8043 = vadd.f32 %v7934, %v8038
      %v8044 = vadd.f32 %v7935, %v8038
      %v8045 = vadd.f32 %v7936, %v8038
      %v8046 = vadd.f32 %v7937, %v8038
      %v8047 = vadd.f32 %v7938, %v8038
      %v8048 = vadd.f32 %v7939, %v8038
      %v8049 = vadd.f32 %v7940, %v8038
      %v8050 = vadd.f32 %v7941, %v8038
      %v8051 = vadd.f32 %v7942, %v8038
      %v8052 = vadd.f32 %v7943, %v8038
      %v8053 = vadd.f32 %v7944, %v8038
      %v8054 = vadd.f32 %v7945, %v8038
      %v8055 = vadd.f32 %v7946, %v8038
      %v8056 = vadd.f32 %v7947, %v8038
      %v8057 = vadd.f32 %v7948, %v8038
      %v8058 = vadd.f32 %v7949, %v8038
      %v8059 = vadd.f32 %v7950, %v8038
      %v8060 = vadd.f32 %v7951, %v8038
      %v8061 = vadd.f32 %v7952, %v8038
      %v8062 = vadd.f32 %v7953, %v8038
      %v8063 = vadd.f32 %v7954, %v8038
      %v8064 = vadd.f32 %v7955, %v8038
      %v8065 = vadd.f32 %v7956, %v8038
      %v8066 = vadd.f32 %v7957, %v8038
      %v8067 = vadd.f32 %v7958, %v8038
      %v8068 = vadd.f32 %v7959, %v8038
      %v8069 = vadd.f32 %v7960, %v8038
      %v8070 = vadd.f32 %v7961, %v8038
      %v8071 = vadd.f32 %v7962, %v8038
      %v8072 = vadd.f32 %v7963, %v8038
      %v8073 = vadd.f32 %v7964, %v8038
      %v8074 = vadd.f32 %v7965, %v8038
      %v8075 = vadd.f32 %v7966, %v8038
      %v8076 = vadd.f32 %v7967, %v8038
      %v8077 = vadd.f32 %v7968, %v8038
      %v8078 = vadd.f32 %v7969, %v8038
      %v8079 = vadd.f32 %v7970, %v8038
      %v8080 = vadd.f32 %v7971, %v8038
      %v8081 = vadd.f32 %v7972, %v8038
      %v8082 = vadd.f32 %v7973, %v8038
      %v8083 = vadd.f32 %v7974, %v8038
      %v8084 = vadd.f32 %v7975, %v8038
      %v8085 = vadd.f32 %v7976, %v8038
      %v8086 = vadd.f32 %v7977, %v8038
      %v8087 = vadd.f32 %v7978, %v8038
      %v8088 = vadd.f32 %v7979, %v8038
      %v8089 = vadd.f32 %v7980, %v8038
      %v8090 = vadd.f32 %v7981, %v8038
      %v8091 = vadd.f32 %v7982, %v8038
      %v8092 = vadd.f32 %v7983, %v8038
      %v8093 = vadd.f32 %v7984, %v8038
      %v8094 = vadd.f32 %v7985, %v8038
      %v8095 = vadd.f32 %v7986, %v8038
      %v8096 = vadd.f32 %v7987, %v8038
      %v8097 = vadd.f32 %v7988, %v8038
      %v8098 = vadd.f32 %v7989, %v8038
      %v8099 = vadd.f32 %v7990, %v8038
      %v8100 = vadd.f32 %v7991, %v8038
      %v8101 = vadd.f32 %v7992, %v8038
      %v8102 = vadd.f32 %v7993, %v8038
      %v8103 = vadd.f32 %v7994, %v8038
      %v8104 = vadd.f32 %v7995, %v8038
      %v8105 = vadd.f32 %v7996, %v8038
      %v8106 = vadd.f32 %v7997, %v8038
      %v8107 = vadd.f32 %v7998, %v8038
      %v8108 = vadd.f32 %v7999, %v8038
      %v8109 = vadd.f32 %v8000, %v8038
      %v8110 = vadd.f32 %v8001, %v8038
      %v8111 = vadd.f32 %v8002, %v8038
      %v8112 = vadd.f32 %v8003, %v8038
      %v8113 = vadd.f32 %v8004, %v8038
      %v8114 = vadd.f32 %v8005, %v8038
      %v8115 = vadd.f32 %v8006, %v8038
      %v8116 = vadd.f32 %v8007, %v8038
      %v8117 = vadd.f32 %v8008, %v8038
      %v8118 = vadd.f32 %v8009, %v8038
      %v8119 = vadd.f32 %v8010, %v8038
      %v8120 = vadd.f32 %v8011, %v8038
      %v8121 = vadd.f32 %v8012, %v8038
      %v8122 = vadd.f32 %v8013, %v8038
      %v8123 = vadd.f32 %v8014, %v8038
      %v8124 = vadd.f32 %v8015, %v8038
      %v8125 = vadd.f32 %v8016, %v8038
      %v8126 = vadd.f32 %v8017, %v8038
      %v8127 = vadd.f32 %v8018, %v8038
      %v8128 = vadd.f32 %v8019, %v8038
      %v8129 = vadd.f32 %v8020, %v8038
      %v8130 = vadd.f32 %v8021, %v8038
      %v8131 = vadd.f32 %v8022, %v8038
      %v8132 = vadd.f32 %v8023, %v8038
      %v8133 = vadd.f32 %v8024, %v8038
      %v8134 = vadd.f32 %v8025, %v8038
      %v8135 = vadd.f32 %v8026, %v8038
      %v8136 = vadd.f32 %v8027, %v8038
      %v8137 = vadd.f32 %v8028, %v8038
      %v8138 = vadd.f32 %v8029, %v8038
      %v8139 = vadd.f32 %v8030, %v8038
      %v8140 = vadd.f32 %v8031, %v8038
      %v8141 = vadd.f32 %v8032, %v8038
      %v8142 = vadd.f32 %v8033, %v8038
      %v8143 = vadd.f32 %v8034, %v8038
      %v8144 = vadd.f32 %v8035, %v8038
      %v8145 = vmax.f32 %v8040, 0.0
      %v8146 = vmax.f32 %v8041, 0.0
      %v8147 = vmax.f32 %v8042, 0.0
      %v8148 = vmax.f32 %v8043, 0.0
      %v8149 = vmax.f32 %v8044, 0.0
      %v8150 = vmax.f32 %v8045, 0.0
      %v8151 = vmax.f32 %v8046, 0.0
      %v8152 = vmax.f32 %v8047, 0.0
      %v8153 = vmax.f32 %v8048, 0.0
      %v8154 = vmax.f32 %v8049, 0.0
      %v8155 = vmax.f32 %v8050, 0.0
      %v8156 = vmax.f32 %v8051, 0.0
      %v8157 = vmax.f32 %v8052, 0.0
      %v8158 = vmax.f32 %v8053, 0.0
      %v8159 = vmax.f32 %v8054, 0.0
      %v8160 = vmax.f32 %v8055, 0.0
      %v8161 = vmax.f32 %v8056, 0.0
      %v8162 = vmax.f32 %v8057, 0.0
      %v8163 = vmax.f32 %v8058, 0.0
      %v8164 = vmax.f32 %v8059, 0.0
      %v8165 = vmax.f32 %v8060, 0.0
      %v8166 = vmax.f32 %v8061, 0.0
      %v8167 = vmax.f32 %v8062, 0.0
      %v8168 = vmax.f32 %v8063, 0.0
      %v8169 = vmax.f32 %v8064, 0.0
      %v8170 = vmax.f32 %v8065, 0.0
      %v8171 = vmax.f32 %v8066, 0.0
      %v8172 = vmax.f32 %v8067, 0.0
      %v8173 = vmax.f32 %v8068, 0.0
      %v8174 = vmax.f32 %v8069, 0.0
      %v8175 = vmax.f32 %v8070, 0.0
      %v8176 = vmax.f32 %v8071, 0.0
      %v8177 = vmax.f32 %v8072, 0.0
      %v8178 = vmax.f32 %v8073, 0.0
      %v8179 = vmax.f32 %v8074, 0.0
      %v8180 = vmax.f32 %v8075, 0.0
      %v8181 = vmax.f32 %v8076, 0.0
      %v8182 = vmax.f32 %v8077, 0.0
      %v8183 = vmax.f32 %v8078, 0.0
      %v8184 = vmax.f32 %v8079, 0.0
      %v8185 = vmax.f32 %v8080, 0.0
      %v8186 = vmax.f32 %v8081, 0.0
      %v8187 = vmax.f32 %v8082, 0.0
      %v8188 = vmax.f32 %v8083, 0.0
      %v8189 = vmax.f32 %v8084, 0.0
      %v8190 = vmax.f32 %v8085, 0.0
      %v8191 = vmax.f32 %v8086, 0.0
      %v8192 = vmax.f32 %v8087, 0.0
      %v8193 = vmax.f32 %v8088, 0.0
      %v8194 = vmax.f32 %v8089, 0.0
      %v8195 = vmax.f32 %v8090, 0.0
      %v8196 = vmax.f32 %v8091, 0.0
      %v8197 = vmax.f32 %v8092, 0.0
      %v8198 = vmax.f32 %v8093, 0.0
      %v8199 = vmax.f32 %v8094, 0.0
      %v8200 = vmax.f32 %v8095, 0.0
      %v8201 = vmax.f32 %v8096, 0.0
      %v8202 = vmax.f32 %v8097, 0.0
      %v8203 = vmax.f32 %v8098, 0.0
      %v8204 = vmax.f32 %v8099, 0.0
      %v8205 = vmax.f32 %v8100, 0.0
      %v8206 = vmax.f32 %v8101, 0.0
      %v8207 = vmax.f32 %v8102, 0.0
      %v8208 = vmax.f32 %v8103, 0.0
      %v8209 = vmax.f32 %v8104, 0.0
      %v8210 = vmax.f32 %v8105, 0.0
      %v8211 = vmax.f32 %v8106, 0.0
      %v8212 = vmax.f32 %v8107, 0.0
      %v8213 = vmax.f32 %v8108, 0.0
      %v8214 = vmax.f32 %v8109, 0.0
      %v8215 = vmax.f32 %v8110, 0.0
      %v8216 = vmax.f32 %v8111, 0.0
      %v8217 = vmax.f32 %v8112, 0.0
      %v8218 = vmax.f32 %v8113, 0.0
      %v8219 = vmax.f32 %v8114, 0.0
      %v8220 = vmax.f32 %v8115, 0.0
      %v8221 = vmax.f32 %v8116, 0.0
      %v8222 = vmax.f32 %v8117, 0.0
      %v8223 = vmax.f32 %v8118, 0.0
      %v8224 = vmax.f32 %v8119, 0.0
      %v8225 = vmax.f32 %v8120, 0.0
      %v8226 = vmax.f32 %v8121, 0.0
      %v8227 = vmax.f32 %v8122, 0.0
      %v8228 = vmax.f32 %v8123, 0.0
      %v8229 = vmax.f32 %v8124, 0.0
      %v8230 = vmax.f32 %v8125, 0.0
      %v8231 = vmax.f32 %v8126, 0.0
      %v8232 = vmax.f32 %v8127, 0.0
      %v8233 = vmax.f32 %v8128, 0.0
      %v8234 = vmax.f32 %v8129, 0.0
      %v8235 = vmax.f32 %v8130, 0.0
      %v8236 = vmax.f32 %v8131, 0.0
      %v8237 = vmax.f32 %v8132, 0.0
      %v8238 = vmax.f32 %v8133, 0.0
      %v8239 = vmax.f32 %v8134, 0.0
      %v8240 = vmax.f32 %v8135, 0.0
      %v8241 = vmax.f32 %v8136, 0.0
      %v8242 = vmax.f32 %v8137, 0.0
      %v8243 = vmax.f32 %v8138, 0.0
      %v8244 = vmax.f32 %v8139, 0.0
      %v8245 = vmax.f32 %v8140, 0.0
      %v8246 = vmax.f32 %v8141, 0.0
      %v8247 = vmax.f32 %v8142, 0.0
      %v8248 = vmax.f32 %v8143, 0.0
      %v8249 = vmax.f32 %v8144, 0.0
      %vm8250 = vcmask 261120
      %8251 = vst.msk [vmem:[#allocation2] sm:$0xff] %vm8250, %v8145
      %8252 = vst.msk [vmem:[#allocation2 + $0x8] sm:$0xff] %vm8250, %v8146
      %8253 = vst.msk [vmem:[#allocation2 + $0x10] sm:$0xff] %vm8250, %v8147
      %8254 = vst.msk [vmem:[#allocation2 + $0x18] sm:$0xff] %vm8250, %v8148
      %8255 = vst.msk [vmem:[#allocation2 + $0x20] sm:$0xff] %vm8250, %v8149
      %8256 = vst.msk [vmem:[#allocation2 + $0x28] sm:$0xff] %vm8250, %v8150
      %8257 = vst.msk [vmem:[#allocation2 + $0x30] sm:$0xff] %vm8250, %v8151
      %8258 = vst.msk [vmem:[#allocation2 + $0x38] sm:$0xff] %vm8250, %v8152
      %8259 = vst.msk [vmem:[#allocation2 + $0x40] sm:$0xff] %vm8250, %v8153
      %8260 = vst.msk [vmem:[#allocation2 + $0x48] sm:$0xff] %vm8250, %v8154
      %8261 = vst.msk [vmem:[#allocation2 + $0x50] sm:$0xff] %vm8250, %v8155
      %8262 = vst.msk [vmem:[#allocation2 + $0x58] sm:$0xff] %vm8250, %v8156
      %8263 = vst.msk [vmem:[#allocation2 + $0x60] sm:$0xff] %vm8250, %v8157
      %8264 = vst.msk [vmem:[#allocation2 + $0x68] sm:$0xff] %vm8250, %v8158
      %8265 = vst.msk [vmem:[#allocation2 + $0x70] sm:$0xff] %vm8250, %v8159
      %8266 = vst.msk [vmem:[#allocation2 + $0x78] sm:$0xff] %vm8250, %v8160
      %8267 = vst.msk [vmem:[#allocation2 + $0x80] sm:$0xff] %vm8250, %v8161
      %8268 = vst.msk [vmem:[#allocation2 + $0x88] sm:$0xff] %vm8250, %v8162
      %8269 = vst.msk [vmem:[#allocation2 + $0x90] sm:$0xff] %vm8250, %v8163
      %8270 = vst.msk [vmem:[#allocation2 + $0x98] sm:$0xff] %vm8250, %v8164
      %8271 = vst.msk [vmem:[#allocation2 + $0xa0] sm:$0xff] %vm8250, %v8165
      %8272 = vst.msk [vmem:[#allocation2 + $0xa8] sm:$0xff] %vm8250, %v8166
      %8273 = vst.msk [vmem:[#allocation2 + $0xb0] sm:$0xff] %vm8250, %v8167
      %8274 = vst.msk [vmem:[#allocation2 + $0xb8] sm:$0xff] %vm8250, %v8168
      %8275 = vst.msk [vmem:[#allocation2 + $0xc0] sm:$0xff] %vm8250, %v8169
      %8276 = vst.msk [vmem:[#allocation2 + $0xc8] sm:$0xff] %vm8250, %v8170
      %8277 = vst.msk [vmem:[#allocation2 + $0xd0] sm:$0xff] %vm8250, %v8171
      %8278 = vst.msk [vmem:[#allocation2 + $0xd8] sm:$0xff] %vm8250, %v8172
      %8279 = vst.msk [vmem:[#allocation2 + $0xe0] sm:$0xff] %vm8250, %v8173
      %8280 = vst.msk [vmem:[#allocation2 + $0xe8] sm:$0xff] %vm8250, %v8174
      %8281 = vst.msk [vmem:[#allocation2 + $0xf0] sm:$0xff] %vm8250, %v8175
      %8282 = vst.msk [vmem:[#allocation2 + $0xf8] sm:$0xff] %vm8250, %v8176
      %8283 = vst.msk [vmem:[#allocation2 + $0x100] sm:$0xff] %vm8250, %v8177
      %8284 = vst.msk [vmem:[#allocation2 + $0x108] sm:$0xff] %vm8250, %v8178
      %8285 = vst.msk [vmem:[#allocation2 + $0x110] sm:$0xff] %vm8250, %v8179
      %8286 = vst.msk [vmem:[#allocation2 + $0x118] sm:$0xff] %vm8250, %v8180
      %8287 = vst.msk [vmem:[#allocation2 + $0x120] sm:$0xff] %vm8250, %v8181
      %8288 = vst.msk [vmem:[#allocation2 + $0x128] sm:$0xff] %vm8250, %v8182
      %8289 = vst.msk [vmem:[#allocation2 + $0x130] sm:$0xff] %vm8250, %v8183
      %8290 = vst.msk [vmem:[#allocation2 + $0x138] sm:$0xff] %vm8250, %v8184
      %8291 = vst.msk [vmem:[#allocation2 + $0x140] sm:$0xff] %vm8250, %v8185
      %8292 = vst.msk [vmem:[#allocation2 + $0x148] sm:$0xff] %vm8250, %v8186
      %8293 = vst.msk [vmem:[#allocation2 + $0x150] sm:$0xff] %vm8250, %v8187
      %8294 = vst.msk [vmem:[#allocation2 + $0x158] sm:$0xff] %vm8250, %v8188
      %8295 = vst.msk [vmem:[#allocation2 + $0x160] sm:$0xff] %vm8250, %v8189
      %8296 = vst.msk [vmem:[#allocation2 + $0x168] sm:$0xff] %vm8250, %v8190
      %8297 = vst.msk [vmem:[#allocation2 + $0x170] sm:$0xff] %vm8250, %v8191
      %8298 = vst.msk [vmem:[#allocation2 + $0x178] sm:$0xff] %vm8250, %v8192
      %8299 = vst.msk [vmem:[#allocation2 + $0x180] sm:$0xff] %vm8250, %v8193
      %8300 = vst.msk [vmem:[#allocation2 + $0x188] sm:$0xff] %vm8250, %v8194
      %8301 = vst.msk [vmem:[#allocation2 + $0x190] sm:$0xff] %vm8250, %v8195
      %8302 = vst.msk [vmem:[#allocation2 + $0x198] sm:$0xff] %vm8250, %v8196
      %8303 = vst.msk [vmem:[#allocation2 + $0x1a0] sm:$0xff] %vm8250, %v8197
      %8304 = vst.msk [vmem:[#allocation2 + $0x1a8] sm:$0xff] %vm8250, %v8198
      %8305 = vst.msk [vmem:[#allocation2 + $0x1b0] sm:$0xff] %vm8250, %v8199
      %8306 = vst.msk [vmem:[#allocation2 + $0x1b8] sm:$0xff] %vm8250, %v8200
      %8307 = vst.msk [vmem:[#allocation2 + $0x1c0] sm:$0xff] %vm8250, %v8201
      %8308 = vst.msk [vmem:[#allocation2 + $0x1c8] sm:$0xff] %vm8250, %v8202
      %8309 = vst.msk [vmem:[#allocation2 + $0x1d0] sm:$0xff] %vm8250, %v8203
      %8310 = vst.msk [vmem:[#allocation2 + $0x1d8] sm:$0xff] %vm8250, %v8204
      %8311 = vst.msk [vmem:[#allocation2 + $0x1e0] sm:$0xff] %vm8250, %v8205
      %8312 = vst.msk [vmem:[#allocation2 + $0x1e8] sm:$0xff] %vm8250, %v8206
      %8313 = vst.msk [vmem:[#allocation2 + $0x1f0] sm:$0xff] %vm8250, %v8207
      %8314 = vst.msk [vmem:[#allocation2 + $0x1f8] sm:$0xff] %vm8250, %v8208
      %8315 = vst.msk [vmem:[#allocation2 + $0x200] sm:$0xff] %vm8250, %v8209
      %8316 = vst.msk [vmem:[#allocation2 + $0x208] sm:$0xff] %vm8250, %v8210
      %8317 = vst.msk [vmem:[#allocation2 + $0x210] sm:$0xff] %vm8250, %v8211
      %8318 = vst.msk [vmem:[#allocation2 + $0x218] sm:$0xff] %vm8250, %v8212
      %8319 = vst.msk [vmem:[#allocation2 + $0x220] sm:$0xff] %vm8250, %v8213
      %8320 = vst.msk [vmem:[#allocation2 + $0x228] sm:$0xff] %vm8250, %v8214
      %8321 = vst.msk [vmem:[#allocation2 + $0x230] sm:$0xff] %vm8250, %v8215
      %8322 = vst.msk [vmem:[#allocation2 + $0x238] sm:$0xff] %vm8250, %v8216
      %8323 = vst.msk [vmem:[#allocation2 + $0x240] sm:$0xff] %vm8250, %v8217
      %8324 = vst.msk [vmem:[#allocation2 + $0x248] sm:$0xff] %vm8250, %v8218
      %8325 = vst.msk [vmem:[#allocation2 + $0x250] sm:$0xff] %vm8250, %v8219
      %8326 = vst.msk [vmem:[#allocation2 + $0x258] sm:$0xff] %vm8250, %v8220
      %8327 = vst.msk [vmem:[#allocation2 + $0x260] sm:$0xff] %vm8250, %v8221
      %8328 = vst.msk [vmem:[#allocation2 + $0x268] sm:$0xff] %vm8250, %v8222
      %8329 = vst.msk [vmem:[#allocation2 + $0x270] sm:$0xff] %vm8250, %v8223
      %8330 = vst.msk [vmem:[#allocation2 + $0x278] sm:$0xff] %vm8250, %v8224
      %8331 = vst.msk [vmem:[#allocation2 + $0x280] sm:$0xff] %vm8250, %v8225
      %8332 = vst.msk [vmem:[#allocation2 + $0x288] sm:$0xff] %vm8250, %v8226
      %8333 = vst.msk [vmem:[#allocation2 + $0x290] sm:$0xff] %vm8250, %v8227
      %8334 = vst.msk [vmem:[#allocation2 + $0x298] sm:$0xff] %vm8250, %v8228
      %8335 = vst.msk [vmem:[#allocation2 + $0x2a0] sm:$0xff] %vm8250, %v8229
      %8336 = vst.msk [vmem:[#allocation2 + $0x2a8] sm:$0xff] %vm8250, %v8230
      %8337 = vst.msk [vmem:[#allocation2 + $0x2b0] sm:$0xff] %vm8250, %v8231
      %8338 = vst.msk [vmem:[#allocation2 + $0x2b8] sm:$0xff] %vm8250, %v8232
      %8339 = vst.msk [vmem:[#allocation2 + $0x2c0] sm:$0xff] %vm8250, %v8233
      %8340 = vst.msk [vmem:[#allocation2 + $0x2c8] sm:$0xff] %vm8250, %v8234
      %8341 = vst.msk [vmem:[#allocation2 + $0x2d0] sm:$0xff] %vm8250, %v8235
      %8342 = vst.msk [vmem:[#allocation2 + $0x2d8] sm:$0xff] %vm8250, %v8236
      %8343 = vst.msk [vmem:[#allocation2 + $0x2e0] sm:$0xff] %vm8250, %v8237
      %8344 = vst.msk [vmem:[#allocation2 + $0x2e8] sm:$0xff] %vm8250, %v8238
      %8345 = vst.msk [vmem:[#allocation2 + $0x2f0] sm:$0xff] %vm8250, %v8239
      %8346 = vst.msk [vmem:[#allocation2 + $0x2f8] sm:$0xff] %vm8250, %v8240
      %8347 = vst.msk [vmem:[#allocation2 + $0x300] sm:$0xff] %vm8250, %v8241
      %8348 = vst.msk [vmem:[#allocation2 + $0x308] sm:$0xff] %vm8250, %v8242
      %8349 = vst.msk [vmem:[#allocation2 + $0x310] sm:$0xff] %vm8250, %v8243
      %8350 = vst.msk [vmem:[#allocation2 + $0x318] sm:$0xff] %vm8250, %v8244
      %8351 = vst.msk [vmem:[#allocation2 + $0x320] sm:$0xff] %vm8250, %v8245
      %8352 = vst.msk [vmem:[#allocation2 + $0x328] sm:$0xff] %vm8250, %v8246
      %8353 = vst.msk [vmem:[#allocation2 + $0x330] sm:$0xff] %vm8250, %v8247
      %8354 = vst.msk [vmem:[#allocation2 + $0x338] sm:$0xff] %vm8250, %v8248
      %8355 = vst.msk [vmem:[#allocation2 + $0x340] sm:$0xff] %vm8250, %v8249
      %v8356 = vld [vmem:[#allocation2] ss:$2 sm:$0xff]
      %s8357 = scalar_lea.vmem [#allocation2], 16
      %v8358 = vld [vmem:[%s8357] ss:$2 sm:$0x3f]
      %s8359 = scalar_lea.vmem [#allocation2], 1
      %v8360 = vld [vmem:[%s8359] ss:$2 sm:$0xff]
      %s8361 = scalar_lea.vmem [#allocation2], 17
      %v8362 = vld [vmem:[%s8361] ss:$2 sm:$0x3f]
      %s8363 = scalar_lea.vmem [#allocation2], 30
      %v8364 = vld [vmem:[%s8363] ss:$2 sm:$0xff]
      %s8365 = scalar_lea.vmem [#allocation2], 46
      %v8366 = vld [vmem:[%s8365] ss:$2 sm:$0x3f]
      %s8367 = scalar_lea.vmem [#allocation2], 31
      %v8368 = vld [vmem:[%s8367] ss:$2 sm:$0xff]
      %s8369 = scalar_lea.vmem [#allocation2], 47
      %v8370 = vld [vmem:[%s8369] ss:$2 sm:$0x3f]
      %v8371 = vmax.f32 %v8356, %v8360
      %v8372 = vmax.f32 %v8358, %v8362
      %v8373 = vmax.f32 %v8364, %v8368
      %v8374 = vmax.f32 %v8366, %v8370
      %v8375 = vmax.f32 %v8371, %v8373
      %v8376 = vmax.f32 %v8372, %v8374
      %v8377 = vpack.c.bf16 %v8375, %v8375
      %v8378 = vpack.c.bf16 %v8376, %v8376
      %vm8379 = vcmask 257024
      %8380 = vst.msk [vmem:[%s170] sm:$0xf] %vm8379, %v8377
      %vm8381 = vcmask 256000
      %8382 = vst.msk [vmem:[%s170 + $0x4] sm:$0x7] %vm8381, %v8378
      %s8383 = scalar_lea.vmem [#allocation2], 60
      %v8384 = vld [vmem:[%s8383] ss:$2 sm:$0xff]
      %s8385 = scalar_lea.vmem [#allocation2], 76
      %v8386 = vld [vmem:[%s8385] ss:$2 sm:$0x3f]
      %s8387 = scalar_lea.vmem [#allocation2], 61
      %v8388 = vld [vmem:[%s8387] ss:$2 sm:$0xff]
      %s8389 = scalar_lea.vmem [#allocation2], 77
      %v8390 = vld [vmem:[%s8389] ss:$2 sm:$0x3f]
      %s8391 = scalar_lea.vmem [#allocation2], 90
      %v8392 = vld [vmem:[%s8391] ss:$2 sm:$0xff]
      %s8393 = scalar_lea.vmem [#allocation2], 106
      %v8394 = vld [vmem:[%s8393] ss:$2 sm:$0x3f]
      %s8395 = scalar_lea.vmem [#allocation2], 91
      %v8396 = vld [vmem:[%s8395] ss:$2 sm:$0xff]
      %s8397 = scalar_lea.vmem [#allocation2], 107
      %v8398 = vld [vmem:[%s8397] ss:$2 sm:$0x3f]
      %v8399 = vmax.f32 %v8384, %v8388
      %v8400 = vmax.f32 %v8386, %v8390
      %v8401 = vmax.f32 %v8392, %v8396
      %v8402 = vmax.f32 %v8394, %v8398
      %v8403 = vmax.f32 %v8399, %v8401
      %v8404 = vmax.f32 %v8400, %v8402
      %v8405 = vpack.c.bf16 %v8403, %v8403
      %v8406 = vpack.c.bf16 %v8404, %v8404
      %vm8409 = vcmask 1042432
      %vm8410 = vcmask 1046532
      %vm8411 = vmor %vm8409, %vm8410
      %v8412 = vrot.slane %v8405, 5
      %v8413 = vrot.slane %v8412, 4
      %v8414 = vrot.slane %v8406, 5
      %v8415 = vsel %vm8411, %v8413, %v8414
      %v8416 = vrot.slane %v8414, 4
      %vm8420 = vcmask 257027
      %8421 = vst.msk [vmem:[%s170 + $0x4] sm:$0x8] %vm8420, %v8412
      %8422 = vst.msk [vmem:[%s170 + $0x8] sm:$0xf] %vm8379, %v8415
      %vm8423 = vcmask 254976
      %8424 = vst.msk [vmem:[%s170 + $0xc] sm:$0x3] %vm8423, %v8416
      %s8425 = scalar_lea.vmem [#allocation2], 120
      %v8426 = vld [vmem:[%s8425] ss:$2 sm:$0xff]
      %s8427 = scalar_lea.vmem [#allocation2], 136
      %v8428 = vld [vmem:[%s8427] ss:$2 sm:$0x3f]
      %s8429 = scalar_lea.vmem [#allocation2], 121
      %v8430 = vld [vmem:[%s8429] ss:$2 sm:$0xff]
      %s8431 = scalar_lea.vmem [#allocation2], 137
      %v8432 = vld [vmem:[%s8431] ss:$2 sm:$0x3f]
      %s8433 = scalar_lea.vmem [#allocation2], 150
      %v8434 = vld [vmem:[%s8433] ss:$2 sm:$0xff]
      %s8435 = scalar_lea.vmem [#allocation2], 166
      %v8436 = vld [vmem:[%s8435] ss:$2 sm:$0x3f]
      %s8437 = scalar_lea.vmem [#allocation2], 151
      %v8438 = vld [vmem:[%s8437] ss:$2 sm:$0xff]
      %s8439 = scalar_lea.vmem [#allocation2], 167
      %v8440 = vld [vmem:[%s8439] ss:$2 sm:$0x3f]
      %v8441 = vmax.f32 %v8426, %v8430
      %v8442 = vmax.f32 %v8428, %v8432
      %v8443 = vmax.f32 %v8434, %v8438
      %v8444 = vmax.f32 %v8436, %v8440
      %v8445 = vmax.f32 %v8441, %v8443
      %v8446 = vmax.f32 %v8442, %v8444
      %v8447 = vpack.c.bf16 %v8445, %v8445
      %v8448 = vpack.c.bf16 %v8446, %v8446
      %vm8451 = vcmask 1041408
      %vm8452 = vcmask 1045508
      %vm8453 = vmor %vm8451, %vm8452
      %v8454 = vrot.slane %v8447, 6
      %v8455 = vrot.slane %v8454, 4
      %v8456 = vrot.slane %v8448, 6
      %v8457 = vsel %vm8453, %v8455, %v8456
      %v8458 = vrot.slane %v8456, 4
      %vm8462 = vcmask 257026
      %8463 = vst.msk [vmem:[%s170 + $0xc] sm:$0xc] %vm8462, %v8454
      %8464 = vst.msk [vmem:[%s170 + $0x10] sm:$0xf] %vm8379, %v8457
      %vm8465 = vcmask 253952
      %8466 = vst.msk [vmem:[%s170 + $0x14] sm:$0x1] %vm8465, %v8458
      %s8467 = scalar_lea.vmem [#allocation2], 180
      %v8468 = vld [vmem:[%s8467] ss:$2 sm:$0xff]
      %s8469 = scalar_lea.vmem [#allocation2], 196
      %v8470 = vld [vmem:[%s8469] ss:$2 sm:$0x3f]
      %s8471 = scalar_lea.vmem [#allocation2], 181
      %v8472 = vld [vmem:[%s8471] ss:$2 sm:$0xff]
      %s8473 = scalar_lea.vmem [#allocation2], 197
      %v8474 = vld [vmem:[%s8473] ss:$2 sm:$0x3f]
      %s8475 = scalar_lea.vmem [#allocation2], 210
      %v8476 = vld [vmem:[%s8475] ss:$2 sm:$0xff]
      %s8477 = scalar_lea.vmem [#allocation2], 226
      %v8478 = vld [vmem:[%s8477] ss:$2 sm:$0x3f]
      %s8479 = scalar_lea.vmem [#allocation2], 211
      %v8480 = vld [vmem:[%s8479] ss:$2 sm:$0xff]
      %s8481 = scalar_lea.vmem [#allocation2], 227
      %v8482 = vld [vmem:[%s8481] ss:$2 sm:$0x3f]
      %v8483 = vmax.f32 %v8468, %v8472
      %v8484 = vmax.f32 %v8470, %v8474
      %v8485 = vmax.f32 %v8476, %v8480
      %v8486 = vmax.f32 %v8478, %v8482
      %v8487 = vmax.f32 %v8483, %v8485
      %v8488 = vmax.f32 %v8484, %v8486
      %v8489 = vpack.c.bf16 %v8487, %v8487
      %v8490 = vpack.c.bf16 %v8488, %v8488
      %vm8493 = vcmask 1040384
      %vm8494 = vcmask 1044484
      %vm8495 = vmor %vm8493, %vm8494
      %v8496 = vrot.slane %v8489, 7
      %v8497 = vrot.slane %v8496, 4
      %v8498 = vrot.slane %v8490, 7
      %v8499 = vsel %vm8495, %v8497, %v8498
      %vm8502 = vcmask 257025
      %8503 = vst.msk [vmem:[%s170 + $0x14] sm:$0xe] %vm8502, %v8496
      %8504 = vst.msk [vmem:[%s170 + $0x18] sm:$0xf] %vm8379, %v8499
      %s8505 = scalar_lea.vmem [#allocation2], 240
      %v8506 = vld [vmem:[%s8505] ss:$2 sm:$0xff]
      %s8507 = scalar_lea.vmem [#allocation2], 256
      %v8508 = vld [vmem:[%s8507] ss:$2 sm:$0x3f]
      %s8509 = scalar_lea.vmem [#allocation2], 241
      %v8510 = vld [vmem:[%s8509] ss:$2 sm:$0xff]
      %s8511 = scalar_lea.vmem [#allocation2], 257
      %v8512 = vld [vmem:[%s8511] ss:$2 sm:$0x3f]
      %s8513 = scalar_lea.vmem [#allocation2], 270
      %v8514 = vld [vmem:[%s8513] ss:$2 sm:$0xff]
      %s8515 = scalar_lea.vmem [#allocation2], 286
      %v8516 = vld [vmem:[%s8515] ss:$2 sm:$0x3f]
      %s8517 = scalar_lea.vmem [#allocation2], 271
      %v8518 = vld [vmem:[%s8517] ss:$2 sm:$0xff]
      %s8519 = scalar_lea.vmem [#allocation2], 287
      %v8520 = vld [vmem:[%s8519] ss:$2 sm:$0x3f]
      %v8521 = vmax.f32 %v8506, %v8510
      %v8522 = vmax.f32 %v8508, %v8512
      %v8523 = vmax.f32 %v8514, %v8518
      %v8524 = vmax.f32 %v8516, %v8520
      %v8525 = vmax.f32 %v8521, %v8523
      %v8526 = vmax.f32 %v8522, %v8524
      %v8527 = vpack.c.bf16 %v8525, %v8525
      %v8528 = vpack.c.bf16 %v8526, %v8526
      %8529 = vst.msk [vmem:[%s170 + $0x1c] sm:$0xf] %vm8379, %v8527
      %8530 = vst.msk [vmem:[%s170 + $0x20] sm:$0x7] %vm8381, %v8528
      %s8531 = scalar_lea.vmem [#allocation2], 300
      %v8532 = vld [vmem:[%s8531] ss:$2 sm:$0xff]
      %s8533 = scalar_lea.vmem [#allocation2], 316
      %v8534 = vld [vmem:[%s8533] ss:$2 sm:$0x3f]
      %s8535 = scalar_lea.vmem [#allocation2], 301
      %v8536 = vld [vmem:[%s8535] ss:$2 sm:$0xff]
      %s8537 = scalar_lea.vmem [#allocation2], 317
      %v8538 = vld [vmem:[%s8537] ss:$2 sm:$0x3f]
      %s8539 = scalar_lea.vmem [#allocation2], 330
      %v8540 = vld [vmem:[%s8539] ss:$2 sm:$0xff]
      %s8541 = scalar_lea.vmem [#allocation2], 346
      %v8542 = vld [vmem:[%s8541] ss:$2 sm:$0x3f]
      %s8543 = scalar_lea.vmem [#allocation2], 331
      %v8544 = vld [vmem:[%s8543] ss:$2 sm:$0xff]
      %s8545 = scalar_lea.vmem [#allocation2], 347
      %v8546 = vld [vmem:[%s8545] ss:$2 sm:$0x3f]
      %v8547 = vmax.f32 %v8532, %v8536
      %v8548 = vmax.f32 %v8534, %v8538
      %v8549 = vmax.f32 %v8540, %v8544
      %v8550 = vmax.f32 %v8542, %v8546
      %v8551 = vmax.f32 %v8547, %v8549
      %v8552 = vmax.f32 %v8548, %v8550
      %v8553 = vpack.c.bf16 %v8551, %v8551
      %v8554 = vpack.c.bf16 %v8552, %v8552
      %v8557 = vrot.slane %v8553, 5
      %v8558 = vrot.slane %v8557, 4
      %v8559 = vrot.slane %v8554, 5
      %v8560 = vsel %vm8411, %v8558, %v8559
      %v8561 = vrot.slane %v8559, 4
      %8565 = vst.msk [vmem:[%s170 + $0x20] sm:$0x8] %vm8420, %v8557
      %8566 = vst.msk [vmem:[%s170 + $0x24] sm:$0xf] %vm8379, %v8560
      %8567 = vst.msk [vmem:[%s170 + $0x28] sm:$0x3] %vm8423, %v8561
      %s8568 = scalar_lea.vmem [#allocation2], 360
      %v8569 = vld [vmem:[%s8568] ss:$2 sm:$0xff]
      %s8570 = scalar_lea.vmem [#allocation2], 376
      %v8571 = vld [vmem:[%s8570] ss:$2 sm:$0x3f]
      %s8572 = scalar_lea.vmem [#allocation2], 361
      %v8573 = vld [vmem:[%s8572] ss:$2 sm:$0xff]
      %s8574 = scalar_lea.vmem [#allocation2], 377
      %v8575 = vld [vmem:[%s8574] ss:$2 sm:$0x3f]
      %s8576 = scalar_lea.vmem [#allocation2], 390
      %v8577 = vld [vmem:[%s8576] ss:$2 sm:$0xff]
      %s8578 = scalar_lea.vmem [#allocation2], 406
      %v8579 = vld [vmem:[%s8578] ss:$2 sm:$0x3f]
      %s8580 = scalar_lea.vmem [#allocation2], 391
      %v8581 = vld [vmem:[%s8580] ss:$2 sm:$0xff]
      %s8582 = scalar_lea.vmem [#allocation2], 407
      %v8583 = vld [vmem:[%s8582] ss:$2 sm:$0x3f]
      %v8584 = vmax.f32 %v8569, %v8573
      %v8585 = vmax.f32 %v8571, %v8575
      %v8586 = vmax.f32 %v8577, %v8581
      %v8587 = vmax.f32 %v8579, %v8583
      %v8588 = vmax.f32 %v8584, %v8586
      %v8589 = vmax.f32 %v8585, %v8587
      %v8590 = vpack.c.bf16 %v8588, %v8588
      %v8591 = vpack.c.bf16 %v8589, %v8589
      %v8594 = vrot.slane %v8590, 6
      %v8595 = vrot.slane %v8594, 4
      %v8596 = vrot.slane %v8591, 6
      %v8597 = vsel %vm8453, %v8595, %v8596
      %v8598 = vrot.slane %v8596, 4
      %8602 = vst.msk [vmem:[%s170 + $0x28] sm:$0xc] %vm8462, %v8594
      %8603 = vst.msk [vmem:[%s170 + $0x2c] sm:$0xf] %vm8379, %v8597
      %8604 = vst.msk [vmem:[%s170 + $0x30] sm:$0x1] %vm8465, %v8598
      %s8605 = scalar_lea.vmem [#allocation2], 420
      %v8606 = vld [vmem:[%s8605] ss:$2 sm:$0xff]
      %s8607 = scalar_lea.vmem [#allocation2], 436
      %v8608 = vld [vmem:[%s8607] ss:$2 sm:$0x3f]
      %s8609 = scalar_lea.vmem [#allocation2], 421
      %v8610 = vld [vmem:[%s8609] ss:$2 sm:$0xff]
      %s8611 = scalar_lea.vmem [#allocation2], 437
      %v8612 = vld [vmem:[%s8611] ss:$2 sm:$0x3f]
      %s8613 = scalar_lea.vmem [#allocation2], 450
      %v8614 = vld [vmem:[%s8613] ss:$2 sm:$0xff]
      %s8615 = scalar_lea.vmem [#allocation2], 466
      %v8616 = vld [vmem:[%s8615] ss:$2 sm:$0x3f]
      %s8617 = scalar_lea.vmem [#allocation2], 451
      %v8618 = vld [vmem:[%s8617] ss:$2 sm:$0xff]
      %s8619 = scalar_lea.vmem [#allocation2], 467
      %v8620 = vld [vmem:[%s8619] ss:$2 sm:$0x3f]
      %v8621 = vmax.f32 %v8606, %v8610
      %v8622 = vmax.f32 %v8608, %v8612
      %v8623 = vmax.f32 %v8614, %v8618
      %v8624 = vmax.f32 %v8616, %v8620
      %v8625 = vmax.f32 %v8621, %v8623
      %v8626 = vmax.f32 %v8622, %v8624
      %v8627 = vpack.c.bf16 %v8625, %v8625
      %v8628 = vpack.c.bf16 %v8626, %v8626
      %v8631 = vrot.slane %v8627, 7
      %v8632 = vrot.slane %v8631, 4
      %v8633 = vrot.slane %v8628, 7
      %v8634 = vsel %vm8495, %v8632, %v8633
      %8637 = vst.msk [vmem:[%s170 + $0x30] sm:$0xe] %vm8502, %v8631
      %8638 = vst.msk [vmem:[%s170 + $0x34] sm:$0xf] %vm8379, %v8634
      %s8639 = scalar_lea.vmem [#allocation2], 480
      %v8640 = vld [vmem:[%s8639] ss:$2 sm:$0xff]
      %s8641 = scalar_lea.vmem [#allocation2], 496
      %v8642 = vld [vmem:[%s8641] ss:$2 sm:$0x3f]
      %s8643 = scalar_lea.vmem [#allocation2], 481
      %v8644 = vld [vmem:[%s8643] ss:$2 sm:$0xff]
      %s8645 = scalar_lea.vmem [#allocation2], 497
      %v8646 = vld [vmem:[%s8645] ss:$2 sm:$0x3f]
      %s8647 = scalar_lea.vmem [#allocation2], 510
      %v8648 = vld [vmem:[%s8647] ss:$2 sm:$0xff]
      %s8649 = scalar_lea.vmem [#allocation2], 526
      %v8650 = vld [vmem:[%s8649] ss:$2 sm:$0x3f]
      %s8651 = scalar_lea.vmem [#allocation2], 511
      %v8652 = vld [vmem:[%s8651] ss:$2 sm:$0xff]
      %s8653 = scalar_lea.vmem [#allocation2], 527
      %v8654 = vld [vmem:[%s8653] ss:$2 sm:$0x3f]
      %v8655 = vmax.f32 %v8640, %v8644
      %v8656 = vmax.f32 %v8642, %v8646
      %v8657 = vmax.f32 %v8648, %v8652
      %v8658 = vmax.f32 %v8650, %v8654
      %v8659 = vmax.f32 %v8655, %v8657
      %v8660 = vmax.f32 %v8656, %v8658
      %v8661 = vpack.c.bf16 %v8659, %v8659
      %v8662 = vpack.c.bf16 %v8660, %v8660
      %8663 = vst.msk [vmem:[%s170 + $0x38] sm:$0xf] %vm8379, %v8661
      %8664 = vst.msk [vmem:[%s170 + $0x3c] sm:$0x7] %vm8381, %v8662
      %s8665 = scalar_lea.vmem [#allocation2], 540
      %v8666 = vld [vmem:[%s8665] ss:$2 sm:$0xff]
      %s8667 = scalar_lea.vmem [#allocation2], 556
      %v8668 = vld [vmem:[%s8667] ss:$2 sm:$0x3f]
      %s8669 = scalar_lea.vmem [#allocation2], 541
      %v8670 = vld [vmem:[%s8669] ss:$2 sm:$0xff]
      %s8671 = scalar_lea.vmem [#allocation2], 557
      %v8672 = vld [vmem:[%s8671] ss:$2 sm:$0x3f]
      %s8673 = scalar_lea.vmem [#allocation2], 570
      %v8674 = vld [vmem:[%s8673] ss:$2 sm:$0xff]
      %s8675 = scalar_lea.vmem [#allocation2], 586
      %v8676 = vld [vmem:[%s8675] ss:$2 sm:$0x3f]
      %s8677 = scalar_lea.vmem [#allocation2], 571
      %v8678 = vld [vmem:[%s8677] ss:$2 sm:$0xff]
      %s8679 = scalar_lea.vmem [#allocation2], 587
      %v8680 = vld [vmem:[%s8679] ss:$2 sm:$0x3f]
      %v8681 = vmax.f32 %v8666, %v8670
      %v8682 = vmax.f32 %v8668, %v8672
      %v8683 = vmax.f32 %v8674, %v8678
      %v8684 = vmax.f32 %v8676, %v8680
      %v8685 = vmax.f32 %v8681, %v8683
      %v8686 = vmax.f32 %v8682, %v8684
      %v8687 = vpack.c.bf16 %v8685, %v8685
      %v8688 = vpack.c.bf16 %v8686, %v8686
      %v8691 = vrot.slane %v8687, 5
      %v8692 = vrot.slane %v8691, 4
      %v8693 = vrot.slane %v8688, 5
      %v8694 = vsel %vm8411, %v8692, %v8693
      %v8695 = vrot.slane %v8693, 4
      %8699 = vst.msk [vmem:[%s170 + $0x3c] sm:$0x8] %vm8420, %v8691
      %8700 = vst.msk [vmem:[%s170 + $0x40] sm:$0xf] %vm8379, %v8694
      %8701 = vst.msk [vmem:[%s170 + $0x44] sm:$0x3] %vm8423, %v8695
      %s8702 = scalar_lea.vmem [#allocation2], 600
      %v8703 = vld [vmem:[%s8702] ss:$2 sm:$0xff]
      %s8704 = scalar_lea.vmem [#allocation2], 616
      %v8705 = vld [vmem:[%s8704] ss:$2 sm:$0x3f]
      %s8706 = scalar_lea.vmem [#allocation2], 601
      %v8707 = vld [vmem:[%s8706] ss:$2 sm:$0xff]
      %s8708 = scalar_lea.vmem [#allocation2], 617
      %v8709 = vld [vmem:[%s8708] ss:$2 sm:$0x3f]
      %s8710 = scalar_lea.vmem [#allocation2], 630
      %v8711 = vld [vmem:[%s8710] ss:$2 sm:$0xff]
      %s8712 = scalar_lea.vmem [#allocation2], 646
      %v8713 = vld [vmem:[%s8712] ss:$2 sm:$0x3f]
      %s8714 = scalar_lea.vmem [#allocation2], 631
      %v8715 = vld [vmem:[%s8714] ss:$2 sm:$0xff]
      %s8716 = scalar_lea.vmem [#allocation2], 647
      %v8717 = vld [vmem:[%s8716] ss:$2 sm:$0x3f]
      %v8718 = vmax.f32 %v8703, %v8707
      %v8719 = vmax.f32 %v8705, %v8709
      %v8720 = vmax.f32 %v8711, %v8715
      %v8721 = vmax.f32 %v8713, %v8717
      %v8722 = vmax.f32 %v8718, %v8720
      %v8723 = vmax.f32 %v8719, %v8721
      %v8724 = vpack.c.bf16 %v8722, %v8722
      %v8725 = vpack.c.bf16 %v8723, %v8723
      %v8728 = vrot.slane %v8724, 6
      %v8729 = vrot.slane %v8728, 4
      %v8730 = vrot.slane %v8725, 6
      %v8731 = vsel %vm8453, %v8729, %v8730
      %v8732 = vrot.slane %v8730, 4
      %8736 = vst.msk [vmem:[%s170 + $0x44] sm:$0xc] %vm8462, %v8728
      %8737 = vst.msk [vmem:[%s170 + $0x48] sm:$0xf] %vm8379, %v8731
      %8738 = vst.msk [vmem:[%s170 + $0x4c] sm:$0x1] %vm8465, %v8732
      %s8739 = scalar_lea.vmem [#allocation2], 660
      %v8740 = vld [vmem:[%s8739] ss:$2 sm:$0xff]
      %s8741 = scalar_lea.vmem [#allocation2], 676
      %v8742 = vld [vmem:[%s8741] ss:$2 sm:$0x3f]
      %s8743 = scalar_lea.vmem [#allocation2], 661
      %v8744 = vld [vmem:[%s8743] ss:$2 sm:$0xff]
      %s8745 = scalar_lea.vmem [#allocation2], 677
      %v8746 = vld [vmem:[%s8745] ss:$2 sm:$0x3f]
      %s8747 = scalar_lea.vmem [#allocation2], 690
      %v8748 = vld [vmem:[%s8747] ss:$2 sm:$0xff]
      %s8749 = scalar_lea.vmem [#allocation2], 706
      %v8750 = vld [vmem:[%s8749] ss:$2 sm:$0x3f]
      %s8751 = scalar_lea.vmem [#allocation2], 691
      %v8752 = vld [vmem:[%s8751] ss:$2 sm:$0xff]
      %s8753 = scalar_lea.vmem [#allocation2], 707
      %v8754 = vld [vmem:[%s8753] ss:$2 sm:$0x3f]
      %v8755 = vmax.f32 %v8740, %v8744
      %v8756 = vmax.f32 %v8742, %v8746
      %v8757 = vmax.f32 %v8748, %v8752
      %v8758 = vmax.f32 %v8750, %v8754
      %v8759 = vmax.f32 %v8755, %v8757
      %v8760 = vmax.f32 %v8756, %v8758
      %v8761 = vpack.c.bf16 %v8759, %v8759
      %v8762 = vpack.c.bf16 %v8760, %v8760
      %v8765 = vrot.slane %v8761, 7
      %v8766 = vrot.slane %v8765, 4
      %v8767 = vrot.slane %v8762, 7
      %v8768 = vsel %vm8495, %v8766, %v8767
      %8771 = vst.msk [vmem:[%s170 + $0x4c] sm:$0xe] %vm8502, %v8765
      %8772 = vst.msk [vmem:[%s170 + $0x50] sm:$0xf] %vm8379, %v8768
      %s8773 = scalar_lea.vmem [#allocation2], 720
      %v8774 = vld [vmem:[%s8773] ss:$2 sm:$0xff]
      %s8775 = scalar_lea.vmem [#allocation2], 736
      %v8776 = vld [vmem:[%s8775] ss:$2 sm:$0x3f]
      %s8777 = scalar_lea.vmem [#allocation2], 721
      %v8778 = vld [vmem:[%s8777] ss:$2 sm:$0xff]
      %s8779 = scalar_lea.vmem [#allocation2], 737
      %v8780 = vld [vmem:[%s8779] ss:$2 sm:$0x3f]
      %s8781 = scalar_lea.vmem [#allocation2], 750
      %v8782 = vld [vmem:[%s8781] ss:$2 sm:$0xff]
      %s8783 = scalar_lea.vmem [#allocation2], 766
      %v8784 = vld [vmem:[%s8783] ss:$2 sm:$0x3f]
      %s8785 = scalar_lea.vmem [#allocation2], 751
      %v8786 = vld [vmem:[%s8785] ss:$2 sm:$0xff]
      %s8787 = scalar_lea.vmem [#allocation2], 767
      %v8788 = vld [vmem:[%s8787] ss:$2 sm:$0x3f]
      %v8789 = vmax.f32 %v8774, %v8778
      %v8790 = vmax.f32 %v8776, %v8780
      %v8791 = vmax.f32 %v8782, %v8786
      %v8792 = vmax.f32 %v8784, %v8788
      %v8793 = vmax.f32 %v8789, %v8791
      %v8794 = vmax.f32 %v8790, %v8792
      %v8795 = vpack.c.bf16 %v8793, %v8793
      %v8796 = vpack.c.bf16 %v8794, %v8794
      %8797 = vst.msk [vmem:[%s170 + $0x54] sm:$0xf] %vm8379, %v8795
      %8798 = vst.msk [vmem:[%s170 + $0x58] sm:$0x7] %vm8381, %v8796
      %s8799 = scalar_lea.vmem [#allocation2], 780
      %v8800 = vld [vmem:[%s8799] ss:$2 sm:$0xff]
      %s8801 = scalar_lea.vmem [#allocation2], 796
      %v8802 = vld [vmem:[%s8801] ss:$2 sm:$0x3f]
      %s8803 = scalar_lea.vmem [#allocation2], 781
      %v8804 = vld [vmem:[%s8803] ss:$2 sm:$0xff]
      %s8805 = scalar_lea.vmem [#allocation2], 797
      %v8806 = vld [vmem:[%s8805] ss:$2 sm:$0x3f]
      %s8807 = scalar_lea.vmem [#allocation2], 810
      %v8808 = vld [vmem:[%s8807] ss:$2 sm:$0xff]
      %s8809 = scalar_lea.vmem [#allocation2], 826
      %v8810 = vld [vmem:[%s8809] ss:$2 sm:$0x3f]
      %s8811 = scalar_lea.vmem [#allocation2], 811
      %v8812 = vld [vmem:[%s8811] ss:$2 sm:$0xff]
      %s8813 = scalar_lea.vmem [#allocation2], 827
      %v8814 = vld [vmem:[%s8813] ss:$2 sm:$0x3f]
      %v8815 = vmax.f32 %v8800, %v8804
      %v8816 = vmax.f32 %v8802, %v8806
      %v8817 = vmax.f32 %v8808, %v8812
      %v8818 = vmax.f32 %v8810, %v8814
      %v8819 = vmax.f32 %v8815, %v8817
      %v8820 = vmax.f32 %v8816, %v8818
      %v8821 = vpack.c.bf16 %v8819, %v8819
      %v8822 = vpack.c.bf16 %v8820, %v8820
      %v8825 = vrot.slane %v8821, 5
      %v8826 = vrot.slane %v8825, 4
      %v8827 = vrot.slane %v8822, 5
      %v8828 = vsel %vm8411, %v8826, %v8827
      %v8829 = vrot.slane %v8827, 4
      %8833 = vst.msk [vmem:[%s170 + $0x58] sm:$0x8] %vm8420, %v8825
      %8834 = vst.msk [vmem:[%s170 + $0x5c] sm:$0xf] %vm8379, %v8828
      %8835 = vst.msk [vmem:[%s170 + $0x60] sm:$0x3] %vm8423, %v8829
      %p8836 = scmp.lt.s32.totalorder %s14, 1
      %s8837 = scalar_select %p8836, %s14, 1
      %s8838 = smul.addr %s8837, 25
      %s8839 = smul.addr %s8838, 4
      %s8840 = scalar_lea.vmem %s3, %s8839
      // Predicated region
      $region33: #{convnet_forward.3} parent=31 // pred_check
        %p8841 = pneg %p100
      $region34: #{convnet_forward.3} parent=31 // pred_check_branch
        %8843 = sbr.rel (%p8841) target = $region36
      $region35: #{convnet_forward.3} parent=31 // pred_region
        _
      $region36: #{convnet_forward.3} parent=31 // pred_fallthru
        _
    $region32: #{convnet_forward.3} parent=5 // pred_fallthru
      _
    %p8844 = scmp.le.s32.totalorder 2, %s9
    // Predicated region
    $region37: #{convnet_forward.3} parent=5 // pred_check
      %p8845 = pneg %p8844
    $region38: #{convnet_forward.3} parent=5 // pred_check_branch
      %8847 = sbr.rel (%p8845) target = $region40
    $region39: #{convnet_forward.3} parent=5 // pred_region
      %s8848 = ssub.s32 %s9, 2
      // Predicated region
      $region41: #{convnet_forward.3} parent=39 // pred_check
        %p8849 = pneg %p106
      $region42: #{convnet_forward.3} parent=39 // pred_check_branch
        %8851 = sbr.rel (%p8849) target = $region44
      $region43: #{convnet_forward.3} parent=39 // pred_region
        %p8852 = scmp.lt.s32.totalorder %s15, 1
        %s8853 = scalar_select %p8852, %s15, 1
        %s8854 = smul.addr %s8853, 25
        %s8855 = smul.addr %s8854, 4
        %s8856 = scalar_lea.vmem %s3, %s8855
      $region44: #{convnet_forward.3} parent=39 // pred_fallthru
        _
    $region40: #{convnet_forward.3} parent=5 // pred_fallthru
      _
  $region6: #{convnet_forward.3} parent=0 // loop_footer
    %s13 = sadd.s32 1, %s9
  $region7: #{convnet_forward.3} parent=0 // loop_footer_branch
    %8 = sbr.rel target = $region3
  $region8: #{convnet_forward.3} parent=0 // loop_exit
    _

</llo_original>
